<compile_context>
chip_gen: v6e
topology: v6e:2x2x1
jax: 0.10.0
libtpu: 0.0.40
codegen_flags: <defaults>
</compile_context>

<pallas_src>
import jax
import jax.numpy as jnp
import numpy as np
from jax import lax
from jax.experimental import pallas as pl
from jax.experimental.pallas import tpu as pltpu


# ----------------------------------------------------------------------------
# Static network configuration (strides MUST stay Python ints: they control
# slicing shapes and must never be traced).
# ----------------------------------------------------------------------------
CONV_CHANNELS = ((1, 64), (64, 64), (64, 128), (128, 128), (128, 256), (256, 256))
CONV_STRIDES = (1, 2, 1, 2, 1, 2)
NEG_SLOPE = 0.1


def _round_up(v, m):
    return ((v + m - 1) // m) * m


# ----------------------------------------------------------------------------
# Pallas kernels
# ----------------------------------------------------------------------------
def _conv_mm_kernel(x_ref, w_ref, b_ref, o_ref):
    """(tm, 9*Cin) @ (9*Cin, Cout) + bias, LeakyReLU(0.1). bf16 in, f32 acc."""
    acc = jnp.dot(x_ref[...], w_ref[...], preferred_element_type=jnp.float32)
    acc = acc + b_ref[...]                                   # (1, Cout) broadcast
    o_ref[...] = jnp.where(acc > 0, acc, NEG_SLOPE * acc).astype(o_ref.dtype)


def _fcn_kernel(x_ref, w1_ref, b1_ref, w2_ref, b2_ref, o_ref):
    """Linear(F,1024) -> LeakyReLU(0.1) -> Linear(1024,1), fused, f32."""
    h = jnp.dot(x_ref[...], w1_ref[...], preferred_element_type=jnp.float32)
    h = h + b1_ref[...]
    h = jnp.where(h > 0, h, NEG_SLOPE * h)
    o = jnp.dot(h, w2_ref[...], preferred_element_type=jnp.float32) + b2_ref[...]
    o_ref[...] = o.astype(o_ref.dtype)


# ----------------------------------------------------------------------------
# Wrappers
# ----------------------------------------------------------------------------
_VMEM = pl.BlockSpec(memory_space=pltpu.MemorySpace.VMEM)


def _im2col_3x3(x, stride):
    """Strided 3x3 patch extraction (wrapper-side layout plumbing).

    x: (B, H, W, C) NHWC  ->  (B*Ho*Wo, 9*C); rows in (b, oy, ox) order, columns
    in (dy, dx, c) order matching HWIO weight .reshape(9*C, Cout).  Only the
    strided output positions are extracted, so stride-2 layers do 1/4 of the
    work of a stride-1-then-subsample scheme.
    """
    B, H, W, C = x.shape
    Ho = (H - 3) // stride + 1
    Wo = (W - 3) // stride + 1
    taps = []
    for dy in range(3):
        for dx in range(3):
            taps.append(x[:, dy:dy + (Ho - 1) * stride + 1:stride,
                            dx:dx + (Wo - 1) * stride + 1:stride, :])
    cols = jnp.concatenate(taps, axis=-1).reshape(B * Ho * Wo, 9 * C)
    return cols, Ho, Wo


def _conv_matmul(x_cols, w2d, b, *, tm_max=256):
    """Row-tiled fused matmul + bias + LeakyReLU as one pallas_call."""
    M, K = x_cols.shape
    Cout = w2d.shape[1]
    tm = min(tm_max, _round_up(M, 8))          # row tile (sublane-aligned)
    Mp = _round_up(M, tm)
    if Mp != M:
        x_cols = jnp.pad(x_cols, ((0, Mp - M), (0, 0)))
    y = pl.pallas_call(
        _conv_mm_kernel,
        out_shape=jax.ShapeDtypeStruct((Mp, Cout), jnp.bfloat16),
        grid_spec=pltpu.PrefetchScalarGridSpec(
            num_scalar_prefetch=0,
            grid=(Mp // tm,),
            in_specs=[
                pl.BlockSpec((tm, K), lambda i: (i, 0)),    # row tile of patches
                pl.BlockSpec((K, Cout), lambda i: (0, 0)),  # whole weight (small)
                pl.BlockSpec((1, Cout), lambda i: (0, 0)),  # bias
            ],
            out_specs=pl.BlockSpec((tm, Cout), lambda i: (i, 0)),
        ),
        compiler_params=pltpu.CompilerParams(
            dimension_semantics=("parallel",)),  # shard row tiles across TCs (v7x)
    )(x_cols, w2d, b)
    return y[:M] if Mp != M else y


def conv3x3_lrelu(x_nhwc, w2d, b, stride):
    B = x_nhwc.shape[0]
    cols, Ho, Wo = _im2col_3x3(x_nhwc, stride)
    y = _conv_matmul(cols, w2d, b)
    return y.reshape(B, Ho, Wo, w2d.shape[1])


def fcn_head(feat, w1, b1, w2, b2):
    B = feat.shape[0]
    return pl.pallas_call(
        _fcn_kernel,
        out_shape=jax.ShapeDtypeStruct((B, 1), jnp.float32),
        in_specs=[_VMEM] * 5,
        out_specs=_VMEM,
    )(feat, w1, b1, w2, b2)


def discriminator_forward(x_nchw, params):
    """Forward pass matching Discriminator_net.forward. Input is NCHW f32."""
    x = jnp.transpose(x_nchw, (0, 2, 3, 1)).astype(jnp.bfloat16)   # NHWC bf16
    for (w2d, b), stride in zip(params["convs"], CONV_STRIDES):
        x = conv3x3_lrelu(x, w2d, b, stride)
    # w1 rows were pre-permuted to NHWC-flatten order at init -> flatten directly.
    feat = x.reshape(x.shape[0], -1).astype(jnp.float32)
    return fcn_head(feat, *params["fcn"])


# ----------------------------------------------------------------------------
# Deterministic parameter init (PyTorch-like uniform(-1/sqrt(fan_in), ...))
# ----------------------------------------------------------------------------
def compute_N(patch_size):
    N = patch_size
    for _ in range(3):
        N = (N - 3) // 1 + 1
        N = (N - 3) // 2 + 1
    return N


def init_params(key, patch_size):
    convs_pallas, convs_ref = [], []
    for (cin, cout) in CONV_CHANNELS:
        key, k1, k2 = jax.random.split(key, 3)
        bound = 1.0 / float(np.sqrt(cin * 9))
        w = jax.random.uniform(k1, (3, 3, cin, cout), jnp.float32, -bound, bound)
        b = jax.random.uniform(k2, (1, cout), jnp.float32, -bound, bound)
        convs_pallas.append((w.reshape(9 * cin, cout).astype(jnp.bfloat16), b))
        convs_ref.append((w, b))

    N = compute_N(patch_size)
    F = 256 * N * N
    key, k1, k2, k3, k4 = jax.random.split(key, 5)
    bound1 = 1.0 / float(np.sqrt(F))
    w1 = jax.random.uniform(k1, (F, 1024), jnp.float32, -bound1, bound1)
    b1 = jax.random.uniform(k2, (1, 1024), jnp.float32, -bound1, bound1)
    bound2 = 1.0 / float(np.sqrt(1024))
    w2 = jax.random.uniform(k3, (1024, 1), jnp.float32, -bound2, bound2)
    b2 = jax.random.uniform(k4, (1, 1), jnp.float32, -bound2, bound2)

    # w1 rows are in PyTorch NCHW-flatten (c, h, w) order; permute once to
    # NHWC-flatten (h, w, c) order so the Pallas path needs no feature transpose.
    w1_nhwc = w1.reshape(256, N, N, 1024).transpose(1, 2, 0, 3).reshape(F, 1024)

    pallas_params = {"convs": convs_pallas, "fcn": (w1_nhwc, b1, w2, b2)}
    ref_params = {"convs": convs_ref, "fcn": (w1, b1, w2, b2)}
    return pallas_params, ref_params, N


# ----------------------------------------------------------------------------
# Pure-JAX reference (f32, HIGHEST precision) for validation
# ----------------------------------------------------------------------------
def reference_forward(x_nchw, ref_params):
    x = jnp.transpose(x_nchw, (0, 2, 3, 1))
    dn = ("NHWC", "HWIO", "NHWC")
    for (w, b), stride in zip(ref_params["convs"], CONV_STRIDES):
        x = lax.conv_general_dilated(x, w, (stride, stride), "VALID",
                                     dimension_numbers=dn,
                                     precision=lax.Precision.HIGHEST)
        x = x + b.reshape(1, 1, 1, -1)
        x = jnp.where(x > 0, x, NEG_SLOPE * x)
    B = x.shape[0]
    feat = jnp.transpose(x, (0, 3, 1, 2)).reshape(B, -1)   # PyTorch NCHW flatten
    w1, b1, w2, b2 = ref_params["fcn"]
    h = jnp.dot(feat, w1, precision=lax.Precision.HIGHEST) + b1
    h = jnp.where(h > 0, h, NEG_SLOPE * h)
    return jnp.dot(h, w2, precision=lax.Precision.HIGHEST) + b2


# ----------------------------------------------------------------------------
if __name__ == "__main__":
    PATCH = 35      # smallest patch_size that survives all six valid convs (N = 1)
    BATCH = 2

    key = jax.random.PRNGKey(0)
    kparams, kx = jax.random.split(key)
    pallas_params, ref_params, N = init_params(kparams, PATCH)

    x = jax.random.normal(kx, (BATCH, 1, PATCH, PATCH), jnp.float32)   # NCHW

    out = jax.jit(discriminator_forward)(x, pallas_params)
    out = jax.block_until_ready(out)
    assert out.shape == (BATCH, 1), out.shape

    ref = jax.block_until_ready(reference_forward(x, ref_params))
    np.testing.assert_allclose(np.asarray(out), np.asarray(ref),
                               rtol=2e-2, atol=1e-2)

    print("KERNEL_OK")
</pallas_src>

<mosaic_0001>
module attributes {stable_mosaic.version = 11 : i64} {
  func.func @_conv_mm_kernel(%arg0: i32, %arg1: memref<256x9xbf16, #tpu.memory_space<vmem>>, %arg2: memref<9x64xbf16, #tpu.memory_space<vmem>>, %arg3: memref<1x64xf32, #tpu.memory_space<vmem>>, %arg4: memref<256x64xbf16, #tpu.memory_space<vmem>>) attributes {dimension_semantics = [#tpu.dimension_semantics<parallel>], iteration_bounds = array<i64: 9>, scalar_prefetch = 0 : i64, scratch_operands = 0 : i64, tpu.core_type = #tpu.core_type<tc>, window_params = [{transform_indices = @transform_0, window_bounds = array<i64: 256, 9>}, {pipeline_mode = #tpu.pipeline_mode<synchronous>, transform_indices = @transform_1, window_bounds = array<i64: 9, 64>}, {pipeline_mode = #tpu.pipeline_mode<synchronous>, transform_indices = @transform_2, window_bounds = array<i64: 1, 64>}, {transform_indices = @transform_3, window_bounds = array<i64: 256, 64>}]} {
    %c0 = arith.constant 0 : index
    %c0_0 = arith.constant 0 : index
    %0 = vector.load %arg1[%c0, %c0_0] : memref<256x9xbf16, #tpu.memory_space<vmem>>, vector<256x9xbf16>
    %c0_1 = arith.constant 0 : index
    %c0_2 = arith.constant 0 : index
    %1 = vector.load %arg2[%c0_1, %c0_2] : memref<9x64xbf16, #tpu.memory_space<vmem>>, vector<9x64xbf16>
    %cst = arith.constant dense<0.000000e+00> : vector<256x64xf32>
    %2 = tpu.matmul %0, %1, %cst {dimension_numbers = #tpu.dot_dimension_numbers<[1], [0], [0], [1], [0, 0, 1, 1], [], []>} : vector<256x9xbf16>, vector<9x64xbf16>, vector<256x64xf32> -> vector<256x64xf32>
    %c0_3 = arith.constant 0 : index
    %c0_4 = arith.constant 0 : index
    %3 = vector.load %arg3[%c0_3, %c0_4] : memref<1x64xf32, #tpu.memory_space<vmem>>, vector<1x64xf32>
    %4 = vector.broadcast %3 : vector<1x64xf32> to vector<256x64xf32>
    %5 = arith.addf %2, %4 : vector<256x64xf32>
    %cst_5 = arith.constant 0.000000e+00 : f32
    %6 = vector.broadcast %cst_5 : f32 to vector<256x64xf32>
    %7 = arith.cmpf ogt, %5, %6 : vector<256x64xf32>
    %cst_6 = arith.constant 1.000000e-01 : f32
    %8 = vector.broadcast %cst_6 : f32 to vector<256x64xf32>
    %9 = arith.mulf %8, %5 : vector<256x64xf32>
    %10 = arith.select %7, %5, %9 : vector<256x64xi1>, vector<256x64xf32>
    %11 = arith.truncf %10 : vector<256x64xf32> to vector<256x64xbf16>
    %c0_7 = arith.constant 0 : index
    %c0_8 = arith.constant 0 : index
    %12 = vector.load %arg4[%c0_7, %c0_8] : memref<256x64xbf16, #tpu.memory_space<vmem>>, vector<256x64xbf16>
    tpu.vector_store %arg4[%c0_7, %c0_8], %11 {strides = array<i32>} : memref<256x64xbf16, #tpu.memory_space<vmem>>, vector<256x64xbf16>,
    return
  }
  func.func @transform_0(%arg0: i32) -> (i32, i32) {
    %c0_i32 = arith.constant 0 : i32
    %c0_i32_0 = arith.constant 0 : i32
    return %arg0, %c0_i32 : i32, i32
  }
  func.func @transform_1(%arg0: i32) -> (i32, i32) {
    %c0_i32 = arith.constant 0 : i32
    %c0_i32_0 = arith.constant 0 : i32
    %c0_i32_1 = arith.constant 0 : i32
    return %c0_i32, %c0_i32_0 : i32, i32
  }
  func.func @transform_2(%arg0: i32) -> (i32, i32) {
    %c0_i32 = arith.constant 0 : i32
    %c0_i32_0 = arith.constant 0 : i32
    %c0_i32_1 = arith.constant 0 : i32
    return %c0_i32, %c0_i32_0 : i32, i32
  }
  func.func @transform_3(%arg0: i32) -> (i32, i32) {
    %c0_i32 = arith.constant 0 : i32
    %c0_i32_0 = arith.constant 0 : i32
    return %arg0, %c0_i32 : i32, i32
  }
}

module attributes {stable_mosaic.version = 11 : i64} {
  func.func @_conv_mm_kernel(%arg0: i32, %arg1: memref<256x576xbf16, #tpu.memory_space<vmem>>, %arg2: memref<576x64xbf16, #tpu.memory_space<vmem>>, %arg3: memref<1x64xf32, #tpu.memory_space<vmem>>, %arg4: memref<256x64xbf16, #tpu.memory_space<vmem>>) attributes {dimension_semantics = [#tpu.dimension_semantics<parallel>], iteration_bounds = array<i64: 2>, scalar_prefetch = 0 : i64, scratch_operands = 0 : i64, tpu.core_type = #tpu.core_type<tc>, window_params = [{transform_indices = @transform_0, window_bounds = array<i64: 256, 576>}, {pipeline_mode = #tpu.pipeline_mode<synchronous>, transform_indices = @transform_1, window_bounds = array<i64: 576, 64>}, {pipeline_mode = #tpu.pipeline_mode<synchronous>, transform_indices = @transform_2, window_bounds = array<i64: 1, 64>}, {transform_indices = @transform_3, window_bounds = array<i64: 256, 64>}]} {
    %c0 = arith.constant 0 : index
    %c0_0 = arith.constant 0 : index
    %0 = vector.load %arg1[%c0, %c0_0] : memref<256x576xbf16, #tpu.memory_space<vmem>>, vector<256x576xbf16>
    %c0_1 = arith.constant 0 : index
    %c0_2 = arith.constant 0 : index
    %1 = vector.load %arg2[%c0_1, %c0_2] : memref<576x64xbf16, #tpu.memory_space<vmem>>, vector<576x64xbf16>
    %cst = arith.constant dense<0.000000e+00> : vector<256x64xf32>
    %2 = tpu.matmul %0, %1, %cst {dimension_numbers = #tpu.dot_dimension_numbers<[1], [0], [0], [1], [0, 0, 1, 1], [], []>} : vector<256x576xbf16>, vector<576x64xbf16>, vector<256x64xf32> -> vector<256x64xf32>
    %c0_3 = arith.constant 0 : index
    %c0_4 = arith.constant 0 : index
    %3 = vector.load %arg3[%c0_3, %c0_4] : memref<1x64xf32, #tpu.memory_space<vmem>>, vector<1x64xf32>
    %4 = vector.broadcast %3 : vector<1x64xf32> to vector<256x64xf32>
    %5 = arith.addf %2, %4 : vector<256x64xf32>
    %cst_5 = arith.constant 0.000000e+00 : f32
    %6 = vector.broadcast %cst_5 : f32 to vector<256x64xf32>
    %7 = arith.cmpf ogt, %5, %6 : vector<256x64xf32>
    %cst_6 = arith.constant 1.000000e-01 : f32
    %8 = vector.broadcast %cst_6 : f32 to vector<256x64xf32>
    %9 = arith.mulf %8, %5 : vector<256x64xf32>
    %10 = arith.select %7, %5, %9 : vector<256x64xi1>, vector<256x64xf32>
    %11 = arith.truncf %10 : vector<256x64xf32> to vector<256x64xbf16>
    %c0_7 = arith.constant 0 : index
    %c0_8 = arith.constant 0 : index
    %12 = vector.load %arg4[%c0_7, %c0_8] : memref<256x64xbf16, #tpu.memory_space<vmem>>, vector<256x64xbf16>
    tpu.vector_store %arg4[%c0_7, %c0_8], %11 {strides = array<i32>} : memref<256x64xbf16, #tpu.memory_space<vmem>>, vector<256x64xbf16>,
    return
  }
  func.func @transform_0(%arg0: i32) -> (i32, i32) {
    %c0_i32 = arith.constant 0 : i32
    %c0_i32_0 = arith.constant 0 : i32
    return %arg0, %c0_i32 : i32, i32
  }
  func.func @transform_1(%arg0: i32) -> (i32, i32) {
    %c0_i32 = arith.constant 0 : i32
    %c0_i32_0 = arith.constant 0 : i32
    %c0_i32_1 = arith.constant 0 : i32
    return %c0_i32, %c0_i32_0 : i32, i32
  }
  func.func @transform_2(%arg0: i32) -> (i32, i32) {
    %c0_i32 = arith.constant 0 : i32
    %c0_i32_0 = arith.constant 0 : i32
    %c0_i32_1 = arith.constant 0 : i32
    return %c0_i32, %c0_i32_0 : i32, i32
  }
  func.func @transform_3(%arg0: i32) -> (i32, i32) {
    %c0_i32 = arith.constant 0 : i32
    %c0_i32_0 = arith.constant 0 : i32
    return %arg0, %c0_i32 : i32, i32
  }
}

module attributes {stable_mosaic.version = 11 : i64} {
  func.func @_conv_mm_kernel(%arg0: i32, %arg1: memref<256x576xbf16, #tpu.memory_space<vmem>>, %arg2: memref<576x128xbf16, #tpu.memory_space<vmem>>, %arg3: memref<1x128xf32, #tpu.memory_space<vmem>>, %arg4: memref<256x128xbf16, #tpu.memory_space<vmem>>) attributes {dimension_semantics = [#tpu.dimension_semantics<parallel>], iteration_bounds = array<i64: 2>, scalar_prefetch = 0 : i64, scratch_operands = 0 : i64, tpu.core_type = #tpu.core_type<tc>, window_params = [{transform_indices = @transform_0, window_bounds = array<i64: 256, 576>}, {pipeline_mode = #tpu.pipeline_mode<synchronous>, transform_indices = @transform_1, window_bounds = array<i64: 576, 128>}, {pipeline_mode = #tpu.pipeline_mode<synchronous>, transform_indices = @transform_2, window_bounds = array<i64: 1, 128>}, {transform_indices = @transform_3, window_bounds = array<i64: 256, 128>}]} {
    %c0 = arith.constant 0 : index
    %c0_0 = arith.constant 0 : index
    %0 = vector.load %arg1[%c0, %c0_0] : memref<256x576xbf16, #tpu.memory_space<vmem>>, vector<256x576xbf16>
    %c0_1 = arith.constant 0 : index
    %c0_2 = arith.constant 0 : index
    %1 = vector.load %arg2[%c0_1, %c0_2] : memref<576x128xbf16, #tpu.memory_space<vmem>>, vector<576x128xbf16>
    %cst = arith.constant dense<0.000000e+00> : vector<256x128xf32>
    %2 = tpu.matmul %0, %1, %cst {dimension_numbers = #tpu.dot_dimension_numbers<[1], [0], [0], [1], [0, 0, 1, 1], [], []>} : vector<256x576xbf16>, vector<576x128xbf16>, vector<256x128xf32> -> vector<256x128xf32>
    %c0_3 = arith.constant 0 : index
    %c0_4 = arith.constant 0 : index
    %3 = vector.load %arg3[%c0_3, %c0_4] : memref<1x128xf32, #tpu.memory_space<vmem>>, vector<1x128xf32>
    %4 = vector.broadcast %3 : vector<1x128xf32> to vector<256x128xf32>
    %5 = arith.addf %2, %4 : vector<256x128xf32>
    %cst_5 = arith.constant 0.000000e+00 : f32
    %6 = vector.broadcast %cst_5 : f32 to vector<256x128xf32>
    %7 = arith.cmpf ogt, %5, %6 : vector<256x128xf32>
    %cst_6 = arith.constant 1.000000e-01 : f32
    %8 = vector.broadcast %cst_6 : f32 to vector<256x128xf32>
    %9 = arith.mulf %8, %5 : vector<256x128xf32>
    %10 = arith.select %7, %5, %9 : vector<256x128xi1>, vector<256x128xf32>
    %11 = arith.truncf %10 : vector<256x128xf32> to vector<256x128xbf16>
    %c0_7 = arith.constant 0 : index
    %c0_8 = arith.constant 0 : index
    %12 = vector.load %arg4[%c0_7, %c0_8] : memref<256x128xbf16, #tpu.memory_space<vmem>>, vector<256x128xbf16>
    tpu.vector_store %arg4[%c0_7, %c0_8], %11 {strides = array<i32>} : memref<256x128xbf16, #tpu.memory_space<vmem>>, vector<256x128xbf16>,
    return
  }
  func.func @transform_0(%arg0: i32) -> (i32, i32) {
    %c0_i32 = arith.constant 0 : i32
    %c0_i32_0 = arith.constant 0 : i32
    return %arg0, %c0_i32 : i32, i32
  }
  func.func @transform_1(%arg0: i32) -> (i32, i32) {
    %c0_i32 = arith.constant 0 : i32
    %c0_i32_0 = arith.constant 0 : i32
    %c0_i32_1 = arith.constant 0 : i32
    return %c0_i32, %c0_i32_0 : i32, i32
  }
  func.func @transform_2(%arg0: i32) -> (i32, i32) {
    %c0_i32 = arith.constant 0 : i32
    %c0_i32_0 = arith.constant 0 : i32
    %c0_i32_1 = arith.constant 0 : i32
    return %c0_i32, %c0_i32_0 : i32, i32
  }
  func.func @transform_3(%arg0: i32) -> (i32, i32) {
    %c0_i32 = arith.constant 0 : i32
    %c0_i32_0 = arith.constant 0 : i32
    return %arg0, %c0_i32 : i32, i32
  }
}

module attributes {stable_mosaic.version = 11 : i64} {
  func.func @_conv_mm_kernel(%arg0: i32, %arg1: memref<72x1152xbf16, #tpu.memory_space<vmem>>, %arg2: memref<1152x128xbf16, #tpu.memory_space<vmem>>, %arg3: memref<1x128xf32, #tpu.memory_space<vmem>>, %arg4: memref<72x128xbf16, #tpu.memory_space<vmem>>) attributes {dimension_semantics = [#tpu.dimension_semantics<parallel>], iteration_bounds = array<i64: 1>, scalar_prefetch = 0 : i64, scratch_operands = 0 : i64, tpu.core_type = #tpu.core_type<tc>, window_params = [{transform_indices = @transform_0, window_bounds = array<i64: 72, 1152>}, {pipeline_mode = #tpu.pipeline_mode<synchronous>, transform_indices = @transform_1, window_bounds = array<i64: 1152, 128>}, {pipeline_mode = #tpu.pipeline_mode<synchronous>, transform_indices = @transform_2, window_bounds = array<i64: 1, 128>}, {transform_indices = @transform_3, window_bounds = array<i64: 72, 128>}]} {
    %c0 = arith.constant 0 : index
    %c0_0 = arith.constant 0 : index
    %0 = vector.load %arg1[%c0, %c0_0] : memref<72x1152xbf16, #tpu.memory_space<vmem>>, vector<72x1152xbf16>
    %c0_1 = arith.constant 0 : index
    %c0_2 = arith.constant 0 : index
    %1 = vector.load %arg2[%c0_1, %c0_2] : memref<1152x128xbf16, #tpu.memory_space<vmem>>, vector<1152x128xbf16>
    %cst = arith.constant dense<0.000000e+00> : vector<72x128xf32>
    %2 = tpu.matmul %0, %1, %cst {dimension_numbers = #tpu.dot_dimension_numbers<[1], [0], [0], [1], [0, 0, 1, 1], [], []>} : vector<72x1152xbf16>, vector<1152x128xbf16>, vector<72x128xf32> -> vector<72x128xf32>
    %c0_3 = arith.constant 0 : index
    %c0_4 = arith.constant 0 : index
    %3 = vector.load %arg3[%c0_3, %c0_4] : memref<1x128xf32, #tpu.memory_space<vmem>>, vector<1x128xf32>
    %4 = vector.broadcast %3 : vector<1x128xf32> to vector<72x128xf32>
    %5 = arith.addf %2, %4 : vector<72x128xf32>
    %cst_5 = arith.constant 0.000000e+00 : f32
    %6 = vector.broadcast %cst_5 : f32 to vector<72x128xf32>
    %7 = arith.cmpf ogt, %5, %6 : vector<72x128xf32>
    %cst_6 = arith.constant 1.000000e-01 : f32
    %8 = vector.broadcast %cst_6 : f32 to vector<72x128xf32>
    %9 = arith.mulf %8, %5 : vector<72x128xf32>
    %10 = arith.select %7, %5, %9 : vector<72x128xi1>, vector<72x128xf32>
    %11 = arith.truncf %10 : vector<72x128xf32> to vector<72x128xbf16>
    %c0_7 = arith.constant 0 : index
    %c0_8 = arith.constant 0 : index
    %12 = vector.load %arg4[%c0_7, %c0_8] : memref<72x128xbf16, #tpu.memory_space<vmem>>, vector<72x128xbf16>
    tpu.vector_store %arg4[%c0_7, %c0_8], %11 {strides = array<i32>} : memref<72x128xbf16, #tpu.memory_space<vmem>>, vector<72x128xbf16>,
    return
  }
  func.func @transform_0(%arg0: i32) -> (i32, i32) {
    %c0_i32 = arith.constant 0 : i32
    %c0_i32_0 = arith.constant 0 : i32
    return %arg0, %c0_i32 : i32, i32
  }
  func.func @transform_1(%arg0: i32) -> (i32, i32) {
    %c0_i32 = arith.constant 0 : i32
    %c0_i32_0 = arith.constant 0 : i32
    %c0_i32_1 = arith.constant 0 : i32
    return %c0_i32, %c0_i32_0 : i32, i32
  }
  func.func @transform_2(%arg0: i32) -> (i32, i32) {
    %c0_i32 = arith.constant 0 : i32
    %c0_i32_0 = arith.constant 0 : i32
    %c0_i32_1 = arith.constant 0 : i32
    return %c0_i32, %c0_i32_0 : i32, i32
  }
  func.func @transform_3(%arg0: i32) -> (i32, i32) {
    %c0_i32 = arith.constant 0 : i32
    %c0_i32_0 = arith.constant 0 : i32
    return %arg0, %c0_i32 : i32, i32
  }
}

module attributes {stable_mosaic.version = 11 : i64} {
  func.func @_conv_mm_kernel(%arg0: i32, %arg1: memref<32x1152xbf16, #tpu.memory_space<vmem>>, %arg2: memref<1152x256xbf16, #tpu.memory_space<vmem>>, %arg3: memref<1x256xf32, #tpu.memory_space<vmem>>, %arg4: memref<32x256xbf16, #tpu.memory_space<vmem>>) attributes {dimension_semantics = [#tpu.dimension_semantics<parallel>], iteration_bounds = array<i64: 1>, scalar_prefetch = 0 : i64, scratch_operands = 0 : i64, tpu.core_type = #tpu.core_type<tc>, window_params = [{transform_indices = @transform_0, window_bounds = array<i64: 32, 1152>}, {pipeline_mode = #tpu.pipeline_mode<synchronous>, transform_indices = @transform_1, window_bounds = array<i64: 1152, 256>}, {pipeline_mode = #tpu.pipeline_mode<synchronous>, transform_indices = @transform_2, window_bounds = array<i64: 1, 256>}, {transform_indices = @transform_3, window_bounds = array<i64: 32, 256>}]} {
    %c0 = arith.constant 0 : index
    %c0_0 = arith.constant 0 : index
    %0 = vector.load %arg1[%c0, %c0_0] : memref<32x1152xbf16, #tpu.memory_space<vmem>>, vector<32x1152xbf16>
    %c0_1 = arith.constant 0 : index
    %c0_2 = arith.constant 0 : index
    %1 = vector.load %arg2[%c0_1, %c0_2] : memref<1152x256xbf16, #tpu.memory_space<vmem>>, vector<1152x256xbf16>
    %cst = arith.constant dense<0.000000e+00> : vector<32x256xf32>
    %2 = tpu.matmul %0, %1, %cst {dimension_numbers = #tpu.dot_dimension_numbers<[1], [0], [0], [1], [0, 0, 1, 1], [], []>} : vector<32x1152xbf16>, vector<1152x256xbf16>, vector<32x256xf32> -> vector<32x256xf32>
    %c0_3 = arith.constant 0 : index
    %c0_4 = arith.constant 0 : index
    %3 = vector.load %arg3[%c0_3, %c0_4] : memref<1x256xf32, #tpu.memory_space<vmem>>, vector<1x256xf32>
    %4 = vector.broadcast %3 : vector<1x256xf32> to vector<32x256xf32>
    %5 = arith.addf %2, %4 : vector<32x256xf32>
    %cst_5 = arith.constant 0.000000e+00 : f32
    %6 = vector.broadcast %cst_5 : f32 to vector<32x256xf32>
    %7 = arith.cmpf ogt, %5, %6 : vector<32x256xf32>
    %cst_6 = arith.constant 1.000000e-01 : f32
    %8 = vector.broadcast %cst_6 : f32 to vector<32x256xf32>
    %9 = arith.mulf %8, %5 : vector<32x256xf32>
    %10 = arith.select %7, %5, %9 : vector<32x256xi1>, vector<32x256xf32>
    %11 = arith.truncf %10 : vector<32x256xf32> to vector<32x256xbf16>
    %c0_7 = arith.constant 0 : index
    %c0_8 = arith.constant 0 : index
    %12 = vector.load %arg4[%c0_7, %c0_8] : memref<32x256xbf16, #tpu.memory_space<vmem>>, vector<32x256xbf16>
    tpu.vector_store %arg4[%c0_7, %c0_8], %11 {strides = array<i32>} : memref<32x256xbf16, #tpu.memory_space<vmem>>, vector<32x256xbf16>,
    return
  }
  func.func @transform_0(%arg0: i32) -> (i32, i32) {
    %c0_i32 = arith.constant 0 : i32
    %c0_i32_0 = arith.constant 0 : i32
    return %arg0, %c0_i32 : i32, i32
  }
  func.func @transform_1(%arg0: i32) -> (i32, i32) {
    %c0_i32 = arith.constant 0 : i32
    %c0_i32_0 = arith.constant 0 : i32
    %c0_i32_1 = arith.constant 0 : i32
    return %c0_i32, %c0_i32_0 : i32, i32
  }
  func.func @transform_2(%arg0: i32) -> (i32, i32) {
    %c0_i32 = arith.constant 0 : i32
    %c0_i32_0 = arith.constant 0 : i32
    %c0_i32_1 = arith.constant 0 : i32
    return %c0_i32, %c0_i32_0 : i32, i32
  }
  func.func @transform_3(%arg0: i32) -> (i32, i32) {
    %c0_i32 = arith.constant 0 : i32
    %c0_i32_0 = arith.constant 0 : i32
    return %arg0, %c0_i32 : i32, i32
  }
}

module attributes {stable_mosaic.version = 11 : i64} {
  func.func @_conv_mm_kernel(%arg0: i32, %arg1: memref<8x2304xbf16, #tpu.memory_space<vmem>>, %arg2: memref<2304x256xbf16, #tpu.memory_space<vmem>>, %arg3: memref<1x256xf32, #tpu.memory_space<vmem>>, %arg4: memref<8x256xbf16, #tpu.memory_space<vmem>>) attributes {dimension_semantics = [#tpu.dimension_semantics<parallel>], iteration_bounds = array<i64: 1>, scalar_prefetch = 0 : i64, scratch_operands = 0 : i64, tpu.core_type = #tpu.core_type<tc>, window_params = [{transform_indices = @transform_0, window_bounds = array<i64: 8, 2304>}, {pipeline_mode = #tpu.pipeline_mode<synchronous>, transform_indices = @transform_1, window_bounds = array<i64: 2304, 256>}, {pipeline_mode = #tpu.pipeline_mode<synchronous>, transform_indices = @transform_2, window_bounds = array<i64: 1, 256>}, {transform_indices = @transform_3, window_bounds = array<i64: 8, 256>}]} {
    %c0 = arith.constant 0 : index
    %c0_0 = arith.constant 0 : index
    %0 = vector.load %arg1[%c0, %c0_0] : memref<8x2304xbf16, #tpu.memory_space<vmem>>, vector<8x2304xbf16>
    %c0_1 = arith.constant 0 : index
    %c0_2 = arith.constant 0 : index
    %1 = vector.load %arg2[%c0_1, %c0_2] : memref<2304x256xbf16, #tpu.memory_space<vmem>>, vector<2304x256xbf16>
    %cst = arith.constant dense<0.000000e+00> : vector<8x256xf32>
    %2 = tpu.matmul %0, %1, %cst {dimension_numbers = #tpu.dot_dimension_numbers<[1], [0], [0], [1], [0, 0, 1, 1], [], []>} : vector<8x2304xbf16>, vector<2304x256xbf16>, vector<8x256xf32> -> vector<8x256xf32>
    %c0_3 = arith.constant 0 : index
    %c0_4 = arith.constant 0 : index
    %3 = vector.load %arg3[%c0_3, %c0_4] : memref<1x256xf32, #tpu.memory_space<vmem>>, vector<1x256xf32>
    %4 = vector.broadcast %3 : vector<1x256xf32> to vector<8x256xf32>
    %5 = arith.addf %2, %4 : vector<8x256xf32>
    %cst_5 = arith.constant 0.000000e+00 : f32
    %6 = vector.broadcast %cst_5 : f32 to vector<8x256xf32>
    %7 = arith.cmpf ogt, %5, %6 : vector<8x256xf32>
    %cst_6 = arith.constant 1.000000e-01 : f32
    %8 = vector.broadcast %cst_6 : f32 to vector<8x256xf32>
    %9 = arith.mulf %8, %5 : vector<8x256xf32>
    %10 = arith.select %7, %5, %9 : vector<8x256xi1>, vector<8x256xf32>
    %11 = arith.truncf %10 : vector<8x256xf32> to vector<8x256xbf16>
    %c0_7 = arith.constant 0 : index
    %c0_8 = arith.constant 0 : index
    %12 = vector.load %arg4[%c0_7, %c0_8] : memref<8x256xbf16, #tpu.memory_space<vmem>>, vector<8x256xbf16>
    tpu.vector_store %arg4[%c0_7, %c0_8], %11 {strides = array<i32>} : memref<8x256xbf16, #tpu.memory_space<vmem>>, vector<8x256xbf16>,
    return
  }
  func.func @transform_0(%arg0: i32) -> (i32, i32) {
    %c0_i32 = arith.constant 0 : i32
    %c0_i32_0 = arith.constant 0 : i32
    return %arg0, %c0_i32 : i32, i32
  }
  func.func @transform_1(%arg0: i32) -> (i32, i32) {
    %c0_i32 = arith.constant 0 : i32
    %c0_i32_0 = arith.constant 0 : i32
    %c0_i32_1 = arith.constant 0 : i32
    return %c0_i32, %c0_i32_0 : i32, i32
  }
  func.func @transform_2(%arg0: i32) -> (i32, i32) {
    %c0_i32 = arith.constant 0 : i32
    %c0_i32_0 = arith.constant 0 : i32
    %c0_i32_1 = arith.constant 0 : i32
    return %c0_i32, %c0_i32_0 : i32, i32
  }
  func.func @transform_3(%arg0: i32) -> (i32, i32) {
    %c0_i32 = arith.constant 0 : i32
    %c0_i32_0 = arith.constant 0 : i32
    return %arg0, %c0_i32 : i32, i32
  }
}

module attributes {stable_mosaic.version = 11 : i64} {
  func.func @_fcn_kernel(%arg0: memref<2x256xf32, #tpu.memory_space<vmem>>, %arg1: memref<256x1024xf32, #tpu.memory_space<vmem>>, %arg2: memref<1x1024xf32, #tpu.memory_space<vmem>>, %arg3: memref<1024x1xf32, #tpu.memory_space<vmem>>, %arg4: memref<1x1xf32, #tpu.memory_space<vmem>>, %arg5: memref<2x1xf32, #tpu.memory_space<vmem>>) attributes {dimension_semantics = [], scalar_prefetch = 0 : i64, scratch_operands = 0 : i64, tpu.core_type = #tpu.core_type<tc>} {
    %c0 = arith.constant 0 : index
    %c0_0 = arith.constant 0 : index
    %0 = vector.load %arg0[%c0, %c0_0] : memref<2x256xf32, #tpu.memory_space<vmem>>, vector<2x256xf32>
    %c0_1 = arith.constant 0 : index
    %c0_2 = arith.constant 0 : index
    %1 = vector.load %arg1[%c0_1, %c0_2] : memref<256x1024xf32, #tpu.memory_space<vmem>>, vector<256x1024xf32>
    %cst = arith.constant dense<0.000000e+00> : vector<2x1024xf32>
    %2 = tpu.matmul %0, %1, %cst {dimension_numbers = #tpu.dot_dimension_numbers<[1], [0], [0], [1], [0, 0, 1, 1], [], []>} : vector<2x256xf32>, vector<256x1024xf32>, vector<2x1024xf32> -> vector<2x1024xf32>
    %c0_3 = arith.constant 0 : index
    %c0_4 = arith.constant 0 : index
    %3 = vector.load %arg2[%c0_3, %c0_4] : memref<1x1024xf32, #tpu.memory_space<vmem>>, vector<1x1024xf32>
    %4 = vector.broadcast %3 : vector<1x1024xf32> to vector<2x1024xf32>
    %5 = arith.addf %2, %4 : vector<2x1024xf32>
    %cst_5 = arith.constant 0.000000e+00 : f32
    %6 = vector.broadcast %cst_5 : f32 to vector<2x1024xf32>
    %7 = arith.cmpf ogt, %5, %6 : vector<2x1024xf32>
    %cst_6 = arith.constant 1.000000e-01 : f32
    %8 = vector.broadcast %cst_6 : f32 to vector<2x1024xf32>
    %9 = arith.mulf %8, %5 : vector<2x1024xf32>
    %10 = arith.select %7, %5, %9 : vector<2x1024xi1>, vector<2x1024xf32>
    %c0_7 = arith.constant 0 : index
    %c0_8 = arith.constant 0 : index
    %11 = vector.load %arg3[%c0_7, %c0_8] : memref<1024x1xf32, #tpu.memory_space<vmem>>, vector<1024x1xf32>
    %cst_9 = arith.constant dense<0.000000e+00> : vector<2x1xf32>
    %12 = tpu.matmul %10, %11, %cst_9 {dimension_numbers = #tpu.dot_dimension_numbers<[1], [0], [0], [1], [0, 0, 1, 1], [], []>} : vector<2x1024xf32>, vector<1024x1xf32>, vector<2x1xf32> -> vector<2x1xf32>
    %c0_10 = arith.constant 0 : index
    %c0_11 = arith.constant 0 : index
    %13 = vector.load %arg4[%c0_10, %c0_11] : memref<1x1xf32, #tpu.memory_space<vmem>>, vector<1x1xf32>
    %14 = vector.broadcast %13 : vector<1x1xf32> to vector<2x1xf32>
    %15 = arith.addf %12, %14 : vector<2x1xf32>
    %c0_12 = arith.constant 0 : index
    %c0_13 = arith.constant 0 : index
    %16 = vector.load %arg5[%c0_12, %c0_13] : memref<2x1xf32, #tpu.memory_space<vmem>>, vector<2x1xf32>
    tpu.vector_store %arg5[%c0_12, %c0_13], %15 {strides = array<i32>} : memref<2x1xf32, #tpu.memory_space<vmem>>, vector<2x1xf32>,
    return
  }
}

</mosaic_0001>

<llo_original>
// kernel: discriminator_forward.7
$region0: #{discriminator_forward.7}
  #allocation0 [shape = 'u32[]', space=smem, size = 0x4, offset = 0x4, fixed_abs, tag = 'smem constant byte address 0x4 - core index']
  #allocation1 [shape = 'u32[144,128]{1,0:T(1,128)}', space=vmem, size = 0x12000, scoped, tag = 'internal scratch']
  %s0 = inlined_call_operand.vmem [shape: bf16[2304,9], index: 0, kind: input, shape index: {}]
  %s1 = inlined_call_operand.vmem [shape: bf16[9,64], index: 1, kind: input, shape index: {}]
  %s2 = inlined_call_operand.vmem [shape: f32[1,64], index: 2, kind: input, shape index: {}]
  %s3 = inlined_call_operand.vmem [shape: bf16[2304,64], index: 3, kind: output, shape index: {}]
  %s4 = sld [smem:[#allocation0]]
  $region45: #{discriminator_forward.7} parent=0
    _
  %s6 = ssub.s32 1, %s4
  %s7 = scalar_select 0, %s6, %s4
  loop: start=0, step=1, limit=11
  $region2: #{discriminator_forward.7} parent=0 // loop_pre_header
    _
  $region3: #{discriminator_forward.7} parent=0 // loop_header
    %s9 = sphi 0, %s13
    %p10 = scmp.ge.s32.totalorder %s9, 11
    %s19 = sphi 0, %s21
    %s22 = sphi 0, %s19
    %s23 = sphi 0, %s22
    %s39 = sphi 0, %s23
    %s43 = sphi 0, %s43
    %s45 = sphi 0, %s43
    %s46 = sphi 0, %s45
    %s60 = sphi 0, %s46
    %s64 = sphi 0, %s64
    %s66 = sphi 0, %s64
    %s67 = sphi 0, %s66
    %s81 = sphi 0, %s67
    %s87 = sphi 0, %s89
    %s90 = sphi 0, %s87
    %s91 = sphi 0, %s90
    %s107 = sphi 0, %s91
  $region4: #{discriminator_forward.7} parent=0 // loop_header_branch
    %12 = sbr.rel (%p10) target = $region8
  $region5: #{discriminator_forward.7} parent=0 // loop_body
    %s14 = ssub.s32 %s9, 1
    %s15 = ssub.s32 %s9, 2
    %s16 = sadd.s32 %s9, 1
    %s17 = ssub.s32 %s9, %s16
    %p18 = scmp.eq.s32.totalorder %s17, 0
    %s20 = sadd.s32 %s19, 1
    %s21 = scalar_select %p18, %s19, %s20
    %p24 = pneg %p18
    %p25 = scmp.eq.s32.totalorder %s9, 8
    %p26 = por %p24, %p25
    %p27 = scmp.ne.s32.totalorder %s19, %s22
    %p28 = scmp.eq.s32.totalorder %s9, 0
    %p29 = por %p27, %p28
    %p30 = scmp.ne.s32.totalorder %s19, %s22
    %p31 = scmp.eq.s32.totalorder %s14, 8
    %p32 = por %p30, %p31
    %p33 = scmp.ne.s32.totalorder %s22, %s23
    %p34 = scmp.eq.s32.totalorder %s14, 0
    %p35 = por %p33, %p34
    %p36 = scmp.ne.s32.totalorder %s22, %s23
    %p37 = scmp.eq.s32.totalorder %s15, 8
    %p38 = por %p36, %p37
    %p40 = scmp.ne.s32.totalorder %s23, %s39
    %p41 = scmp.eq.s32.totalorder %s15, 0
    %p42 = por %p40, %p41
    %s44 = sadd.s32 %s43, 1
    %p47 = scmp.eq.s32.totalorder %s9, 8
    %p48 = scmp.ne.s32.totalorder %s43, %s45
    %p49 = scmp.eq.s32.totalorder %s9, 0
    %p50 = por %p48, %p49
    %p51 = scmp.ne.s32.totalorder %s43, %s45
    %p52 = scmp.eq.s32.totalorder %s14, 8
    %p53 = por %p51, %p52
    %p54 = scmp.ne.s32.totalorder %s45, %s46
    %p55 = scmp.eq.s32.totalorder %s14, 0
    %p56 = por %p54, %p55
    %p57 = scmp.ne.s32.totalorder %s45, %s46
    %p58 = scmp.eq.s32.totalorder %s15, 8
    %p59 = por %p57, %p58
    %p61 = scmp.ne.s32.totalorder %s46, %s60
    %p62 = scmp.eq.s32.totalorder %s15, 0
    %p63 = por %p61, %p62
    %s65 = sadd.s32 %s64, 1
    %p68 = scmp.eq.s32.totalorder %s9, 8
    %p69 = scmp.ne.s32.totalorder %s64, %s66
    %p70 = scmp.eq.s32.totalorder %s9, 0
    %p71 = por %p69, %p70
    %p72 = scmp.ne.s32.totalorder %s64, %s66
    %p73 = scmp.eq.s32.totalorder %s14, 8
    %p74 = por %p72, %p73
    %p75 = scmp.ne.s32.totalorder %s66, %s67
    %p76 = scmp.eq.s32.totalorder %s14, 0
    %p77 = por %p75, %p76
    %p78 = scmp.ne.s32.totalorder %s66, %s67
    %p79 = scmp.eq.s32.totalorder %s15, 8
    %p80 = por %p78, %p79
    %p82 = scmp.ne.s32.totalorder %s67, %s81
    %p83 = scmp.eq.s32.totalorder %s15, 0
    %p84 = por %p82, %p83
    %s85 = ssub.s32 %s9, %s16
    %p86 = scmp.eq.s32.totalorder %s85, 0
    %s88 = sadd.s32 %s87, 1
    %s89 = scalar_select %p86, %s87, %s88
    %p92 = pneg %p86
    %p93 = scmp.eq.s32.totalorder %s9, 8
    %p94 = por %p92, %p93
    %p95 = scmp.ne.s32.totalorder %s87, %s90
    %p96 = scmp.eq.s32.totalorder %s9, 0
    %p97 = por %p95, %p96
    %p98 = scmp.ne.s32.totalorder %s87, %s90
    %p99 = scmp.eq.s32.totalorder %s14, 8
    %p100 = por %p98, %p99
    %p101 = scmp.ne.s32.totalorder %s90, %s91
    %p102 = scmp.eq.s32.totalorder %s14, 0
    %p103 = por %p101, %p102
    %p104 = scmp.ne.s32.totalorder %s90, %s91
    %p105 = scmp.eq.s32.totalorder %s15, 8
    %p106 = por %p104, %p105
    %p108 = scmp.ne.s32.totalorder %s91, %s107
    %p109 = scmp.eq.s32.totalorder %s15, 0
    %p110 = por %p108, %p109
    %p111 = scmp.le.s32.totalorder 1, %s9
    %p112 = scmp.lt.s32.totalorder %s9, 10
    %p113 = pnand %p111, %p112
    %p114 = pneg %p113
    // Predicated region
    $region9: #{discriminator_forward.7} parent=5 // pred_check
      _
    $region10: #{discriminator_forward.7} parent=5 // pred_check_branch
      %116 = sbr.rel (%p113) target = $region12
    $region11: #{discriminator_forward.7} parent=5 // pred_region
      %s117 = ssub.s32 %s9, 1
      // Predicated region
      $region13: #{discriminator_forward.7} parent=11 // pred_check
        %p118 = pneg %p56
      $region14: #{discriminator_forward.7} parent=11 // pred_check_branch
        %120 = sbr.rel (%p118) target = $region16
      $region15: #{discriminator_forward.7} parent=11 // pred_region
        _
      $region16: #{discriminator_forward.7} parent=11 // pred_fallthru
        _
      // Predicated region
      $region17: #{discriminator_forward.7} parent=11 // pred_check
        %p121 = pneg %p77
      $region18: #{discriminator_forward.7} parent=11 // pred_check_branch
        %123 = sbr.rel (%p121) target = $region20
      $region19: #{discriminator_forward.7} parent=11 // pred_region
        _
      $region20: #{discriminator_forward.7} parent=11 // pred_fallthru
        _
    $region12: #{discriminator_forward.7} parent=5 // pred_fallthru
      _
    %p124 = scmp.lt.s32.totalorder %s9, 9
    // Predicated region
    $region21: #{discriminator_forward.7} parent=5 // pred_check
      %p125 = pneg %p124
    $region22: #{discriminator_forward.7} parent=5 // pred_check_branch
      %127 = sbr.rel (%p125) target = $region24
    $region23: #{discriminator_forward.7} parent=5 // pred_region
      // Predicated region
      $region25: #{discriminator_forward.7} parent=23 // pred_check
        %p128 = pneg %p29
      $region26: #{discriminator_forward.7} parent=23 // pred_check_branch
        %130 = sbr.rel (%p128) target = $region28
      $region27: #{discriminator_forward.7} parent=23 // pred_region
        %s131 = smul.u32 32, %s9
        %p132 = scmp.lt.s32.totalorder %s131, 287
        %s133 = scalar_select %p132, %s131, 287
        %s134 = smul.addr %s133, 4
        %s135 = scalar_lea.vmem %s0, %s134
        %s136 = smul.u32 32, %s9
      $region28: #{discriminator_forward.7} parent=23 // pred_fallthru
        _
    $region24: #{discriminator_forward.7} parent=5 // pred_fallthru
      _
    %p137 = scmp.le.s32.totalorder 1, %s9
    %p138 = scmp.lt.s32.totalorder %s9, 10
    %p139 = pnand %p137, %p138
    %p140 = pneg %p139
    // Predicated region
    $region29: #{discriminator_forward.7} parent=5 // pred_check
      _
    $region30: #{discriminator_forward.7} parent=5 // pred_check_branch
      %142 = sbr.rel (%p139) target = $region32
    $region31: #{discriminator_forward.7} parent=5 // pred_region
      %s143 = ssub.s32 %s9, 1
      %s144 = smul.u32 32, %s14
      %p145 = scmp.lt.s32.totalorder %s144, 287
      %s146 = scalar_select %p145, %s144, 287
      %s147 = smul.addr %s146, 4
      %s148 = scalar_lea.vmem %s0, %s147
      %p149 = pneg %p35
      %p150 = pneg %p32
      %p151 = pneg %p56
      %p152 = pneg %p53
      %p153 = pneg %p77
      %p154 = pneg %p74
      %p155 = pneg %p103
      %p156 = pneg %p100
      %s157 = smul.u32 32, %s14
      %p158 = scmp.lt.s32.totalorder %s157, 287
      %s159 = scalar_select %p158, %s157, 287
      %s160 = smul.addr %s159, 4
      %s161 = scalar_lea.vmem %s3, %s160
      %s162 = smul.u32 32, %s14
      %p163 = scmp.lt.s32.totalorder %s162, 287
      %s164 = scalar_select %p163, %s162, 287
      %s165 = smul.addr %s164, 4
      %s166 = scalar_lea.vmem %s0, %s165
      %s167 = smul.u32 32, %s14
      %s168 = smul.u32 32, %s14
      %p169 = scmp.lt.s32.totalorder %s168, 287
      %s170 = scalar_select %p169, %s168, 287
      %s171 = smul.addr %s170, 4
      %s172 = scalar_lea.vmem %s3, %s171
      %s173 = smul.u32 32, %s14
      %v175 = vld [vmem:[%s166] sm:$0xf]
      %v176 = vld [vmem:[%s166 + $0x4] sm:$0xf]
      %v177 = vld [vmem:[%s166 + $0x8] sm:$0xf]
      %v178 = vld [vmem:[%s166 + $0xc] sm:$0xf]
      %v179 = vld [vmem:[%s166 + $0x10] sm:$0xf]
      %v180 = vld [vmem:[%s166 + $0x14] sm:$0xf]
      %v181 = vld [vmem:[%s166 + $0x18] sm:$0xf]
      %v182 = vld [vmem:[%s166 + $0x1c] sm:$0xf]
      %v183 = vld [vmem:[%s166 + $0x20] sm:$0xf]
      %v184 = vld [vmem:[%s166 + $0x24] sm:$0xf]
      %v185 = vld [vmem:[%s166 + $0x28] sm:$0xf]
      %v186 = vld [vmem:[%s166 + $0x2c] sm:$0xf]
      %v187 = vld [vmem:[%s166 + $0x30] sm:$0xf]
      %v188 = vld [vmem:[%s166 + $0x34] sm:$0xf]
      %v189 = vld [vmem:[%s166 + $0x38] sm:$0xf]
      %v190 = vld [vmem:[%s166 + $0x3c] sm:$0xf]
      %v191 = vld [vmem:[%s166 + $0x40] sm:$0xf]
      %v192 = vld [vmem:[%s166 + $0x44] sm:$0xf]
      %v193 = vld [vmem:[%s166 + $0x48] sm:$0xf]
      %v194 = vld [vmem:[%s166 + $0x4c] sm:$0xf]
      %v195 = vld [vmem:[%s166 + $0x50] sm:$0xf]
      %v196 = vld [vmem:[%s166 + $0x54] sm:$0xf]
      %v197 = vld [vmem:[%s166 + $0x58] sm:$0xf]
      %v198 = vld [vmem:[%s166 + $0x5c] sm:$0xf]
      %v199 = vld [vmem:[%s166 + $0x60] sm:$0xf]
      %v200 = vld [vmem:[%s166 + $0x64] sm:$0xf]
      %v201 = vld [vmem:[%s166 + $0x68] sm:$0xf]
      %v202 = vld [vmem:[%s166 + $0x6c] sm:$0xf]
      %v203 = vld [vmem:[%s166 + $0x70] sm:$0xf]
      %v204 = vld [vmem:[%s166 + $0x74] sm:$0xf]
      %v205 = vld [vmem:[%s166 + $0x78] sm:$0xf]
      %v206 = vld [vmem:[%s166 + $0x7c] sm:$0xf]
      %v207 = vld [vmem:[%s1] sm:$0xf]
      %v208 = vld [vmem:[%s1 + $0x4] sm:$0x1]
      %v209 = vld [vmem:[%s2] sm:$0x1]
      %v211 = vlaneseq
      %v212 = vshrl.u32 %v211, 7
      %v213 = vsub.s32 0, %v212
      %v214 = vrot.slane %v209, %v213
      %v248 = vunpack.c.l.b16 %v175
      %v249 = vunpack.c.l.b16 %v176
      %v250 = vunpack.c.l.b16 %v177
      %v251 = vunpack.c.l.b16 %v178
      %v252 = vunpack.c.l.b16 %v179
      %v253 = vunpack.c.l.b16 %v180
      %v254 = vunpack.c.l.b16 %v181
      %v255 = vunpack.c.l.b16 %v182
      %v256 = vunpack.c.l.b16 %v183
      %v257 = vunpack.c.l.b16 %v184
      %v258 = vunpack.c.l.b16 %v185
      %v259 = vunpack.c.l.b16 %v186
      %v260 = vunpack.c.l.b16 %v187
      %v261 = vunpack.c.l.b16 %v188
      %v262 = vunpack.c.l.b16 %v189
      %v263 = vunpack.c.l.b16 %v190
      %v264 = vunpack.c.l.b16 %v191
      %v265 = vunpack.c.l.b16 %v192
      %v266 = vunpack.c.l.b16 %v193
      %v267 = vunpack.c.l.b16 %v194
      %v268 = vunpack.c.l.b16 %v195
      %v269 = vunpack.c.l.b16 %v196
      %v270 = vunpack.c.l.b16 %v197
      %v271 = vunpack.c.l.b16 %v198
      %v272 = vunpack.c.l.b16 %v199
      %v273 = vunpack.c.l.b16 %v200
      %v274 = vunpack.c.l.b16 %v201
      %v275 = vunpack.c.l.b16 %v202
      %v276 = vunpack.c.l.b16 %v203
      %v277 = vunpack.c.l.b16 %v204
      %v278 = vunpack.c.l.b16 %v205
      %v279 = vunpack.c.l.b16 %v206
      %v280 = vpack.c.b16 %v249, %v248
      %v281 = vpack.c.b16 %v251, %v250
      %v282 = vpack.c.b16 %v253, %v252
      %v283 = vpack.c.b16 %v255, %v254
      %v284 = vpack.c.b16 %v257, %v256
      %v285 = vpack.c.b16 %v259, %v258
      %v286 = vpack.c.b16 %v261, %v260
      %v287 = vpack.c.b16 %v263, %v262
      %v288 = vpack.c.b16 %v265, %v264
      %v289 = vpack.c.b16 %v267, %v266
      %v290 = vpack.c.b16 %v269, %v268
      %v291 = vpack.c.b16 %v271, %v270
      %v292 = vpack.c.b16 %v273, %v272
      %v293 = vpack.c.b16 %v275, %v274
      %v294 = vpack.c.b16 %v277, %v276
      %v295 = vpack.c.b16 %v279, %v278
      %v298 = vunpack.c.l.b16 %v207
      %v299 = vunpack.c.l.b16 %v208
      %v300 = vpack.c.b16 %v299, %v298
      %vm301 = vcmask 72704
      %v303 = vsel %vm301, %v280, 0
      %v306 = vsel %vm301, %v281, 0
      %v309 = vsel %vm301, %v282, 0
      %v312 = vsel %vm301, %v283, 0
      %v315 = vsel %vm301, %v284, 0
      %v318 = vsel %vm301, %v285, 0
      %v321 = vsel %vm301, %v286, 0
      %v324 = vsel %vm301, %v287, 0
      %v327 = vsel %vm301, %v288, 0
      %v330 = vsel %vm301, %v289, 0
      %v333 = vsel %vm301, %v290, 0
      %v336 = vsel %vm301, %v291, 0
      %v339 = vsel %vm301, %v292, 0
      %v342 = vsel %vm301, %v293, 0
      %v345 = vsel %vm301, %v294, 0
      %v348 = vsel %vm301, %v295, 0
      %vm350 = vcmask 1043456
      %vm351 = vcmask 1044480
      %v352 = vsel %vm350, 4294967295, 65535
      %v353 = vsel %vm351, %v352, 0
      %v355 = vand.u32 %v300, %v353
      %357 = vmatprep.subr.bf16.mxu0 0
      %358 = vmatpush1.bf16.msra.mxu0 0
      %359 = vmatprep.subr.bf16.mxu0 0
      %360 = vmatpush1.bf16.msra.mxu0 0
      %361 = vmatprep.subr.bf16.mxu0 0
      %362 = vmatpush1.bf16.msra.mxu0 0
      %363 = vmatprep.subr.bf16.mxu0 0
      %364 = vmatpush1.bf16.msra.mxu0 0
      %365 = vmatprep.subr.bf16.mxu0 0
      %366 = vmatpush1.bf16.msra.mxu0 0
      %367 = vmatprep.subr.bf16.mxu0 0
      %368 = vmatpush1.bf16.msra.mxu0 0
      %369 = vmatprep.subr.bf16.mxu0 0
      %370 = vmatpush1.bf16.msra.mxu0 0
      %371 = vmatprep.subr.bf16.mxu0 0
      %372 = vmatpush1.bf16.msra.mxu0 %v355
      %373 = vmatprep.subr.bf16.mxu0 0
      %374 = vmatpush2.bf16.msra.mxu0 0
      %375 = vmatprep.subr.bf16.mxu0 0
      %376 = vmatpush2.bf16.msra.mxu0 0
      %377 = vmatprep.subr.bf16.mxu0 0
      %378 = vmatpush2.bf16.msra.mxu0 0
      %379 = vmatprep.subr.bf16.mxu0 0
      %380 = vmatpush2.bf16.msra.mxu0 0
      %381 = vmatprep.subr.bf16.mxu0 0
      %382 = vmatpush2.bf16.msra.mxu0 0
      %383 = vmatprep.subr.bf16.mxu0 0
      %384 = vmatpush2.bf16.msra.mxu0 0
      %385 = vmatprep.subr.bf16.mxu0 0
      %386 = vmatpush2.bf16.msra.mxu0 0
      %387 = vmatprep.subr.bf16.mxu0 0
      %388 = vmatpush2.bf16.msra.mxu0 0
      %389 = vmatprep.mubr.bf16.mxu0 0
      %390 = vmatmul.mubr.bf16.gmra.mxu0 %v303
      %v391 = vpop.f32.mrf.mxu0
      %v392 = vadd.f32 %v214, %v391
      %v393 = vpop.f32.mrf.mxu0
      %v394 = vpop.f32.mrf.mxu0
      %v395 = vadd.f32 %v214, %v394
      %v396 = vpop.f32.mrf.mxu0
      %397 = vmatprep.mubr.bf16.mxu0 0
      %398 = vmatmul.mubr.bf16.gmra.mxu0 %v306
      %v399 = vpop.f32.mrf.mxu0
      %v400 = vadd.f32 %v214, %v399
      %v401 = vpop.f32.mrf.mxu0
      %v402 = vpop.f32.mrf.mxu0
      %v403 = vadd.f32 %v214, %v402
      %v404 = vpop.f32.mrf.mxu0
      %405 = vmatprep.mubr.bf16.mxu0 0
      %406 = vmatmul.mubr.bf16.gmra.mxu0 %v309
      %v407 = vpop.f32.mrf.mxu0
      %v408 = vadd.f32 %v214, %v407
      %v409 = vpop.f32.mrf.mxu0
      %v410 = vpop.f32.mrf.mxu0
      %v411 = vadd.f32 %v214, %v410
      %v412 = vpop.f32.mrf.mxu0
      %413 = vmatprep.mubr.bf16.mxu0 0
      %414 = vmatmul.mubr.bf16.gmra.mxu0 %v312
      %v415 = vpop.f32.mrf.mxu0
      %v416 = vadd.f32 %v214, %v415
      %v417 = vpop.f32.mrf.mxu0
      %v418 = vpop.f32.mrf.mxu0
      %v419 = vadd.f32 %v214, %v418
      %v420 = vpop.f32.mrf.mxu0
      %421 = vmatprep.mubr.bf16.mxu0 0
      %422 = vmatmul.mubr.bf16.gmra.mxu0 %v315
      %v423 = vpop.f32.mrf.mxu0
      %v424 = vadd.f32 %v214, %v423
      %v425 = vpop.f32.mrf.mxu0
      %v426 = vpop.f32.mrf.mxu0
      %v427 = vadd.f32 %v214, %v426
      %v428 = vpop.f32.mrf.mxu0
      %429 = vmatprep.mubr.bf16.mxu0 0
      %430 = vmatmul.mubr.bf16.gmra.mxu0 %v318
      %v431 = vpop.f32.mrf.mxu0
      %v432 = vadd.f32 %v214, %v431
      %v433 = vpop.f32.mrf.mxu0
      %v434 = vpop.f32.mrf.mxu0
      %v435 = vadd.f32 %v214, %v434
      %v436 = vpop.f32.mrf.mxu0
      %437 = vmatprep.mubr.bf16.mxu0 0
      %438 = vmatmul.mubr.bf16.gmra.mxu0 %v321
      %v439 = vpop.f32.mrf.mxu0
      %v440 = vadd.f32 %v214, %v439
      %v441 = vpop.f32.mrf.mxu0
      %v442 = vpop.f32.mrf.mxu0
      %v443 = vadd.f32 %v214, %v442
      %v444 = vpop.f32.mrf.mxu0
      %445 = vmatprep.mubr.bf16.mxu0 0
      %446 = vmatmul.mubr.bf16.gmra.mxu0 %v324
      %v447 = vpop.f32.mrf.mxu0
      %v448 = vadd.f32 %v214, %v447
      %v449 = vpop.f32.mrf.mxu0
      %v450 = vpop.f32.mrf.mxu0
      %v451 = vadd.f32 %v214, %v450
      %v452 = vpop.f32.mrf.mxu0
      %453 = vmatprep.mubr.bf16.mxu0 0
      %454 = vmatmul.mubr.bf16.gmra.mxu0 %v327
      %v455 = vpop.f32.mrf.mxu0
      %v456 = vadd.f32 %v214, %v455
      %v457 = vpop.f32.mrf.mxu0
      %v458 = vpop.f32.mrf.mxu0
      %v459 = vadd.f32 %v214, %v458
      %v460 = vpop.f32.mrf.mxu0
      %461 = vmatprep.mubr.bf16.mxu0 0
      %462 = vmatmul.mubr.bf16.gmra.mxu0 %v330
      %v463 = vpop.f32.mrf.mxu0
      %v464 = vadd.f32 %v214, %v463
      %v465 = vpop.f32.mrf.mxu0
      %v466 = vpop.f32.mrf.mxu0
      %v467 = vadd.f32 %v214, %v466
      %v468 = vpop.f32.mrf.mxu0
      %469 = vmatprep.mubr.bf16.mxu0 0
      %470 = vmatmul.mubr.bf16.gmra.mxu0 %v333
      %v471 = vpop.f32.mrf.mxu0
      %v472 = vadd.f32 %v214, %v471
      %v473 = vpop.f32.mrf.mxu0
      %v474 = vpop.f32.mrf.mxu0
      %v475 = vadd.f32 %v214, %v474
      %v476 = vpop.f32.mrf.mxu0
      %477 = vmatprep.mubr.bf16.mxu0 0
      %478 = vmatmul.mubr.bf16.gmra.mxu0 %v336
      %v479 = vpop.f32.mrf.mxu0
      %v480 = vadd.f32 %v214, %v479
      %v481 = vpop.f32.mrf.mxu0
      %v482 = vpop.f32.mrf.mxu0
      %v483 = vadd.f32 %v214, %v482
      %v484 = vpop.f32.mrf.mxu0
      %485 = vmatprep.mubr.bf16.mxu0 0
      %486 = vmatmul.mubr.bf16.gmra.mxu0 %v339
      %v487 = vpop.f32.mrf.mxu0
      %v488 = vadd.f32 %v214, %v487
      %v489 = vpop.f32.mrf.mxu0
      %v490 = vpop.f32.mrf.mxu0
      %v491 = vadd.f32 %v214, %v490
      %v492 = vpop.f32.mrf.mxu0
      %493 = vmatprep.mubr.bf16.mxu0 0
      %494 = vmatmul.mubr.bf16.gmra.mxu0 %v342
      %v495 = vpop.f32.mrf.mxu0
      %v496 = vadd.f32 %v214, %v495
      %v497 = vpop.f32.mrf.mxu0
      %v498 = vpop.f32.mrf.mxu0
      %v499 = vadd.f32 %v214, %v498
      %v500 = vpop.f32.mrf.mxu0
      %501 = vmatprep.mubr.bf16.mxu0 0
      %502 = vmatmul.mubr.bf16.gmra.mxu0 %v345
      %v503 = vpop.f32.mrf.mxu0
      %v504 = vadd.f32 %v214, %v503
      %v505 = vpop.f32.mrf.mxu0
      %v506 = vpop.f32.mrf.mxu0
      %v507 = vadd.f32 %v214, %v506
      %v508 = vpop.f32.mrf.mxu0
      %509 = vmatprep.mubr.bf16.mxu0 0
      %510 = vmatmul.mubr.bf16.gmra.mxu0 %v348
      %v511 = vpop.f32.mrf.mxu0
      %v512 = vadd.f32 %v214, %v511
      %v513 = vpop.f32.mrf.mxu0
      %v514 = vpop.f32.mrf.mxu0
      %v515 = vadd.f32 %v214, %v514
      %v516 = vpop.f32.mrf.mxu0
      %517 = vdwg.mxu0
      %vm518 = vcmp.gt.f32.partialorder %v392, 0.0
      %vm519 = vcmp.gt.f32.partialorder %v395, 0.0
      %vm520 = vcmp.gt.f32.partialorder %v400, 0.0
      %vm521 = vcmp.gt.f32.partialorder %v403, 0.0
      %vm522 = vcmp.gt.f32.partialorder %v408, 0.0
      %vm523 = vcmp.gt.f32.partialorder %v411, 0.0
      %vm524 = vcmp.gt.f32.partialorder %v416, 0.0
      %vm525 = vcmp.gt.f32.partialorder %v419, 0.0
      %vm526 = vcmp.gt.f32.partialorder %v424, 0.0
      %vm527 = vcmp.gt.f32.partialorder %v427, 0.0
      %vm528 = vcmp.gt.f32.partialorder %v432, 0.0
      %vm529 = vcmp.gt.f32.partialorder %v435, 0.0
      %vm530 = vcmp.gt.f32.partialorder %v440, 0.0
      %vm531 = vcmp.gt.f32.partialorder %v443, 0.0
      %vm532 = vcmp.gt.f32.partialorder %v448, 0.0
      %vm533 = vcmp.gt.f32.partialorder %v451, 0.0
      %vm534 = vcmp.gt.f32.partialorder %v456, 0.0
      %vm535 = vcmp.gt.f32.partialorder %v459, 0.0
      %vm536 = vcmp.gt.f32.partialorder %v464, 0.0
      %vm537 = vcmp.gt.f32.partialorder %v467, 0.0
      %vm538 = vcmp.gt.f32.partialorder %v472, 0.0
      %vm539 = vcmp.gt.f32.partialorder %v475, 0.0
      %vm540 = vcmp.gt.f32.partialorder %v480, 0.0
      %vm541 = vcmp.gt.f32.partialorder %v483, 0.0
      %vm542 = vcmp.gt.f32.partialorder %v488, 0.0
      %vm543 = vcmp.gt.f32.partialorder %v491, 0.0
      %vm544 = vcmp.gt.f32.partialorder %v496, 0.0
      %vm545 = vcmp.gt.f32.partialorder %v499, 0.0
      %vm546 = vcmp.gt.f32.partialorder %v504, 0.0
      %vm547 = vcmp.gt.f32.partialorder %v507, 0.0
      %vm548 = vcmp.gt.f32.partialorder %v512, 0.0
      %vm549 = vcmp.gt.f32.partialorder %v515, 0.0
      %v550 = vmul.f32 %v392, 0.1
      %v551 = vmul.f32 %v395, 0.1
      %v552 = vmul.f32 %v400, 0.1
      %v553 = vmul.f32 %v403, 0.1
      %v554 = vmul.f32 %v408, 0.1
      %v555 = vmul.f32 %v411, 0.1
      %v556 = vmul.f32 %v416, 0.1
      %v557 = vmul.f32 %v419, 0.1
      %v558 = vmul.f32 %v424, 0.1
      %v559 = vmul.f32 %v427, 0.1
      %v560 = vmul.f32 %v432, 0.1
      %v561 = vmul.f32 %v435, 0.1
      %v562 = vmul.f32 %v440, 0.1
      %v563 = vmul.f32 %v443, 0.1
      %v564 = vmul.f32 %v448, 0.1
      %v565 = vmul.f32 %v451, 0.1
      %v566 = vmul.f32 %v456, 0.1
      %v567 = vmul.f32 %v459, 0.1
      %v568 = vmul.f32 %v464, 0.1
      %v569 = vmul.f32 %v467, 0.1
      %v570 = vmul.f32 %v472, 0.1
      %v571 = vmul.f32 %v475, 0.1
      %v572 = vmul.f32 %v480, 0.1
      %v573 = vmul.f32 %v483, 0.1
      %v574 = vmul.f32 %v488, 0.1
      %v575 = vmul.f32 %v491, 0.1
      %v576 = vmul.f32 %v496, 0.1
      %v577 = vmul.f32 %v499, 0.1
      %v578 = vmul.f32 %v504, 0.1
      %v579 = vmul.f32 %v507, 0.1
      %v580 = vmul.f32 %v512, 0.1
      %v581 = vmul.f32 %v515, 0.1
      %v582 = vsel %vm518, %v392, %v550
      %v583 = vsel %vm519, %v395, %v551
      %v584 = vsel %vm520, %v400, %v552
      %v585 = vsel %vm521, %v403, %v553
      %v586 = vsel %vm522, %v408, %v554
      %v587 = vsel %vm523, %v411, %v555
      %v588 = vsel %vm524, %v416, %v556
      %v589 = vsel %vm525, %v419, %v557
      %v590 = vsel %vm526, %v424, %v558
      %v591 = vsel %vm527, %v427, %v559
      %v592 = vsel %vm528, %v432, %v560
      %v593 = vsel %vm529, %v435, %v561
      %v594 = vsel %vm530, %v440, %v562
      %v595 = vsel %vm531, %v443, %v563
      %v596 = vsel %vm532, %v448, %v564
      %v597 = vsel %vm533, %v451, %v565
      %v598 = vsel %vm534, %v456, %v566
      %v599 = vsel %vm535, %v459, %v567
      %v600 = vsel %vm536, %v464, %v568
      %v601 = vsel %vm537, %v467, %v569
      %v602 = vsel %vm538, %v472, %v570
      %v603 = vsel %vm539, %v475, %v571
      %v604 = vsel %vm540, %v480, %v572
      %v605 = vsel %vm541, %v483, %v573
      %v606 = vsel %vm542, %v488, %v574
      %v607 = vsel %vm543, %v491, %v575
      %v608 = vsel %vm544, %v496, %v576
      %v609 = vsel %vm545, %v499, %v577
      %v610 = vsel %vm546, %v504, %v578
      %v611 = vsel %vm547, %v507, %v579
      %v612 = vsel %vm548, %v512, %v580
      %v613 = vsel %vm549, %v515, %v581
      %v614 = vpack.c.bf16 %v583, %v582
      %v615 = vpack.c.bf16 %v585, %v584
      %v616 = vpack.c.bf16 %v587, %v586
      %v617 = vpack.c.bf16 %v589, %v588
      %v618 = vpack.c.bf16 %v591, %v590
      %v619 = vpack.c.bf16 %v593, %v592
      %v620 = vpack.c.bf16 %v595, %v594
      %v621 = vpack.c.bf16 %v597, %v596
      %v622 = vpack.c.bf16 %v599, %v598
      %v623 = vpack.c.bf16 %v601, %v600
      %v624 = vpack.c.bf16 %v603, %v602
      %v625 = vpack.c.bf16 %v605, %v604
      %v626 = vpack.c.bf16 %v607, %v606
      %v627 = vpack.c.bf16 %v609, %v608
      %v628 = vpack.c.bf16 %v611, %v610
      %v629 = vpack.c.bf16 %v613, %v612
      %v646 = vunpack.c.l.b16 %v614
      %v647 = vunpack.c.h.b16 %v614
      %v648 = vunpack.c.l.b16 %v615
      %v649 = vunpack.c.h.b16 %v615
      %v650 = vunpack.c.l.b16 %v616
      %v651 = vunpack.c.h.b16 %v616
      %v652 = vunpack.c.l.b16 %v617
      %v653 = vunpack.c.h.b16 %v617
      %v654 = vunpack.c.l.b16 %v618
      %v655 = vunpack.c.h.b16 %v618
      %v656 = vunpack.c.l.b16 %v619
      %v657 = vunpack.c.h.b16 %v619
      %v658 = vunpack.c.l.b16 %v620
      %v659 = vunpack.c.h.b16 %v620
      %v660 = vunpack.c.l.b16 %v621
      %v661 = vunpack.c.h.b16 %v621
      %v662 = vunpack.c.l.b16 %v622
      %v663 = vunpack.c.h.b16 %v622
      %v664 = vunpack.c.l.b16 %v623
      %v665 = vunpack.c.h.b16 %v623
      %v666 = vunpack.c.l.b16 %v624
      %v667 = vunpack.c.h.b16 %v624
      %v668 = vunpack.c.l.b16 %v625
      %v669 = vunpack.c.h.b16 %v625
      %v670 = vunpack.c.l.b16 %v626
      %v671 = vunpack.c.h.b16 %v626
      %v672 = vunpack.c.l.b16 %v627
      %v673 = vunpack.c.h.b16 %v627
      %v674 = vunpack.c.l.b16 %v628
      %v675 = vunpack.c.h.b16 %v628
      %v676 = vunpack.c.l.b16 %v629
      %v677 = vunpack.c.h.b16 %v629
      %v678 = vpack.c.b16 %v646, %v646
      %v679 = vpack.c.b16 %v647, %v647
      %v680 = vpack.c.b16 %v648, %v648
      %v681 = vpack.c.b16 %v649, %v649
      %v682 = vpack.c.b16 %v650, %v650
      %v683 = vpack.c.b16 %v651, %v651
      %v684 = vpack.c.b16 %v652, %v652
      %v685 = vpack.c.b16 %v653, %v653
      %v686 = vpack.c.b16 %v654, %v654
      %v687 = vpack.c.b16 %v655, %v655
      %v688 = vpack.c.b16 %v656, %v656
      %v689 = vpack.c.b16 %v657, %v657
      %v690 = vpack.c.b16 %v658, %v658
      %v691 = vpack.c.b16 %v659, %v659
      %v692 = vpack.c.b16 %v660, %v660
      %v693 = vpack.c.b16 %v661, %v661
      %v694 = vpack.c.b16 %v662, %v662
      %v695 = vpack.c.b16 %v663, %v663
      %v696 = vpack.c.b16 %v664, %v664
      %v697 = vpack.c.b16 %v665, %v665
      %v698 = vpack.c.b16 %v666, %v666
      %v699 = vpack.c.b16 %v667, %v667
      %v700 = vpack.c.b16 %v668, %v668
      %v701 = vpack.c.b16 %v669, %v669
      %v702 = vpack.c.b16 %v670, %v670
      %v703 = vpack.c.b16 %v671, %v671
      %v704 = vpack.c.b16 %v672, %v672
      %v705 = vpack.c.b16 %v673, %v673
      %v706 = vpack.c.b16 %v674, %v674
      %v707 = vpack.c.b16 %v675, %v675
      %v708 = vpack.c.b16 %v676, %v676
      %v709 = vpack.c.b16 %v677, %v677
      %vm742 = vcmask 519168
      %743 = vst.msk [vmem:[%s172] sm:$0xf] %vm742, %v678
      %744 = vst.msk [vmem:[%s172 + $0x4] sm:$0xf] %vm742, %v679
      %745 = vst.msk [vmem:[%s172 + $0x8] sm:$0xf] %vm742, %v680
      %746 = vst.msk [vmem:[%s172 + $0xc] sm:$0xf] %vm742, %v681
      %747 = vst.msk [vmem:[%s172 + $0x10] sm:$0xf] %vm742, %v682
      %748 = vst.msk [vmem:[%s172 + $0x14] sm:$0xf] %vm742, %v683
      %749 = vst.msk [vmem:[%s172 + $0x18] sm:$0xf] %vm742, %v684
      %750 = vst.msk [vmem:[%s172 + $0x1c] sm:$0xf] %vm742, %v685
      %751 = vst.msk [vmem:[%s172 + $0x20] sm:$0xf] %vm742, %v686
      %752 = vst.msk [vmem:[%s172 + $0x24] sm:$0xf] %vm742, %v687
      %753 = vst.msk [vmem:[%s172 + $0x28] sm:$0xf] %vm742, %v688
      %754 = vst.msk [vmem:[%s172 + $0x2c] sm:$0xf] %vm742, %v689
      %755 = vst.msk [vmem:[%s172 + $0x30] sm:$0xf] %vm742, %v690
      %756 = vst.msk [vmem:[%s172 + $0x34] sm:$0xf] %vm742, %v691
      %757 = vst.msk [vmem:[%s172 + $0x38] sm:$0xf] %vm742, %v692
      %758 = vst.msk [vmem:[%s172 + $0x3c] sm:$0xf] %vm742, %v693
      %759 = vst.msk [vmem:[%s172 + $0x40] sm:$0xf] %vm742, %v694
      %760 = vst.msk [vmem:[%s172 + $0x44] sm:$0xf] %vm742, %v695
      %761 = vst.msk [vmem:[%s172 + $0x48] sm:$0xf] %vm742, %v696
      %762 = vst.msk [vmem:[%s172 + $0x4c] sm:$0xf] %vm742, %v697
      %763 = vst.msk [vmem:[%s172 + $0x50] sm:$0xf] %vm742, %v698
      %764 = vst.msk [vmem:[%s172 + $0x54] sm:$0xf] %vm742, %v699
      %765 = vst.msk [vmem:[%s172 + $0x58] sm:$0xf] %vm742, %v700
      %766 = vst.msk [vmem:[%s172 + $0x5c] sm:$0xf] %vm742, %v701
      %767 = vst.msk [vmem:[%s172 + $0x60] sm:$0xf] %vm742, %v702
      %768 = vst.msk [vmem:[%s172 + $0x64] sm:$0xf] %vm742, %v703
      %769 = vst.msk [vmem:[%s172 + $0x68] sm:$0xf] %vm742, %v704
      %770 = vst.msk [vmem:[%s172 + $0x6c] sm:$0xf] %vm742, %v705
      %771 = vst.msk [vmem:[%s172 + $0x70] sm:$0xf] %vm742, %v706
      %772 = vst.msk [vmem:[%s172 + $0x74] sm:$0xf] %vm742, %v707
      %773 = vst.msk [vmem:[%s172 + $0x78] sm:$0xf] %vm742, %v708
      %774 = vst.msk [vmem:[%s172 + $0x7c] sm:$0xf] %vm742, %v709
      %s775 = smul.u32 32, %s14
      %p776 = scmp.lt.s32.totalorder %s775, 287
      %s777 = scalar_select %p776, %s775, 287
      %s778 = smul.addr %s777, 4
      %s779 = scalar_lea.vmem %s3, %s778
      // Predicated region
      $region33: #{discriminator_forward.7} parent=31 // pred_check
        %p780 = pneg %p100
      $region34: #{discriminator_forward.7} parent=31 // pred_check_branch
        %782 = sbr.rel (%p780) target = $region36
      $region35: #{discriminator_forward.7} parent=31 // pred_region
        %s783 = smul.u32 32, %s14
      $region36: #{discriminator_forward.7} parent=31 // pred_fallthru
        _
    $region32: #{discriminator_forward.7} parent=5 // pred_fallthru
      _
    %p784 = scmp.le.s32.totalorder 2, %s9
    // Predicated region
    $region37: #{discriminator_forward.7} parent=5 // pred_check
      %p785 = pneg %p784
    $region38: #{discriminator_forward.7} parent=5 // pred_check_branch
      %787 = sbr.rel (%p785) target = $region40
    $region39: #{discriminator_forward.7} parent=5 // pred_region
      %s788 = ssub.s32 %s9, 2
      // Predicated region
      $region41: #{discriminator_forward.7} parent=39 // pred_check
        %p789 = pneg %p106
      $region42: #{discriminator_forward.7} parent=39 // pred_check_branch
        %791 = sbr.rel (%p789) target = $region44
      $region43: #{discriminator_forward.7} parent=39 // pred_region
        %s792 = smul.u32 32, %s15
        %p793 = scmp.lt.s32.totalorder %s792, 287
        %s794 = scalar_select %p793, %s792, 287
        %s795 = smul.addr %s794, 4
        %s796 = scalar_lea.vmem %s3, %s795
      $region44: #{discriminator_forward.7} parent=39 // pred_fallthru
        _
    $region40: #{discriminator_forward.7} parent=5 // pred_fallthru
      _
  $region6: #{discriminator_forward.7} parent=0 // loop_footer
    %s13 = sadd.s32 1, %s9
  $region7: #{discriminator_forward.7} parent=0 // loop_footer_branch
    %8 = sbr.rel target = $region3
  $region8: #{discriminator_forward.7} parent=0 // loop_exit
    _

// kernel: discriminator_forward.8
$region0: #{discriminator_forward.8}
  #allocation0 [shape = 'u32[]', space=smem, size = 0x4, offset = 0x4, fixed_abs, tag = 'smem constant byte address 0x4 - core index']
  #allocation1 [shape = 'u32[144,128]{1,0:T(1,128)}', space=vmem, size = 0x12000, scoped, tag = 'internal scratch']
  %s0 = inlined_call_operand.vmem [shape: bf16[512,576], index: 0, kind: input, shape index: {}]
  %s1 = inlined_call_operand.vmem [shape: bf16[576,64], index: 1, kind: input, shape index: {}]
  %s2 = inlined_call_operand.vmem [shape: f32[1,64], index: 2, kind: input, shape index: {}]
  %s3 = inlined_call_operand.vmem [shape: bf16[512,64], index: 3, kind: output, shape index: {}]
  %s4 = sld [smem:[#allocation0]]
  $region45: #{discriminator_forward.8} parent=0
    _
  %s6 = ssub.s32 1, %s4
  %s7 = scalar_select 0, %s6, %s4
  loop: start=0, step=1, limit=4
  $region2: #{discriminator_forward.8} parent=0 // loop_pre_header
    _
  $region3: #{discriminator_forward.8} parent=0 // loop_header
    %s9 = sphi 0, %s13
    %p10 = scmp.ge.s32.totalorder %s9, 4
    %s19 = sphi 0, %s21
    %s22 = sphi 0, %s19
    %s23 = sphi 0, %s22
    %s39 = sphi 0, %s23
    %s43 = sphi 0, %s43
    %s45 = sphi 0, %s43
    %s46 = sphi 0, %s45
    %s60 = sphi 0, %s46
    %s64 = sphi 0, %s64
    %s66 = sphi 0, %s64
    %s67 = sphi 0, %s66
    %s81 = sphi 0, %s67
    %s87 = sphi 0, %s89
    %s90 = sphi 0, %s87
    %s91 = sphi 0, %s90
    %s107 = sphi 0, %s91
  $region4: #{discriminator_forward.8} parent=0 // loop_header_branch
    %12 = sbr.rel (%p10) target = $region8
  $region5: #{discriminator_forward.8} parent=0 // loop_body
    %s14 = ssub.s32 %s9, 1
    %s15 = ssub.s32 %s9, 2
    %s16 = sadd.s32 %s9, 1
    %s17 = ssub.s32 %s9, %s16
    %p18 = scmp.eq.s32.totalorder %s17, 0
    %s20 = sadd.s32 %s19, 1
    %s21 = scalar_select %p18, %s19, %s20
    %p24 = pneg %p18
    %p25 = scmp.eq.s32.totalorder %s9, 1
    %p26 = por %p24, %p25
    %p27 = scmp.ne.s32.totalorder %s19, %s22
    %p28 = scmp.eq.s32.totalorder %s9, 0
    %p29 = por %p27, %p28
    %p30 = scmp.ne.s32.totalorder %s19, %s22
    %p31 = scmp.eq.s32.totalorder %s14, 1
    %p32 = por %p30, %p31
    %p33 = scmp.ne.s32.totalorder %s22, %s23
    %p34 = scmp.eq.s32.totalorder %s14, 0
    %p35 = por %p33, %p34
    %p36 = scmp.ne.s32.totalorder %s22, %s23
    %p37 = scmp.eq.s32.totalorder %s15, 1
    %p38 = por %p36, %p37
    %p40 = scmp.ne.s32.totalorder %s23, %s39
    %p41 = scmp.eq.s32.totalorder %s15, 0
    %p42 = por %p40, %p41
    %s44 = sadd.s32 %s43, 1
    %p47 = scmp.eq.s32.totalorder %s9, 1
    %p48 = scmp.ne.s32.totalorder %s43, %s45
    %p49 = scmp.eq.s32.totalorder %s9, 0
    %p50 = por %p48, %p49
    %p51 = scmp.ne.s32.totalorder %s43, %s45
    %p52 = scmp.eq.s32.totalorder %s14, 1
    %p53 = por %p51, %p52
    %p54 = scmp.ne.s32.totalorder %s45, %s46
    %p55 = scmp.eq.s32.totalorder %s14, 0
    %p56 = por %p54, %p55
    %p57 = scmp.ne.s32.totalorder %s45, %s46
    %p58 = scmp.eq.s32.totalorder %s15, 1
    %p59 = por %p57, %p58
    %p61 = scmp.ne.s32.totalorder %s46, %s60
    %p62 = scmp.eq.s32.totalorder %s15, 0
    %p63 = por %p61, %p62
    %s65 = sadd.s32 %s64, 1
    %p68 = scmp.eq.s32.totalorder %s9, 1
    %p69 = scmp.ne.s32.totalorder %s64, %s66
    %p70 = scmp.eq.s32.totalorder %s9, 0
    %p71 = por %p69, %p70
    %p72 = scmp.ne.s32.totalorder %s64, %s66
    %p73 = scmp.eq.s32.totalorder %s14, 1
    %p74 = por %p72, %p73
    %p75 = scmp.ne.s32.totalorder %s66, %s67
    %p76 = scmp.eq.s32.totalorder %s14, 0
    %p77 = por %p75, %p76
    %p78 = scmp.ne.s32.totalorder %s66, %s67
    %p79 = scmp.eq.s32.totalorder %s15, 1
    %p80 = por %p78, %p79
    %p82 = scmp.ne.s32.totalorder %s67, %s81
    %p83 = scmp.eq.s32.totalorder %s15, 0
    %p84 = por %p82, %p83
    %s85 = ssub.s32 %s9, %s16
    %p86 = scmp.eq.s32.totalorder %s85, 0
    %s88 = sadd.s32 %s87, 1
    %s89 = scalar_select %p86, %s87, %s88
    %p92 = pneg %p86
    %p93 = scmp.eq.s32.totalorder %s9, 1
    %p94 = por %p92, %p93
    %p95 = scmp.ne.s32.totalorder %s87, %s90
    %p96 = scmp.eq.s32.totalorder %s9, 0
    %p97 = por %p95, %p96
    %p98 = scmp.ne.s32.totalorder %s87, %s90
    %p99 = scmp.eq.s32.totalorder %s14, 1
    %p100 = por %p98, %p99
    %p101 = scmp.ne.s32.totalorder %s90, %s91
    %p102 = scmp.eq.s32.totalorder %s14, 0
    %p103 = por %p101, %p102
    %p104 = scmp.ne.s32.totalorder %s90, %s91
    %p105 = scmp.eq.s32.totalorder %s15, 1
    %p106 = por %p104, %p105
    %p108 = scmp.ne.s32.totalorder %s91, %s107
    %p109 = scmp.eq.s32.totalorder %s15, 0
    %p110 = por %p108, %p109
    %p111 = scmp.le.s32.totalorder 1, %s9
    %p112 = scmp.lt.s32.totalorder %s9, 3
    %p113 = pnand %p111, %p112
    %p114 = pneg %p113
    // Predicated region
    $region9: #{discriminator_forward.8} parent=5 // pred_check
      _
    $region10: #{discriminator_forward.8} parent=5 // pred_check_branch
      %116 = sbr.rel (%p113) target = $region12
    $region11: #{discriminator_forward.8} parent=5 // pred_region
      %s117 = ssub.s32 %s9, 1
      // Predicated region
      $region13: #{discriminator_forward.8} parent=11 // pred_check
        %p118 = pneg %p56
      $region14: #{discriminator_forward.8} parent=11 // pred_check_branch
        %120 = sbr.rel (%p118) target = $region16
      $region15: #{discriminator_forward.8} parent=11 // pred_region
        _
      $region16: #{discriminator_forward.8} parent=11 // pred_fallthru
        _
      // Predicated region
      $region17: #{discriminator_forward.8} parent=11 // pred_check
        %p121 = pneg %p77
      $region18: #{discriminator_forward.8} parent=11 // pred_check_branch
        %123 = sbr.rel (%p121) target = $region20
      $region19: #{discriminator_forward.8} parent=11 // pred_region
        _
      $region20: #{discriminator_forward.8} parent=11 // pred_fallthru
        _
    $region12: #{discriminator_forward.8} parent=5 // pred_fallthru
      _
    %p124 = scmp.lt.s32.totalorder %s9, 2
    // Predicated region
    $region21: #{discriminator_forward.8} parent=5 // pred_check
      %p125 = pneg %p124
    $region22: #{discriminator_forward.8} parent=5 // pred_check_branch
      %127 = sbr.rel (%p125) target = $region24
    $region23: #{discriminator_forward.8} parent=5 // pred_region
      // Predicated region
      $region25: #{discriminator_forward.8} parent=23 // pred_check
        %p128 = pneg %p29
      $region26: #{discriminator_forward.8} parent=23 // pred_check_branch
        %130 = sbr.rel (%p128) target = $region28
      $region27: #{discriminator_forward.8} parent=23 // pred_region
        %s131 = smul.u32 32, %s9
        %p132 = scmp.lt.s32.totalorder %s131, 63
        %s133 = scalar_select %p132, %s131, 63
        %s134 = smul.addr %s133, 5
        %s135 = smul.addr %s134, 4
        %s136 = scalar_lea.vmem %s0, %s135
        %s137 = smul.u32 32, %s9
      $region28: #{discriminator_forward.8} parent=23 // pred_fallthru
        _
    $region24: #{discriminator_forward.8} parent=5 // pred_fallthru
      _
    %p138 = scmp.le.s32.totalorder 1, %s9
    %p139 = scmp.lt.s32.totalorder %s9, 3
    %p140 = pnand %p138, %p139
    %p141 = pneg %p140
    // Predicated region
    $region29: #{discriminator_forward.8} parent=5 // pred_check
      _
    $region30: #{discriminator_forward.8} parent=5 // pred_check_branch
      %143 = sbr.rel (%p140) target = $region32
    $region31: #{discriminator_forward.8} parent=5 // pred_region
      %s144 = ssub.s32 %s9, 1
      %s145 = smul.u32 32, %s14
      %p146 = scmp.lt.s32.totalorder %s145, 63
      %s147 = scalar_select %p146, %s145, 63
      %s148 = smul.addr %s147, 5
      %s149 = smul.addr %s148, 4
      %s150 = scalar_lea.vmem %s0, %s149
      %p151 = pneg %p35
      %p152 = pneg %p32
      %p153 = pneg %p56
      %p154 = pneg %p53
      %p155 = pneg %p77
      %p156 = pneg %p74
      %p157 = pneg %p103
      %p158 = pneg %p100
      %s159 = smul.u32 32, %s14
      %p160 = scmp.lt.s32.totalorder %s159, 63
      %s161 = scalar_select %p160, %s159, 63
      %s162 = smul.addr %s161, 4
      %s163 = scalar_lea.vmem %s3, %s162
      %s164 = smul.u32 32, %s14
      %p165 = scmp.lt.s32.totalorder %s164, 63
      %s166 = scalar_select %p165, %s164, 63
      %s167 = smul.addr %s166, 5
      %s168 = smul.addr %s167, 4
      %s169 = scalar_lea.vmem %s0, %s168
      %s170 = smul.u32 32, %s14
      %s171 = smul.u32 32, %s14
      %p172 = scmp.lt.s32.totalorder %s171, 63
      %s173 = scalar_select %p172, %s171, 63
      %s174 = smul.addr %s173, 4
      %s175 = scalar_lea.vmem %s3, %s174
      %s176 = smul.u32 32, %s14
      %v178 = vld [vmem:[%s169] sm:$0xff]
      %v179 = vld [vmem:[%s169 + $0x8] sm:$0xff]
      %v180 = vld [vmem:[%s169 + $0x10] sm:$0xf]
      %v181 = vld [vmem:[%s169 + $0x14] sm:$0xff]
      %v182 = vld [vmem:[%s169 + $0x1c] sm:$0xff]
      %v183 = vld [vmem:[%s169 + $0x24] sm:$0xf]
      %v184 = vld [vmem:[%s169 + $0x28] sm:$0xff]
      %v185 = vld [vmem:[%s169 + $0x30] sm:$0xff]
      %v186 = vld [vmem:[%s169 + $0x38] sm:$0xf]
      %v187 = vld [vmem:[%s169 + $0x3c] sm:$0xff]
      %v188 = vld [vmem:[%s169 + $0x44] sm:$0xff]
      %v189 = vld [vmem:[%s169 + $0x4c] sm:$0xf]
      %v190 = vld [vmem:[%s169 + $0x50] sm:$0xff]
      %v191 = vld [vmem:[%s169 + $0x58] sm:$0xff]
      %v192 = vld [vmem:[%s169 + $0x60] sm:$0xf]
      %v193 = vld [vmem:[%s169 + $0x64] sm:$0xff]
      %v194 = vld [vmem:[%s169 + $0x6c] sm:$0xff]
      %v195 = vld [vmem:[%s169 + $0x74] sm:$0xf]
      %v196 = vld [vmem:[%s169 + $0x78] sm:$0xff]
      %v197 = vld [vmem:[%s169 + $0x80] sm:$0xff]
      %v198 = vld [vmem:[%s169 + $0x88] sm:$0xf]
      %v199 = vld [vmem:[%s169 + $0x8c] sm:$0xff]
      %v200 = vld [vmem:[%s169 + $0x94] sm:$0xff]
      %v201 = vld [vmem:[%s169 + $0x9c] sm:$0xf]
      %v202 = vld [vmem:[%s169 + $0xa0] sm:$0xff]
      %v203 = vld [vmem:[%s169 + $0xa8] sm:$0xff]
      %v204 = vld [vmem:[%s169 + $0xb0] sm:$0xf]
      %v205 = vld [vmem:[%s169 + $0xb4] sm:$0xff]
      %v206 = vld [vmem:[%s169 + $0xbc] sm:$0xff]
      %v207 = vld [vmem:[%s169 + $0xc4] sm:$0xf]
      %v208 = vld [vmem:[%s169 + $0xc8] sm:$0xff]
      %v209 = vld [vmem:[%s169 + $0xd0] sm:$0xff]
      %v210 = vld [vmem:[%s169 + $0xd8] sm:$0xf]
      %v211 = vld [vmem:[%s169 + $0xdc] sm:$0xff]
      %v212 = vld [vmem:[%s169 + $0xe4] sm:$0xff]
      %v213 = vld [vmem:[%s169 + $0xec] sm:$0xf]
      %v214 = vld [vmem:[%s169 + $0xf0] sm:$0xff]
      %v215 = vld [vmem:[%s169 + $0xf8] sm:$0xff]
      %v216 = vld [vmem:[%s169 + $0x100] sm:$0xf]
      %v217 = vld [vmem:[%s169 + $0x104] sm:$0xff]
      %v218 = vld [vmem:[%s169 + $0x10c] sm:$0xff]
      %v219 = vld [vmem:[%s169 + $0x114] sm:$0xf]
      %v220 = vld [vmem:[%s169 + $0x118] sm:$0xff]
      %v221 = vld [vmem:[%s169 + $0x120] sm:$0xff]
      %v222 = vld [vmem:[%s169 + $0x128] sm:$0xf]
      %v223 = vld [vmem:[%s169 + $0x12c] sm:$0xff]
      %v224 = vld [vmem:[%s169 + $0x134] sm:$0xff]
      %v225 = vld [vmem:[%s169 + $0x13c] sm:$0xf]
      %v226 = vld [vmem:[%s169 + $0x140] sm:$0xff]
      %v227 = vld [vmem:[%s169 + $0x148] sm:$0xff]
      %v228 = vld [vmem:[%s169 + $0x150] sm:$0xf]
      %v229 = vld [vmem:[%s169 + $0x154] sm:$0xff]
      %v230 = vld [vmem:[%s169 + $0x15c] sm:$0xff]
      %v231 = vld [vmem:[%s169 + $0x164] sm:$0xf]
      %v232 = vld [vmem:[%s169 + $0x168] sm:$0xff]
      %v233 = vld [vmem:[%s169 + $0x170] sm:$0xff]
      %v234 = vld [vmem:[%s169 + $0x178] sm:$0xf]
      %v235 = vld [vmem:[%s169 + $0x17c] sm:$0xff]
      %v236 = vld [vmem:[%s169 + $0x184] sm:$0xff]
      %v237 = vld [vmem:[%s169 + $0x18c] sm:$0xf]
      %v238 = vld [vmem:[%s169 + $0x190] sm:$0xff]
      %v239 = vld [vmem:[%s169 + $0x198] sm:$0xff]
      %v240 = vld [vmem:[%s169 + $0x1a0] sm:$0xf]
      %v241 = vld [vmem:[%s169 + $0x1a4] sm:$0xff]
      %v242 = vld [vmem:[%s169 + $0x1ac] sm:$0xff]
      %v243 = vld [vmem:[%s169 + $0x1b4] sm:$0xf]
      %v244 = vld [vmem:[%s169 + $0x1b8] sm:$0xff]
      %v245 = vld [vmem:[%s169 + $0x1c0] sm:$0xff]
      %v246 = vld [vmem:[%s169 + $0x1c8] sm:$0xf]
      %v247 = vld [vmem:[%s169 + $0x1cc] sm:$0xff]
      %v248 = vld [vmem:[%s169 + $0x1d4] sm:$0xff]
      %v249 = vld [vmem:[%s169 + $0x1dc] sm:$0xf]
      %v250 = vld [vmem:[%s169 + $0x1e0] sm:$0xff]
      %v251 = vld [vmem:[%s169 + $0x1e8] sm:$0xff]
      %v252 = vld [vmem:[%s169 + $0x1f0] sm:$0xf]
      %v253 = vld [vmem:[%s169 + $0x1f4] sm:$0xff]
      %v254 = vld [vmem:[%s169 + $0x1fc] sm:$0xff]
      %v255 = vld [vmem:[%s169 + $0x204] sm:$0xf]
      %v256 = vld [vmem:[%s169 + $0x208] sm:$0xff]
      %v257 = vld [vmem:[%s169 + $0x210] sm:$0xff]
      %v258 = vld [vmem:[%s169 + $0x218] sm:$0xf]
      %v259 = vld [vmem:[%s169 + $0x21c] sm:$0xff]
      %v260 = vld [vmem:[%s169 + $0x224] sm:$0xff]
      %v261 = vld [vmem:[%s169 + $0x22c] sm:$0xf]
      %v262 = vld [vmem:[%s169 + $0x230] sm:$0xff]
      %v263 = vld [vmem:[%s169 + $0x238] sm:$0xff]
      %v264 = vld [vmem:[%s169 + $0x240] sm:$0xf]
      %v265 = vld [vmem:[%s169 + $0x244] sm:$0xff]
      %v266 = vld [vmem:[%s169 + $0x24c] sm:$0xff]
      %v267 = vld [vmem:[%s169 + $0x254] sm:$0xf]
      %v268 = vld [vmem:[%s169 + $0x258] sm:$0xff]
      %v269 = vld [vmem:[%s169 + $0x260] sm:$0xff]
      %v270 = vld [vmem:[%s169 + $0x268] sm:$0xf]
      %v271 = vld [vmem:[%s169 + $0x26c] sm:$0xff]
      %v272 = vld [vmem:[%s169 + $0x274] sm:$0xff]
      %v273 = vld [vmem:[%s169 + $0x27c] sm:$0xf]
      %v274 = vld [vmem:[%s1] sm:$0xf]
      %v275 = vld [vmem:[%s1 + $0x4] sm:$0xf]
      %v276 = vld [vmem:[%s1 + $0x8] sm:$0xf]
      %v277 = vld [vmem:[%s1 + $0xc] sm:$0xf]
      %v278 = vld [vmem:[%s1 + $0x10] sm:$0xf]
      %v279 = vld [vmem:[%s1 + $0x14] sm:$0xf]
      %v280 = vld [vmem:[%s1 + $0x18] sm:$0xf]
      %v281 = vld [vmem:[%s1 + $0x1c] sm:$0xf]
      %v282 = vld [vmem:[%s1 + $0x20] sm:$0xf]
      %v283 = vld [vmem:[%s1 + $0x24] sm:$0xf]
      %v284 = vld [vmem:[%s1 + $0x28] sm:$0xf]
      %v285 = vld [vmem:[%s1 + $0x2c] sm:$0xf]
      %v286 = vld [vmem:[%s1 + $0x30] sm:$0xf]
      %v287 = vld [vmem:[%s1 + $0x34] sm:$0xf]
      %v288 = vld [vmem:[%s1 + $0x38] sm:$0xf]
      %v289 = vld [vmem:[%s1 + $0x3c] sm:$0xf]
      %v290 = vld [vmem:[%s1 + $0x40] sm:$0xf]
      %v291 = vld [vmem:[%s1 + $0x44] sm:$0xf]
      %v292 = vld [vmem:[%s1 + $0x48] sm:$0xf]
      %v293 = vld [vmem:[%s1 + $0x4c] sm:$0xf]
      %v294 = vld [vmem:[%s1 + $0x50] sm:$0xf]
      %v295 = vld [vmem:[%s1 + $0x54] sm:$0xf]
      %v296 = vld [vmem:[%s1 + $0x58] sm:$0xf]
      %v297 = vld [vmem:[%s1 + $0x5c] sm:$0xf]
      %v298 = vld [vmem:[%s1 + $0x60] sm:$0xf]
      %v299 = vld [vmem:[%s1 + $0x64] sm:$0xf]
      %v300 = vld [vmem:[%s1 + $0x68] sm:$0xf]
      %v301 = vld [vmem:[%s1 + $0x6c] sm:$0xf]
      %v302 = vld [vmem:[%s1 + $0x70] sm:$0xf]
      %v303 = vld [vmem:[%s1 + $0x74] sm:$0xf]
      %v304 = vld [vmem:[%s1 + $0x78] sm:$0xf]
      %v305 = vld [vmem:[%s1 + $0x7c] sm:$0xf]
      %v306 = vld [vmem:[%s1 + $0x80] sm:$0xf]
      %v307 = vld [vmem:[%s1 + $0x84] sm:$0xf]
      %v308 = vld [vmem:[%s1 + $0x88] sm:$0xf]
      %v309 = vld [vmem:[%s1 + $0x8c] sm:$0xf]
      %v310 = vld [vmem:[%s1 + $0x90] sm:$0xf]
      %v311 = vld [vmem:[%s1 + $0x94] sm:$0xf]
      %v312 = vld [vmem:[%s1 + $0x98] sm:$0xf]
      %v313 = vld [vmem:[%s1 + $0x9c] sm:$0xf]
      %v314 = vld [vmem:[%s1 + $0xa0] sm:$0xf]
      %v315 = vld [vmem:[%s1 + $0xa4] sm:$0xf]
      %v316 = vld [vmem:[%s1 + $0xa8] sm:$0xf]
      %v317 = vld [vmem:[%s1 + $0xac] sm:$0xf]
      %v318 = vld [vmem:[%s1 + $0xb0] sm:$0xf]
      %v319 = vld [vmem:[%s1 + $0xb4] sm:$0xf]
      %v320 = vld [vmem:[%s1 + $0xb8] sm:$0xf]
      %v321 = vld [vmem:[%s1 + $0xbc] sm:$0xf]
      %v322 = vld [vmem:[%s1 + $0xc0] sm:$0xf]
      %v323 = vld [vmem:[%s1 + $0xc4] sm:$0xf]
      %v324 = vld [vmem:[%s1 + $0xc8] sm:$0xf]
      %v325 = vld [vmem:[%s1 + $0xcc] sm:$0xf]
      %v326 = vld [vmem:[%s1 + $0xd0] sm:$0xf]
      %v327 = vld [vmem:[%s1 + $0xd4] sm:$0xf]
      %v328 = vld [vmem:[%s1 + $0xd8] sm:$0xf]
      %v329 = vld [vmem:[%s1 + $0xdc] sm:$0xf]
      %v330 = vld [vmem:[%s1 + $0xe0] sm:$0xf]
      %v331 = vld [vmem:[%s1 + $0xe4] sm:$0xf]
      %v332 = vld [vmem:[%s1 + $0xe8] sm:$0xf]
      %v333 = vld [vmem:[%s1 + $0xec] sm:$0xf]
      %v334 = vld [vmem:[%s1 + $0xf0] sm:$0xf]
      %v335 = vld [vmem:[%s1 + $0xf4] sm:$0xf]
      %v336 = vld [vmem:[%s1 + $0xf8] sm:$0xf]
      %v337 = vld [vmem:[%s1 + $0xfc] sm:$0xf]
      %v338 = vld [vmem:[%s1 + $0x100] sm:$0xf]
      %v339 = vld [vmem:[%s1 + $0x104] sm:$0xf]
      %v340 = vld [vmem:[%s1 + $0x108] sm:$0xf]
      %v341 = vld [vmem:[%s1 + $0x10c] sm:$0xf]
      %v342 = vld [vmem:[%s1 + $0x110] sm:$0xf]
      %v343 = vld [vmem:[%s1 + $0x114] sm:$0xf]
      %v344 = vld [vmem:[%s1 + $0x118] sm:$0xf]
      %v345 = vld [vmem:[%s1 + $0x11c] sm:$0xf]
      %v346 = vld [vmem:[%s2] sm:$0x1]
      %v348 = vlaneseq
      %v349 = vshrl.u32 %v348, 7
      %v350 = vsub.s32 0, %v349
      %v351 = vrot.slane %v346, %v350
      %v449 = vunpack.c.l.b16 %v178
      %v450 = vunpack.c.h.b16 %v178
      %v451 = vunpack.c.l.b16 %v179
      %v452 = vunpack.c.h.b16 %v179
      %v453 = vunpack.c.l.b16 %v180
      %v454 = vunpack.c.l.b16 %v181
      %v455 = vunpack.c.h.b16 %v181
      %v456 = vunpack.c.l.b16 %v182
      %v457 = vunpack.c.h.b16 %v182
      %v458 = vunpack.c.l.b16 %v183
      %v459 = vunpack.c.l.b16 %v184
      %v460 = vunpack.c.h.b16 %v184
      %v461 = vunpack.c.l.b16 %v185
      %v462 = vunpack.c.h.b16 %v185
      %v463 = vunpack.c.l.b16 %v186
      %v464 = vunpack.c.l.b16 %v187
      %v465 = vunpack.c.h.b16 %v187
      %v466 = vunpack.c.l.b16 %v188
      %v467 = vunpack.c.h.b16 %v188
      %v468 = vunpack.c.l.b16 %v189
      %v469 = vunpack.c.l.b16 %v190
      %v470 = vunpack.c.h.b16 %v190
      %v471 = vunpack.c.l.b16 %v191
      %v472 = vunpack.c.h.b16 %v191
      %v473 = vunpack.c.l.b16 %v192
      %v474 = vunpack.c.l.b16 %v193
      %v475 = vunpack.c.h.b16 %v193
      %v476 = vunpack.c.l.b16 %v194
      %v477 = vunpack.c.h.b16 %v194
      %v478 = vunpack.c.l.b16 %v195
      %v479 = vunpack.c.l.b16 %v196
      %v480 = vunpack.c.h.b16 %v196
      %v481 = vunpack.c.l.b16 %v197
      %v482 = vunpack.c.h.b16 %v197
      %v483 = vunpack.c.l.b16 %v198
      %v484 = vunpack.c.l.b16 %v199
      %v485 = vunpack.c.h.b16 %v199
      %v486 = vunpack.c.l.b16 %v200
      %v487 = vunpack.c.h.b16 %v200
      %v488 = vunpack.c.l.b16 %v201
      %v489 = vunpack.c.l.b16 %v202
      %v490 = vunpack.c.h.b16 %v202
      %v491 = vunpack.c.l.b16 %v203
      %v492 = vunpack.c.h.b16 %v203
      %v493 = vunpack.c.l.b16 %v204
      %v494 = vunpack.c.l.b16 %v205
      %v495 = vunpack.c.h.b16 %v205
      %v496 = vunpack.c.l.b16 %v206
      %v497 = vunpack.c.h.b16 %v206
      %v498 = vunpack.c.l.b16 %v207
      %v499 = vunpack.c.l.b16 %v208
      %v500 = vunpack.c.h.b16 %v208
      %v501 = vunpack.c.l.b16 %v209
      %v502 = vunpack.c.h.b16 %v209
      %v503 = vunpack.c.l.b16 %v210
      %v504 = vunpack.c.l.b16 %v211
      %v505 = vunpack.c.h.b16 %v211
      %v506 = vunpack.c.l.b16 %v212
      %v507 = vunpack.c.h.b16 %v212
      %v508 = vunpack.c.l.b16 %v213
      %v509 = vunpack.c.l.b16 %v214
      %v510 = vunpack.c.h.b16 %v214
      %v511 = vunpack.c.l.b16 %v215
      %v512 = vunpack.c.h.b16 %v215
      %v513 = vunpack.c.l.b16 %v216
      %v514 = vunpack.c.l.b16 %v217
      %v515 = vunpack.c.h.b16 %v217
      %v516 = vunpack.c.l.b16 %v218
      %v517 = vunpack.c.h.b16 %v218
      %v518 = vunpack.c.l.b16 %v219
      %v519 = vunpack.c.l.b16 %v220
      %v520 = vunpack.c.h.b16 %v220
      %v521 = vunpack.c.l.b16 %v221
      %v522 = vunpack.c.h.b16 %v221
      %v523 = vunpack.c.l.b16 %v222
      %v524 = vunpack.c.l.b16 %v223
      %v525 = vunpack.c.h.b16 %v223
      %v526 = vunpack.c.l.b16 %v224
      %v527 = vunpack.c.h.b16 %v224
      %v528 = vunpack.c.l.b16 %v225
      %v529 = vunpack.c.l.b16 %v226
      %v530 = vunpack.c.h.b16 %v226
      %v531 = vunpack.c.l.b16 %v227
      %v532 = vunpack.c.h.b16 %v227
      %v533 = vunpack.c.l.b16 %v228
      %v534 = vunpack.c.l.b16 %v229
      %v535 = vunpack.c.h.b16 %v229
      %v536 = vunpack.c.l.b16 %v230
      %v537 = vunpack.c.h.b16 %v230
      %v538 = vunpack.c.l.b16 %v231
      %v539 = vunpack.c.l.b16 %v232
      %v540 = vunpack.c.h.b16 %v232
      %v541 = vunpack.c.l.b16 %v233
      %v542 = vunpack.c.h.b16 %v233
      %v543 = vunpack.c.l.b16 %v234
      %v544 = vunpack.c.l.b16 %v235
      %v545 = vunpack.c.h.b16 %v235
      %v546 = vunpack.c.l.b16 %v236
      %v547 = vunpack.c.h.b16 %v236
      %v548 = vunpack.c.l.b16 %v237
      %v549 = vunpack.c.l.b16 %v238
      %v550 = vunpack.c.h.b16 %v238
      %v551 = vunpack.c.l.b16 %v239
      %v552 = vunpack.c.h.b16 %v239
      %v553 = vunpack.c.l.b16 %v240
      %v554 = vunpack.c.l.b16 %v241
      %v555 = vunpack.c.h.b16 %v241
      %v556 = vunpack.c.l.b16 %v242
      %v557 = vunpack.c.h.b16 %v242
      %v558 = vunpack.c.l.b16 %v243
      %v559 = vunpack.c.l.b16 %v244
      %v560 = vunpack.c.h.b16 %v244
      %v561 = vunpack.c.l.b16 %v245
      %v562 = vunpack.c.h.b16 %v245
      %v563 = vunpack.c.l.b16 %v246
      %v564 = vunpack.c.l.b16 %v247
      %v565 = vunpack.c.h.b16 %v247
      %v566 = vunpack.c.l.b16 %v248
      %v567 = vunpack.c.h.b16 %v248
      %v568 = vunpack.c.l.b16 %v249
      %v569 = vunpack.c.l.b16 %v250
      %v570 = vunpack.c.h.b16 %v250
      %v571 = vunpack.c.l.b16 %v251
      %v572 = vunpack.c.h.b16 %v251
      %v573 = vunpack.c.l.b16 %v252
      %v574 = vunpack.c.l.b16 %v253
      %v575 = vunpack.c.h.b16 %v253
      %v576 = vunpack.c.l.b16 %v254
      %v577 = vunpack.c.h.b16 %v254
      %v578 = vunpack.c.l.b16 %v255
      %v579 = vunpack.c.l.b16 %v256
      %v580 = vunpack.c.h.b16 %v256
      %v581 = vunpack.c.l.b16 %v257
      %v582 = vunpack.c.h.b16 %v257
      %v583 = vunpack.c.l.b16 %v258
      %v584 = vunpack.c.l.b16 %v259
      %v585 = vunpack.c.h.b16 %v259
      %v586 = vunpack.c.l.b16 %v260
      %v587 = vunpack.c.h.b16 %v260
      %v588 = vunpack.c.l.b16 %v261
      %v589 = vunpack.c.l.b16 %v262
      %v590 = vunpack.c.h.b16 %v262
      %v591 = vunpack.c.l.b16 %v263
      %v592 = vunpack.c.h.b16 %v263
      %v593 = vunpack.c.l.b16 %v264
      %v594 = vunpack.c.l.b16 %v265
      %v595 = vunpack.c.h.b16 %v265
      %v596 = vunpack.c.l.b16 %v266
      %v597 = vunpack.c.h.b16 %v266
      %v598 = vunpack.c.l.b16 %v267
      %v599 = vunpack.c.l.b16 %v268
      %v600 = vunpack.c.h.b16 %v268
      %v601 = vunpack.c.l.b16 %v269
      %v602 = vunpack.c.h.b16 %v269
      %v603 = vunpack.c.l.b16 %v270
      %v604 = vunpack.c.l.b16 %v271
      %v605 = vunpack.c.h.b16 %v271
      %v606 = vunpack.c.l.b16 %v272
      %v607 = vunpack.c.h.b16 %v272
      %v608 = vunpack.c.l.b16 %v273
      %v609 = vpack.c.b16 %v454, %v449
      %v610 = vpack.c.b16 %v455, %v450
      %v611 = vpack.c.b16 %v456, %v451
      %v612 = vpack.c.b16 %v457, %v452
      %v613 = vpack.c.b16 %v458, %v453
      %v614 = vpack.c.b16 %v464, %v459
      %v615 = vpack.c.b16 %v465, %v460
      %v616 = vpack.c.b16 %v466, %v461
      %v617 = vpack.c.b16 %v467, %v462
      %v618 = vpack.c.b16 %v468, %v463
      %v619 = vpack.c.b16 %v474, %v469
      %v620 = vpack.c.b16 %v475, %v470
      %v621 = vpack.c.b16 %v476, %v471
      %v622 = vpack.c.b16 %v477, %v472
      %v623 = vpack.c.b16 %v478, %v473
      %v624 = vpack.c.b16 %v484, %v479
      %v625 = vpack.c.b16 %v485, %v480
      %v626 = vpack.c.b16 %v486, %v481
      %v627 = vpack.c.b16 %v487, %v482
      %v628 = vpack.c.b16 %v488, %v483
      %v629 = vpack.c.b16 %v494, %v489
      %v630 = vpack.c.b16 %v495, %v490
      %v631 = vpack.c.b16 %v496, %v491
      %v632 = vpack.c.b16 %v497, %v492
      %v633 = vpack.c.b16 %v498, %v493
      %v634 = vpack.c.b16 %v504, %v499
      %v635 = vpack.c.b16 %v505, %v500
      %v636 = vpack.c.b16 %v506, %v501
      %v637 = vpack.c.b16 %v507, %v502
      %v638 = vpack.c.b16 %v508, %v503
      %v639 = vpack.c.b16 %v514, %v509
      %v640 = vpack.c.b16 %v515, %v510
      %v641 = vpack.c.b16 %v516, %v511
      %v642 = vpack.c.b16 %v517, %v512
      %v643 = vpack.c.b16 %v518, %v513
      %v644 = vpack.c.b16 %v524, %v519
      %v645 = vpack.c.b16 %v525, %v520
      %v646 = vpack.c.b16 %v526, %v521
      %v647 = vpack.c.b16 %v527, %v522
      %v648 = vpack.c.b16 %v528, %v523
      %v649 = vpack.c.b16 %v534, %v529
      %v650 = vpack.c.b16 %v535, %v530
      %v651 = vpack.c.b16 %v536, %v531
      %v652 = vpack.c.b16 %v537, %v532
      %v653 = vpack.c.b16 %v538, %v533
      %v654 = vpack.c.b16 %v544, %v539
      %v655 = vpack.c.b16 %v545, %v540
      %v656 = vpack.c.b16 %v546, %v541
      %v657 = vpack.c.b16 %v547, %v542
      %v658 = vpack.c.b16 %v548, %v543
      %v659 = vpack.c.b16 %v554, %v549
      %v660 = vpack.c.b16 %v555, %v550
      %v661 = vpack.c.b16 %v556, %v551
      %v662 = vpack.c.b16 %v557, %v552
      %v663 = vpack.c.b16 %v558, %v553
      %v664 = vpack.c.b16 %v564, %v559
      %v665 = vpack.c.b16 %v565, %v560
      %v666 = vpack.c.b16 %v566, %v561
      %v667 = vpack.c.b16 %v567, %v562
      %v668 = vpack.c.b16 %v568, %v563
      %v669 = vpack.c.b16 %v574, %v569
      %v670 = vpack.c.b16 %v575, %v570
      %v671 = vpack.c.b16 %v576, %v571
      %v672 = vpack.c.b16 %v577, %v572
      %v673 = vpack.c.b16 %v578, %v573
      %v674 = vpack.c.b16 %v584, %v579
      %v675 = vpack.c.b16 %v585, %v580
      %v676 = vpack.c.b16 %v586, %v581
      %v677 = vpack.c.b16 %v587, %v582
      %v678 = vpack.c.b16 %v588, %v583
      %v679 = vpack.c.b16 %v594, %v589
      %v680 = vpack.c.b16 %v595, %v590
      %v681 = vpack.c.b16 %v596, %v591
      %v682 = vpack.c.b16 %v597, %v592
      %v683 = vpack.c.b16 %v598, %v593
      %v684 = vpack.c.b16 %v604, %v599
      %v685 = vpack.c.b16 %v605, %v600
      %v686 = vpack.c.b16 %v606, %v601
      %v687 = vpack.c.b16 %v607, %v602
      %v688 = vpack.c.b16 %v608, %v603
      %v825 = vunpack.c.l.b16 %v274
      %v826 = vunpack.c.l.b16 %v275
      %v827 = vunpack.c.l.b16 %v276
      %v828 = vunpack.c.l.b16 %v277
      %v829 = vunpack.c.l.b16 %v278
      %v830 = vunpack.c.l.b16 %v279
      %v831 = vunpack.c.l.b16 %v280
      %v832 = vunpack.c.l.b16 %v281
      %v833 = vunpack.c.l.b16 %v282
      %v834 = vunpack.c.l.b16 %v283
      %v835 = vunpack.c.l.b16 %v284
      %v836 = vunpack.c.l.b16 %v285
      %v837 = vunpack.c.l.b16 %v286
      %v838 = vunpack.c.l.b16 %v287
      %v839 = vunpack.c.l.b16 %v288
      %v840 = vunpack.c.l.b16 %v289
      %v841 = vunpack.c.l.b16 %v290
      %v842 = vunpack.c.l.b16 %v291
      %v843 = vunpack.c.l.b16 %v292
      %v844 = vunpack.c.l.b16 %v293
      %v845 = vunpack.c.l.b16 %v294
      %v846 = vunpack.c.l.b16 %v295
      %v847 = vunpack.c.l.b16 %v296
      %v848 = vunpack.c.l.b16 %v297
      %v849 = vunpack.c.l.b16 %v298
      %v850 = vunpack.c.l.b16 %v299
      %v851 = vunpack.c.l.b16 %v300
      %v852 = vunpack.c.l.b16 %v301
      %v853 = vunpack.c.l.b16 %v302
      %v854 = vunpack.c.l.b16 %v303
      %v855 = vunpack.c.l.b16 %v304
      %v856 = vunpack.c.l.b16 %v305
      %v857 = vunpack.c.l.b16 %v306
      %v858 = vunpack.c.l.b16 %v307
      %v859 = vunpack.c.l.b16 %v308
      %v860 = vunpack.c.l.b16 %v309
      %v861 = vunpack.c.l.b16 %v310
      %v862 = vunpack.c.l.b16 %v311
      %v863 = vunpack.c.l.b16 %v312
      %v864 = vunpack.c.l.b16 %v313
      %v865 = vunpack.c.l.b16 %v314
      %v866 = vunpack.c.l.b16 %v315
      %v867 = vunpack.c.l.b16 %v316
      %v868 = vunpack.c.l.b16 %v317
      %v869 = vunpack.c.l.b16 %v318
      %v870 = vunpack.c.l.b16 %v319
      %v871 = vunpack.c.l.b16 %v320
      %v872 = vunpack.c.l.b16 %v321
      %v873 = vunpack.c.l.b16 %v322
      %v874 = vunpack.c.l.b16 %v323
      %v875 = vunpack.c.l.b16 %v324
      %v876 = vunpack.c.l.b16 %v325
      %v877 = vunpack.c.l.b16 %v326
      %v878 = vunpack.c.l.b16 %v327
      %v879 = vunpack.c.l.b16 %v328
      %v880 = vunpack.c.l.b16 %v329
      %v881 = vunpack.c.l.b16 %v330
      %v882 = vunpack.c.l.b16 %v331
      %v883 = vunpack.c.l.b16 %v332
      %v884 = vunpack.c.l.b16 %v333
      %v885 = vunpack.c.l.b16 %v334
      %v886 = vunpack.c.l.b16 %v335
      %v887 = vunpack.c.l.b16 %v336
      %v888 = vunpack.c.l.b16 %v337
      %v889 = vunpack.c.l.b16 %v338
      %v890 = vunpack.c.l.b16 %v339
      %v891 = vunpack.c.l.b16 %v340
      %v892 = vunpack.c.l.b16 %v341
      %v893 = vunpack.c.l.b16 %v342
      %v894 = vunpack.c.l.b16 %v343
      %v895 = vunpack.c.l.b16 %v344
      %v896 = vunpack.c.l.b16 %v345
      %v897 = vpack.c.b16 %v826, %v825
      %v898 = vpack.c.b16 %v828, %v827
      %v899 = vpack.c.b16 %v830, %v829
      %v900 = vpack.c.b16 %v832, %v831
      %v901 = vpack.c.b16 %v834, %v833
      %v902 = vpack.c.b16 %v836, %v835
      %v903 = vpack.c.b16 %v838, %v837
      %v904 = vpack.c.b16 %v840, %v839
      %v905 = vpack.c.b16 %v842, %v841
      %v906 = vpack.c.b16 %v844, %v843
      %v907 = vpack.c.b16 %v846, %v845
      %v908 = vpack.c.b16 %v848, %v847
      %v909 = vpack.c.b16 %v850, %v849
      %v910 = vpack.c.b16 %v852, %v851
      %v911 = vpack.c.b16 %v854, %v853
      %v912 = vpack.c.b16 %v856, %v855
      %v913 = vpack.c.b16 %v858, %v857
      %v914 = vpack.c.b16 %v860, %v859
      %v915 = vpack.c.b16 %v862, %v861
      %v916 = vpack.c.b16 %v864, %v863
      %v917 = vpack.c.b16 %v866, %v865
      %v918 = vpack.c.b16 %v868, %v867
      %v919 = vpack.c.b16 %v870, %v869
      %v920 = vpack.c.b16 %v872, %v871
      %v921 = vpack.c.b16 %v874, %v873
      %v922 = vpack.c.b16 %v876, %v875
      %v923 = vpack.c.b16 %v878, %v877
      %v924 = vpack.c.b16 %v880, %v879
      %v925 = vpack.c.b16 %v882, %v881
      %v926 = vpack.c.b16 %v884, %v883
      %v927 = vpack.c.b16 %v886, %v885
      %v928 = vpack.c.b16 %v888, %v887
      %v929 = vpack.c.b16 %v890, %v889
      %v930 = vpack.c.b16 %v892, %v891
      %v931 = vpack.c.b16 %v894, %v893
      %v932 = vpack.c.b16 %v896, %v895
      %vm969 = vcmask 523264
      %v971 = vsel %vm969, %v613, 0
      %v974 = vsel %vm969, %v618, 0
      %v977 = vsel %vm969, %v623, 0
      %v980 = vsel %vm969, %v628, 0
      %v983 = vsel %vm969, %v633, 0
      %v986 = vsel %vm969, %v638, 0
      %v989 = vsel %vm969, %v643, 0
      %v992 = vsel %vm969, %v648, 0
      %v995 = vsel %vm969, %v653, 0
      %v998 = vsel %vm969, %v658, 0
      %v1001 = vsel %vm969, %v663, 0
      %v1004 = vsel %vm969, %v668, 0
      %v1007 = vsel %vm969, %v673, 0
      %v1010 = vsel %vm969, %v678, 0
      %v1013 = vsel %vm969, %v683, 0
      %v1016 = vsel %vm969, %v688, 0
      %1018 = vmatprep.subr.bf16.mxu0 0
      %1019 = vmatpush1.bf16.msra.mxu0 %v904
      %1020 = vmatprep.subr.bf16.mxu0 0
      %1021 = vmatpush1.bf16.msra.mxu0 %v903
      %1022 = vmatprep.subr.bf16.mxu0 0
      %1023 = vmatpush1.bf16.msra.mxu0 %v902
      %1024 = vmatprep.subr.bf16.mxu0 0
      %1025 = vmatpush1.bf16.msra.mxu0 %v901
      %1026 = vmatprep.subr.bf16.mxu0 0
      %1027 = vmatpush1.bf16.msra.mxu0 %v900
      %1028 = vmatprep.subr.bf16.mxu0 0
      %1029 = vmatpush1.bf16.msra.mxu0 %v899
      %1030 = vmatprep.subr.bf16.mxu0 0
      %1031 = vmatpush1.bf16.msra.mxu0 %v898
      %1032 = vmatprep.subr.bf16.mxu0 0
      %1033 = vmatpush1.bf16.msra.mxu0 %v897
      %1034 = vmatprep.subr.bf16.mxu0 0
      %1035 = vmatpush2.bf16.msra.mxu0 %v912
      %1036 = vmatprep.subr.bf16.mxu0 0
      %1037 = vmatpush2.bf16.msra.mxu0 %v911
      %1038 = vmatprep.subr.bf16.mxu0 0
      %1039 = vmatpush2.bf16.msra.mxu0 %v910
      %1040 = vmatprep.subr.bf16.mxu0 0
      %1041 = vmatpush2.bf16.msra.mxu0 %v909
      %1042 = vmatprep.subr.bf16.mxu0 0
      %1043 = vmatpush2.bf16.msra.mxu0 %v908
      %1044 = vmatprep.subr.bf16.mxu0 0
      %1045 = vmatpush2.bf16.msra.mxu0 %v907
      %1046 = vmatprep.subr.bf16.mxu0 0
      %1047 = vmatpush2.bf16.msra.mxu0 %v906
      %1048 = vmatprep.subr.bf16.mxu0 0
      %1049 = vmatpush2.bf16.msra.mxu0 %v905
      %1050 = vmatprep.mubr.bf16.mxu0 %v610
      %1051 = vmatmul.mubr.bf16.gmra.mxu0 %v609
      %v1052 = vpop.f32.mrf.mxu0
      %v1053 = vadd.f32 %v351, %v1052
      %v1054 = vpop.f32.mrf.mxu0
      %v1055 = vpop.f32.mrf.mxu0
      %v1056 = vadd.f32 %v351, %v1055
      %v1057 = vpop.f32.mrf.mxu0
      %1058 = vmatprep.mubr.bf16.mxu0 %v615
      %1059 = vmatmul.mubr.bf16.gmra.mxu0 %v614
      %v1060 = vpop.f32.mrf.mxu0
      %v1061 = vadd.f32 %v351, %v1060
      %v1062 = vpop.f32.mrf.mxu0
      %v1063 = vpop.f32.mrf.mxu0
      %v1064 = vadd.f32 %v351, %v1063
      %v1065 = vpop.f32.mrf.mxu0
      %1066 = vmatprep.mubr.bf16.mxu0 %v620
      %1067 = vmatmul.mubr.bf16.gmra.mxu0 %v619
      %v1068 = vpop.f32.mrf.mxu0
      %v1069 = vadd.f32 %v351, %v1068
      %v1070 = vpop.f32.mrf.mxu0
      %v1071 = vpop.f32.mrf.mxu0
      %v1072 = vadd.f32 %v351, %v1071
      %v1073 = vpop.f32.mrf.mxu0
      %1074 = vmatprep.mubr.bf16.mxu0 %v625
      %1075 = vmatmul.mubr.bf16.gmra.mxu0 %v624
      %v1076 = vpop.f32.mrf.mxu0
      %v1077 = vadd.f32 %v351, %v1076
      %v1078 = vpop.f32.mrf.mxu0
      %v1079 = vpop.f32.mrf.mxu0
      %v1080 = vadd.f32 %v351, %v1079
      %v1081 = vpop.f32.mrf.mxu0
      %1082 = vmatprep.mubr.bf16.mxu0 %v630
      %1083 = vmatmul.mubr.bf16.gmra.mxu0 %v629
      %v1084 = vpop.f32.mrf.mxu0
      %v1085 = vadd.f32 %v351, %v1084
      %v1086 = vpop.f32.mrf.mxu0
      %v1087 = vpop.f32.mrf.mxu0
      %v1088 = vadd.f32 %v351, %v1087
      %v1089 = vpop.f32.mrf.mxu0
      %1090 = vmatprep.mubr.bf16.mxu0 %v635
      %1091 = vmatmul.mubr.bf16.gmra.mxu0 %v634
      %v1092 = vpop.f32.mrf.mxu0
      %v1093 = vadd.f32 %v351, %v1092
      %v1094 = vpop.f32.mrf.mxu0
      %v1095 = vpop.f32.mrf.mxu0
      %v1096 = vadd.f32 %v351, %v1095
      %v1097 = vpop.f32.mrf.mxu0
      %1098 = vmatprep.mubr.bf16.mxu0 %v640
      %1099 = vmatmul.mubr.bf16.gmra.mxu0 %v639
      %v1100 = vpop.f32.mrf.mxu0
      %v1101 = vadd.f32 %v351, %v1100
      %v1102 = vpop.f32.mrf.mxu0
      %v1103 = vpop.f32.mrf.mxu0
      %v1104 = vadd.f32 %v351, %v1103
      %v1105 = vpop.f32.mrf.mxu0
      %1106 = vmatprep.mubr.bf16.mxu0 %v645
      %1107 = vmatmul.mubr.bf16.gmra.mxu0 %v644
      %v1108 = vpop.f32.mrf.mxu0
      %v1109 = vadd.f32 %v351, %v1108
      %v1110 = vpop.f32.mrf.mxu0
      %v1111 = vpop.f32.mrf.mxu0
      %v1112 = vadd.f32 %v351, %v1111
      %v1113 = vpop.f32.mrf.mxu0
      %1114 = vmatprep.mubr.bf16.mxu0 %v650
      %1115 = vmatmul.mubr.bf16.gmra.mxu0 %v649
      %v1116 = vpop.f32.mrf.mxu0
      %v1117 = vadd.f32 %v351, %v1116
      %v1118 = vpop.f32.mrf.mxu0
      %v1119 = vpop.f32.mrf.mxu0
      %v1120 = vadd.f32 %v351, %v1119
      %v1121 = vpop.f32.mrf.mxu0
      %1122 = vmatprep.mubr.bf16.mxu0 %v655
      %1123 = vmatmul.mubr.bf16.gmra.mxu0 %v654
      %v1124 = vpop.f32.mrf.mxu0
      %v1125 = vadd.f32 %v351, %v1124
      %v1126 = vpop.f32.mrf.mxu0
      %v1127 = vpop.f32.mrf.mxu0
      %v1128 = vadd.f32 %v351, %v1127
      %v1129 = vpop.f32.mrf.mxu0
      %1130 = vmatprep.mubr.bf16.mxu0 %v660
      %1131 = vmatmul.mubr.bf16.gmra.mxu0 %v659
      %v1132 = vpop.f32.mrf.mxu0
      %v1133 = vadd.f32 %v351, %v1132
      %v1134 = vpop.f32.mrf.mxu0
      %v1135 = vpop.f32.mrf.mxu0
      %v1136 = vadd.f32 %v351, %v1135
      %v1137 = vpop.f32.mrf.mxu0
      %1138 = vmatprep.mubr.bf16.mxu0 %v665
      %1139 = vmatmul.mubr.bf16.gmra.mxu0 %v664
      %v1140 = vpop.f32.mrf.mxu0
      %v1141 = vadd.f32 %v351, %v1140
      %v1142 = vpop.f32.mrf.mxu0
      %v1143 = vpop.f32.mrf.mxu0
      %v1144 = vadd.f32 %v351, %v1143
      %v1145 = vpop.f32.mrf.mxu0
      %1146 = vmatprep.mubr.bf16.mxu0 %v670
      %1147 = vmatmul.mubr.bf16.gmra.mxu0 %v669
      %v1148 = vpop.f32.mrf.mxu0
      %v1149 = vadd.f32 %v351, %v1148
      %v1150 = vpop.f32.mrf.mxu0
      %v1151 = vpop.f32.mrf.mxu0
      %v1152 = vadd.f32 %v351, %v1151
      %v1153 = vpop.f32.mrf.mxu0
      %1154 = vmatprep.mubr.bf16.mxu0 %v675
      %1155 = vmatmul.mubr.bf16.gmra.mxu0 %v674
      %v1156 = vpop.f32.mrf.mxu0
      %v1157 = vadd.f32 %v351, %v1156
      %v1158 = vpop.f32.mrf.mxu0
      %v1159 = vpop.f32.mrf.mxu0
      %v1160 = vadd.f32 %v351, %v1159
      %v1161 = vpop.f32.mrf.mxu0
      %1162 = vmatprep.mubr.bf16.mxu0 %v680
      %1163 = vmatmul.mubr.bf16.gmra.mxu0 %v679
      %v1164 = vpop.f32.mrf.mxu0
      %v1165 = vadd.f32 %v351, %v1164
      %v1166 = vpop.f32.mrf.mxu0
      %v1167 = vpop.f32.mrf.mxu0
      %v1168 = vadd.f32 %v351, %v1167
      %v1169 = vpop.f32.mrf.mxu0
      %1170 = vmatprep.mubr.bf16.mxu0 %v685
      %1171 = vmatmul.mubr.bf16.gmra.mxu0 %v684
      %v1172 = vpop.f32.mrf.mxu0
      %v1173 = vadd.f32 %v351, %v1172
      %v1174 = vpop.f32.mrf.mxu0
      %v1175 = vpop.f32.mrf.mxu0
      %v1176 = vadd.f32 %v351, %v1175
      %v1177 = vpop.f32.mrf.mxu0
      %1178 = vdwg.mxu0
      %1179 = vmatprep.subr.bf16.mxu0 0
      %1180 = vmatpush1.bf16.msra.mxu0 %v920
      %1181 = vmatprep.subr.bf16.mxu0 0
      %1182 = vmatpush1.bf16.msra.mxu0 %v919
      %1183 = vmatprep.subr.bf16.mxu0 0
      %1184 = vmatpush1.bf16.msra.mxu0 %v918
      %1185 = vmatprep.subr.bf16.mxu0 0
      %1186 = vmatpush1.bf16.msra.mxu0 %v917
      %1187 = vmatprep.subr.bf16.mxu0 0
      %1188 = vmatpush1.bf16.msra.mxu0 %v916
      %1189 = vmatprep.subr.bf16.mxu0 0
      %1190 = vmatpush1.bf16.msra.mxu0 %v915
      %1191 = vmatprep.subr.bf16.mxu0 0
      %1192 = vmatpush1.bf16.msra.mxu0 %v914
      %1193 = vmatprep.subr.bf16.mxu0 0
      %1194 = vmatpush1.bf16.msra.mxu0 %v913
      %1195 = vmatprep.subr.bf16.mxu0 0
      %1196 = vmatpush2.bf16.msra.mxu0 %v928
      %1197 = vmatprep.subr.bf16.mxu0 0
      %1198 = vmatpush2.bf16.msra.mxu0 %v927
      %1199 = vmatprep.subr.bf16.mxu0 0
      %1200 = vmatpush2.bf16.msra.mxu0 %v926
      %1201 = vmatprep.subr.bf16.mxu0 0
      %1202 = vmatpush2.bf16.msra.mxu0 %v925
      %1203 = vmatprep.subr.bf16.mxu0 0
      %1204 = vmatpush2.bf16.msra.mxu0 %v924
      %1205 = vmatprep.subr.bf16.mxu0 0
      %1206 = vmatpush2.bf16.msra.mxu0 %v923
      %1207 = vmatprep.subr.bf16.mxu0 0
      %1208 = vmatpush2.bf16.msra.mxu0 %v922
      %1209 = vmatprep.subr.bf16.mxu0 0
      %1210 = vmatpush2.bf16.msra.mxu0 %v921
      %1211 = vmatprep.mubr.bf16.mxu0 %v612
      %1212 = vmatmul.mubr.bf16.gmra.mxu0 %v611
      %v1213 = vpop.f32.mrf.mxu0
      %v1214 = vadd.f32 %v1053, %v1213
      %v1215 = vpop.f32.mrf.mxu0
      %v1216 = vpop.f32.mrf.mxu0
      %v1217 = vadd.f32 %v1056, %v1216
      %v1218 = vpop.f32.mrf.mxu0
      %1219 = vmatprep.mubr.bf16.mxu0 %v617
      %1220 = vmatmul.mubr.bf16.gmra.mxu0 %v616
      %v1221 = vpop.f32.mrf.mxu0
      %v1222 = vadd.f32 %v1061, %v1221
      %v1223 = vpop.f32.mrf.mxu0
      %v1224 = vpop.f32.mrf.mxu0
      %v1225 = vadd.f32 %v1064, %v1224
      %v1226 = vpop.f32.mrf.mxu0
      %1227 = vmatprep.mubr.bf16.mxu0 %v622
      %1228 = vmatmul.mubr.bf16.gmra.mxu0 %v621
      %v1229 = vpop.f32.mrf.mxu0
      %v1230 = vadd.f32 %v1069, %v1229
      %v1231 = vpop.f32.mrf.mxu0
      %v1232 = vpop.f32.mrf.mxu0
      %v1233 = vadd.f32 %v1072, %v1232
      %v1234 = vpop.f32.mrf.mxu0
      %1235 = vmatprep.mubr.bf16.mxu0 %v627
      %1236 = vmatmul.mubr.bf16.gmra.mxu0 %v626
      %v1237 = vpop.f32.mrf.mxu0
      %v1238 = vadd.f32 %v1077, %v1237
      %v1239 = vpop.f32.mrf.mxu0
      %v1240 = vpop.f32.mrf.mxu0
      %v1241 = vadd.f32 %v1080, %v1240
      %v1242 = vpop.f32.mrf.mxu0
      %1243 = vmatprep.mubr.bf16.mxu0 %v632
      %1244 = vmatmul.mubr.bf16.gmra.mxu0 %v631
      %v1245 = vpop.f32.mrf.mxu0
      %v1246 = vadd.f32 %v1085, %v1245
      %v1247 = vpop.f32.mrf.mxu0
      %v1248 = vpop.f32.mrf.mxu0
      %v1249 = vadd.f32 %v1088, %v1248
      %v1250 = vpop.f32.mrf.mxu0
      %1251 = vmatprep.mubr.bf16.mxu0 %v637
      %1252 = vmatmul.mubr.bf16.gmra.mxu0 %v636
      %v1253 = vpop.f32.mrf.mxu0
      %v1254 = vadd.f32 %v1093, %v1253
      %v1255 = vpop.f32.mrf.mxu0
      %v1256 = vpop.f32.mrf.mxu0
      %v1257 = vadd.f32 %v1096, %v1256
      %v1258 = vpop.f32.mrf.mxu0
      %1259 = vmatprep.mubr.bf16.mxu0 %v642
      %1260 = vmatmul.mubr.bf16.gmra.mxu0 %v641
      %v1261 = vpop.f32.mrf.mxu0
      %v1262 = vadd.f32 %v1101, %v1261
      %v1263 = vpop.f32.mrf.mxu0
      %v1264 = vpop.f32.mrf.mxu0
      %v1265 = vadd.f32 %v1104, %v1264
      %v1266 = vpop.f32.mrf.mxu0
      %1267 = vmatprep.mubr.bf16.mxu0 %v647
      %1268 = vmatmul.mubr.bf16.gmra.mxu0 %v646
      %v1269 = vpop.f32.mrf.mxu0
      %v1270 = vadd.f32 %v1109, %v1269
      %v1271 = vpop.f32.mrf.mxu0
      %v1272 = vpop.f32.mrf.mxu0
      %v1273 = vadd.f32 %v1112, %v1272
      %v1274 = vpop.f32.mrf.mxu0
      %1275 = vmatprep.mubr.bf16.mxu0 %v652
      %1276 = vmatmul.mubr.bf16.gmra.mxu0 %v651
      %v1277 = vpop.f32.mrf.mxu0
      %v1278 = vadd.f32 %v1117, %v1277
      %v1279 = vpop.f32.mrf.mxu0
      %v1280 = vpop.f32.mrf.mxu0
      %v1281 = vadd.f32 %v1120, %v1280
      %v1282 = vpop.f32.mrf.mxu0
      %1283 = vmatprep.mubr.bf16.mxu0 %v657
      %1284 = vmatmul.mubr.bf16.gmra.mxu0 %v656
      %v1285 = vpop.f32.mrf.mxu0
      %v1286 = vadd.f32 %v1125, %v1285
      %v1287 = vpop.f32.mrf.mxu0
      %v1288 = vpop.f32.mrf.mxu0
      %v1289 = vadd.f32 %v1128, %v1288
      %v1290 = vpop.f32.mrf.mxu0
      %1291 = vmatprep.mubr.bf16.mxu0 %v662
      %1292 = vmatmul.mubr.bf16.gmra.mxu0 %v661
      %v1293 = vpop.f32.mrf.mxu0
      %v1294 = vadd.f32 %v1133, %v1293
      %v1295 = vpop.f32.mrf.mxu0
      %v1296 = vpop.f32.mrf.mxu0
      %v1297 = vadd.f32 %v1136, %v1296
      %v1298 = vpop.f32.mrf.mxu0
      %1299 = vmatprep.mubr.bf16.mxu0 %v667
      %1300 = vmatmul.mubr.bf16.gmra.mxu0 %v666
      %v1301 = vpop.f32.mrf.mxu0
      %v1302 = vadd.f32 %v1141, %v1301
      %v1303 = vpop.f32.mrf.mxu0
      %v1304 = vpop.f32.mrf.mxu0
      %v1305 = vadd.f32 %v1144, %v1304
      %v1306 = vpop.f32.mrf.mxu0
      %1307 = vmatprep.mubr.bf16.mxu0 %v672
      %1308 = vmatmul.mubr.bf16.gmra.mxu0 %v671
      %v1309 = vpop.f32.mrf.mxu0
      %v1310 = vadd.f32 %v1149, %v1309
      %v1311 = vpop.f32.mrf.mxu0
      %v1312 = vpop.f32.mrf.mxu0
      %v1313 = vadd.f32 %v1152, %v1312
      %v1314 = vpop.f32.mrf.mxu0
      %1315 = vmatprep.mubr.bf16.mxu0 %v677
      %1316 = vmatmul.mubr.bf16.gmra.mxu0 %v676
      %v1317 = vpop.f32.mrf.mxu0
      %v1318 = vadd.f32 %v1157, %v1317
      %v1319 = vpop.f32.mrf.mxu0
      %v1320 = vpop.f32.mrf.mxu0
      %v1321 = vadd.f32 %v1160, %v1320
      %v1322 = vpop.f32.mrf.mxu0
      %1323 = vmatprep.mubr.bf16.mxu0 %v682
      %1324 = vmatmul.mubr.bf16.gmra.mxu0 %v681
      %v1325 = vpop.f32.mrf.mxu0
      %v1326 = vadd.f32 %v1165, %v1325
      %v1327 = vpop.f32.mrf.mxu0
      %v1328 = vpop.f32.mrf.mxu0
      %v1329 = vadd.f32 %v1168, %v1328
      %v1330 = vpop.f32.mrf.mxu0
      %1331 = vmatprep.mubr.bf16.mxu0 %v687
      %1332 = vmatmul.mubr.bf16.gmra.mxu0 %v686
      %v1333 = vpop.f32.mrf.mxu0
      %v1334 = vadd.f32 %v1173, %v1333
      %v1335 = vpop.f32.mrf.mxu0
      %v1336 = vpop.f32.mrf.mxu0
      %v1337 = vadd.f32 %v1176, %v1336
      %v1338 = vpop.f32.mrf.mxu0
      %1339 = vdwg.mxu0
      %1340 = vmatprep.subr.bf16.mxu0 0
      %1341 = vmatpush1.bf16.msra.mxu0 0
      %1342 = vmatprep.subr.bf16.mxu0 0
      %1343 = vmatpush1.bf16.msra.mxu0 0
      %1344 = vmatprep.subr.bf16.mxu0 0
      %1345 = vmatpush1.bf16.msra.mxu0 0
      %1346 = vmatprep.subr.bf16.mxu0 0
      %1347 = vmatpush1.bf16.msra.mxu0 0
      %1348 = vmatprep.subr.bf16.mxu0 0
      %1349 = vmatpush1.bf16.msra.mxu0 %v932
      %1350 = vmatprep.subr.bf16.mxu0 0
      %1351 = vmatpush1.bf16.msra.mxu0 %v931
      %1352 = vmatprep.subr.bf16.mxu0 0
      %1353 = vmatpush1.bf16.msra.mxu0 %v930
      %1354 = vmatprep.subr.bf16.mxu0 0
      %1355 = vmatpush1.bf16.msra.mxu0 %v929
      %1356 = vmatprep.subr.bf16.mxu0 0
      %1357 = vmatpush2.bf16.msra.mxu0 0
      %1358 = vmatprep.subr.bf16.mxu0 0
      %1359 = vmatpush2.bf16.msra.mxu0 0
      %1360 = vmatprep.subr.bf16.mxu0 0
      %1361 = vmatpush2.bf16.msra.mxu0 0
      %1362 = vmatprep.subr.bf16.mxu0 0
      %1363 = vmatpush2.bf16.msra.mxu0 0
      %1364 = vmatprep.subr.bf16.mxu0 0
      %1365 = vmatpush2.bf16.msra.mxu0 0
      %1366 = vmatprep.subr.bf16.mxu0 0
      %1367 = vmatpush2.bf16.msra.mxu0 0
      %1368 = vmatprep.subr.bf16.mxu0 0
      %1369 = vmatpush2.bf16.msra.mxu0 0
      %1370 = vmatprep.subr.bf16.mxu0 0
      %1371 = vmatpush2.bf16.msra.mxu0 0
      %1372 = vmatprep.mubr.bf16.mxu0 0
      %1373 = vmatmul.mubr.bf16.gmra.mxu0 %v971
      %v1374 = vpop.f32.mrf.mxu0
      %v1375 = vadd.f32 %v1214, %v1374
      %v1376 = vpop.f32.mrf.mxu0
      %v1377 = vpop.f32.mrf.mxu0
      %v1378 = vadd.f32 %v1217, %v1377
      %v1379 = vpop.f32.mrf.mxu0
      %1380 = vmatprep.mubr.bf16.mxu0 0
      %1381 = vmatmul.mubr.bf16.gmra.mxu0 %v974
      %v1382 = vpop.f32.mrf.mxu0
      %v1383 = vadd.f32 %v1222, %v1382
      %v1384 = vpop.f32.mrf.mxu0
      %v1385 = vpop.f32.mrf.mxu0
      %v1386 = vadd.f32 %v1225, %v1385
      %v1387 = vpop.f32.mrf.mxu0
      %1388 = vmatprep.mubr.bf16.mxu0 0
      %1389 = vmatmul.mubr.bf16.gmra.mxu0 %v977
      %v1390 = vpop.f32.mrf.mxu0
      %v1391 = vadd.f32 %v1230, %v1390
      %v1392 = vpop.f32.mrf.mxu0
      %v1393 = vpop.f32.mrf.mxu0
      %v1394 = vadd.f32 %v1233, %v1393
      %v1395 = vpop.f32.mrf.mxu0
      %1396 = vmatprep.mubr.bf16.mxu0 0
      %1397 = vmatmul.mubr.bf16.gmra.mxu0 %v980
      %v1398 = vpop.f32.mrf.mxu0
      %v1399 = vadd.f32 %v1238, %v1398
      %v1400 = vpop.f32.mrf.mxu0
      %v1401 = vpop.f32.mrf.mxu0
      %v1402 = vadd.f32 %v1241, %v1401
      %v1403 = vpop.f32.mrf.mxu0
      %1404 = vmatprep.mubr.bf16.mxu0 0
      %1405 = vmatmul.mubr.bf16.gmra.mxu0 %v983
      %v1406 = vpop.f32.mrf.mxu0
      %v1407 = vadd.f32 %v1246, %v1406
      %v1408 = vpop.f32.mrf.mxu0
      %v1409 = vpop.f32.mrf.mxu0
      %v1410 = vadd.f32 %v1249, %v1409
      %v1411 = vpop.f32.mrf.mxu0
      %1412 = vmatprep.mubr.bf16.mxu0 0
      %1413 = vmatmul.mubr.bf16.gmra.mxu0 %v986
      %v1414 = vpop.f32.mrf.mxu0
      %v1415 = vadd.f32 %v1254, %v1414
      %v1416 = vpop.f32.mrf.mxu0
      %v1417 = vpop.f32.mrf.mxu0
      %v1418 = vadd.f32 %v1257, %v1417
      %v1419 = vpop.f32.mrf.mxu0
      %1420 = vmatprep.mubr.bf16.mxu0 0
      %1421 = vmatmul.mubr.bf16.gmra.mxu0 %v989
      %v1422 = vpop.f32.mrf.mxu0
      %v1423 = vadd.f32 %v1262, %v1422
      %v1424 = vpop.f32.mrf.mxu0
      %v1425 = vpop.f32.mrf.mxu0
      %v1426 = vadd.f32 %v1265, %v1425
      %v1427 = vpop.f32.mrf.mxu0
      %1428 = vmatprep.mubr.bf16.mxu0 0
      %1429 = vmatmul.mubr.bf16.gmra.mxu0 %v992
      %v1430 = vpop.f32.mrf.mxu0
      %v1431 = vadd.f32 %v1270, %v1430
      %v1432 = vpop.f32.mrf.mxu0
      %v1433 = vpop.f32.mrf.mxu0
      %v1434 = vadd.f32 %v1273, %v1433
      %v1435 = vpop.f32.mrf.mxu0
      %1436 = vmatprep.mubr.bf16.mxu0 0
      %1437 = vmatmul.mubr.bf16.gmra.mxu0 %v995
      %v1438 = vpop.f32.mrf.mxu0
      %v1439 = vadd.f32 %v1278, %v1438
      %v1440 = vpop.f32.mrf.mxu0
      %v1441 = vpop.f32.mrf.mxu0
      %v1442 = vadd.f32 %v1281, %v1441
      %v1443 = vpop.f32.mrf.mxu0
      %1444 = vmatprep.mubr.bf16.mxu0 0
      %1445 = vmatmul.mubr.bf16.gmra.mxu0 %v998
      %v1446 = vpop.f32.mrf.mxu0
      %v1447 = vadd.f32 %v1286, %v1446
      %v1448 = vpop.f32.mrf.mxu0
      %v1449 = vpop.f32.mrf.mxu0
      %v1450 = vadd.f32 %v1289, %v1449
      %v1451 = vpop.f32.mrf.mxu0
      %1452 = vmatprep.mubr.bf16.mxu0 0
      %1453 = vmatmul.mubr.bf16.gmra.mxu0 %v1001
      %v1454 = vpop.f32.mrf.mxu0
      %v1455 = vadd.f32 %v1294, %v1454
      %v1456 = vpop.f32.mrf.mxu0
      %v1457 = vpop.f32.mrf.mxu0
      %v1458 = vadd.f32 %v1297, %v1457
      %v1459 = vpop.f32.mrf.mxu0
      %1460 = vmatprep.mubr.bf16.mxu0 0
      %1461 = vmatmul.mubr.bf16.gmra.mxu0 %v1004
      %v1462 = vpop.f32.mrf.mxu0
      %v1463 = vadd.f32 %v1302, %v1462
      %v1464 = vpop.f32.mrf.mxu0
      %v1465 = vpop.f32.mrf.mxu0
      %v1466 = vadd.f32 %v1305, %v1465
      %v1467 = vpop.f32.mrf.mxu0
      %1468 = vmatprep.mubr.bf16.mxu0 0
      %1469 = vmatmul.mubr.bf16.gmra.mxu0 %v1007
      %v1470 = vpop.f32.mrf.mxu0
      %v1471 = vadd.f32 %v1310, %v1470
      %v1472 = vpop.f32.mrf.mxu0
      %v1473 = vpop.f32.mrf.mxu0
      %v1474 = vadd.f32 %v1313, %v1473
      %v1475 = vpop.f32.mrf.mxu0
      %1476 = vmatprep.mubr.bf16.mxu0 0
      %1477 = vmatmul.mubr.bf16.gmra.mxu0 %v1010
      %v1478 = vpop.f32.mrf.mxu0
      %v1479 = vadd.f32 %v1318, %v1478
      %v1480 = vpop.f32.mrf.mxu0
      %v1481 = vpop.f32.mrf.mxu0
      %v1482 = vadd.f32 %v1321, %v1481
      %v1483 = vpop.f32.mrf.mxu0
      %1484 = vmatprep.mubr.bf16.mxu0 0
      %1485 = vmatmul.mubr.bf16.gmra.mxu0 %v1013
      %v1486 = vpop.f32.mrf.mxu0
      %v1487 = vadd.f32 %v1326, %v1486
      %v1488 = vpop.f32.mrf.mxu0
      %v1489 = vpop.f32.mrf.mxu0
      %v1490 = vadd.f32 %v1329, %v1489
      %v1491 = vpop.f32.mrf.mxu0
      %1492 = vmatprep.mubr.bf16.mxu0 0
      %1493 = vmatmul.mubr.bf16.gmra.mxu0 %v1016
      %v1494 = vpop.f32.mrf.mxu0
      %v1495 = vadd.f32 %v1334, %v1494
      %v1496 = vpop.f32.mrf.mxu0
      %v1497 = vpop.f32.mrf.mxu0
      %v1498 = vadd.f32 %v1337, %v1497
      %v1499 = vpop.f32.mrf.mxu0
      %1500 = vdwg.mxu0
      %vm1501 = vcmp.gt.f32.partialorder %v1375, 0.0
      %vm1502 = vcmp.gt.f32.partialorder %v1378, 0.0
      %vm1503 = vcmp.gt.f32.partialorder %v1383, 0.0
      %vm1504 = vcmp.gt.f32.partialorder %v1386, 0.0
      %vm1505 = vcmp.gt.f32.partialorder %v1391, 0.0
      %vm1506 = vcmp.gt.f32.partialorder %v1394, 0.0
      %vm1507 = vcmp.gt.f32.partialorder %v1399, 0.0
      %vm1508 = vcmp.gt.f32.partialorder %v1402, 0.0
      %vm1509 = vcmp.gt.f32.partialorder %v1407, 0.0
      %vm1510 = vcmp.gt.f32.partialorder %v1410, 0.0
      %vm1511 = vcmp.gt.f32.partialorder %v1415, 0.0
      %vm1512 = vcmp.gt.f32.partialorder %v1418, 0.0
      %vm1513 = vcmp.gt.f32.partialorder %v1423, 0.0
      %vm1514 = vcmp.gt.f32.partialorder %v1426, 0.0
      %vm1515 = vcmp.gt.f32.partialorder %v1431, 0.0
      %vm1516 = vcmp.gt.f32.partialorder %v1434, 0.0
      %vm1517 = vcmp.gt.f32.partialorder %v1439, 0.0
      %vm1518 = vcmp.gt.f32.partialorder %v1442, 0.0
      %vm1519 = vcmp.gt.f32.partialorder %v1447, 0.0
      %vm1520 = vcmp.gt.f32.partialorder %v1450, 0.0
      %vm1521 = vcmp.gt.f32.partialorder %v1455, 0.0
      %vm1522 = vcmp.gt.f32.partialorder %v1458, 0.0
      %vm1523 = vcmp.gt.f32.partialorder %v1463, 0.0
      %vm1524 = vcmp.gt.f32.partialorder %v1466, 0.0
      %vm1525 = vcmp.gt.f32.partialorder %v1471, 0.0
      %vm1526 = vcmp.gt.f32.partialorder %v1474, 0.0
      %vm1527 = vcmp.gt.f32.partialorder %v1479, 0.0
      %vm1528 = vcmp.gt.f32.partialorder %v1482, 0.0
      %vm1529 = vcmp.gt.f32.partialorder %v1487, 0.0
      %vm1530 = vcmp.gt.f32.partialorder %v1490, 0.0
      %vm1531 = vcmp.gt.f32.partialorder %v1495, 0.0
      %vm1532 = vcmp.gt.f32.partialorder %v1498, 0.0
      %v1533 = vmul.f32 %v1375, 0.1
      %v1534 = vmul.f32 %v1378, 0.1
      %v1535 = vmul.f32 %v1383, 0.1
      %v1536 = vmul.f32 %v1386, 0.1
      %v1537 = vmul.f32 %v1391, 0.1
      %v1538 = vmul.f32 %v1394, 0.1
      %v1539 = vmul.f32 %v1399, 0.1
      %v1540 = vmul.f32 %v1402, 0.1
      %v1541 = vmul.f32 %v1407, 0.1
      %v1542 = vmul.f32 %v1410, 0.1
      %v1543 = vmul.f32 %v1415, 0.1
      %v1544 = vmul.f32 %v1418, 0.1
      %v1545 = vmul.f32 %v1423, 0.1
      %v1546 = vmul.f32 %v1426, 0.1
      %v1547 = vmul.f32 %v1431, 0.1
      %v1548 = vmul.f32 %v1434, 0.1
      %v1549 = vmul.f32 %v1439, 0.1
      %v1550 = vmul.f32 %v1442, 0.1
      %v1551 = vmul.f32 %v1447, 0.1
      %v1552 = vmul.f32 %v1450, 0.1
      %v1553 = vmul.f32 %v1455, 0.1
      %v1554 = vmul.f32 %v1458, 0.1
      %v1555 = vmul.f32 %v1463, 0.1
      %v1556 = vmul.f32 %v1466, 0.1
      %v1557 = vmul.f32 %v1471, 0.1
      %v1558 = vmul.f32 %v1474, 0.1
      %v1559 = vmul.f32 %v1479, 0.1
      %v1560 = vmul.f32 %v1482, 0.1
      %v1561 = vmul.f32 %v1487, 0.1
      %v1562 = vmul.f32 %v1490, 0.1
      %v1563 = vmul.f32 %v1495, 0.1
      %v1564 = vmul.f32 %v1498, 0.1
      %v1565 = vsel %vm1501, %v1375, %v1533
      %v1566 = vsel %vm1502, %v1378, %v1534
      %v1567 = vsel %vm1503, %v1383, %v1535
      %v1568 = vsel %vm1504, %v1386, %v1536
      %v1569 = vsel %vm1505, %v1391, %v1537
      %v1570 = vsel %vm1506, %v1394, %v1538
      %v1571 = vsel %vm1507, %v1399, %v1539
      %v1572 = vsel %vm1508, %v1402, %v1540
      %v1573 = vsel %vm1509, %v1407, %v1541
      %v1574 = vsel %vm1510, %v1410, %v1542
      %v1575 = vsel %vm1511, %v1415, %v1543
      %v1576 = vsel %vm1512, %v1418, %v1544
      %v1577 = vsel %vm1513, %v1423, %v1545
      %v1578 = vsel %vm1514, %v1426, %v1546
      %v1579 = vsel %vm1515, %v1431, %v1547
      %v1580 = vsel %vm1516, %v1434, %v1548
      %v1581 = vsel %vm1517, %v1439, %v1549
      %v1582 = vsel %vm1518, %v1442, %v1550
      %v1583 = vsel %vm1519, %v1447, %v1551
      %v1584 = vsel %vm1520, %v1450, %v1552
      %v1585 = vsel %vm1521, %v1455, %v1553
      %v1586 = vsel %vm1522, %v1458, %v1554
      %v1587 = vsel %vm1523, %v1463, %v1555
      %v1588 = vsel %vm1524, %v1466, %v1556
      %v1589 = vsel %vm1525, %v1471, %v1557
      %v1590 = vsel %vm1526, %v1474, %v1558
      %v1591 = vsel %vm1527, %v1479, %v1559
      %v1592 = vsel %vm1528, %v1482, %v1560
      %v1593 = vsel %vm1529, %v1487, %v1561
      %v1594 = vsel %vm1530, %v1490, %v1562
      %v1595 = vsel %vm1531, %v1495, %v1563
      %v1596 = vsel %vm1532, %v1498, %v1564
      %v1597 = vpack.c.bf16 %v1566, %v1565
      %v1598 = vpack.c.bf16 %v1568, %v1567
      %v1599 = vpack.c.bf16 %v1570, %v1569
      %v1600 = vpack.c.bf16 %v1572, %v1571
      %v1601 = vpack.c.bf16 %v1574, %v1573
      %v1602 = vpack.c.bf16 %v1576, %v1575
      %v1603 = vpack.c.bf16 %v1578, %v1577
      %v1604 = vpack.c.bf16 %v1580, %v1579
      %v1605 = vpack.c.bf16 %v1582, %v1581
      %v1606 = vpack.c.bf16 %v1584, %v1583
      %v1607 = vpack.c.bf16 %v1586, %v1585
      %v1608 = vpack.c.bf16 %v1588, %v1587
      %v1609 = vpack.c.bf16 %v1590, %v1589
      %v1610 = vpack.c.bf16 %v1592, %v1591
      %v1611 = vpack.c.bf16 %v1594, %v1593
      %v1612 = vpack.c.bf16 %v1596, %v1595
      %v1629 = vunpack.c.l.b16 %v1597
      %v1630 = vunpack.c.h.b16 %v1597
      %v1631 = vunpack.c.l.b16 %v1598
      %v1632 = vunpack.c.h.b16 %v1598
      %v1633 = vunpack.c.l.b16 %v1599
      %v1634 = vunpack.c.h.b16 %v1599
      %v1635 = vunpack.c.l.b16 %v1600
      %v1636 = vunpack.c.h.b16 %v1600
      %v1637 = vunpack.c.l.b16 %v1601
      %v1638 = vunpack.c.h.b16 %v1601
      %v1639 = vunpack.c.l.b16 %v1602
      %v1640 = vunpack.c.h.b16 %v1602
      %v1641 = vunpack.c.l.b16 %v1603
      %v1642 = vunpack.c.h.b16 %v1603
      %v1643 = vunpack.c.l.b16 %v1604
      %v1644 = vunpack.c.h.b16 %v1604
      %v1645 = vunpack.c.l.b16 %v1605
      %v1646 = vunpack.c.h.b16 %v1605
      %v1647 = vunpack.c.l.b16 %v1606
      %v1648 = vunpack.c.h.b16 %v1606
      %v1649 = vunpack.c.l.b16 %v1607
      %v1650 = vunpack.c.h.b16 %v1607
      %v1651 = vunpack.c.l.b16 %v1608
      %v1652 = vunpack.c.h.b16 %v1608
      %v1653 = vunpack.c.l.b16 %v1609
      %v1654 = vunpack.c.h.b16 %v1609
      %v1655 = vunpack.c.l.b16 %v1610
      %v1656 = vunpack.c.h.b16 %v1610
      %v1657 = vunpack.c.l.b16 %v1611
      %v1658 = vunpack.c.h.b16 %v1611
      %v1659 = vunpack.c.l.b16 %v1612
      %v1660 = vunpack.c.h.b16 %v1612
      %v1661 = vpack.c.b16 %v1629, %v1629
      %v1662 = vpack.c.b16 %v1630, %v1630
      %v1663 = vpack.c.b16 %v1631, %v1631
      %v1664 = vpack.c.b16 %v1632, %v1632
      %v1665 = vpack.c.b16 %v1633, %v1633
      %v1666 = vpack.c.b16 %v1634, %v1634
      %v1667 = vpack.c.b16 %v1635, %v1635
      %v1668 = vpack.c.b16 %v1636, %v1636
      %v1669 = vpack.c.b16 %v1637, %v1637
      %v1670 = vpack.c.b16 %v1638, %v1638
      %v1671 = vpack.c.b16 %v1639, %v1639
      %v1672 = vpack.c.b16 %v1640, %v1640
      %v1673 = vpack.c.b16 %v1641, %v1641
      %v1674 = vpack.c.b16 %v1642, %v1642
      %v1675 = vpack.c.b16 %v1643, %v1643
      %v1676 = vpack.c.b16 %v1644, %v1644
      %v1677 = vpack.c.b16 %v1645, %v1645
      %v1678 = vpack.c.b16 %v1646, %v1646
      %v1679 = vpack.c.b16 %v1647, %v1647
      %v1680 = vpack.c.b16 %v1648, %v1648
      %v1681 = vpack.c.b16 %v1649, %v1649
      %v1682 = vpack.c.b16 %v1650, %v1650
      %v1683 = vpack.c.b16 %v1651, %v1651
      %v1684 = vpack.c.b16 %v1652, %v1652
      %v1685 = vpack.c.b16 %v1653, %v1653
      %v1686 = vpack.c.b16 %v1654, %v1654
      %v1687 = vpack.c.b16 %v1655, %v1655
      %v1688 = vpack.c.b16 %v1656, %v1656
      %v1689 = vpack.c.b16 %v1657, %v1657
      %v1690 = vpack.c.b16 %v1658, %v1658
      %v1691 = vpack.c.b16 %v1659, %v1659
      %v1692 = vpack.c.b16 %v1660, %v1660
      %vm1725 = vcmask 519168
      %1726 = vst.msk [vmem:[%s175] sm:$0xf] %vm1725, %v1661
      %1727 = vst.msk [vmem:[%s175 + $0x4] sm:$0xf] %vm1725, %v1662
      %1728 = vst.msk [vmem:[%s175 + $0x8] sm:$0xf] %vm1725, %v1663
      %1729 = vst.msk [vmem:[%s175 + $0xc] sm:$0xf] %vm1725, %v1664
      %1730 = vst.msk [vmem:[%s175 + $0x10] sm:$0xf] %vm1725, %v1665
      %1731 = vst.msk [vmem:[%s175 + $0x14] sm:$0xf] %vm1725, %v1666
      %1732 = vst.msk [vmem:[%s175 + $0x18] sm:$0xf] %vm1725, %v1667
      %1733 = vst.msk [vmem:[%s175 + $0x1c] sm:$0xf] %vm1725, %v1668
      %1734 = vst.msk [vmem:[%s175 + $0x20] sm:$0xf] %vm1725, %v1669
      %1735 = vst.msk [vmem:[%s175 + $0x24] sm:$0xf] %vm1725, %v1670
      %1736 = vst.msk [vmem:[%s175 + $0x28] sm:$0xf] %vm1725, %v1671
      %1737 = vst.msk [vmem:[%s175 + $0x2c] sm:$0xf] %vm1725, %v1672
      %1738 = vst.msk [vmem:[%s175 + $0x30] sm:$0xf] %vm1725, %v1673
      %1739 = vst.msk [vmem:[%s175 + $0x34] sm:$0xf] %vm1725, %v1674
      %1740 = vst.msk [vmem:[%s175 + $0x38] sm:$0xf] %vm1725, %v1675
      %1741 = vst.msk [vmem:[%s175 + $0x3c] sm:$0xf] %vm1725, %v1676
      %1742 = vst.msk [vmem:[%s175 + $0x40] sm:$0xf] %vm1725, %v1677
      %1743 = vst.msk [vmem:[%s175 + $0x44] sm:$0xf] %vm1725, %v1678
      %1744 = vst.msk [vmem:[%s175 + $0x48] sm:$0xf] %vm1725, %v1679
      %1745 = vst.msk [vmem:[%s175 + $0x4c] sm:$0xf] %vm1725, %v1680
      %1746 = vst.msk [vmem:[%s175 + $0x50] sm:$0xf] %vm1725, %v1681
      %1747 = vst.msk [vmem:[%s175 + $0x54] sm:$0xf] %vm1725, %v1682
      %1748 = vst.msk [vmem:[%s175 + $0x58] sm:$0xf] %vm1725, %v1683
      %1749 = vst.msk [vmem:[%s175 + $0x5c] sm:$0xf] %vm1725, %v1684
      %1750 = vst.msk [vmem:[%s175 + $0x60] sm:$0xf] %vm1725, %v1685
      %1751 = vst.msk [vmem:[%s175 + $0x64] sm:$0xf] %vm1725, %v1686
      %1752 = vst.msk [vmem:[%s175 + $0x68] sm:$0xf] %vm1725, %v1687
      %1753 = vst.msk [vmem:[%s175 + $0x6c] sm:$0xf] %vm1725, %v1688
      %1754 = vst.msk [vmem:[%s175 + $0x70] sm:$0xf] %vm1725, %v1689
      %1755 = vst.msk [vmem:[%s175 + $0x74] sm:$0xf] %vm1725, %v1690
      %1756 = vst.msk [vmem:[%s175 + $0x78] sm:$0xf] %vm1725, %v1691
      %1757 = vst.msk [vmem:[%s175 + $0x7c] sm:$0xf] %vm1725, %v1692
      %s1758 = smul.u32 32, %s14
      %p1759 = scmp.lt.s32.totalorder %s1758, 63
      %s1760 = scalar_select %p1759, %s1758, 63
      %s1761 = smul.addr %s1760, 4
      %s1762 = scalar_lea.vmem %s3, %s1761
      // Predicated region
      $region33: #{discriminator_forward.8} parent=31 // pred_check
        %p1763 = pneg %p100
      $region34: #{discriminator_forward.8} parent=31 // pred_check_branch
        %1765 = sbr.rel (%p1763) target = $region36
      $region35: #{discriminator_forward.8} parent=31 // pred_region
        %s1766 = smul.u32 32, %s14
      $region36: #{discriminator_forward.8} parent=31 // pred_fallthru
        _
    $region32: #{discriminator_forward.8} parent=5 // pred_fallthru
      _
    %p1767 = scmp.le.s32.totalorder 2, %s9
    // Predicated region
    $region37: #{discriminator_forward.8} parent=5 // pred_check
      %p1768 = pneg %p1767
    $region38: #{discriminator_forward.8} parent=5 // pred_check_branch
      %1770 = sbr.rel (%p1768) target = $region40
    $region39: #{discriminator_forward.8} parent=5 // pred_region
      %s1771 = ssub.s32 %s9, 2
      // Predicated region
      $region41: #{discriminator_forward.8} parent=39 // pred_check
        %p1772 = pneg %p106
      $region42: #{discriminator_forward.8} parent=39 // pred_check_branch
        %1774 = sbr.rel (%p1772) target = $region44
      $region43: #{discriminator_forward.8} parent=39 // pred_region
        %s1775 = smul.u32 32, %s15
        %p1776 = scmp.lt.s32.totalorder %s1775, 63
        %s1777 = scalar_select %p1776, %s1775, 63
        %s1778 = smul.addr %s1777, 4
        %s1779 = scalar_lea.vmem %s3, %s1778
      $region44: #{discriminator_forward.8} parent=39 // pred_fallthru
        _
    $region40: #{discriminator_forward.8} parent=5 // pred_fallthru
      _
  $region6: #{discriminator_forward.8} parent=0 // loop_footer
    %s13 = sadd.s32 1, %s9
  $region7: #{discriminator_forward.8} parent=0 // loop_footer_branch
    %8 = sbr.rel target = $region3
  $region8: #{discriminator_forward.8} parent=0 // loop_exit
    _

// kernel: discriminator_forward.9
$region0: #{discriminator_forward.9}
  #allocation0 [shape = 'u32[]', space=smem, size = 0x4, offset = 0x4, fixed_abs, tag = 'smem constant byte address 0x4 - core index']
  #allocation1 [shape = 'u32[144,128]{1,0:T(1,128)}', space=vmem, size = 0x12000, scoped, tag = 'internal scratch']
  %s0 = inlined_call_operand.vmem [shape: bf16[512,576], index: 0, kind: input, shape index: {}]
  %s1 = inlined_call_operand.vmem [shape: bf16[576,128], index: 1, kind: input, shape index: {}]
  %s2 = inlined_call_operand.vmem [shape: f32[1,128], index: 2, kind: input, shape index: {}]
  %s3 = inlined_call_operand.vmem [shape: bf16[512,128], index: 3, kind: output, shape index: {}]
  %s4 = sld [smem:[#allocation0]]
  $region45: #{discriminator_forward.9} parent=0
    _
  %s6 = ssub.s32 1, %s4
  %s7 = scalar_select 0, %s6, %s4
  loop: start=0, step=1, limit=4
  $region2: #{discriminator_forward.9} parent=0 // loop_pre_header
    _
  $region3: #{discriminator_forward.9} parent=0 // loop_header
    %s9 = sphi 0, %s13
    %p10 = scmp.ge.s32.totalorder %s9, 4
    %s19 = sphi 0, %s21
    %s22 = sphi 0, %s19
    %s23 = sphi 0, %s22
    %s39 = sphi 0, %s23
    %s43 = sphi 0, %s43
    %s45 = sphi 0, %s43
    %s46 = sphi 0, %s45
    %s60 = sphi 0, %s46
    %s64 = sphi 0, %s64
    %s66 = sphi 0, %s64
    %s67 = sphi 0, %s66
    %s81 = sphi 0, %s67
    %s87 = sphi 0, %s89
    %s90 = sphi 0, %s87
    %s91 = sphi 0, %s90
    %s107 = sphi 0, %s91
  $region4: #{discriminator_forward.9} parent=0 // loop_header_branch
    %12 = sbr.rel (%p10) target = $region8
  $region5: #{discriminator_forward.9} parent=0 // loop_body
    %s14 = ssub.s32 %s9, 1
    %s15 = ssub.s32 %s9, 2
    %s16 = sadd.s32 %s9, 1
    %s17 = ssub.s32 %s9, %s16
    %p18 = scmp.eq.s32.totalorder %s17, 0
    %s20 = sadd.s32 %s19, 1
    %s21 = scalar_select %p18, %s19, %s20
    %p24 = pneg %p18
    %p25 = scmp.eq.s32.totalorder %s9, 1
    %p26 = por %p24, %p25
    %p27 = scmp.ne.s32.totalorder %s19, %s22
    %p28 = scmp.eq.s32.totalorder %s9, 0
    %p29 = por %p27, %p28
    %p30 = scmp.ne.s32.totalorder %s19, %s22
    %p31 = scmp.eq.s32.totalorder %s14, 1
    %p32 = por %p30, %p31
    %p33 = scmp.ne.s32.totalorder %s22, %s23
    %p34 = scmp.eq.s32.totalorder %s14, 0
    %p35 = por %p33, %p34
    %p36 = scmp.ne.s32.totalorder %s22, %s23
    %p37 = scmp.eq.s32.totalorder %s15, 1
    %p38 = por %p36, %p37
    %p40 = scmp.ne.s32.totalorder %s23, %s39
    %p41 = scmp.eq.s32.totalorder %s15, 0
    %p42 = por %p40, %p41
    %s44 = sadd.s32 %s43, 1
    %p47 = scmp.eq.s32.totalorder %s9, 1
    %p48 = scmp.ne.s32.totalorder %s43, %s45
    %p49 = scmp.eq.s32.totalorder %s9, 0
    %p50 = por %p48, %p49
    %p51 = scmp.ne.s32.totalorder %s43, %s45
    %p52 = scmp.eq.s32.totalorder %s14, 1
    %p53 = por %p51, %p52
    %p54 = scmp.ne.s32.totalorder %s45, %s46
    %p55 = scmp.eq.s32.totalorder %s14, 0
    %p56 = por %p54, %p55
    %p57 = scmp.ne.s32.totalorder %s45, %s46
    %p58 = scmp.eq.s32.totalorder %s15, 1
    %p59 = por %p57, %p58
    %p61 = scmp.ne.s32.totalorder %s46, %s60
    %p62 = scmp.eq.s32.totalorder %s15, 0
    %p63 = por %p61, %p62
    %s65 = sadd.s32 %s64, 1
    %p68 = scmp.eq.s32.totalorder %s9, 1
    %p69 = scmp.ne.s32.totalorder %s64, %s66
    %p70 = scmp.eq.s32.totalorder %s9, 0
    %p71 = por %p69, %p70
    %p72 = scmp.ne.s32.totalorder %s64, %s66
    %p73 = scmp.eq.s32.totalorder %s14, 1
    %p74 = por %p72, %p73
    %p75 = scmp.ne.s32.totalorder %s66, %s67
    %p76 = scmp.eq.s32.totalorder %s14, 0
    %p77 = por %p75, %p76
    %p78 = scmp.ne.s32.totalorder %s66, %s67
    %p79 = scmp.eq.s32.totalorder %s15, 1
    %p80 = por %p78, %p79
    %p82 = scmp.ne.s32.totalorder %s67, %s81
    %p83 = scmp.eq.s32.totalorder %s15, 0
    %p84 = por %p82, %p83
    %s85 = ssub.s32 %s9, %s16
    %p86 = scmp.eq.s32.totalorder %s85, 0
    %s88 = sadd.s32 %s87, 1
    %s89 = scalar_select %p86, %s87, %s88
    %p92 = pneg %p86
    %p93 = scmp.eq.s32.totalorder %s9, 1
    %p94 = por %p92, %p93
    %p95 = scmp.ne.s32.totalorder %s87, %s90
    %p96 = scmp.eq.s32.totalorder %s9, 0
    %p97 = por %p95, %p96
    %p98 = scmp.ne.s32.totalorder %s87, %s90
    %p99 = scmp.eq.s32.totalorder %s14, 1
    %p100 = por %p98, %p99
    %p101 = scmp.ne.s32.totalorder %s90, %s91
    %p102 = scmp.eq.s32.totalorder %s14, 0
    %p103 = por %p101, %p102
    %p104 = scmp.ne.s32.totalorder %s90, %s91
    %p105 = scmp.eq.s32.totalorder %s15, 1
    %p106 = por %p104, %p105
    %p108 = scmp.ne.s32.totalorder %s91, %s107
    %p109 = scmp.eq.s32.totalorder %s15, 0
    %p110 = por %p108, %p109
    %p111 = scmp.le.s32.totalorder 1, %s9
    %p112 = scmp.lt.s32.totalorder %s9, 3
    %p113 = pnand %p111, %p112
    %p114 = pneg %p113
    // Predicated region
    $region9: #{discriminator_forward.9} parent=5 // pred_check
      _
    $region10: #{discriminator_forward.9} parent=5 // pred_check_branch
      %116 = sbr.rel (%p113) target = $region12
    $region11: #{discriminator_forward.9} parent=5 // pred_region
      %s117 = ssub.s32 %s9, 1
      // Predicated region
      $region13: #{discriminator_forward.9} parent=11 // pred_check
        %p118 = pneg %p56
      $region14: #{discriminator_forward.9} parent=11 // pred_check_branch
        %120 = sbr.rel (%p118) target = $region16
      $region15: #{discriminator_forward.9} parent=11 // pred_region
        _
      $region16: #{discriminator_forward.9} parent=11 // pred_fallthru
        _
      // Predicated region
      $region17: #{discriminator_forward.9} parent=11 // pred_check
        %p121 = pneg %p77
      $region18: #{discriminator_forward.9} parent=11 // pred_check_branch
        %123 = sbr.rel (%p121) target = $region20
      $region19: #{discriminator_forward.9} parent=11 // pred_region
        _
      $region20: #{discriminator_forward.9} parent=11 // pred_fallthru
        _
    $region12: #{discriminator_forward.9} parent=5 // pred_fallthru
      _
    %p124 = scmp.lt.s32.totalorder %s9, 2
    // Predicated region
    $region21: #{discriminator_forward.9} parent=5 // pred_check
      %p125 = pneg %p124
    $region22: #{discriminator_forward.9} parent=5 // pred_check_branch
      %127 = sbr.rel (%p125) target = $region24
    $region23: #{discriminator_forward.9} parent=5 // pred_region
      // Predicated region
      $region25: #{discriminator_forward.9} parent=23 // pred_check
        %p128 = pneg %p29
      $region26: #{discriminator_forward.9} parent=23 // pred_check_branch
        %130 = sbr.rel (%p128) target = $region28
      $region27: #{discriminator_forward.9} parent=23 // pred_region
        %s131 = smul.u32 32, %s9
        %p132 = scmp.lt.s32.totalorder %s131, 63
        %s133 = scalar_select %p132, %s131, 63
        %s134 = smul.addr %s133, 5
        %s135 = smul.addr %s134, 4
        %s136 = scalar_lea.vmem %s0, %s135
        %s137 = smul.u32 32, %s9
      $region28: #{discriminator_forward.9} parent=23 // pred_fallthru
        _
    $region24: #{discriminator_forward.9} parent=5 // pred_fallthru
      _
    %p138 = scmp.le.s32.totalorder 1, %s9
    %p139 = scmp.lt.s32.totalorder %s9, 3
    %p140 = pnand %p138, %p139
    %p141 = pneg %p140
    // Predicated region
    $region29: #{discriminator_forward.9} parent=5 // pred_check
      _
    $region30: #{discriminator_forward.9} parent=5 // pred_check_branch
      %143 = sbr.rel (%p140) target = $region32
    $region31: #{discriminator_forward.9} parent=5 // pred_region
      %s144 = ssub.s32 %s9, 1
      %s145 = smul.u32 32, %s14
      %p146 = scmp.lt.s32.totalorder %s145, 63
      %s147 = scalar_select %p146, %s145, 63
      %s148 = smul.addr %s147, 5
      %s149 = smul.addr %s148, 4
      %s150 = scalar_lea.vmem %s0, %s149
      %p151 = pneg %p35
      %p152 = pneg %p32
      %p153 = pneg %p56
      %p154 = pneg %p53
      %p155 = pneg %p77
      %p156 = pneg %p74
      %p157 = pneg %p103
      %p158 = pneg %p100
      %s159 = smul.u32 32, %s14
      %p160 = scmp.lt.s32.totalorder %s159, 63
      %s161 = scalar_select %p160, %s159, 63
      %s162 = smul.addr %s161, 4
      %s163 = scalar_lea.vmem %s3, %s162
      %s164 = smul.u32 32, %s14
      %p165 = scmp.lt.s32.totalorder %s164, 63
      %s166 = scalar_select %p165, %s164, 63
      %s167 = smul.addr %s166, 5
      %s168 = smul.addr %s167, 4
      %s169 = scalar_lea.vmem %s0, %s168
      %s170 = smul.u32 32, %s14
      %s171 = smul.u32 32, %s14
      %p172 = scmp.lt.s32.totalorder %s171, 63
      %s173 = scalar_select %p172, %s171, 63
      %s174 = smul.addr %s173, 4
      %s175 = scalar_lea.vmem %s3, %s174
      %s176 = smul.u32 32, %s14
      %v178 = vld [vmem:[%s169] sm:$0xff]
      %v179 = vld [vmem:[%s169 + $0x8] sm:$0xff]
      %v180 = vld [vmem:[%s169 + $0x10] sm:$0xf]
      %v181 = vld [vmem:[%s169 + $0x14] sm:$0xff]
      %v182 = vld [vmem:[%s169 + $0x1c] sm:$0xff]
      %v183 = vld [vmem:[%s169 + $0x24] sm:$0xf]
      %v184 = vld [vmem:[%s169 + $0x28] sm:$0xff]
      %v185 = vld [vmem:[%s169 + $0x30] sm:$0xff]
      %v186 = vld [vmem:[%s169 + $0x38] sm:$0xf]
      %v187 = vld [vmem:[%s169 + $0x3c] sm:$0xff]
      %v188 = vld [vmem:[%s169 + $0x44] sm:$0xff]
      %v189 = vld [vmem:[%s169 + $0x4c] sm:$0xf]
      %v190 = vld [vmem:[%s169 + $0x50] sm:$0xff]
      %v191 = vld [vmem:[%s169 + $0x58] sm:$0xff]
      %v192 = vld [vmem:[%s169 + $0x60] sm:$0xf]
      %v193 = vld [vmem:[%s169 + $0x64] sm:$0xff]
      %v194 = vld [vmem:[%s169 + $0x6c] sm:$0xff]
      %v195 = vld [vmem:[%s169 + $0x74] sm:$0xf]
      %v196 = vld [vmem:[%s169 + $0x78] sm:$0xff]
      %v197 = vld [vmem:[%s169 + $0x80] sm:$0xff]
      %v198 = vld [vmem:[%s169 + $0x88] sm:$0xf]
      %v199 = vld [vmem:[%s169 + $0x8c] sm:$0xff]
      %v200 = vld [vmem:[%s169 + $0x94] sm:$0xff]
      %v201 = vld [vmem:[%s169 + $0x9c] sm:$0xf]
      %v202 = vld [vmem:[%s169 + $0xa0] sm:$0xff]
      %v203 = vld [vmem:[%s169 + $0xa8] sm:$0xff]
      %v204 = vld [vmem:[%s169 + $0xb0] sm:$0xf]
      %v205 = vld [vmem:[%s169 + $0xb4] sm:$0xff]
      %v206 = vld [vmem:[%s169 + $0xbc] sm:$0xff]
      %v207 = vld [vmem:[%s169 + $0xc4] sm:$0xf]
      %v208 = vld [vmem:[%s169 + $0xc8] sm:$0xff]
      %v209 = vld [vmem:[%s169 + $0xd0] sm:$0xff]
      %v210 = vld [vmem:[%s169 + $0xd8] sm:$0xf]
      %v211 = vld [vmem:[%s169 + $0xdc] sm:$0xff]
      %v212 = vld [vmem:[%s169 + $0xe4] sm:$0xff]
      %v213 = vld [vmem:[%s169 + $0xec] sm:$0xf]
      %v214 = vld [vmem:[%s169 + $0xf0] sm:$0xff]
      %v215 = vld [vmem:[%s169 + $0xf8] sm:$0xff]
      %v216 = vld [vmem:[%s169 + $0x100] sm:$0xf]
      %v217 = vld [vmem:[%s169 + $0x104] sm:$0xff]
      %v218 = vld [vmem:[%s169 + $0x10c] sm:$0xff]
      %v219 = vld [vmem:[%s169 + $0x114] sm:$0xf]
      %v220 = vld [vmem:[%s169 + $0x118] sm:$0xff]
      %v221 = vld [vmem:[%s169 + $0x120] sm:$0xff]
      %v222 = vld [vmem:[%s169 + $0x128] sm:$0xf]
      %v223 = vld [vmem:[%s169 + $0x12c] sm:$0xff]
      %v224 = vld [vmem:[%s169 + $0x134] sm:$0xff]
      %v225 = vld [vmem:[%s169 + $0x13c] sm:$0xf]
      %v226 = vld [vmem:[%s169 + $0x140] sm:$0xff]
      %v227 = vld [vmem:[%s169 + $0x148] sm:$0xff]
      %v228 = vld [vmem:[%s169 + $0x150] sm:$0xf]
      %v229 = vld [vmem:[%s169 + $0x154] sm:$0xff]
      %v230 = vld [vmem:[%s169 + $0x15c] sm:$0xff]
      %v231 = vld [vmem:[%s169 + $0x164] sm:$0xf]
      %v232 = vld [vmem:[%s169 + $0x168] sm:$0xff]
      %v233 = vld [vmem:[%s169 + $0x170] sm:$0xff]
      %v234 = vld [vmem:[%s169 + $0x178] sm:$0xf]
      %v235 = vld [vmem:[%s169 + $0x17c] sm:$0xff]
      %v236 = vld [vmem:[%s169 + $0x184] sm:$0xff]
      %v237 = vld [vmem:[%s169 + $0x18c] sm:$0xf]
      %v238 = vld [vmem:[%s169 + $0x190] sm:$0xff]
      %v239 = vld [vmem:[%s169 + $0x198] sm:$0xff]
      %v240 = vld [vmem:[%s169 + $0x1a0] sm:$0xf]
      %v241 = vld [vmem:[%s169 + $0x1a4] sm:$0xff]
      %v242 = vld [vmem:[%s169 + $0x1ac] sm:$0xff]
      %v243 = vld [vmem:[%s169 + $0x1b4] sm:$0xf]
      %v244 = vld [vmem:[%s169 + $0x1b8] sm:$0xff]
      %v245 = vld [vmem:[%s169 + $0x1c0] sm:$0xff]
      %v246 = vld [vmem:[%s169 + $0x1c8] sm:$0xf]
      %v247 = vld [vmem:[%s169 + $0x1cc] sm:$0xff]
      %v248 = vld [vmem:[%s169 + $0x1d4] sm:$0xff]
      %v249 = vld [vmem:[%s169 + $0x1dc] sm:$0xf]
      %v250 = vld [vmem:[%s169 + $0x1e0] sm:$0xff]
      %v251 = vld [vmem:[%s169 + $0x1e8] sm:$0xff]
      %v252 = vld [vmem:[%s169 + $0x1f0] sm:$0xf]
      %v253 = vld [vmem:[%s169 + $0x1f4] sm:$0xff]
      %v254 = vld [vmem:[%s169 + $0x1fc] sm:$0xff]
      %v255 = vld [vmem:[%s169 + $0x204] sm:$0xf]
      %v256 = vld [vmem:[%s169 + $0x208] sm:$0xff]
      %v257 = vld [vmem:[%s169 + $0x210] sm:$0xff]
      %v258 = vld [vmem:[%s169 + $0x218] sm:$0xf]
      %v259 = vld [vmem:[%s169 + $0x21c] sm:$0xff]
      %v260 = vld [vmem:[%s169 + $0x224] sm:$0xff]
      %v261 = vld [vmem:[%s169 + $0x22c] sm:$0xf]
      %v262 = vld [vmem:[%s169 + $0x230] sm:$0xff]
      %v263 = vld [vmem:[%s169 + $0x238] sm:$0xff]
      %v264 = vld [vmem:[%s169 + $0x240] sm:$0xf]
      %v265 = vld [vmem:[%s169 + $0x244] sm:$0xff]
      %v266 = vld [vmem:[%s169 + $0x24c] sm:$0xff]
      %v267 = vld [vmem:[%s169 + $0x254] sm:$0xf]
      %v268 = vld [vmem:[%s169 + $0x258] sm:$0xff]
      %v269 = vld [vmem:[%s169 + $0x260] sm:$0xff]
      %v270 = vld [vmem:[%s169 + $0x268] sm:$0xf]
      %v271 = vld [vmem:[%s169 + $0x26c] sm:$0xff]
      %v272 = vld [vmem:[%s169 + $0x274] sm:$0xff]
      %v273 = vld [vmem:[%s169 + $0x27c] sm:$0xf]
      %v274 = vld [vmem:[%s1] sm:$0xf]
      %v275 = vld [vmem:[%s1 + $0x4] sm:$0xf]
      %v276 = vld [vmem:[%s1 + $0x8] sm:$0xf]
      %v277 = vld [vmem:[%s1 + $0xc] sm:$0xf]
      %v278 = vld [vmem:[%s1 + $0x10] sm:$0xf]
      %v279 = vld [vmem:[%s1 + $0x14] sm:$0xf]
      %v280 = vld [vmem:[%s1 + $0x18] sm:$0xf]
      %v281 = vld [vmem:[%s1 + $0x1c] sm:$0xf]
      %v282 = vld [vmem:[%s1 + $0x20] sm:$0xf]
      %v283 = vld [vmem:[%s1 + $0x24] sm:$0xf]
      %v284 = vld [vmem:[%s1 + $0x28] sm:$0xf]
      %v285 = vld [vmem:[%s1 + $0x2c] sm:$0xf]
      %v286 = vld [vmem:[%s1 + $0x30] sm:$0xf]
      %v287 = vld [vmem:[%s1 + $0x34] sm:$0xf]
      %v288 = vld [vmem:[%s1 + $0x38] sm:$0xf]
      %v289 = vld [vmem:[%s1 + $0x3c] sm:$0xf]
      %v290 = vld [vmem:[%s1 + $0x40] sm:$0xf]
      %v291 = vld [vmem:[%s1 + $0x44] sm:$0xf]
      %v292 = vld [vmem:[%s1 + $0x48] sm:$0xf]
      %v293 = vld [vmem:[%s1 + $0x4c] sm:$0xf]
      %v294 = vld [vmem:[%s1 + $0x50] sm:$0xf]
      %v295 = vld [vmem:[%s1 + $0x54] sm:$0xf]
      %v296 = vld [vmem:[%s1 + $0x58] sm:$0xf]
      %v297 = vld [vmem:[%s1 + $0x5c] sm:$0xf]
      %v298 = vld [vmem:[%s1 + $0x60] sm:$0xf]
      %v299 = vld [vmem:[%s1 + $0x64] sm:$0xf]
      %v300 = vld [vmem:[%s1 + $0x68] sm:$0xf]
      %v301 = vld [vmem:[%s1 + $0x6c] sm:$0xf]
      %v302 = vld [vmem:[%s1 + $0x70] sm:$0xf]
      %v303 = vld [vmem:[%s1 + $0x74] sm:$0xf]
      %v304 = vld [vmem:[%s1 + $0x78] sm:$0xf]
      %v305 = vld [vmem:[%s1 + $0x7c] sm:$0xf]
      %v306 = vld [vmem:[%s1 + $0x80] sm:$0xf]
      %v307 = vld [vmem:[%s1 + $0x84] sm:$0xf]
      %v308 = vld [vmem:[%s1 + $0x88] sm:$0xf]
      %v309 = vld [vmem:[%s1 + $0x8c] sm:$0xf]
      %v310 = vld [vmem:[%s1 + $0x90] sm:$0xf]
      %v311 = vld [vmem:[%s1 + $0x94] sm:$0xf]
      %v312 = vld [vmem:[%s1 + $0x98] sm:$0xf]
      %v313 = vld [vmem:[%s1 + $0x9c] sm:$0xf]
      %v314 = vld [vmem:[%s1 + $0xa0] sm:$0xf]
      %v315 = vld [vmem:[%s1 + $0xa4] sm:$0xf]
      %v316 = vld [vmem:[%s1 + $0xa8] sm:$0xf]
      %v317 = vld [vmem:[%s1 + $0xac] sm:$0xf]
      %v318 = vld [vmem:[%s1 + $0xb0] sm:$0xf]
      %v319 = vld [vmem:[%s1 + $0xb4] sm:$0xf]
      %v320 = vld [vmem:[%s1 + $0xb8] sm:$0xf]
      %v321 = vld [vmem:[%s1 + $0xbc] sm:$0xf]
      %v322 = vld [vmem:[%s1 + $0xc0] sm:$0xf]
      %v323 = vld [vmem:[%s1 + $0xc4] sm:$0xf]
      %v324 = vld [vmem:[%s1 + $0xc8] sm:$0xf]
      %v325 = vld [vmem:[%s1 + $0xcc] sm:$0xf]
      %v326 = vld [vmem:[%s1 + $0xd0] sm:$0xf]
      %v327 = vld [vmem:[%s1 + $0xd4] sm:$0xf]
      %v328 = vld [vmem:[%s1 + $0xd8] sm:$0xf]
      %v329 = vld [vmem:[%s1 + $0xdc] sm:$0xf]
      %v330 = vld [vmem:[%s1 + $0xe0] sm:$0xf]
      %v331 = vld [vmem:[%s1 + $0xe4] sm:$0xf]
      %v332 = vld [vmem:[%s1 + $0xe8] sm:$0xf]
      %v333 = vld [vmem:[%s1 + $0xec] sm:$0xf]
      %v334 = vld [vmem:[%s1 + $0xf0] sm:$0xf]
      %v335 = vld [vmem:[%s1 + $0xf4] sm:$0xf]
      %v336 = vld [vmem:[%s1 + $0xf8] sm:$0xf]
      %v337 = vld [vmem:[%s1 + $0xfc] sm:$0xf]
      %v338 = vld [vmem:[%s1 + $0x100] sm:$0xf]
      %v339 = vld [vmem:[%s1 + $0x104] sm:$0xf]
      %v340 = vld [vmem:[%s1 + $0x108] sm:$0xf]
      %v341 = vld [vmem:[%s1 + $0x10c] sm:$0xf]
      %v342 = vld [vmem:[%s1 + $0x110] sm:$0xf]
      %v343 = vld [vmem:[%s1 + $0x114] sm:$0xf]
      %v344 = vld [vmem:[%s1 + $0x118] sm:$0xf]
      %v345 = vld [vmem:[%s1 + $0x11c] sm:$0xf]
      %v346 = vld [vmem:[%s2] sm:$0x1]
      %v348 = vlaneseq
      %v349 = vshrl.u32 %v348, 7
      %v350 = vsub.s32 0, %v349
      %v351 = vrot.slane %v346, %v350
      %v449 = vunpack.c.l.b16 %v178
      %v450 = vunpack.c.h.b16 %v178
      %v451 = vunpack.c.l.b16 %v179
      %v452 = vunpack.c.h.b16 %v179
      %v453 = vunpack.c.l.b16 %v180
      %v454 = vunpack.c.l.b16 %v181
      %v455 = vunpack.c.h.b16 %v181
      %v456 = vunpack.c.l.b16 %v182
      %v457 = vunpack.c.h.b16 %v182
      %v458 = vunpack.c.l.b16 %v183
      %v459 = vunpack.c.l.b16 %v184
      %v460 = vunpack.c.h.b16 %v184
      %v461 = vunpack.c.l.b16 %v185
      %v462 = vunpack.c.h.b16 %v185
      %v463 = vunpack.c.l.b16 %v186
      %v464 = vunpack.c.l.b16 %v187
      %v465 = vunpack.c.h.b16 %v187
      %v466 = vunpack.c.l.b16 %v188
      %v467 = vunpack.c.h.b16 %v188
      %v468 = vunpack.c.l.b16 %v189
      %v469 = vunpack.c.l.b16 %v190
      %v470 = vunpack.c.h.b16 %v190
      %v471 = vunpack.c.l.b16 %v191
      %v472 = vunpack.c.h.b16 %v191
      %v473 = vunpack.c.l.b16 %v192
      %v474 = vunpack.c.l.b16 %v193
      %v475 = vunpack.c.h.b16 %v193
      %v476 = vunpack.c.l.b16 %v194
      %v477 = vunpack.c.h.b16 %v194
      %v478 = vunpack.c.l.b16 %v195
      %v479 = vunpack.c.l.b16 %v196
      %v480 = vunpack.c.h.b16 %v196
      %v481 = vunpack.c.l.b16 %v197
      %v482 = vunpack.c.h.b16 %v197
      %v483 = vunpack.c.l.b16 %v198
      %v484 = vunpack.c.l.b16 %v199
      %v485 = vunpack.c.h.b16 %v199
      %v486 = vunpack.c.l.b16 %v200
      %v487 = vunpack.c.h.b16 %v200
      %v488 = vunpack.c.l.b16 %v201
      %v489 = vunpack.c.l.b16 %v202
      %v490 = vunpack.c.h.b16 %v202
      %v491 = vunpack.c.l.b16 %v203
      %v492 = vunpack.c.h.b16 %v203
      %v493 = vunpack.c.l.b16 %v204
      %v494 = vunpack.c.l.b16 %v205
      %v495 = vunpack.c.h.b16 %v205
      %v496 = vunpack.c.l.b16 %v206
      %v497 = vunpack.c.h.b16 %v206
      %v498 = vunpack.c.l.b16 %v207
      %v499 = vunpack.c.l.b16 %v208
      %v500 = vunpack.c.h.b16 %v208
      %v501 = vunpack.c.l.b16 %v209
      %v502 = vunpack.c.h.b16 %v209
      %v503 = vunpack.c.l.b16 %v210
      %v504 = vunpack.c.l.b16 %v211
      %v505 = vunpack.c.h.b16 %v211
      %v506 = vunpack.c.l.b16 %v212
      %v507 = vunpack.c.h.b16 %v212
      %v508 = vunpack.c.l.b16 %v213
      %v509 = vunpack.c.l.b16 %v214
      %v510 = vunpack.c.h.b16 %v214
      %v511 = vunpack.c.l.b16 %v215
      %v512 = vunpack.c.h.b16 %v215
      %v513 = vunpack.c.l.b16 %v216
      %v514 = vunpack.c.l.b16 %v217
      %v515 = vunpack.c.h.b16 %v217
      %v516 = vunpack.c.l.b16 %v218
      %v517 = vunpack.c.h.b16 %v218
      %v518 = vunpack.c.l.b16 %v219
      %v519 = vunpack.c.l.b16 %v220
      %v520 = vunpack.c.h.b16 %v220
      %v521 = vunpack.c.l.b16 %v221
      %v522 = vunpack.c.h.b16 %v221
      %v523 = vunpack.c.l.b16 %v222
      %v524 = vunpack.c.l.b16 %v223
      %v525 = vunpack.c.h.b16 %v223
      %v526 = vunpack.c.l.b16 %v224
      %v527 = vunpack.c.h.b16 %v224
      %v528 = vunpack.c.l.b16 %v225
      %v529 = vunpack.c.l.b16 %v226
      %v530 = vunpack.c.h.b16 %v226
      %v531 = vunpack.c.l.b16 %v227
      %v532 = vunpack.c.h.b16 %v227
      %v533 = vunpack.c.l.b16 %v228
      %v534 = vunpack.c.l.b16 %v229
      %v535 = vunpack.c.h.b16 %v229
      %v536 = vunpack.c.l.b16 %v230
      %v537 = vunpack.c.h.b16 %v230
      %v538 = vunpack.c.l.b16 %v231
      %v539 = vunpack.c.l.b16 %v232
      %v540 = vunpack.c.h.b16 %v232
      %v541 = vunpack.c.l.b16 %v233
      %v542 = vunpack.c.h.b16 %v233
      %v543 = vunpack.c.l.b16 %v234
      %v544 = vunpack.c.l.b16 %v235
      %v545 = vunpack.c.h.b16 %v235
      %v546 = vunpack.c.l.b16 %v236
      %v547 = vunpack.c.h.b16 %v236
      %v548 = vunpack.c.l.b16 %v237
      %v549 = vunpack.c.l.b16 %v238
      %v550 = vunpack.c.h.b16 %v238
      %v551 = vunpack.c.l.b16 %v239
      %v552 = vunpack.c.h.b16 %v239
      %v553 = vunpack.c.l.b16 %v240
      %v554 = vunpack.c.l.b16 %v241
      %v555 = vunpack.c.h.b16 %v241
      %v556 = vunpack.c.l.b16 %v242
      %v557 = vunpack.c.h.b16 %v242
      %v558 = vunpack.c.l.b16 %v243
      %v559 = vunpack.c.l.b16 %v244
      %v560 = vunpack.c.h.b16 %v244
      %v561 = vunpack.c.l.b16 %v245
      %v562 = vunpack.c.h.b16 %v245
      %v563 = vunpack.c.l.b16 %v246
      %v564 = vunpack.c.l.b16 %v247
      %v565 = vunpack.c.h.b16 %v247
      %v566 = vunpack.c.l.b16 %v248
      %v567 = vunpack.c.h.b16 %v248
      %v568 = vunpack.c.l.b16 %v249
      %v569 = vunpack.c.l.b16 %v250
      %v570 = vunpack.c.h.b16 %v250
      %v571 = vunpack.c.l.b16 %v251
      %v572 = vunpack.c.h.b16 %v251
      %v573 = vunpack.c.l.b16 %v252
      %v574 = vunpack.c.l.b16 %v253
      %v575 = vunpack.c.h.b16 %v253
      %v576 = vunpack.c.l.b16 %v254
      %v577 = vunpack.c.h.b16 %v254
      %v578 = vunpack.c.l.b16 %v255
      %v579 = vunpack.c.l.b16 %v256
      %v580 = vunpack.c.h.b16 %v256
      %v581 = vunpack.c.l.b16 %v257
      %v582 = vunpack.c.h.b16 %v257
      %v583 = vunpack.c.l.b16 %v258
      %v584 = vunpack.c.l.b16 %v259
      %v585 = vunpack.c.h.b16 %v259
      %v586 = vunpack.c.l.b16 %v260
      %v587 = vunpack.c.h.b16 %v260
      %v588 = vunpack.c.l.b16 %v261
      %v589 = vunpack.c.l.b16 %v262
      %v590 = vunpack.c.h.b16 %v262
      %v591 = vunpack.c.l.b16 %v263
      %v592 = vunpack.c.h.b16 %v263
      %v593 = vunpack.c.l.b16 %v264
      %v594 = vunpack.c.l.b16 %v265
      %v595 = vunpack.c.h.b16 %v265
      %v596 = vunpack.c.l.b16 %v266
      %v597 = vunpack.c.h.b16 %v266
      %v598 = vunpack.c.l.b16 %v267
      %v599 = vunpack.c.l.b16 %v268
      %v600 = vunpack.c.h.b16 %v268
      %v601 = vunpack.c.l.b16 %v269
      %v602 = vunpack.c.h.b16 %v269
      %v603 = vunpack.c.l.b16 %v270
      %v604 = vunpack.c.l.b16 %v271
      %v605 = vunpack.c.h.b16 %v271
      %v606 = vunpack.c.l.b16 %v272
      %v607 = vunpack.c.h.b16 %v272
      %v608 = vunpack.c.l.b16 %v273
      %v609 = vpack.c.b16 %v454, %v449
      %v610 = vpack.c.b16 %v455, %v450
      %v611 = vpack.c.b16 %v456, %v451
      %v612 = vpack.c.b16 %v457, %v452
      %v613 = vpack.c.b16 %v458, %v453
      %v614 = vpack.c.b16 %v464, %v459
      %v615 = vpack.c.b16 %v465, %v460
      %v616 = vpack.c.b16 %v466, %v461
      %v617 = vpack.c.b16 %v467, %v462
      %v618 = vpack.c.b16 %v468, %v463
      %v619 = vpack.c.b16 %v474, %v469
      %v620 = vpack.c.b16 %v475, %v470
      %v621 = vpack.c.b16 %v476, %v471
      %v622 = vpack.c.b16 %v477, %v472
      %v623 = vpack.c.b16 %v478, %v473
      %v624 = vpack.c.b16 %v484, %v479
      %v625 = vpack.c.b16 %v485, %v480
      %v626 = vpack.c.b16 %v486, %v481
      %v627 = vpack.c.b16 %v487, %v482
      %v628 = vpack.c.b16 %v488, %v483
      %v629 = vpack.c.b16 %v494, %v489
      %v630 = vpack.c.b16 %v495, %v490
      %v631 = vpack.c.b16 %v496, %v491
      %v632 = vpack.c.b16 %v497, %v492
      %v633 = vpack.c.b16 %v498, %v493
      %v634 = vpack.c.b16 %v504, %v499
      %v635 = vpack.c.b16 %v505, %v500
      %v636 = vpack.c.b16 %v506, %v501
      %v637 = vpack.c.b16 %v507, %v502
      %v638 = vpack.c.b16 %v508, %v503
      %v639 = vpack.c.b16 %v514, %v509
      %v640 = vpack.c.b16 %v515, %v510
      %v641 = vpack.c.b16 %v516, %v511
      %v642 = vpack.c.b16 %v517, %v512
      %v643 = vpack.c.b16 %v518, %v513
      %v644 = vpack.c.b16 %v524, %v519
      %v645 = vpack.c.b16 %v525, %v520
      %v646 = vpack.c.b16 %v526, %v521
      %v647 = vpack.c.b16 %v527, %v522
      %v648 = vpack.c.b16 %v528, %v523
      %v649 = vpack.c.b16 %v534, %v529
      %v650 = vpack.c.b16 %v535, %v530
      %v651 = vpack.c.b16 %v536, %v531
      %v652 = vpack.c.b16 %v537, %v532
      %v653 = vpack.c.b16 %v538, %v533
      %v654 = vpack.c.b16 %v544, %v539
      %v655 = vpack.c.b16 %v545, %v540
      %v656 = vpack.c.b16 %v546, %v541
      %v657 = vpack.c.b16 %v547, %v542
      %v658 = vpack.c.b16 %v548, %v543
      %v659 = vpack.c.b16 %v554, %v549
      %v660 = vpack.c.b16 %v555, %v550
      %v661 = vpack.c.b16 %v556, %v551
      %v662 = vpack.c.b16 %v557, %v552
      %v663 = vpack.c.b16 %v558, %v553
      %v664 = vpack.c.b16 %v564, %v559
      %v665 = vpack.c.b16 %v565, %v560
      %v666 = vpack.c.b16 %v566, %v561
      %v667 = vpack.c.b16 %v567, %v562
      %v668 = vpack.c.b16 %v568, %v563
      %v669 = vpack.c.b16 %v574, %v569
      %v670 = vpack.c.b16 %v575, %v570
      %v671 = vpack.c.b16 %v576, %v571
      %v672 = vpack.c.b16 %v577, %v572
      %v673 = vpack.c.b16 %v578, %v573
      %v674 = vpack.c.b16 %v584, %v579
      %v675 = vpack.c.b16 %v585, %v580
      %v676 = vpack.c.b16 %v586, %v581
      %v677 = vpack.c.b16 %v587, %v582
      %v678 = vpack.c.b16 %v588, %v583
      %v679 = vpack.c.b16 %v594, %v589
      %v680 = vpack.c.b16 %v595, %v590
      %v681 = vpack.c.b16 %v596, %v591
      %v682 = vpack.c.b16 %v597, %v592
      %v683 = vpack.c.b16 %v598, %v593
      %v684 = vpack.c.b16 %v604, %v599
      %v685 = vpack.c.b16 %v605, %v600
      %v686 = vpack.c.b16 %v606, %v601
      %v687 = vpack.c.b16 %v607, %v602
      %v688 = vpack.c.b16 %v608, %v603
      %v825 = vunpack.c.l.b16 %v274
      %v826 = vunpack.c.l.b16 %v275
      %v827 = vunpack.c.l.b16 %v276
      %v828 = vunpack.c.l.b16 %v277
      %v829 = vunpack.c.l.b16 %v278
      %v830 = vunpack.c.l.b16 %v279
      %v831 = vunpack.c.l.b16 %v280
      %v832 = vunpack.c.l.b16 %v281
      %v833 = vunpack.c.l.b16 %v282
      %v834 = vunpack.c.l.b16 %v283
      %v835 = vunpack.c.l.b16 %v284
      %v836 = vunpack.c.l.b16 %v285
      %v837 = vunpack.c.l.b16 %v286
      %v838 = vunpack.c.l.b16 %v287
      %v839 = vunpack.c.l.b16 %v288
      %v840 = vunpack.c.l.b16 %v289
      %v841 = vunpack.c.l.b16 %v290
      %v842 = vunpack.c.l.b16 %v291
      %v843 = vunpack.c.l.b16 %v292
      %v844 = vunpack.c.l.b16 %v293
      %v845 = vunpack.c.l.b16 %v294
      %v846 = vunpack.c.l.b16 %v295
      %v847 = vunpack.c.l.b16 %v296
      %v848 = vunpack.c.l.b16 %v297
      %v849 = vunpack.c.l.b16 %v298
      %v850 = vunpack.c.l.b16 %v299
      %v851 = vunpack.c.l.b16 %v300
      %v852 = vunpack.c.l.b16 %v301
      %v853 = vunpack.c.l.b16 %v302
      %v854 = vunpack.c.l.b16 %v303
      %v855 = vunpack.c.l.b16 %v304
      %v856 = vunpack.c.l.b16 %v305
      %v857 = vunpack.c.l.b16 %v306
      %v858 = vunpack.c.l.b16 %v307
      %v859 = vunpack.c.l.b16 %v308
      %v860 = vunpack.c.l.b16 %v309
      %v861 = vunpack.c.l.b16 %v310
      %v862 = vunpack.c.l.b16 %v311
      %v863 = vunpack.c.l.b16 %v312
      %v864 = vunpack.c.l.b16 %v313
      %v865 = vunpack.c.l.b16 %v314
      %v866 = vunpack.c.l.b16 %v315
      %v867 = vunpack.c.l.b16 %v316
      %v868 = vunpack.c.l.b16 %v317
      %v869 = vunpack.c.l.b16 %v318
      %v870 = vunpack.c.l.b16 %v319
      %v871 = vunpack.c.l.b16 %v320
      %v872 = vunpack.c.l.b16 %v321
      %v873 = vunpack.c.l.b16 %v322
      %v874 = vunpack.c.l.b16 %v323
      %v875 = vunpack.c.l.b16 %v324
      %v876 = vunpack.c.l.b16 %v325
      %v877 = vunpack.c.l.b16 %v326
      %v878 = vunpack.c.l.b16 %v327
      %v879 = vunpack.c.l.b16 %v328
      %v880 = vunpack.c.l.b16 %v329
      %v881 = vunpack.c.l.b16 %v330
      %v882 = vunpack.c.l.b16 %v331
      %v883 = vunpack.c.l.b16 %v332
      %v884 = vunpack.c.l.b16 %v333
      %v885 = vunpack.c.l.b16 %v334
      %v886 = vunpack.c.l.b16 %v335
      %v887 = vunpack.c.l.b16 %v336
      %v888 = vunpack.c.l.b16 %v337
      %v889 = vunpack.c.l.b16 %v338
      %v890 = vunpack.c.l.b16 %v339
      %v891 = vunpack.c.l.b16 %v340
      %v892 = vunpack.c.l.b16 %v341
      %v893 = vunpack.c.l.b16 %v342
      %v894 = vunpack.c.l.b16 %v343
      %v895 = vunpack.c.l.b16 %v344
      %v896 = vunpack.c.l.b16 %v345
      %v897 = vpack.c.b16 %v826, %v825
      %v898 = vpack.c.b16 %v828, %v827
      %v899 = vpack.c.b16 %v830, %v829
      %v900 = vpack.c.b16 %v832, %v831
      %v901 = vpack.c.b16 %v834, %v833
      %v902 = vpack.c.b16 %v836, %v835
      %v903 = vpack.c.b16 %v838, %v837
      %v904 = vpack.c.b16 %v840, %v839
      %v905 = vpack.c.b16 %v842, %v841
      %v906 = vpack.c.b16 %v844, %v843
      %v907 = vpack.c.b16 %v846, %v845
      %v908 = vpack.c.b16 %v848, %v847
      %v909 = vpack.c.b16 %v850, %v849
      %v910 = vpack.c.b16 %v852, %v851
      %v911 = vpack.c.b16 %v854, %v853
      %v912 = vpack.c.b16 %v856, %v855
      %v913 = vpack.c.b16 %v858, %v857
      %v914 = vpack.c.b16 %v860, %v859
      %v915 = vpack.c.b16 %v862, %v861
      %v916 = vpack.c.b16 %v864, %v863
      %v917 = vpack.c.b16 %v866, %v865
      %v918 = vpack.c.b16 %v868, %v867
      %v919 = vpack.c.b16 %v870, %v869
      %v920 = vpack.c.b16 %v872, %v871
      %v921 = vpack.c.b16 %v874, %v873
      %v922 = vpack.c.b16 %v876, %v875
      %v923 = vpack.c.b16 %v878, %v877
      %v924 = vpack.c.b16 %v880, %v879
      %v925 = vpack.c.b16 %v882, %v881
      %v926 = vpack.c.b16 %v884, %v883
      %v927 = vpack.c.b16 %v886, %v885
      %v928 = vpack.c.b16 %v888, %v887
      %v929 = vpack.c.b16 %v890, %v889
      %v930 = vpack.c.b16 %v892, %v891
      %v931 = vpack.c.b16 %v894, %v893
      %v932 = vpack.c.b16 %v896, %v895
      %vm969 = vcmask 523264
      %v971 = vsel %vm969, %v613, 0
      %v974 = vsel %vm969, %v618, 0
      %v977 = vsel %vm969, %v623, 0
      %v980 = vsel %vm969, %v628, 0
      %v983 = vsel %vm969, %v633, 0
      %v986 = vsel %vm969, %v638, 0
      %v989 = vsel %vm969, %v643, 0
      %v992 = vsel %vm969, %v648, 0
      %v995 = vsel %vm969, %v653, 0
      %v998 = vsel %vm969, %v658, 0
      %v1001 = vsel %vm969, %v663, 0
      %v1004 = vsel %vm969, %v668, 0
      %v1007 = vsel %vm969, %v673, 0
      %v1010 = vsel %vm969, %v678, 0
      %v1013 = vsel %vm969, %v683, 0
      %v1016 = vsel %vm969, %v688, 0
      %1018 = vmatprep.subr.bf16.mxu0 0
      %1019 = vmatpush1.bf16.msra.mxu0 %v904
      %1020 = vmatprep.subr.bf16.mxu0 0
      %1021 = vmatpush1.bf16.msra.mxu0 %v903
      %1022 = vmatprep.subr.bf16.mxu0 0
      %1023 = vmatpush1.bf16.msra.mxu0 %v902
      %1024 = vmatprep.subr.bf16.mxu0 0
      %1025 = vmatpush1.bf16.msra.mxu0 %v901
      %1026 = vmatprep.subr.bf16.mxu0 0
      %1027 = vmatpush1.bf16.msra.mxu0 %v900
      %1028 = vmatprep.subr.bf16.mxu0 0
      %1029 = vmatpush1.bf16.msra.mxu0 %v899
      %1030 = vmatprep.subr.bf16.mxu0 0
      %1031 = vmatpush1.bf16.msra.mxu0 %v898
      %1032 = vmatprep.subr.bf16.mxu0 0
      %1033 = vmatpush1.bf16.msra.mxu0 %v897
      %1034 = vmatprep.subr.bf16.mxu0 0
      %1035 = vmatpush2.bf16.msra.mxu0 %v912
      %1036 = vmatprep.subr.bf16.mxu0 0
      %1037 = vmatpush2.bf16.msra.mxu0 %v911
      %1038 = vmatprep.subr.bf16.mxu0 0
      %1039 = vmatpush2.bf16.msra.mxu0 %v910
      %1040 = vmatprep.subr.bf16.mxu0 0
      %1041 = vmatpush2.bf16.msra.mxu0 %v909
      %1042 = vmatprep.subr.bf16.mxu0 0
      %1043 = vmatpush2.bf16.msra.mxu0 %v908
      %1044 = vmatprep.subr.bf16.mxu0 0
      %1045 = vmatpush2.bf16.msra.mxu0 %v907
      %1046 = vmatprep.subr.bf16.mxu0 0
      %1047 = vmatpush2.bf16.msra.mxu0 %v906
      %1048 = vmatprep.subr.bf16.mxu0 0
      %1049 = vmatpush2.bf16.msra.mxu0 %v905
      %1050 = vmatprep.mubr.bf16.mxu0 %v610
      %1051 = vmatmul.mubr.bf16.gmra.mxu0 %v609
      %v1052 = vpop.f32.mrf.mxu0
      %v1053 = vadd.f32 %v351, %v1052
      %v1054 = vpop.f32.mrf.mxu0
      %v1055 = vpop.f32.mrf.mxu0
      %v1056 = vadd.f32 %v351, %v1055
      %v1057 = vpop.f32.mrf.mxu0
      %1058 = vmatprep.mubr.bf16.mxu0 %v615
      %1059 = vmatmul.mubr.bf16.gmra.mxu0 %v614
      %v1060 = vpop.f32.mrf.mxu0
      %v1061 = vadd.f32 %v351, %v1060
      %v1062 = vpop.f32.mrf.mxu0
      %v1063 = vpop.f32.mrf.mxu0
      %v1064 = vadd.f32 %v351, %v1063
      %v1065 = vpop.f32.mrf.mxu0
      %1066 = vmatprep.mubr.bf16.mxu0 %v620
      %1067 = vmatmul.mubr.bf16.gmra.mxu0 %v619
      %v1068 = vpop.f32.mrf.mxu0
      %v1069 = vadd.f32 %v351, %v1068
      %v1070 = vpop.f32.mrf.mxu0
      %v1071 = vpop.f32.mrf.mxu0
      %v1072 = vadd.f32 %v351, %v1071
      %v1073 = vpop.f32.mrf.mxu0
      %1074 = vmatprep.mubr.bf16.mxu0 %v625
      %1075 = vmatmul.mubr.bf16.gmra.mxu0 %v624
      %v1076 = vpop.f32.mrf.mxu0
      %v1077 = vadd.f32 %v351, %v1076
      %v1078 = vpop.f32.mrf.mxu0
      %v1079 = vpop.f32.mrf.mxu0
      %v1080 = vadd.f32 %v351, %v1079
      %v1081 = vpop.f32.mrf.mxu0
      %1082 = vmatprep.mubr.bf16.mxu0 %v630
      %1083 = vmatmul.mubr.bf16.gmra.mxu0 %v629
      %v1084 = vpop.f32.mrf.mxu0
      %v1085 = vadd.f32 %v351, %v1084
      %v1086 = vpop.f32.mrf.mxu0
      %v1087 = vpop.f32.mrf.mxu0
      %v1088 = vadd.f32 %v351, %v1087
      %v1089 = vpop.f32.mrf.mxu0
      %1090 = vmatprep.mubr.bf16.mxu0 %v635
      %1091 = vmatmul.mubr.bf16.gmra.mxu0 %v634
      %v1092 = vpop.f32.mrf.mxu0
      %v1093 = vadd.f32 %v351, %v1092
      %v1094 = vpop.f32.mrf.mxu0
      %v1095 = vpop.f32.mrf.mxu0
      %v1096 = vadd.f32 %v351, %v1095
      %v1097 = vpop.f32.mrf.mxu0
      %1098 = vmatprep.mubr.bf16.mxu0 %v640
      %1099 = vmatmul.mubr.bf16.gmra.mxu0 %v639
      %v1100 = vpop.f32.mrf.mxu0
      %v1101 = vadd.f32 %v351, %v1100
      %v1102 = vpop.f32.mrf.mxu0
      %v1103 = vpop.f32.mrf.mxu0
      %v1104 = vadd.f32 %v351, %v1103
      %v1105 = vpop.f32.mrf.mxu0
      %1106 = vmatprep.mubr.bf16.mxu0 %v645
      %1107 = vmatmul.mubr.bf16.gmra.mxu0 %v644
      %v1108 = vpop.f32.mrf.mxu0
      %v1109 = vadd.f32 %v351, %v1108
      %v1110 = vpop.f32.mrf.mxu0
      %v1111 = vpop.f32.mrf.mxu0
      %v1112 = vadd.f32 %v351, %v1111
      %v1113 = vpop.f32.mrf.mxu0
      %1114 = vmatprep.mubr.bf16.mxu0 %v650
      %1115 = vmatmul.mubr.bf16.gmra.mxu0 %v649
      %v1116 = vpop.f32.mrf.mxu0
      %v1117 = vadd.f32 %v351, %v1116
      %v1118 = vpop.f32.mrf.mxu0
      %v1119 = vpop.f32.mrf.mxu0
      %v1120 = vadd.f32 %v351, %v1119
      %v1121 = vpop.f32.mrf.mxu0
      %1122 = vmatprep.mubr.bf16.mxu0 %v655
      %1123 = vmatmul.mubr.bf16.gmra.mxu0 %v654
      %v1124 = vpop.f32.mrf.mxu0
      %v1125 = vadd.f32 %v351, %v1124
      %v1126 = vpop.f32.mrf.mxu0
      %v1127 = vpop.f32.mrf.mxu0
      %v1128 = vadd.f32 %v351, %v1127
      %v1129 = vpop.f32.mrf.mxu0
      %1130 = vmatprep.mubr.bf16.mxu0 %v660
      %1131 = vmatmul.mubr.bf16.gmra.mxu0 %v659
      %v1132 = vpop.f32.mrf.mxu0
      %v1133 = vadd.f32 %v351, %v1132
      %v1134 = vpop.f32.mrf.mxu0
      %v1135 = vpop.f32.mrf.mxu0
      %v1136 = vadd.f32 %v351, %v1135
      %v1137 = vpop.f32.mrf.mxu0
      %1138 = vmatprep.mubr.bf16.mxu0 %v665
      %1139 = vmatmul.mubr.bf16.gmra.mxu0 %v664
      %v1140 = vpop.f32.mrf.mxu0
      %v1141 = vadd.f32 %v351, %v1140
      %v1142 = vpop.f32.mrf.mxu0
      %v1143 = vpop.f32.mrf.mxu0
      %v1144 = vadd.f32 %v351, %v1143
      %v1145 = vpop.f32.mrf.mxu0
      %1146 = vmatprep.mubr.bf16.mxu0 %v670
      %1147 = vmatmul.mubr.bf16.gmra.mxu0 %v669
      %v1148 = vpop.f32.mrf.mxu0
      %v1149 = vadd.f32 %v351, %v1148
      %v1150 = vpop.f32.mrf.mxu0
      %v1151 = vpop.f32.mrf.mxu0
      %v1152 = vadd.f32 %v351, %v1151
      %v1153 = vpop.f32.mrf.mxu0
      %1154 = vmatprep.mubr.bf16.mxu0 %v675
      %1155 = vmatmul.mubr.bf16.gmra.mxu0 %v674
      %v1156 = vpop.f32.mrf.mxu0
      %v1157 = vadd.f32 %v351, %v1156
      %v1158 = vpop.f32.mrf.mxu0
      %v1159 = vpop.f32.mrf.mxu0
      %v1160 = vadd.f32 %v351, %v1159
      %v1161 = vpop.f32.mrf.mxu0
      %1162 = vmatprep.mubr.bf16.mxu0 %v680
      %1163 = vmatmul.mubr.bf16.gmra.mxu0 %v679
      %v1164 = vpop.f32.mrf.mxu0
      %v1165 = vadd.f32 %v351, %v1164
      %v1166 = vpop.f32.mrf.mxu0
      %v1167 = vpop.f32.mrf.mxu0
      %v1168 = vadd.f32 %v351, %v1167
      %v1169 = vpop.f32.mrf.mxu0
      %1170 = vmatprep.mubr.bf16.mxu0 %v685
      %1171 = vmatmul.mubr.bf16.gmra.mxu0 %v684
      %v1172 = vpop.f32.mrf.mxu0
      %v1173 = vadd.f32 %v351, %v1172
      %v1174 = vpop.f32.mrf.mxu0
      %v1175 = vpop.f32.mrf.mxu0
      %v1176 = vadd.f32 %v351, %v1175
      %v1177 = vpop.f32.mrf.mxu0
      %1178 = vdwg.mxu0
      %1179 = vmatprep.subr.bf16.mxu0 0
      %1180 = vmatpush1.bf16.msra.mxu0 %v920
      %1181 = vmatprep.subr.bf16.mxu0 0
      %1182 = vmatpush1.bf16.msra.mxu0 %v919
      %1183 = vmatprep.subr.bf16.mxu0 0
      %1184 = vmatpush1.bf16.msra.mxu0 %v918
      %1185 = vmatprep.subr.bf16.mxu0 0
      %1186 = vmatpush1.bf16.msra.mxu0 %v917
      %1187 = vmatprep.subr.bf16.mxu0 0
      %1188 = vmatpush1.bf16.msra.mxu0 %v916
      %1189 = vmatprep.subr.bf16.mxu0 0
      %1190 = vmatpush1.bf16.msra.mxu0 %v915
      %1191 = vmatprep.subr.bf16.mxu0 0
      %1192 = vmatpush1.bf16.msra.mxu0 %v914
      %1193 = vmatprep.subr.bf16.mxu0 0
      %1194 = vmatpush1.bf16.msra.mxu0 %v913
      %1195 = vmatprep.subr.bf16.mxu0 0
      %1196 = vmatpush2.bf16.msra.mxu0 %v928
      %1197 = vmatprep.subr.bf16.mxu0 0
      %1198 = vmatpush2.bf16.msra.mxu0 %v927
      %1199 = vmatprep.subr.bf16.mxu0 0
      %1200 = vmatpush2.bf16.msra.mxu0 %v926
      %1201 = vmatprep.subr.bf16.mxu0 0
      %1202 = vmatpush2.bf16.msra.mxu0 %v925
      %1203 = vmatprep.subr.bf16.mxu0 0
      %1204 = vmatpush2.bf16.msra.mxu0 %v924
      %1205 = vmatprep.subr.bf16.mxu0 0
      %1206 = vmatpush2.bf16.msra.mxu0 %v923
      %1207 = vmatprep.subr.bf16.mxu0 0
      %1208 = vmatpush2.bf16.msra.mxu0 %v922
      %1209 = vmatprep.subr.bf16.mxu0 0
      %1210 = vmatpush2.bf16.msra.mxu0 %v921
      %1211 = vmatprep.mubr.bf16.mxu0 %v612
      %1212 = vmatmul.mubr.bf16.gmra.mxu0 %v611
      %v1213 = vpop.f32.mrf.mxu0
      %v1214 = vadd.f32 %v1053, %v1213
      %v1215 = vpop.f32.mrf.mxu0
      %v1216 = vpop.f32.mrf.mxu0
      %v1217 = vadd.f32 %v1056, %v1216
      %v1218 = vpop.f32.mrf.mxu0
      %1219 = vmatprep.mubr.bf16.mxu0 %v617
      %1220 = vmatmul.mubr.bf16.gmra.mxu0 %v616
      %v1221 = vpop.f32.mrf.mxu0
      %v1222 = vadd.f32 %v1061, %v1221
      %v1223 = vpop.f32.mrf.mxu0
      %v1224 = vpop.f32.mrf.mxu0
      %v1225 = vadd.f32 %v1064, %v1224
      %v1226 = vpop.f32.mrf.mxu0
      %1227 = vmatprep.mubr.bf16.mxu0 %v622
      %1228 = vmatmul.mubr.bf16.gmra.mxu0 %v621
      %v1229 = vpop.f32.mrf.mxu0
      %v1230 = vadd.f32 %v1069, %v1229
      %v1231 = vpop.f32.mrf.mxu0
      %v1232 = vpop.f32.mrf.mxu0
      %v1233 = vadd.f32 %v1072, %v1232
      %v1234 = vpop.f32.mrf.mxu0
      %1235 = vmatprep.mubr.bf16.mxu0 %v627
      %1236 = vmatmul.mubr.bf16.gmra.mxu0 %v626
      %v1237 = vpop.f32.mrf.mxu0
      %v1238 = vadd.f32 %v1077, %v1237
      %v1239 = vpop.f32.mrf.mxu0
      %v1240 = vpop.f32.mrf.mxu0
      %v1241 = vadd.f32 %v1080, %v1240
      %v1242 = vpop.f32.mrf.mxu0
      %1243 = vmatprep.mubr.bf16.mxu0 %v632
      %1244 = vmatmul.mubr.bf16.gmra.mxu0 %v631
      %v1245 = vpop.f32.mrf.mxu0
      %v1246 = vadd.f32 %v1085, %v1245
      %v1247 = vpop.f32.mrf.mxu0
      %v1248 = vpop.f32.mrf.mxu0
      %v1249 = vadd.f32 %v1088, %v1248
      %v1250 = vpop.f32.mrf.mxu0
      %1251 = vmatprep.mubr.bf16.mxu0 %v637
      %1252 = vmatmul.mubr.bf16.gmra.mxu0 %v636
      %v1253 = vpop.f32.mrf.mxu0
      %v1254 = vadd.f32 %v1093, %v1253
      %v1255 = vpop.f32.mrf.mxu0
      %v1256 = vpop.f32.mrf.mxu0
      %v1257 = vadd.f32 %v1096, %v1256
      %v1258 = vpop.f32.mrf.mxu0
      %1259 = vmatprep.mubr.bf16.mxu0 %v642
      %1260 = vmatmul.mubr.bf16.gmra.mxu0 %v641
      %v1261 = vpop.f32.mrf.mxu0
      %v1262 = vadd.f32 %v1101, %v1261
      %v1263 = vpop.f32.mrf.mxu0
      %v1264 = vpop.f32.mrf.mxu0
      %v1265 = vadd.f32 %v1104, %v1264
      %v1266 = vpop.f32.mrf.mxu0
      %1267 = vmatprep.mubr.bf16.mxu0 %v647
      %1268 = vmatmul.mubr.bf16.gmra.mxu0 %v646
      %v1269 = vpop.f32.mrf.mxu0
      %v1270 = vadd.f32 %v1109, %v1269
      %v1271 = vpop.f32.mrf.mxu0
      %v1272 = vpop.f32.mrf.mxu0
      %v1273 = vadd.f32 %v1112, %v1272
      %v1274 = vpop.f32.mrf.mxu0
      %1275 = vmatprep.mubr.bf16.mxu0 %v652
      %1276 = vmatmul.mubr.bf16.gmra.mxu0 %v651
      %v1277 = vpop.f32.mrf.mxu0
      %v1278 = vadd.f32 %v1117, %v1277
      %v1279 = vpop.f32.mrf.mxu0
      %v1280 = vpop.f32.mrf.mxu0
      %v1281 = vadd.f32 %v1120, %v1280
      %v1282 = vpop.f32.mrf.mxu0
      %1283 = vmatprep.mubr.bf16.mxu0 %v657
      %1284 = vmatmul.mubr.bf16.gmra.mxu0 %v656
      %v1285 = vpop.f32.mrf.mxu0
      %v1286 = vadd.f32 %v1125, %v1285
      %v1287 = vpop.f32.mrf.mxu0
      %v1288 = vpop.f32.mrf.mxu0
      %v1289 = vadd.f32 %v1128, %v1288
      %v1290 = vpop.f32.mrf.mxu0
      %1291 = vmatprep.mubr.bf16.mxu0 %v662
      %1292 = vmatmul.mubr.bf16.gmra.mxu0 %v661
      %v1293 = vpop.f32.mrf.mxu0
      %v1294 = vadd.f32 %v1133, %v1293
      %v1295 = vpop.f32.mrf.mxu0
      %v1296 = vpop.f32.mrf.mxu0
      %v1297 = vadd.f32 %v1136, %v1296
      %v1298 = vpop.f32.mrf.mxu0
      %1299 = vmatprep.mubr.bf16.mxu0 %v667
      %1300 = vmatmul.mubr.bf16.gmra.mxu0 %v666
      %v1301 = vpop.f32.mrf.mxu0
      %v1302 = vadd.f32 %v1141, %v1301
      %v1303 = vpop.f32.mrf.mxu0
      %v1304 = vpop.f32.mrf.mxu0
      %v1305 = vadd.f32 %v1144, %v1304
      %v1306 = vpop.f32.mrf.mxu0
      %1307 = vmatprep.mubr.bf16.mxu0 %v672
      %1308 = vmatmul.mubr.bf16.gmra.mxu0 %v671
      %v1309 = vpop.f32.mrf.mxu0
      %v1310 = vadd.f32 %v1149, %v1309
      %v1311 = vpop.f32.mrf.mxu0
      %v1312 = vpop.f32.mrf.mxu0
      %v1313 = vadd.f32 %v1152, %v1312
      %v1314 = vpop.f32.mrf.mxu0
      %1315 = vmatprep.mubr.bf16.mxu0 %v677
      %1316 = vmatmul.mubr.bf16.gmra.mxu0 %v676
      %v1317 = vpop.f32.mrf.mxu0
      %v1318 = vadd.f32 %v1157, %v1317
      %v1319 = vpop.f32.mrf.mxu0
      %v1320 = vpop.f32.mrf.mxu0
      %v1321 = vadd.f32 %v1160, %v1320
      %v1322 = vpop.f32.mrf.mxu0
      %1323 = vmatprep.mubr.bf16.mxu0 %v682
      %1324 = vmatmul.mubr.bf16.gmra.mxu0 %v681
      %v1325 = vpop.f32.mrf.mxu0
      %v1326 = vadd.f32 %v1165, %v1325
      %v1327 = vpop.f32.mrf.mxu0
      %v1328 = vpop.f32.mrf.mxu0
      %v1329 = vadd.f32 %v1168, %v1328
      %v1330 = vpop.f32.mrf.mxu0
      %1331 = vmatprep.mubr.bf16.mxu0 %v687
      %1332 = vmatmul.mubr.bf16.gmra.mxu0 %v686
      %v1333 = vpop.f32.mrf.mxu0
      %v1334 = vadd.f32 %v1173, %v1333
      %v1335 = vpop.f32.mrf.mxu0
      %v1336 = vpop.f32.mrf.mxu0
      %v1337 = vadd.f32 %v1176, %v1336
      %v1338 = vpop.f32.mrf.mxu0
      %1339 = vdwg.mxu0
      %1340 = vmatprep.subr.bf16.mxu0 0
      %1341 = vmatpush1.bf16.msra.mxu0 0
      %1342 = vmatprep.subr.bf16.mxu0 0
      %1343 = vmatpush1.bf16.msra.mxu0 0
      %1344 = vmatprep.subr.bf16.mxu0 0
      %1345 = vmatpush1.bf16.msra.mxu0 0
      %1346 = vmatprep.subr.bf16.mxu0 0
      %1347 = vmatpush1.bf16.msra.mxu0 0
      %1348 = vmatprep.subr.bf16.mxu0 0
      %1349 = vmatpush1.bf16.msra.mxu0 %v932
      %1350 = vmatprep.subr.bf16.mxu0 0
      %1351 = vmatpush1.bf16.msra.mxu0 %v931
      %1352 = vmatprep.subr.bf16.mxu0 0
      %1353 = vmatpush1.bf16.msra.mxu0 %v930
      %1354 = vmatprep.subr.bf16.mxu0 0
      %1355 = vmatpush1.bf16.msra.mxu0 %v929
      %1356 = vmatprep.subr.bf16.mxu0 0
      %1357 = vmatpush2.bf16.msra.mxu0 0
      %1358 = vmatprep.subr.bf16.mxu0 0
      %1359 = vmatpush2.bf16.msra.mxu0 0
      %1360 = vmatprep.subr.bf16.mxu0 0
      %1361 = vmatpush2.bf16.msra.mxu0 0
      %1362 = vmatprep.subr.bf16.mxu0 0
      %1363 = vmatpush2.bf16.msra.mxu0 0
      %1364 = vmatprep.subr.bf16.mxu0 0
      %1365 = vmatpush2.bf16.msra.mxu0 0
      %1366 = vmatprep.subr.bf16.mxu0 0
      %1367 = vmatpush2.bf16.msra.mxu0 0
      %1368 = vmatprep.subr.bf16.mxu0 0
      %1369 = vmatpush2.bf16.msra.mxu0 0
      %1370 = vmatprep.subr.bf16.mxu0 0
      %1371 = vmatpush2.bf16.msra.mxu0 0
      %1372 = vmatprep.mubr.bf16.mxu0 0
      %1373 = vmatmul.mubr.bf16.gmra.mxu0 %v971
      %v1374 = vpop.f32.mrf.mxu0
      %v1375 = vadd.f32 %v1214, %v1374
      %v1376 = vpop.f32.mrf.mxu0
      %v1377 = vpop.f32.mrf.mxu0
      %v1378 = vadd.f32 %v1217, %v1377
      %v1379 = vpop.f32.mrf.mxu0
      %1380 = vmatprep.mubr.bf16.mxu0 0
      %1381 = vmatmul.mubr.bf16.gmra.mxu0 %v974
      %v1382 = vpop.f32.mrf.mxu0
      %v1383 = vadd.f32 %v1222, %v1382
      %v1384 = vpop.f32.mrf.mxu0
      %v1385 = vpop.f32.mrf.mxu0
      %v1386 = vadd.f32 %v1225, %v1385
      %v1387 = vpop.f32.mrf.mxu0
      %1388 = vmatprep.mubr.bf16.mxu0 0
      %1389 = vmatmul.mubr.bf16.gmra.mxu0 %v977
      %v1390 = vpop.f32.mrf.mxu0
      %v1391 = vadd.f32 %v1230, %v1390
      %v1392 = vpop.f32.mrf.mxu0
      %v1393 = vpop.f32.mrf.mxu0
      %v1394 = vadd.f32 %v1233, %v1393
      %v1395 = vpop.f32.mrf.mxu0
      %1396 = vmatprep.mubr.bf16.mxu0 0
      %1397 = vmatmul.mubr.bf16.gmra.mxu0 %v980
      %v1398 = vpop.f32.mrf.mxu0
      %v1399 = vadd.f32 %v1238, %v1398
      %v1400 = vpop.f32.mrf.mxu0
      %v1401 = vpop.f32.mrf.mxu0
      %v1402 = vadd.f32 %v1241, %v1401
      %v1403 = vpop.f32.mrf.mxu0
      %1404 = vmatprep.mubr.bf16.mxu0 0
      %1405 = vmatmul.mubr.bf16.gmra.mxu0 %v983
      %v1406 = vpop.f32.mrf.mxu0
      %v1407 = vadd.f32 %v1246, %v1406
      %v1408 = vpop.f32.mrf.mxu0
      %v1409 = vpop.f32.mrf.mxu0
      %v1410 = vadd.f32 %v1249, %v1409
      %v1411 = vpop.f32.mrf.mxu0
      %1412 = vmatprep.mubr.bf16.mxu0 0
      %1413 = vmatmul.mubr.bf16.gmra.mxu0 %v986
      %v1414 = vpop.f32.mrf.mxu0
      %v1415 = vadd.f32 %v1254, %v1414
      %v1416 = vpop.f32.mrf.mxu0
      %v1417 = vpop.f32.mrf.mxu0
      %v1418 = vadd.f32 %v1257, %v1417
      %v1419 = vpop.f32.mrf.mxu0
      %1420 = vmatprep.mubr.bf16.mxu0 0
      %1421 = vmatmul.mubr.bf16.gmra.mxu0 %v989
      %v1422 = vpop.f32.mrf.mxu0
      %v1423 = vadd.f32 %v1262, %v1422
      %v1424 = vpop.f32.mrf.mxu0
      %v1425 = vpop.f32.mrf.mxu0
      %v1426 = vadd.f32 %v1265, %v1425
      %v1427 = vpop.f32.mrf.mxu0
      %1428 = vmatprep.mubr.bf16.mxu0 0
      %1429 = vmatmul.mubr.bf16.gmra.mxu0 %v992
      %v1430 = vpop.f32.mrf.mxu0
      %v1431 = vadd.f32 %v1270, %v1430
      %v1432 = vpop.f32.mrf.mxu0
      %v1433 = vpop.f32.mrf.mxu0
      %v1434 = vadd.f32 %v1273, %v1433
      %v1435 = vpop.f32.mrf.mxu0
      %1436 = vmatprep.mubr.bf16.mxu0 0
      %1437 = vmatmul.mubr.bf16.gmra.mxu0 %v995
      %v1438 = vpop.f32.mrf.mxu0
      %v1439 = vadd.f32 %v1278, %v1438
      %v1440 = vpop.f32.mrf.mxu0
      %v1441 = vpop.f32.mrf.mxu0
      %v1442 = vadd.f32 %v1281, %v1441
      %v1443 = vpop.f32.mrf.mxu0
      %1444 = vmatprep.mubr.bf16.mxu0 0
      %1445 = vmatmul.mubr.bf16.gmra.mxu0 %v998
      %v1446 = vpop.f32.mrf.mxu0
      %v1447 = vadd.f32 %v1286, %v1446
      %v1448 = vpop.f32.mrf.mxu0
      %v1449 = vpop.f32.mrf.mxu0
      %v1450 = vadd.f32 %v1289, %v1449
      %v1451 = vpop.f32.mrf.mxu0
      %1452 = vmatprep.mubr.bf16.mxu0 0
      %1453 = vmatmul.mubr.bf16.gmra.mxu0 %v1001
      %v1454 = vpop.f32.mrf.mxu0
      %v1455 = vadd.f32 %v1294, %v1454
      %v1456 = vpop.f32.mrf.mxu0
      %v1457 = vpop.f32.mrf.mxu0
      %v1458 = vadd.f32 %v1297, %v1457
      %v1459 = vpop.f32.mrf.mxu0
      %1460 = vmatprep.mubr.bf16.mxu0 0
      %1461 = vmatmul.mubr.bf16.gmra.mxu0 %v1004
      %v1462 = vpop.f32.mrf.mxu0
      %v1463 = vadd.f32 %v1302, %v1462
      %v1464 = vpop.f32.mrf.mxu0
      %v1465 = vpop.f32.mrf.mxu0
      %v1466 = vadd.f32 %v1305, %v1465
      %v1467 = vpop.f32.mrf.mxu0
      %1468 = vmatprep.mubr.bf16.mxu0 0
      %1469 = vmatmul.mubr.bf16.gmra.mxu0 %v1007
      %v1470 = vpop.f32.mrf.mxu0
      %v1471 = vadd.f32 %v1310, %v1470
      %v1472 = vpop.f32.mrf.mxu0
      %v1473 = vpop.f32.mrf.mxu0
      %v1474 = vadd.f32 %v1313, %v1473
      %v1475 = vpop.f32.mrf.mxu0
      %1476 = vmatprep.mubr.bf16.mxu0 0
      %1477 = vmatmul.mubr.bf16.gmra.mxu0 %v1010
      %v1478 = vpop.f32.mrf.mxu0
      %v1479 = vadd.f32 %v1318, %v1478
      %v1480 = vpop.f32.mrf.mxu0
      %v1481 = vpop.f32.mrf.mxu0
      %v1482 = vadd.f32 %v1321, %v1481
      %v1483 = vpop.f32.mrf.mxu0
      %1484 = vmatprep.mubr.bf16.mxu0 0
      %1485 = vmatmul.mubr.bf16.gmra.mxu0 %v1013
      %v1486 = vpop.f32.mrf.mxu0
      %v1487 = vadd.f32 %v1326, %v1486
      %v1488 = vpop.f32.mrf.mxu0
      %v1489 = vpop.f32.mrf.mxu0
      %v1490 = vadd.f32 %v1329, %v1489
      %v1491 = vpop.f32.mrf.mxu0
      %1492 = vmatprep.mubr.bf16.mxu0 0
      %1493 = vmatmul.mubr.bf16.gmra.mxu0 %v1016
      %v1494 = vpop.f32.mrf.mxu0
      %v1495 = vadd.f32 %v1334, %v1494
      %v1496 = vpop.f32.mrf.mxu0
      %v1497 = vpop.f32.mrf.mxu0
      %v1498 = vadd.f32 %v1337, %v1497
      %v1499 = vpop.f32.mrf.mxu0
      %1500 = vdwg.mxu0
      %vm1501 = vcmp.gt.f32.partialorder %v1375, 0.0
      %vm1502 = vcmp.gt.f32.partialorder %v1378, 0.0
      %vm1503 = vcmp.gt.f32.partialorder %v1383, 0.0
      %vm1504 = vcmp.gt.f32.partialorder %v1386, 0.0
      %vm1505 = vcmp.gt.f32.partialorder %v1391, 0.0
      %vm1506 = vcmp.gt.f32.partialorder %v1394, 0.0
      %vm1507 = vcmp.gt.f32.partialorder %v1399, 0.0
      %vm1508 = vcmp.gt.f32.partialorder %v1402, 0.0
      %vm1509 = vcmp.gt.f32.partialorder %v1407, 0.0
      %vm1510 = vcmp.gt.f32.partialorder %v1410, 0.0
      %vm1511 = vcmp.gt.f32.partialorder %v1415, 0.0
      %vm1512 = vcmp.gt.f32.partialorder %v1418, 0.0
      %vm1513 = vcmp.gt.f32.partialorder %v1423, 0.0
      %vm1514 = vcmp.gt.f32.partialorder %v1426, 0.0
      %vm1515 = vcmp.gt.f32.partialorder %v1431, 0.0
      %vm1516 = vcmp.gt.f32.partialorder %v1434, 0.0
      %vm1517 = vcmp.gt.f32.partialorder %v1439, 0.0
      %vm1518 = vcmp.gt.f32.partialorder %v1442, 0.0
      %vm1519 = vcmp.gt.f32.partialorder %v1447, 0.0
      %vm1520 = vcmp.gt.f32.partialorder %v1450, 0.0
      %vm1521 = vcmp.gt.f32.partialorder %v1455, 0.0
      %vm1522 = vcmp.gt.f32.partialorder %v1458, 0.0
      %vm1523 = vcmp.gt.f32.partialorder %v1463, 0.0
      %vm1524 = vcmp.gt.f32.partialorder %v1466, 0.0
      %vm1525 = vcmp.gt.f32.partialorder %v1471, 0.0
      %vm1526 = vcmp.gt.f32.partialorder %v1474, 0.0
      %vm1527 = vcmp.gt.f32.partialorder %v1479, 0.0
      %vm1528 = vcmp.gt.f32.partialorder %v1482, 0.0
      %vm1529 = vcmp.gt.f32.partialorder %v1487, 0.0
      %vm1530 = vcmp.gt.f32.partialorder %v1490, 0.0
      %vm1531 = vcmp.gt.f32.partialorder %v1495, 0.0
      %vm1532 = vcmp.gt.f32.partialorder %v1498, 0.0
      %v1533 = vmul.f32 %v1375, 0.1
      %v1534 = vmul.f32 %v1378, 0.1
      %v1535 = vmul.f32 %v1383, 0.1
      %v1536 = vmul.f32 %v1386, 0.1
      %v1537 = vmul.f32 %v1391, 0.1
      %v1538 = vmul.f32 %v1394, 0.1
      %v1539 = vmul.f32 %v1399, 0.1
      %v1540 = vmul.f32 %v1402, 0.1
      %v1541 = vmul.f32 %v1407, 0.1
      %v1542 = vmul.f32 %v1410, 0.1
      %v1543 = vmul.f32 %v1415, 0.1
      %v1544 = vmul.f32 %v1418, 0.1
      %v1545 = vmul.f32 %v1423, 0.1
      %v1546 = vmul.f32 %v1426, 0.1
      %v1547 = vmul.f32 %v1431, 0.1
      %v1548 = vmul.f32 %v1434, 0.1
      %v1549 = vmul.f32 %v1439, 0.1
      %v1550 = vmul.f32 %v1442, 0.1
      %v1551 = vmul.f32 %v1447, 0.1
      %v1552 = vmul.f32 %v1450, 0.1
      %v1553 = vmul.f32 %v1455, 0.1
      %v1554 = vmul.f32 %v1458, 0.1
      %v1555 = vmul.f32 %v1463, 0.1
      %v1556 = vmul.f32 %v1466, 0.1
      %v1557 = vmul.f32 %v1471, 0.1
      %v1558 = vmul.f32 %v1474, 0.1
      %v1559 = vmul.f32 %v1479, 0.1
      %v1560 = vmul.f32 %v1482, 0.1
      %v1561 = vmul.f32 %v1487, 0.1
      %v1562 = vmul.f32 %v1490, 0.1
      %v1563 = vmul.f32 %v1495, 0.1
      %v1564 = vmul.f32 %v1498, 0.1
      %v1565 = vsel %vm1501, %v1375, %v1533
      %v1566 = vsel %vm1502, %v1378, %v1534
      %v1567 = vsel %vm1503, %v1383, %v1535
      %v1568 = vsel %vm1504, %v1386, %v1536
      %v1569 = vsel %vm1505, %v1391, %v1537
      %v1570 = vsel %vm1506, %v1394, %v1538
      %v1571 = vsel %vm1507, %v1399, %v1539
      %v1572 = vsel %vm1508, %v1402, %v1540
      %v1573 = vsel %vm1509, %v1407, %v1541
      %v1574 = vsel %vm1510, %v1410, %v1542
      %v1575 = vsel %vm1511, %v1415, %v1543
      %v1576 = vsel %vm1512, %v1418, %v1544
      %v1577 = vsel %vm1513, %v1423, %v1545
      %v1578 = vsel %vm1514, %v1426, %v1546
      %v1579 = vsel %vm1515, %v1431, %v1547
      %v1580 = vsel %vm1516, %v1434, %v1548
      %v1581 = vsel %vm1517, %v1439, %v1549
      %v1582 = vsel %vm1518, %v1442, %v1550
      %v1583 = vsel %vm1519, %v1447, %v1551
      %v1584 = vsel %vm1520, %v1450, %v1552
      %v1585 = vsel %vm1521, %v1455, %v1553
      %v1586 = vsel %vm1522, %v1458, %v1554
      %v1587 = vsel %vm1523, %v1463, %v1555
      %v1588 = vsel %vm1524, %v1466, %v1556
      %v1589 = vsel %vm1525, %v1471, %v1557
      %v1590 = vsel %vm1526, %v1474, %v1558
      %v1591 = vsel %vm1527, %v1479, %v1559
      %v1592 = vsel %vm1528, %v1482, %v1560
      %v1593 = vsel %vm1529, %v1487, %v1561
      %v1594 = vsel %vm1530, %v1490, %v1562
      %v1595 = vsel %vm1531, %v1495, %v1563
      %v1596 = vsel %vm1532, %v1498, %v1564
      %v1597 = vpack.c.bf16 %v1566, %v1565
      %v1598 = vpack.c.bf16 %v1568, %v1567
      %v1599 = vpack.c.bf16 %v1570, %v1569
      %v1600 = vpack.c.bf16 %v1572, %v1571
      %v1601 = vpack.c.bf16 %v1574, %v1573
      %v1602 = vpack.c.bf16 %v1576, %v1575
      %v1603 = vpack.c.bf16 %v1578, %v1577
      %v1604 = vpack.c.bf16 %v1580, %v1579
      %v1605 = vpack.c.bf16 %v1582, %v1581
      %v1606 = vpack.c.bf16 %v1584, %v1583
      %v1607 = vpack.c.bf16 %v1586, %v1585
      %v1608 = vpack.c.bf16 %v1588, %v1587
      %v1609 = vpack.c.bf16 %v1590, %v1589
      %v1610 = vpack.c.bf16 %v1592, %v1591
      %v1611 = vpack.c.bf16 %v1594, %v1593
      %v1612 = vpack.c.bf16 %v1596, %v1595
      %v1629 = vunpack.c.l.b16 %v1597
      %v1630 = vunpack.c.h.b16 %v1597
      %v1631 = vunpack.c.l.b16 %v1598
      %v1632 = vunpack.c.h.b16 %v1598
      %v1633 = vunpack.c.l.b16 %v1599
      %v1634 = vunpack.c.h.b16 %v1599
      %v1635 = vunpack.c.l.b16 %v1600
      %v1636 = vunpack.c.h.b16 %v1600
      %v1637 = vunpack.c.l.b16 %v1601
      %v1638 = vunpack.c.h.b16 %v1601
      %v1639 = vunpack.c.l.b16 %v1602
      %v1640 = vunpack.c.h.b16 %v1602
      %v1641 = vunpack.c.l.b16 %v1603
      %v1642 = vunpack.c.h.b16 %v1603
      %v1643 = vunpack.c.l.b16 %v1604
      %v1644 = vunpack.c.h.b16 %v1604
      %v1645 = vunpack.c.l.b16 %v1605
      %v1646 = vunpack.c.h.b16 %v1605
      %v1647 = vunpack.c.l.b16 %v1606
      %v1648 = vunpack.c.h.b16 %v1606
      %v1649 = vunpack.c.l.b16 %v1607
      %v1650 = vunpack.c.h.b16 %v1607
      %v1651 = vunpack.c.l.b16 %v1608
      %v1652 = vunpack.c.h.b16 %v1608
      %v1653 = vunpack.c.l.b16 %v1609
      %v1654 = vunpack.c.h.b16 %v1609
      %v1655 = vunpack.c.l.b16 %v1610
      %v1656 = vunpack.c.h.b16 %v1610
      %v1657 = vunpack.c.l.b16 %v1611
      %v1658 = vunpack.c.h.b16 %v1611
      %v1659 = vunpack.c.l.b16 %v1612
      %v1660 = vunpack.c.h.b16 %v1612
      %v1661 = vpack.c.b16 %v1629, %v1629
      %v1662 = vpack.c.b16 %v1630, %v1630
      %v1663 = vpack.c.b16 %v1631, %v1631
      %v1664 = vpack.c.b16 %v1632, %v1632
      %v1665 = vpack.c.b16 %v1633, %v1633
      %v1666 = vpack.c.b16 %v1634, %v1634
      %v1667 = vpack.c.b16 %v1635, %v1635
      %v1668 = vpack.c.b16 %v1636, %v1636
      %v1669 = vpack.c.b16 %v1637, %v1637
      %v1670 = vpack.c.b16 %v1638, %v1638
      %v1671 = vpack.c.b16 %v1639, %v1639
      %v1672 = vpack.c.b16 %v1640, %v1640
      %v1673 = vpack.c.b16 %v1641, %v1641
      %v1674 = vpack.c.b16 %v1642, %v1642
      %v1675 = vpack.c.b16 %v1643, %v1643
      %v1676 = vpack.c.b16 %v1644, %v1644
      %v1677 = vpack.c.b16 %v1645, %v1645
      %v1678 = vpack.c.b16 %v1646, %v1646
      %v1679 = vpack.c.b16 %v1647, %v1647
      %v1680 = vpack.c.b16 %v1648, %v1648
      %v1681 = vpack.c.b16 %v1649, %v1649
      %v1682 = vpack.c.b16 %v1650, %v1650
      %v1683 = vpack.c.b16 %v1651, %v1651
      %v1684 = vpack.c.b16 %v1652, %v1652
      %v1685 = vpack.c.b16 %v1653, %v1653
      %v1686 = vpack.c.b16 %v1654, %v1654
      %v1687 = vpack.c.b16 %v1655, %v1655
      %v1688 = vpack.c.b16 %v1656, %v1656
      %v1689 = vpack.c.b16 %v1657, %v1657
      %v1690 = vpack.c.b16 %v1658, %v1658
      %v1691 = vpack.c.b16 %v1659, %v1659
      %v1692 = vpack.c.b16 %v1660, %v1660
      %1725 = vst [vmem:[%s175] sm:$0xf] %v1661
      %1726 = vst [vmem:[%s175 + $0x4] sm:$0xf] %v1662
      %1727 = vst [vmem:[%s175 + $0x8] sm:$0xf] %v1663
      %1728 = vst [vmem:[%s175 + $0xc] sm:$0xf] %v1664
      %1729 = vst [vmem:[%s175 + $0x10] sm:$0xf] %v1665
      %1730 = vst [vmem:[%s175 + $0x14] sm:$0xf] %v1666
      %1731 = vst [vmem:[%s175 + $0x18] sm:$0xf] %v1667
      %1732 = vst [vmem:[%s175 + $0x1c] sm:$0xf] %v1668
      %1733 = vst [vmem:[%s175 + $0x20] sm:$0xf] %v1669
      %1734 = vst [vmem:[%s175 + $0x24] sm:$0xf] %v1670
      %1735 = vst [vmem:[%s175 + $0x28] sm:$0xf] %v1671
      %1736 = vst [vmem:[%s175 + $0x2c] sm:$0xf] %v1672
      %1737 = vst [vmem:[%s175 + $0x30] sm:$0xf] %v1673
      %1738 = vst [vmem:[%s175 + $0x34] sm:$0xf] %v1674
      %1739 = vst [vmem:[%s175 + $0x38] sm:$0xf] %v1675
      %1740 = vst [vmem:[%s175 + $0x3c] sm:$0xf] %v1676
      %1741 = vst [vmem:[%s175 + $0x40] sm:$0xf] %v1677
      %1742 = vst [vmem:[%s175 + $0x44] sm:$0xf] %v1678
      %1743 = vst [vmem:[%s175 + $0x48] sm:$0xf] %v1679
      %1744 = vst [vmem:[%s175 + $0x4c] sm:$0xf] %v1680
      %1745 = vst [vmem:[%s175 + $0x50] sm:$0xf] %v1681
      %1746 = vst [vmem:[%s175 + $0x54] sm:$0xf] %v1682
      %1747 = vst [vmem:[%s175 + $0x58] sm:$0xf] %v1683
      %1748 = vst [vmem:[%s175 + $0x5c] sm:$0xf] %v1684
      %1749 = vst [vmem:[%s175 + $0x60] sm:$0xf] %v1685
      %1750 = vst [vmem:[%s175 + $0x64] sm:$0xf] %v1686
      %1751 = vst [vmem:[%s175 + $0x68] sm:$0xf] %v1687
      %1752 = vst [vmem:[%s175 + $0x6c] sm:$0xf] %v1688
      %1753 = vst [vmem:[%s175 + $0x70] sm:$0xf] %v1689
      %1754 = vst [vmem:[%s175 + $0x74] sm:$0xf] %v1690
      %1755 = vst [vmem:[%s175 + $0x78] sm:$0xf] %v1691
      %1756 = vst [vmem:[%s175 + $0x7c] sm:$0xf] %v1692
      %s1757 = smul.u32 32, %s14
      %p1758 = scmp.lt.s32.totalorder %s1757, 63
      %s1759 = scalar_select %p1758, %s1757, 63
      %s1760 = smul.addr %s1759, 4
      %s1761 = scalar_lea.vmem %s3, %s1760
      // Predicated region
      $region33: #{discriminator_forward.9} parent=31 // pred_check
        %p1762 = pneg %p100
      $region34: #{discriminator_forward.9} parent=31 // pred_check_branch
        %1764 = sbr.rel (%p1762) target = $region36
      $region35: #{discriminator_forward.9} parent=31 // pred_region
        %s1765 = smul.u32 32, %s14
      $region36: #{discriminator_forward.9} parent=31 // pred_fallthru
        _
    $region32: #{discriminator_forward.9} parent=5 // pred_fallthru
      _
    %p1766 = scmp.le.s32.totalorder 2, %s9
    // Predicated region
    $region37: #{discriminator_forward.9} parent=5 // pred_check
      %p1767 = pneg %p1766
    $region38: #{discriminator_forward.9} parent=5 // pred_check_branch
      %1769 = sbr.rel (%p1767) target = $region40
    $region39: #{discriminator_forward.9} parent=5 // pred_region
      %s1770 = ssub.s32 %s9, 2
      // Predicated region
      $region41: #{discriminator_forward.9} parent=39 // pred_check
        %p1771 = pneg %p106
      $region42: #{discriminator_forward.9} parent=39 // pred_check_branch
        %1773 = sbr.rel (%p1771) target = $region44
      $region43: #{discriminator_forward.9} parent=39 // pred_region
        %s1774 = smul.u32 32, %s15
        %p1775 = scmp.lt.s32.totalorder %s1774, 63
        %s1776 = scalar_select %p1775, %s1774, 63
        %s1777 = smul.addr %s1776, 4
        %s1778 = scalar_lea.vmem %s3, %s1777
      $region44: #{discriminator_forward.9} parent=39 // pred_fallthru
        _
    $region40: #{discriminator_forward.9} parent=5 // pred_fallthru
      _
  $region6: #{discriminator_forward.9} parent=0 // loop_footer
    %s13 = sadd.s32 1, %s9
  $region7: #{discriminator_forward.9} parent=0 // loop_footer_branch
    %8 = sbr.rel target = $region3
  $region8: #{discriminator_forward.9} parent=0 // loop_exit
    _

// kernel: discriminator_forward.10
$region0: #{discriminator_forward.10}
  #allocation0 [shape = 'u32[]', space=smem, size = 0x4, offset = 0x4, fixed_abs, tag = 'smem constant byte address 0x4 - core index']
  #allocation1 [shape = 'u32[144,128]{1,0:T(1,128)}', space=vmem, size = 0x12000, scoped, tag = 'internal scratch']
  %s0 = inlined_call_operand.vmem [shape: bf16[72,1152], index: 0, kind: input, shape index: {}]
  %s1 = inlined_call_operand.vmem [shape: bf16[1152,128], index: 1, kind: input, shape index: {}]
  %s2 = inlined_call_operand.vmem [shape: f32[1,128], index: 2, kind: input, shape index: {}]
  %s3 = inlined_call_operand.vmem [shape: bf16[72,128], index: 3, kind: output, shape index: {}]
  %s4 = sld [smem:[#allocation0]]
  $region22: #{discriminator_forward.10} parent=0
    _
  %s6 = ssub.s32 1, %s4
  %s7 = scalar_select 0, %s6, %s4
  // Predicated region
  $region2: #{discriminator_forward.10} parent=0 // pred_check
    _
  $region3: #{discriminator_forward.10} parent=0 // pred_check_branch
    %9 = sbr.rel (0) target = $region5
  $region4: #{discriminator_forward.10} parent=0 // pred_region
    _
  $region5: #{discriminator_forward.10} parent=0 // pred_fallthru
    _
  // Predicated region
  $region6: #{discriminator_forward.10} parent=0 // pred_check
    _
  $region7: #{discriminator_forward.10} parent=0 // pred_check_branch
    %11 = sbr.rel (0) target = $region9
  $region8: #{discriminator_forward.10} parent=0 // pred_region
    _
  $region9: #{discriminator_forward.10} parent=0 // pred_fallthru
    _
  // Predicated region
  $region10: #{discriminator_forward.10} parent=0 // pred_check
    _
  $region11: #{discriminator_forward.10} parent=0 // pred_check_branch
    %13 = sbr.rel (0) target = $region13
  $region12: #{discriminator_forward.10} parent=0 // pred_region
    _
  $region13: #{discriminator_forward.10} parent=0 // pred_fallthru
    _
  %v15 = vld [vmem:[%s0] sm:$0xff]
  %v16 = vld [vmem:[%s0 + $0x8] sm:$0xff]
  %v17 = vld [vmem:[%s0 + $0x10] sm:$0xff]
  %v18 = vld [vmem:[%s0 + $0x18] sm:$0xff]
  %v19 = vld [vmem:[%s0 + $0x20] sm:$0xf]
  %v20 = vld [vmem:[%s0 + $0x24] sm:$0xff]
  %v21 = vld [vmem:[%s0 + $0x2c] sm:$0xff]
  %v22 = vld [vmem:[%s0 + $0x34] sm:$0xff]
  %v23 = vld [vmem:[%s0 + $0x3c] sm:$0xff]
  %v24 = vld [vmem:[%s0 + $0x44] sm:$0xf]
  %v25 = vld [vmem:[%s0 + $0x48] sm:$0xff]
  %v26 = vld [vmem:[%s0 + $0x50] sm:$0xff]
  %v27 = vld [vmem:[%s0 + $0x58] sm:$0xff]
  %v28 = vld [vmem:[%s0 + $0x60] sm:$0xff]
  %v29 = vld [vmem:[%s0 + $0x68] sm:$0xf]
  %v30 = vld [vmem:[%s0 + $0x6c] sm:$0xff]
  %v31 = vld [vmem:[%s0 + $0x74] sm:$0xff]
  %v32 = vld [vmem:[%s0 + $0x7c] sm:$0xff]
  %v33 = vld [vmem:[%s0 + $0x84] sm:$0xff]
  %v34 = vld [vmem:[%s0 + $0x8c] sm:$0xf]
  %v35 = vld [vmem:[%s0 + $0x90] sm:$0xff]
  %v36 = vld [vmem:[%s0 + $0x98] sm:$0xff]
  %v37 = vld [vmem:[%s0 + $0xa0] sm:$0xff]
  %v38 = vld [vmem:[%s0 + $0xa8] sm:$0xff]
  %v39 = vld [vmem:[%s0 + $0xb0] sm:$0xf]
  %v40 = vld [vmem:[%s0 + $0xb4] sm:$0xff]
  %v41 = vld [vmem:[%s0 + $0xbc] sm:$0xff]
  %v42 = vld [vmem:[%s0 + $0xc4] sm:$0xff]
  %v43 = vld [vmem:[%s0 + $0xcc] sm:$0xff]
  %v44 = vld [vmem:[%s0 + $0xd4] sm:$0xf]
  %v45 = vld [vmem:[%s0 + $0xd8] sm:$0xff]
  %v46 = vld [vmem:[%s0 + $0xe0] sm:$0xff]
  %v47 = vld [vmem:[%s0 + $0xe8] sm:$0xff]
  %v48 = vld [vmem:[%s0 + $0xf0] sm:$0xff]
  %v49 = vld [vmem:[%s0 + $0xf8] sm:$0xf]
  %v50 = vld [vmem:[%s0 + $0xfc] sm:$0xff]
  %v51 = vld [vmem:[%s0 + $0x104] sm:$0xff]
  %v52 = vld [vmem:[%s0 + $0x10c] sm:$0xff]
  %v53 = vld [vmem:[%s0 + $0x114] sm:$0xff]
  %v54 = vld [vmem:[%s0 + $0x11c] sm:$0xf]
  %v55 = vld [vmem:[%s0 + $0x120] sm:$0xff]
  %v56 = vld [vmem:[%s0 + $0x128] sm:$0xff]
  %v57 = vld [vmem:[%s0 + $0x130] sm:$0xff]
  %v58 = vld [vmem:[%s0 + $0x138] sm:$0xff]
  %v59 = vld [vmem:[%s0 + $0x140] sm:$0xf]
  %v60 = vld [vmem:[%s1] sm:$0xf]
  %v61 = vld [vmem:[%s1 + $0x4] sm:$0xf]
  %v62 = vld [vmem:[%s1 + $0x8] sm:$0xf]
  %v63 = vld [vmem:[%s1 + $0xc] sm:$0xf]
  %v64 = vld [vmem:[%s1 + $0x10] sm:$0xf]
  %v65 = vld [vmem:[%s1 + $0x14] sm:$0xf]
  %v66 = vld [vmem:[%s1 + $0x18] sm:$0xf]
  %v67 = vld [vmem:[%s1 + $0x1c] sm:$0xf]
  %v68 = vld [vmem:[%s1 + $0x20] sm:$0xf]
  %v69 = vld [vmem:[%s1 + $0x24] sm:$0xf]
  %v70 = vld [vmem:[%s1 + $0x28] sm:$0xf]
  %v71 = vld [vmem:[%s1 + $0x2c] sm:$0xf]
  %v72 = vld [vmem:[%s1 + $0x30] sm:$0xf]
  %v73 = vld [vmem:[%s1 + $0x34] sm:$0xf]
  %v74 = vld [vmem:[%s1 + $0x38] sm:$0xf]
  %v75 = vld [vmem:[%s1 + $0x3c] sm:$0xf]
  %v76 = vld [vmem:[%s1 + $0x40] sm:$0xf]
  %v77 = vld [vmem:[%s1 + $0x44] sm:$0xf]
  %v78 = vld [vmem:[%s1 + $0x48] sm:$0xf]
  %v79 = vld [vmem:[%s1 + $0x4c] sm:$0xf]
  %v80 = vld [vmem:[%s1 + $0x50] sm:$0xf]
  %v81 = vld [vmem:[%s1 + $0x54] sm:$0xf]
  %v82 = vld [vmem:[%s1 + $0x58] sm:$0xf]
  %v83 = vld [vmem:[%s1 + $0x5c] sm:$0xf]
  %v84 = vld [vmem:[%s1 + $0x60] sm:$0xf]
  %v85 = vld [vmem:[%s1 + $0x64] sm:$0xf]
  %v86 = vld [vmem:[%s1 + $0x68] sm:$0xf]
  %v87 = vld [vmem:[%s1 + $0x6c] sm:$0xf]
  %v88 = vld [vmem:[%s1 + $0x70] sm:$0xf]
  %v89 = vld [vmem:[%s1 + $0x74] sm:$0xf]
  %v90 = vld [vmem:[%s1 + $0x78] sm:$0xf]
  %v91 = vld [vmem:[%s1 + $0x7c] sm:$0xf]
  %v92 = vld [vmem:[%s1 + $0x80] sm:$0xf]
  %v93 = vld [vmem:[%s1 + $0x84] sm:$0xf]
  %v94 = vld [vmem:[%s1 + $0x88] sm:$0xf]
  %v95 = vld [vmem:[%s1 + $0x8c] sm:$0xf]
  %v96 = vld [vmem:[%s1 + $0x90] sm:$0xf]
  %v97 = vld [vmem:[%s1 + $0x94] sm:$0xf]
  %v98 = vld [vmem:[%s1 + $0x98] sm:$0xf]
  %v99 = vld [vmem:[%s1 + $0x9c] sm:$0xf]
  %v100 = vld [vmem:[%s1 + $0xa0] sm:$0xf]
  %v101 = vld [vmem:[%s1 + $0xa4] sm:$0xf]
  %v102 = vld [vmem:[%s1 + $0xa8] sm:$0xf]
  %v103 = vld [vmem:[%s1 + $0xac] sm:$0xf]
  %v104 = vld [vmem:[%s1 + $0xb0] sm:$0xf]
  %v105 = vld [vmem:[%s1 + $0xb4] sm:$0xf]
  %v106 = vld [vmem:[%s1 + $0xb8] sm:$0xf]
  %v107 = vld [vmem:[%s1 + $0xbc] sm:$0xf]
  %v108 = vld [vmem:[%s1 + $0xc0] sm:$0xf]
  %v109 = vld [vmem:[%s1 + $0xc4] sm:$0xf]
  %v110 = vld [vmem:[%s1 + $0xc8] sm:$0xf]
  %v111 = vld [vmem:[%s1 + $0xcc] sm:$0xf]
  %v112 = vld [vmem:[%s1 + $0xd0] sm:$0xf]
  %v113 = vld [vmem:[%s1 + $0xd4] sm:$0xf]
  %v114 = vld [vmem:[%s1 + $0xd8] sm:$0xf]
  %v115 = vld [vmem:[%s1 + $0xdc] sm:$0xf]
  %v116 = vld [vmem:[%s1 + $0xe0] sm:$0xf]
  %v117 = vld [vmem:[%s1 + $0xe4] sm:$0xf]
  %v118 = vld [vmem:[%s1 + $0xe8] sm:$0xf]
  %v119 = vld [vmem:[%s1 + $0xec] sm:$0xf]
  %v120 = vld [vmem:[%s1 + $0xf0] sm:$0xf]
  %v121 = vld [vmem:[%s1 + $0xf4] sm:$0xf]
  %v122 = vld [vmem:[%s1 + $0xf8] sm:$0xf]
  %v123 = vld [vmem:[%s1 + $0xfc] sm:$0xf]
  %v124 = vld [vmem:[%s1 + $0x100] sm:$0xf]
  %v125 = vld [vmem:[%s1 + $0x104] sm:$0xf]
  %v126 = vld [vmem:[%s1 + $0x108] sm:$0xf]
  %v127 = vld [vmem:[%s1 + $0x10c] sm:$0xf]
  %v128 = vld [vmem:[%s1 + $0x110] sm:$0xf]
  %v129 = vld [vmem:[%s1 + $0x114] sm:$0xf]
  %v130 = vld [vmem:[%s1 + $0x118] sm:$0xf]
  %v131 = vld [vmem:[%s1 + $0x11c] sm:$0xf]
  %v132 = vld [vmem:[%s1 + $0x120] sm:$0xf]
  %v133 = vld [vmem:[%s1 + $0x124] sm:$0xf]
  %v134 = vld [vmem:[%s1 + $0x128] sm:$0xf]
  %v135 = vld [vmem:[%s1 + $0x12c] sm:$0xf]
  %v136 = vld [vmem:[%s1 + $0x130] sm:$0xf]
  %v137 = vld [vmem:[%s1 + $0x134] sm:$0xf]
  %v138 = vld [vmem:[%s1 + $0x138] sm:$0xf]
  %v139 = vld [vmem:[%s1 + $0x13c] sm:$0xf]
  %v140 = vld [vmem:[%s1 + $0x140] sm:$0xf]
  %v141 = vld [vmem:[%s1 + $0x144] sm:$0xf]
  %v142 = vld [vmem:[%s1 + $0x148] sm:$0xf]
  %v143 = vld [vmem:[%s1 + $0x14c] sm:$0xf]
  %v144 = vld [vmem:[%s1 + $0x150] sm:$0xf]
  %v145 = vld [vmem:[%s1 + $0x154] sm:$0xf]
  %v146 = vld [vmem:[%s1 + $0x158] sm:$0xf]
  %v147 = vld [vmem:[%s1 + $0x15c] sm:$0xf]
  %v148 = vld [vmem:[%s1 + $0x160] sm:$0xf]
  %v149 = vld [vmem:[%s1 + $0x164] sm:$0xf]
  %v150 = vld [vmem:[%s1 + $0x168] sm:$0xf]
  %v151 = vld [vmem:[%s1 + $0x16c] sm:$0xf]
  %v152 = vld [vmem:[%s1 + $0x170] sm:$0xf]
  %v153 = vld [vmem:[%s1 + $0x174] sm:$0xf]
  %v154 = vld [vmem:[%s1 + $0x178] sm:$0xf]
  %v155 = vld [vmem:[%s1 + $0x17c] sm:$0xf]
  %v156 = vld [vmem:[%s1 + $0x180] sm:$0xf]
  %v157 = vld [vmem:[%s1 + $0x184] sm:$0xf]
  %v158 = vld [vmem:[%s1 + $0x188] sm:$0xf]
  %v159 = vld [vmem:[%s1 + $0x18c] sm:$0xf]
  %v160 = vld [vmem:[%s1 + $0x190] sm:$0xf]
  %v161 = vld [vmem:[%s1 + $0x194] sm:$0xf]
  %v162 = vld [vmem:[%s1 + $0x198] sm:$0xf]
  %v163 = vld [vmem:[%s1 + $0x19c] sm:$0xf]
  %v164 = vld [vmem:[%s1 + $0x1a0] sm:$0xf]
  %v165 = vld [vmem:[%s1 + $0x1a4] sm:$0xf]
  %v166 = vld [vmem:[%s1 + $0x1a8] sm:$0xf]
  %v167 = vld [vmem:[%s1 + $0x1ac] sm:$0xf]
  %v168 = vld [vmem:[%s1 + $0x1b0] sm:$0xf]
  %v169 = vld [vmem:[%s1 + $0x1b4] sm:$0xf]
  %v170 = vld [vmem:[%s1 + $0x1b8] sm:$0xf]
  %v171 = vld [vmem:[%s1 + $0x1bc] sm:$0xf]
  %v172 = vld [vmem:[%s1 + $0x1c0] sm:$0xf]
  %v173 = vld [vmem:[%s1 + $0x1c4] sm:$0xf]
  %v174 = vld [vmem:[%s1 + $0x1c8] sm:$0xf]
  %v175 = vld [vmem:[%s1 + $0x1cc] sm:$0xf]
  %v176 = vld [vmem:[%s1 + $0x1d0] sm:$0xf]
  %v177 = vld [vmem:[%s1 + $0x1d4] sm:$0xf]
  %v178 = vld [vmem:[%s1 + $0x1d8] sm:$0xf]
  %v179 = vld [vmem:[%s1 + $0x1dc] sm:$0xf]
  %v180 = vld [vmem:[%s1 + $0x1e0] sm:$0xf]
  %v181 = vld [vmem:[%s1 + $0x1e4] sm:$0xf]
  %v182 = vld [vmem:[%s1 + $0x1e8] sm:$0xf]
  %v183 = vld [vmem:[%s1 + $0x1ec] sm:$0xf]
  %v184 = vld [vmem:[%s1 + $0x1f0] sm:$0xf]
  %v185 = vld [vmem:[%s1 + $0x1f4] sm:$0xf]
  %v186 = vld [vmem:[%s1 + $0x1f8] sm:$0xf]
  %v187 = vld [vmem:[%s1 + $0x1fc] sm:$0xf]
  %v188 = vld [vmem:[%s1 + $0x200] sm:$0xf]
  %v189 = vld [vmem:[%s1 + $0x204] sm:$0xf]
  %v190 = vld [vmem:[%s1 + $0x208] sm:$0xf]
  %v191 = vld [vmem:[%s1 + $0x20c] sm:$0xf]
  %v192 = vld [vmem:[%s1 + $0x210] sm:$0xf]
  %v193 = vld [vmem:[%s1 + $0x214] sm:$0xf]
  %v194 = vld [vmem:[%s1 + $0x218] sm:$0xf]
  %v195 = vld [vmem:[%s1 + $0x21c] sm:$0xf]
  %v196 = vld [vmem:[%s1 + $0x220] sm:$0xf]
  %v197 = vld [vmem:[%s1 + $0x224] sm:$0xf]
  %v198 = vld [vmem:[%s1 + $0x228] sm:$0xf]
  %v199 = vld [vmem:[%s1 + $0x22c] sm:$0xf]
  %v200 = vld [vmem:[%s1 + $0x230] sm:$0xf]
  %v201 = vld [vmem:[%s1 + $0x234] sm:$0xf]
  %v202 = vld [vmem:[%s1 + $0x238] sm:$0xf]
  %v203 = vld [vmem:[%s1 + $0x23c] sm:$0xf]
  %v204 = vld [vmem:[%s2] sm:$0x1]
  %v206 = vlaneseq
  %v207 = vshrl.u32 %v206, 7
  %v208 = vsub.s32 0, %v207
  %v209 = vrot.slane %v204, %v208
  %v256 = vunpack.c.l.b16 %v15
  %v257 = vunpack.c.h.b16 %v15
  %v258 = vunpack.c.l.b16 %v16
  %v259 = vunpack.c.h.b16 %v16
  %v260 = vunpack.c.l.b16 %v17
  %v261 = vunpack.c.h.b16 %v17
  %v262 = vunpack.c.l.b16 %v18
  %v263 = vunpack.c.h.b16 %v18
  %v264 = vunpack.c.l.b16 %v19
  %v265 = vunpack.c.l.b16 %v20
  %v266 = vunpack.c.h.b16 %v20
  %v267 = vunpack.c.l.b16 %v21
  %v268 = vunpack.c.h.b16 %v21
  %v269 = vunpack.c.l.b16 %v22
  %v270 = vunpack.c.h.b16 %v22
  %v271 = vunpack.c.l.b16 %v23
  %v272 = vunpack.c.h.b16 %v23
  %v273 = vunpack.c.l.b16 %v24
  %v274 = vunpack.c.l.b16 %v25
  %v275 = vunpack.c.h.b16 %v25
  %v276 = vunpack.c.l.b16 %v26
  %v277 = vunpack.c.h.b16 %v26
  %v278 = vunpack.c.l.b16 %v27
  %v279 = vunpack.c.h.b16 %v27
  %v280 = vunpack.c.l.b16 %v28
  %v281 = vunpack.c.h.b16 %v28
  %v282 = vunpack.c.l.b16 %v29
  %v283 = vunpack.c.l.b16 %v30
  %v284 = vunpack.c.h.b16 %v30
  %v285 = vunpack.c.l.b16 %v31
  %v286 = vunpack.c.h.b16 %v31
  %v287 = vunpack.c.l.b16 %v32
  %v288 = vunpack.c.h.b16 %v32
  %v289 = vunpack.c.l.b16 %v33
  %v290 = vunpack.c.h.b16 %v33
  %v291 = vunpack.c.l.b16 %v34
  %v292 = vunpack.c.l.b16 %v35
  %v293 = vunpack.c.h.b16 %v35
  %v294 = vunpack.c.l.b16 %v36
  %v295 = vunpack.c.h.b16 %v36
  %v296 = vunpack.c.l.b16 %v37
  %v297 = vunpack.c.h.b16 %v37
  %v298 = vunpack.c.l.b16 %v38
  %v299 = vunpack.c.h.b16 %v38
  %v300 = vunpack.c.l.b16 %v39
  %v301 = vunpack.c.l.b16 %v40
  %v302 = vunpack.c.h.b16 %v40
  %v303 = vunpack.c.l.b16 %v41
  %v304 = vunpack.c.h.b16 %v41
  %v305 = vunpack.c.l.b16 %v42
  %v306 = vunpack.c.h.b16 %v42
  %v307 = vunpack.c.l.b16 %v43
  %v308 = vunpack.c.h.b16 %v43
  %v309 = vunpack.c.l.b16 %v44
  %v310 = vunpack.c.l.b16 %v45
  %v311 = vunpack.c.h.b16 %v45
  %v312 = vunpack.c.l.b16 %v46
  %v313 = vunpack.c.h.b16 %v46
  %v314 = vunpack.c.l.b16 %v47
  %v315 = vunpack.c.h.b16 %v47
  %v316 = vunpack.c.l.b16 %v48
  %v317 = vunpack.c.h.b16 %v48
  %v318 = vunpack.c.l.b16 %v49
  %v319 = vunpack.c.l.b16 %v50
  %v320 = vunpack.c.h.b16 %v50
  %v321 = vunpack.c.l.b16 %v51
  %v322 = vunpack.c.h.b16 %v51
  %v323 = vunpack.c.l.b16 %v52
  %v324 = vunpack.c.h.b16 %v52
  %v325 = vunpack.c.l.b16 %v53
  %v326 = vunpack.c.h.b16 %v53
  %v327 = vunpack.c.l.b16 %v54
  %v328 = vunpack.c.l.b16 %v55
  %v329 = vunpack.c.h.b16 %v55
  %v330 = vunpack.c.l.b16 %v56
  %v331 = vunpack.c.h.b16 %v56
  %v332 = vunpack.c.l.b16 %v57
  %v333 = vunpack.c.h.b16 %v57
  %v334 = vunpack.c.l.b16 %v58
  %v335 = vunpack.c.h.b16 %v58
  %v336 = vunpack.c.l.b16 %v59
  %v337 = vpack.c.b16 %v265, %v256
  %v338 = vpack.c.b16 %v266, %v257
  %v339 = vpack.c.b16 %v267, %v258
  %v340 = vpack.c.b16 %v268, %v259
  %v341 = vpack.c.b16 %v269, %v260
  %v342 = vpack.c.b16 %v270, %v261
  %v343 = vpack.c.b16 %v271, %v262
  %v344 = vpack.c.b16 %v272, %v263
  %v345 = vpack.c.b16 %v273, %v264
  %v346 = vpack.c.b16 %v283, %v274
  %v347 = vpack.c.b16 %v284, %v275
  %v348 = vpack.c.b16 %v285, %v276
  %v349 = vpack.c.b16 %v286, %v277
  %v350 = vpack.c.b16 %v287, %v278
  %v351 = vpack.c.b16 %v288, %v279
  %v352 = vpack.c.b16 %v289, %v280
  %v353 = vpack.c.b16 %v290, %v281
  %v354 = vpack.c.b16 %v291, %v282
  %v355 = vpack.c.b16 %v301, %v292
  %v356 = vpack.c.b16 %v302, %v293
  %v357 = vpack.c.b16 %v303, %v294
  %v358 = vpack.c.b16 %v304, %v295
  %v359 = vpack.c.b16 %v305, %v296
  %v360 = vpack.c.b16 %v306, %v297
  %v361 = vpack.c.b16 %v307, %v298
  %v362 = vpack.c.b16 %v308, %v299
  %v363 = vpack.c.b16 %v309, %v300
  %v364 = vpack.c.b16 %v319, %v310
  %v365 = vpack.c.b16 %v320, %v311
  %v366 = vpack.c.b16 %v321, %v312
  %v367 = vpack.c.b16 %v322, %v313
  %v368 = vpack.c.b16 %v323, %v314
  %v369 = vpack.c.b16 %v324, %v315
  %v370 = vpack.c.b16 %v325, %v316
  %v371 = vpack.c.b16 %v326, %v317
  %v372 = vpack.c.b16 %v327, %v318
  %v373 = vpack.c.b16 %v328, %v328
  %v374 = vpack.c.b16 %v329, %v329
  %v375 = vpack.c.b16 %v330, %v330
  %v376 = vpack.c.b16 %v331, %v331
  %v377 = vpack.c.b16 %v332, %v332
  %v378 = vpack.c.b16 %v333, %v333
  %v379 = vpack.c.b16 %v334, %v334
  %v380 = vpack.c.b16 %v335, %v335
  %v381 = vpack.c.b16 %v336, %v336
  %v571 = vunpack.c.l.b16 %v60
  %v572 = vunpack.c.l.b16 %v61
  %v573 = vunpack.c.l.b16 %v62
  %v574 = vunpack.c.l.b16 %v63
  %v575 = vunpack.c.l.b16 %v64
  %v576 = vunpack.c.l.b16 %v65
  %v577 = vunpack.c.l.b16 %v66
  %v578 = vunpack.c.l.b16 %v67
  %v579 = vunpack.c.l.b16 %v68
  %v580 = vunpack.c.l.b16 %v69
  %v581 = vunpack.c.l.b16 %v70
  %v582 = vunpack.c.l.b16 %v71
  %v583 = vunpack.c.l.b16 %v72
  %v584 = vunpack.c.l.b16 %v73
  %v585 = vunpack.c.l.b16 %v74
  %v586 = vunpack.c.l.b16 %v75
  %v587 = vunpack.c.l.b16 %v76
  %v588 = vunpack.c.l.b16 %v77
  %v589 = vunpack.c.l.b16 %v78
  %v590 = vunpack.c.l.b16 %v79
  %v591 = vunpack.c.l.b16 %v80
  %v592 = vunpack.c.l.b16 %v81
  %v593 = vunpack.c.l.b16 %v82
  %v594 = vunpack.c.l.b16 %v83
  %v595 = vunpack.c.l.b16 %v84
  %v596 = vunpack.c.l.b16 %v85
  %v597 = vunpack.c.l.b16 %v86
  %v598 = vunpack.c.l.b16 %v87
  %v599 = vunpack.c.l.b16 %v88
  %v600 = vunpack.c.l.b16 %v89
  %v601 = vunpack.c.l.b16 %v90
  %v602 = vunpack.c.l.b16 %v91
  %v603 = vunpack.c.l.b16 %v92
  %v604 = vunpack.c.l.b16 %v93
  %v605 = vunpack.c.l.b16 %v94
  %v606 = vunpack.c.l.b16 %v95
  %v607 = vunpack.c.l.b16 %v96
  %v608 = vunpack.c.l.b16 %v97
  %v609 = vunpack.c.l.b16 %v98
  %v610 = vunpack.c.l.b16 %v99
  %v611 = vunpack.c.l.b16 %v100
  %v612 = vunpack.c.l.b16 %v101
  %v613 = vunpack.c.l.b16 %v102
  %v614 = vunpack.c.l.b16 %v103
  %v615 = vunpack.c.l.b16 %v104
  %v616 = vunpack.c.l.b16 %v105
  %v617 = vunpack.c.l.b16 %v106
  %v618 = vunpack.c.l.b16 %v107
  %v619 = vunpack.c.l.b16 %v108
  %v620 = vunpack.c.l.b16 %v109
  %v621 = vunpack.c.l.b16 %v110
  %v622 = vunpack.c.l.b16 %v111
  %v623 = vunpack.c.l.b16 %v112
  %v624 = vunpack.c.l.b16 %v113
  %v625 = vunpack.c.l.b16 %v114
  %v626 = vunpack.c.l.b16 %v115
  %v627 = vunpack.c.l.b16 %v116
  %v628 = vunpack.c.l.b16 %v117
  %v629 = vunpack.c.l.b16 %v118
  %v630 = vunpack.c.l.b16 %v119
  %v631 = vunpack.c.l.b16 %v120
  %v632 = vunpack.c.l.b16 %v121
  %v633 = vunpack.c.l.b16 %v122
  %v634 = vunpack.c.l.b16 %v123
  %v635 = vunpack.c.l.b16 %v124
  %v636 = vunpack.c.l.b16 %v125
  %v637 = vunpack.c.l.b16 %v126
  %v638 = vunpack.c.l.b16 %v127
  %v639 = vunpack.c.l.b16 %v128
  %v640 = vunpack.c.l.b16 %v129
  %v641 = vunpack.c.l.b16 %v130
  %v642 = vunpack.c.l.b16 %v131
  %v643 = vunpack.c.l.b16 %v132
  %v644 = vunpack.c.l.b16 %v133
  %v645 = vunpack.c.l.b16 %v134
  %v646 = vunpack.c.l.b16 %v135
  %v647 = vunpack.c.l.b16 %v136
  %v648 = vunpack.c.l.b16 %v137
  %v649 = vunpack.c.l.b16 %v138
  %v650 = vunpack.c.l.b16 %v139
  %v651 = vunpack.c.l.b16 %v140
  %v652 = vunpack.c.l.b16 %v141
  %v653 = vunpack.c.l.b16 %v142
  %v654 = vunpack.c.l.b16 %v143
  %v655 = vunpack.c.l.b16 %v144
  %v656 = vunpack.c.l.b16 %v145
  %v657 = vunpack.c.l.b16 %v146
  %v658 = vunpack.c.l.b16 %v147
  %v659 = vunpack.c.l.b16 %v148
  %v660 = vunpack.c.l.b16 %v149
  %v661 = vunpack.c.l.b16 %v150
  %v662 = vunpack.c.l.b16 %v151
  %v663 = vunpack.c.l.b16 %v152
  %v664 = vunpack.c.l.b16 %v153
  %v665 = vunpack.c.l.b16 %v154
  %v666 = vunpack.c.l.b16 %v155
  %v667 = vunpack.c.l.b16 %v156
  %v668 = vunpack.c.l.b16 %v157
  %v669 = vunpack.c.l.b16 %v158
  %v670 = vunpack.c.l.b16 %v159
  %v671 = vunpack.c.l.b16 %v160
  %v672 = vunpack.c.l.b16 %v161
  %v673 = vunpack.c.l.b16 %v162
  %v674 = vunpack.c.l.b16 %v163
  %v675 = vunpack.c.l.b16 %v164
  %v676 = vunpack.c.l.b16 %v165
  %v677 = vunpack.c.l.b16 %v166
  %v678 = vunpack.c.l.b16 %v167
  %v679 = vunpack.c.l.b16 %v168
  %v680 = vunpack.c.l.b16 %v169
  %v681 = vunpack.c.l.b16 %v170
  %v682 = vunpack.c.l.b16 %v171
  %v683 = vunpack.c.l.b16 %v172
  %v684 = vunpack.c.l.b16 %v173
  %v685 = vunpack.c.l.b16 %v174
  %v686 = vunpack.c.l.b16 %v175
  %v687 = vunpack.c.l.b16 %v176
  %v688 = vunpack.c.l.b16 %v177
  %v689 = vunpack.c.l.b16 %v178
  %v690 = vunpack.c.l.b16 %v179
  %v691 = vunpack.c.l.b16 %v180
  %v692 = vunpack.c.l.b16 %v181
  %v693 = vunpack.c.l.b16 %v182
  %v694 = vunpack.c.l.b16 %v183
  %v695 = vunpack.c.l.b16 %v184
  %v696 = vunpack.c.l.b16 %v185
  %v697 = vunpack.c.l.b16 %v186
  %v698 = vunpack.c.l.b16 %v187
  %v699 = vunpack.c.l.b16 %v188
  %v700 = vunpack.c.l.b16 %v189
  %v701 = vunpack.c.l.b16 %v190
  %v702 = vunpack.c.l.b16 %v191
  %v703 = vunpack.c.l.b16 %v192
  %v704 = vunpack.c.l.b16 %v193
  %v705 = vunpack.c.l.b16 %v194
  %v706 = vunpack.c.l.b16 %v195
  %v707 = vunpack.c.l.b16 %v196
  %v708 = vunpack.c.l.b16 %v197
  %v709 = vunpack.c.l.b16 %v198
  %v710 = vunpack.c.l.b16 %v199
  %v711 = vunpack.c.l.b16 %v200
  %v712 = vunpack.c.l.b16 %v201
  %v713 = vunpack.c.l.b16 %v202
  %v714 = vunpack.c.l.b16 %v203
  %v715 = vpack.c.b16 %v572, %v571
  %v716 = vpack.c.b16 %v574, %v573
  %v717 = vpack.c.b16 %v576, %v575
  %v718 = vpack.c.b16 %v578, %v577
  %v719 = vpack.c.b16 %v580, %v579
  %v720 = vpack.c.b16 %v582, %v581
  %v721 = vpack.c.b16 %v584, %v583
  %v722 = vpack.c.b16 %v586, %v585
  %v723 = vpack.c.b16 %v588, %v587
  %v724 = vpack.c.b16 %v590, %v589
  %v725 = vpack.c.b16 %v592, %v591
  %v726 = vpack.c.b16 %v594, %v593
  %v727 = vpack.c.b16 %v596, %v595
  %v728 = vpack.c.b16 %v598, %v597
  %v729 = vpack.c.b16 %v600, %v599
  %v730 = vpack.c.b16 %v602, %v601
  %v731 = vpack.c.b16 %v604, %v603
  %v732 = vpack.c.b16 %v606, %v605
  %v733 = vpack.c.b16 %v608, %v607
  %v734 = vpack.c.b16 %v610, %v609
  %v735 = vpack.c.b16 %v612, %v611
  %v736 = vpack.c.b16 %v614, %v613
  %v737 = vpack.c.b16 %v616, %v615
  %v738 = vpack.c.b16 %v618, %v617
  %v739 = vpack.c.b16 %v620, %v619
  %v740 = vpack.c.b16 %v622, %v621
  %v741 = vpack.c.b16 %v624, %v623
  %v742 = vpack.c.b16 %v626, %v625
  %v743 = vpack.c.b16 %v628, %v627
  %v744 = vpack.c.b16 %v630, %v629
  %v745 = vpack.c.b16 %v632, %v631
  %v746 = vpack.c.b16 %v634, %v633
  %v747 = vpack.c.b16 %v636, %v635
  %v748 = vpack.c.b16 %v638, %v637
  %v749 = vpack.c.b16 %v640, %v639
  %v750 = vpack.c.b16 %v642, %v641
  %v751 = vpack.c.b16 %v644, %v643
  %v752 = vpack.c.b16 %v646, %v645
  %v753 = vpack.c.b16 %v648, %v647
  %v754 = vpack.c.b16 %v650, %v649
  %v755 = vpack.c.b16 %v652, %v651
  %v756 = vpack.c.b16 %v654, %v653
  %v757 = vpack.c.b16 %v656, %v655
  %v758 = vpack.c.b16 %v658, %v657
  %v759 = vpack.c.b16 %v660, %v659
  %v760 = vpack.c.b16 %v662, %v661
  %v761 = vpack.c.b16 %v664, %v663
  %v762 = vpack.c.b16 %v666, %v665
  %v763 = vpack.c.b16 %v668, %v667
  %v764 = vpack.c.b16 %v670, %v669
  %v765 = vpack.c.b16 %v672, %v671
  %v766 = vpack.c.b16 %v674, %v673
  %v767 = vpack.c.b16 %v676, %v675
  %v768 = vpack.c.b16 %v678, %v677
  %v769 = vpack.c.b16 %v680, %v679
  %v770 = vpack.c.b16 %v682, %v681
  %v771 = vpack.c.b16 %v684, %v683
  %v772 = vpack.c.b16 %v686, %v685
  %v773 = vpack.c.b16 %v688, %v687
  %v774 = vpack.c.b16 %v690, %v689
  %v775 = vpack.c.b16 %v692, %v691
  %v776 = vpack.c.b16 %v694, %v693
  %v777 = vpack.c.b16 %v696, %v695
  %v778 = vpack.c.b16 %v698, %v697
  %v779 = vpack.c.b16 %v700, %v699
  %v780 = vpack.c.b16 %v702, %v701
  %v781 = vpack.c.b16 %v704, %v703
  %v782 = vpack.c.b16 %v706, %v705
  %v783 = vpack.c.b16 %v708, %v707
  %v784 = vpack.c.b16 %v710, %v709
  %v785 = vpack.c.b16 %v712, %v711
  %v786 = vpack.c.b16 %v714, %v713
  %859 = vmatprep.subr.bf16.mxu0 0
  %860 = vmatpush1.bf16.msra.mxu0 %v722
  %861 = vmatprep.subr.bf16.mxu0 0
  %862 = vmatpush1.bf16.msra.mxu0 %v721
  %863 = vmatprep.subr.bf16.mxu0 0
  %864 = vmatpush1.bf16.msra.mxu0 %v720
  %865 = vmatprep.subr.bf16.mxu0 0
  %866 = vmatpush1.bf16.msra.mxu0 %v719
  %867 = vmatprep.subr.bf16.mxu0 0
  %868 = vmatpush1.bf16.msra.mxu0 %v718
  %869 = vmatprep.subr.bf16.mxu0 0
  %870 = vmatpush1.bf16.msra.mxu0 %v717
  %871 = vmatprep.subr.bf16.mxu0 0
  %872 = vmatpush1.bf16.msra.mxu0 %v716
  %873 = vmatprep.subr.bf16.mxu0 0
  %874 = vmatpush1.bf16.msra.mxu0 %v715
  %875 = vmatprep.subr.bf16.mxu0 0
  %876 = vmatpush2.bf16.msra.mxu0 %v730
  %877 = vmatprep.subr.bf16.mxu0 0
  %878 = vmatpush2.bf16.msra.mxu0 %v729
  %879 = vmatprep.subr.bf16.mxu0 0
  %880 = vmatpush2.bf16.msra.mxu0 %v728
  %881 = vmatprep.subr.bf16.mxu0 0
  %882 = vmatpush2.bf16.msra.mxu0 %v727
  %883 = vmatprep.subr.bf16.mxu0 0
  %884 = vmatpush2.bf16.msra.mxu0 %v726
  %885 = vmatprep.subr.bf16.mxu0 0
  %886 = vmatpush2.bf16.msra.mxu0 %v725
  %887 = vmatprep.subr.bf16.mxu0 0
  %888 = vmatpush2.bf16.msra.mxu0 %v724
  %889 = vmatprep.subr.bf16.mxu0 0
  %890 = vmatpush2.bf16.msra.mxu0 %v723
  %891 = vmatprep.mubr.bf16.mxu0 %v338
  %892 = vmatmul.mubr.bf16.gmra.mxu0 %v337
  %v893 = vpop.f32.mrf.mxu0
  %v894 = vadd.f32 %v209, %v893
  %v895 = vpop.f32.mrf.mxu0
  %v896 = vpop.f32.mrf.mxu0
  %v897 = vadd.f32 %v209, %v896
  %v898 = vpop.f32.mrf.mxu0
  %899 = vmatprep.mubr.bf16.mxu0 %v347
  %900 = vmatmul.mubr.bf16.gmra.mxu0 %v346
  %v901 = vpop.f32.mrf.mxu0
  %v902 = vadd.f32 %v209, %v901
  %v903 = vpop.f32.mrf.mxu0
  %v904 = vpop.f32.mrf.mxu0
  %v905 = vadd.f32 %v209, %v904
  %v906 = vpop.f32.mrf.mxu0
  %907 = vmatprep.mubr.bf16.mxu0 %v356
  %908 = vmatmul.mubr.bf16.gmra.mxu0 %v355
  %v909 = vpop.f32.mrf.mxu0
  %v910 = vadd.f32 %v209, %v909
  %v911 = vpop.f32.mrf.mxu0
  %v912 = vpop.f32.mrf.mxu0
  %v913 = vadd.f32 %v209, %v912
  %v914 = vpop.f32.mrf.mxu0
  %915 = vmatprep.mubr.bf16.mxu0 %v365
  %916 = vmatmul.mubr.bf16.gmra.mxu0 %v364
  %v917 = vpop.f32.mrf.mxu0
  %v918 = vadd.f32 %v209, %v917
  %v919 = vpop.f32.mrf.mxu0
  %v920 = vpop.f32.mrf.mxu0
  %v921 = vadd.f32 %v209, %v920
  %v922 = vpop.f32.mrf.mxu0
  %923 = vmatprep.mubr.bf16.mxu0 %v374
  %924 = vmatmul.mubr.bf16.gmra.mxu0 %v373
  %v925 = vpop.f32.mrf.mxu0
  %v926 = vadd.f32 %v209, %v925
  %v927 = vpop.f32.mrf.mxu0
  %v928 = vpop.f32.mrf.mxu0
  %v929 = vpop.f32.mrf.mxu0
  %930 = vdwg.mxu0
  %931 = vmatprep.subr.bf16.mxu0 0
  %932 = vmatpush1.bf16.msra.mxu0 %v738
  %933 = vmatprep.subr.bf16.mxu0 0
  %934 = vmatpush1.bf16.msra.mxu0 %v737
  %935 = vmatprep.subr.bf16.mxu0 0
  %936 = vmatpush1.bf16.msra.mxu0 %v736
  %937 = vmatprep.subr.bf16.mxu0 0
  %938 = vmatpush1.bf16.msra.mxu0 %v735
  %939 = vmatprep.subr.bf16.mxu0 0
  %940 = vmatpush1.bf16.msra.mxu0 %v734
  %941 = vmatprep.subr.bf16.mxu0 0
  %942 = vmatpush1.bf16.msra.mxu0 %v733
  %943 = vmatprep.subr.bf16.mxu0 0
  %944 = vmatpush1.bf16.msra.mxu0 %v732
  %945 = vmatprep.subr.bf16.mxu0 0
  %946 = vmatpush1.bf16.msra.mxu0 %v731
  %947 = vmatprep.subr.bf16.mxu0 0
  %948 = vmatpush2.bf16.msra.mxu0 %v746
  %949 = vmatprep.subr.bf16.mxu0 0
  %950 = vmatpush2.bf16.msra.mxu0 %v745
  %951 = vmatprep.subr.bf16.mxu0 0
  %952 = vmatpush2.bf16.msra.mxu0 %v744
  %953 = vmatprep.subr.bf16.mxu0 0
  %954 = vmatpush2.bf16.msra.mxu0 %v743
  %955 = vmatprep.subr.bf16.mxu0 0
  %956 = vmatpush2.bf16.msra.mxu0 %v742
  %957 = vmatprep.subr.bf16.mxu0 0
  %958 = vmatpush2.bf16.msra.mxu0 %v741
  %959 = vmatprep.subr.bf16.mxu0 0
  %960 = vmatpush2.bf16.msra.mxu0 %v740
  %961 = vmatprep.subr.bf16.mxu0 0
  %962 = vmatpush2.bf16.msra.mxu0 %v739
  %963 = vmatprep.mubr.bf16.mxu0 %v340
  %964 = vmatmul.mubr.bf16.gmra.mxu0 %v339
  %v965 = vpop.f32.mrf.mxu0
  %v966 = vadd.f32 %v894, %v965
  %v967 = vpop.f32.mrf.mxu0
  %v968 = vpop.f32.mrf.mxu0
  %v969 = vadd.f32 %v897, %v968
  %v970 = vpop.f32.mrf.mxu0
  %971 = vmatprep.mubr.bf16.mxu0 %v349
  %972 = vmatmul.mubr.bf16.gmra.mxu0 %v348
  %v973 = vpop.f32.mrf.mxu0
  %v974 = vadd.f32 %v902, %v973
  %v975 = vpop.f32.mrf.mxu0
  %v976 = vpop.f32.mrf.mxu0
  %v977 = vadd.f32 %v905, %v976
  %v978 = vpop.f32.mrf.mxu0
  %979 = vmatprep.mubr.bf16.mxu0 %v358
  %980 = vmatmul.mubr.bf16.gmra.mxu0 %v357
  %v981 = vpop.f32.mrf.mxu0
  %v982 = vadd.f32 %v910, %v981
  %v983 = vpop.f32.mrf.mxu0
  %v984 = vpop.f32.mrf.mxu0
  %v985 = vadd.f32 %v913, %v984
  %v986 = vpop.f32.mrf.mxu0
  %987 = vmatprep.mubr.bf16.mxu0 %v367
  %988 = vmatmul.mubr.bf16.gmra.mxu0 %v366
  %v989 = vpop.f32.mrf.mxu0
  %v990 = vadd.f32 %v918, %v989
  %v991 = vpop.f32.mrf.mxu0
  %v992 = vpop.f32.mrf.mxu0
  %v993 = vadd.f32 %v921, %v992
  %v994 = vpop.f32.mrf.mxu0
  %995 = vmatprep.mubr.bf16.mxu0 %v376
  %996 = vmatmul.mubr.bf16.gmra.mxu0 %v375
  %v997 = vpop.f32.mrf.mxu0
  %v998 = vadd.f32 %v926, %v997
  %v999 = vpop.f32.mrf.mxu0
  %v1000 = vpop.f32.mrf.mxu0
  %v1001 = vpop.f32.mrf.mxu0
  %1002 = vdwg.mxu0
  %1003 = vmatprep.subr.bf16.mxu0 0
  %1004 = vmatpush1.bf16.msra.mxu0 %v754
  %1005 = vmatprep.subr.bf16.mxu0 0
  %1006 = vmatpush1.bf16.msra.mxu0 %v753
  %1007 = vmatprep.subr.bf16.mxu0 0
  %1008 = vmatpush1.bf16.msra.mxu0 %v752
  %1009 = vmatprep.subr.bf16.mxu0 0
  %1010 = vmatpush1.bf16.msra.mxu0 %v751
  %1011 = vmatprep.subr.bf16.mxu0 0
  %1012 = vmatpush1.bf16.msra.mxu0 %v750
  %1013 = vmatprep.subr.bf16.mxu0 0
  %1014 = vmatpush1.bf16.msra.mxu0 %v749
  %1015 = vmatprep.subr.bf16.mxu0 0
  %1016 = vmatpush1.bf16.msra.mxu0 %v748
  %1017 = vmatprep.subr.bf16.mxu0 0
  %1018 = vmatpush1.bf16.msra.mxu0 %v747
  %1019 = vmatprep.subr.bf16.mxu0 0
  %1020 = vmatpush2.bf16.msra.mxu0 %v762
  %1021 = vmatprep.subr.bf16.mxu0 0
  %1022 = vmatpush2.bf16.msra.mxu0 %v761
  %1023 = vmatprep.subr.bf16.mxu0 0
  %1024 = vmatpush2.bf16.msra.mxu0 %v760
  %1025 = vmatprep.subr.bf16.mxu0 0
  %1026 = vmatpush2.bf16.msra.mxu0 %v759
  %1027 = vmatprep.subr.bf16.mxu0 0
  %1028 = vmatpush2.bf16.msra.mxu0 %v758
  %1029 = vmatprep.subr.bf16.mxu0 0
  %1030 = vmatpush2.bf16.msra.mxu0 %v757
  %1031 = vmatprep.subr.bf16.mxu0 0
  %1032 = vmatpush2.bf16.msra.mxu0 %v756
  %1033 = vmatprep.subr.bf16.mxu0 0
  %1034 = vmatpush2.bf16.msra.mxu0 %v755
  %1035 = vmatprep.mubr.bf16.mxu0 %v342
  %1036 = vmatmul.mubr.bf16.gmra.mxu0 %v341
  %v1037 = vpop.f32.mrf.mxu0
  %v1038 = vadd.f32 %v966, %v1037
  %v1039 = vpop.f32.mrf.mxu0
  %v1040 = vpop.f32.mrf.mxu0
  %v1041 = vadd.f32 %v969, %v1040
  %v1042 = vpop.f32.mrf.mxu0
  %1043 = vmatprep.mubr.bf16.mxu0 %v351
  %1044 = vmatmul.mubr.bf16.gmra.mxu0 %v350
  %v1045 = vpop.f32.mrf.mxu0
  %v1046 = vadd.f32 %v974, %v1045
  %v1047 = vpop.f32.mrf.mxu0
  %v1048 = vpop.f32.mrf.mxu0
  %v1049 = vadd.f32 %v977, %v1048
  %v1050 = vpop.f32.mrf.mxu0
  %1051 = vmatprep.mubr.bf16.mxu0 %v360
  %1052 = vmatmul.mubr.bf16.gmra.mxu0 %v359
  %v1053 = vpop.f32.mrf.mxu0
  %v1054 = vadd.f32 %v982, %v1053
  %v1055 = vpop.f32.mrf.mxu0
  %v1056 = vpop.f32.mrf.mxu0
  %v1057 = vadd.f32 %v985, %v1056
  %v1058 = vpop.f32.mrf.mxu0
  %1059 = vmatprep.mubr.bf16.mxu0 %v369
  %1060 = vmatmul.mubr.bf16.gmra.mxu0 %v368
  %v1061 = vpop.f32.mrf.mxu0
  %v1062 = vadd.f32 %v990, %v1061
  %v1063 = vpop.f32.mrf.mxu0
  %v1064 = vpop.f32.mrf.mxu0
  %v1065 = vadd.f32 %v993, %v1064
  %v1066 = vpop.f32.mrf.mxu0
  %1067 = vmatprep.mubr.bf16.mxu0 %v378
  %1068 = vmatmul.mubr.bf16.gmra.mxu0 %v377
  %v1069 = vpop.f32.mrf.mxu0
  %v1070 = vadd.f32 %v998, %v1069
  %v1071 = vpop.f32.mrf.mxu0
  %v1072 = vpop.f32.mrf.mxu0
  %v1073 = vpop.f32.mrf.mxu0
  %1074 = vdwg.mxu0
  %1075 = vmatprep.subr.bf16.mxu0 0
  %1076 = vmatpush1.bf16.msra.mxu0 %v770
  %1077 = vmatprep.subr.bf16.mxu0 0
  %1078 = vmatpush1.bf16.msra.mxu0 %v769
  %1079 = vmatprep.subr.bf16.mxu0 0
  %1080 = vmatpush1.bf16.msra.mxu0 %v768
  %1081 = vmatprep.subr.bf16.mxu0 0
  %1082 = vmatpush1.bf16.msra.mxu0 %v767
  %1083 = vmatprep.subr.bf16.mxu0 0
  %1084 = vmatpush1.bf16.msra.mxu0 %v766
  %1085 = vmatprep.subr.bf16.mxu0 0
  %1086 = vmatpush1.bf16.msra.mxu0 %v765
  %1087 = vmatprep.subr.bf16.mxu0 0
  %1088 = vmatpush1.bf16.msra.mxu0 %v764
  %1089 = vmatprep.subr.bf16.mxu0 0
  %1090 = vmatpush1.bf16.msra.mxu0 %v763
  %1091 = vmatprep.subr.bf16.mxu0 0
  %1092 = vmatpush2.bf16.msra.mxu0 %v778
  %1093 = vmatprep.subr.bf16.mxu0 0
  %1094 = vmatpush2.bf16.msra.mxu0 %v777
  %1095 = vmatprep.subr.bf16.mxu0 0
  %1096 = vmatpush2.bf16.msra.mxu0 %v776
  %1097 = vmatprep.subr.bf16.mxu0 0
  %1098 = vmatpush2.bf16.msra.mxu0 %v775
  %1099 = vmatprep.subr.bf16.mxu0 0
  %1100 = vmatpush2.bf16.msra.mxu0 %v774
  %1101 = vmatprep.subr.bf16.mxu0 0
  %1102 = vmatpush2.bf16.msra.mxu0 %v773
  %1103 = vmatprep.subr.bf16.mxu0 0
  %1104 = vmatpush2.bf16.msra.mxu0 %v772
  %1105 = vmatprep.subr.bf16.mxu0 0
  %1106 = vmatpush2.bf16.msra.mxu0 %v771
  %1107 = vmatprep.mubr.bf16.mxu0 %v344
  %1108 = vmatmul.mubr.bf16.gmra.mxu0 %v343
  %v1109 = vpop.f32.mrf.mxu0
  %v1110 = vadd.f32 %v1038, %v1109
  %v1111 = vpop.f32.mrf.mxu0
  %v1112 = vpop.f32.mrf.mxu0
  %v1113 = vadd.f32 %v1041, %v1112
  %v1114 = vpop.f32.mrf.mxu0
  %1115 = vmatprep.mubr.bf16.mxu0 %v353
  %1116 = vmatmul.mubr.bf16.gmra.mxu0 %v352
  %v1117 = vpop.f32.mrf.mxu0
  %v1118 = vadd.f32 %v1046, %v1117
  %v1119 = vpop.f32.mrf.mxu0
  %v1120 = vpop.f32.mrf.mxu0
  %v1121 = vadd.f32 %v1049, %v1120
  %v1122 = vpop.f32.mrf.mxu0
  %1123 = vmatprep.mubr.bf16.mxu0 %v362
  %1124 = vmatmul.mubr.bf16.gmra.mxu0 %v361
  %v1125 = vpop.f32.mrf.mxu0
  %v1126 = vadd.f32 %v1054, %v1125
  %v1127 = vpop.f32.mrf.mxu0
  %v1128 = vpop.f32.mrf.mxu0
  %v1129 = vadd.f32 %v1057, %v1128
  %v1130 = vpop.f32.mrf.mxu0
  %1131 = vmatprep.mubr.bf16.mxu0 %v371
  %1132 = vmatmul.mubr.bf16.gmra.mxu0 %v370
  %v1133 = vpop.f32.mrf.mxu0
  %v1134 = vadd.f32 %v1062, %v1133
  %v1135 = vpop.f32.mrf.mxu0
  %v1136 = vpop.f32.mrf.mxu0
  %v1137 = vadd.f32 %v1065, %v1136
  %v1138 = vpop.f32.mrf.mxu0
  %1139 = vmatprep.mubr.bf16.mxu0 %v380
  %1140 = vmatmul.mubr.bf16.gmra.mxu0 %v379
  %v1141 = vpop.f32.mrf.mxu0
  %v1142 = vadd.f32 %v1070, %v1141
  %v1143 = vpop.f32.mrf.mxu0
  %v1144 = vpop.f32.mrf.mxu0
  %v1145 = vpop.f32.mrf.mxu0
  %1146 = vdwg.mxu0
  %1147 = vmatprep.subr.bf16.mxu0 0
  %1148 = vmatpush1.bf16.msra.mxu0 %v786
  %1149 = vmatprep.subr.bf16.mxu0 0
  %1150 = vmatpush1.bf16.msra.mxu0 %v785
  %1151 = vmatprep.subr.bf16.mxu0 0
  %1152 = vmatpush1.bf16.msra.mxu0 %v784
  %1153 = vmatprep.subr.bf16.mxu0 0
  %1154 = vmatpush1.bf16.msra.mxu0 %v783
  %1155 = vmatprep.subr.bf16.mxu0 0
  %1156 = vmatpush1.bf16.msra.mxu0 %v782
  %1157 = vmatprep.subr.bf16.mxu0 0
  %1158 = vmatpush1.bf16.msra.mxu0 %v781
  %1159 = vmatprep.subr.bf16.mxu0 0
  %1160 = vmatpush1.bf16.msra.mxu0 %v780
  %1161 = vmatprep.subr.bf16.mxu0 0
  %1162 = vmatpush1.bf16.msra.mxu0 %v779
  %1163 = vmatprep.subr.bf16.mxu0 0
  %1164 = vmatpush2.bf16.msra.mxu0 0
  %1165 = vmatprep.subr.bf16.mxu0 0
  %1166 = vmatpush2.bf16.msra.mxu0 0
  %1167 = vmatprep.subr.bf16.mxu0 0
  %1168 = vmatpush2.bf16.msra.mxu0 0
  %1169 = vmatprep.subr.bf16.mxu0 0
  %1170 = vmatpush2.bf16.msra.mxu0 0
  %1171 = vmatprep.subr.bf16.mxu0 0
  %1172 = vmatpush2.bf16.msra.mxu0 0
  %1173 = vmatprep.subr.bf16.mxu0 0
  %1174 = vmatpush2.bf16.msra.mxu0 0
  %1175 = vmatprep.subr.bf16.mxu0 0
  %1176 = vmatpush2.bf16.msra.mxu0 0
  %1177 = vmatprep.subr.bf16.mxu0 0
  %1178 = vmatpush2.bf16.msra.mxu0 0
  %1179 = vmatprep.mubr.bf16.mxu0 0
  %1180 = vmatmul.mubr.bf16.gmra.mxu0 %v345
  %v1181 = vpop.f32.mrf.mxu0
  %v1182 = vadd.f32 %v1110, %v1181
  %v1183 = vpop.f32.mrf.mxu0
  %v1184 = vpop.f32.mrf.mxu0
  %v1185 = vadd.f32 %v1113, %v1184
  %v1186 = vpop.f32.mrf.mxu0
  %1187 = vmatprep.mubr.bf16.mxu0 0
  %1188 = vmatmul.mubr.bf16.gmra.mxu0 %v354
  %v1189 = vpop.f32.mrf.mxu0
  %v1190 = vadd.f32 %v1118, %v1189
  %v1191 = vpop.f32.mrf.mxu0
  %v1192 = vpop.f32.mrf.mxu0
  %v1193 = vadd.f32 %v1121, %v1192
  %v1194 = vpop.f32.mrf.mxu0
  %1195 = vmatprep.mubr.bf16.mxu0 0
  %1196 = vmatmul.mubr.bf16.gmra.mxu0 %v363
  %v1197 = vpop.f32.mrf.mxu0
  %v1198 = vadd.f32 %v1126, %v1197
  %v1199 = vpop.f32.mrf.mxu0
  %v1200 = vpop.f32.mrf.mxu0
  %v1201 = vadd.f32 %v1129, %v1200
  %v1202 = vpop.f32.mrf.mxu0
  %1203 = vmatprep.mubr.bf16.mxu0 0
  %1204 = vmatmul.mubr.bf16.gmra.mxu0 %v372
  %v1205 = vpop.f32.mrf.mxu0
  %v1206 = vadd.f32 %v1134, %v1205
  %v1207 = vpop.f32.mrf.mxu0
  %v1208 = vpop.f32.mrf.mxu0
  %v1209 = vadd.f32 %v1137, %v1208
  %v1210 = vpop.f32.mrf.mxu0
  %1211 = vmatprep.mubr.bf16.mxu0 0
  %1212 = vmatmul.mubr.bf16.gmra.mxu0 %v381
  %v1213 = vpop.f32.mrf.mxu0
  %v1214 = vadd.f32 %v1142, %v1213
  %v1215 = vpop.f32.mrf.mxu0
  %v1216 = vpop.f32.mrf.mxu0
  %v1217 = vpop.f32.mrf.mxu0
  %1218 = vdwg.mxu0
  %vm1219 = vcmp.gt.f32.partialorder %v1182, 0.0
  %vm1220 = vcmp.gt.f32.partialorder %v1185, 0.0
  %vm1221 = vcmp.gt.f32.partialorder %v1190, 0.0
  %vm1222 = vcmp.gt.f32.partialorder %v1193, 0.0
  %vm1223 = vcmp.gt.f32.partialorder %v1198, 0.0
  %vm1224 = vcmp.gt.f32.partialorder %v1201, 0.0
  %vm1225 = vcmp.gt.f32.partialorder %v1206, 0.0
  %vm1226 = vcmp.gt.f32.partialorder %v1209, 0.0
  %vm1227 = vcmp.gt.f32.partialorder %v1214, 0.0
  %v1228 = vmul.f32 %v1182, 0.1
  %v1229 = vmul.f32 %v1185, 0.1
  %v1230 = vmul.f32 %v1190, 0.1
  %v1231 = vmul.f32 %v1193, 0.1
  %v1232 = vmul.f32 %v1198, 0.1
  %v1233 = vmul.f32 %v1201, 0.1
  %v1234 = vmul.f32 %v1206, 0.1
  %v1235 = vmul.f32 %v1209, 0.1
  %v1236 = vmul.f32 %v1214, 0.1
  %v1237 = vsel %vm1219, %v1182, %v1228
  %v1238 = vsel %vm1220, %v1185, %v1229
  %v1239 = vsel %vm1221, %v1190, %v1230
  %v1240 = vsel %vm1222, %v1193, %v1231
  %v1241 = vsel %vm1223, %v1198, %v1232
  %v1242 = vsel %vm1224, %v1201, %v1233
  %v1243 = vsel %vm1225, %v1206, %v1234
  %v1244 = vsel %vm1226, %v1209, %v1235
  %v1245 = vsel %vm1227, %v1214, %v1236
  %v1246 = vpack.c.bf16 %v1238, %v1237
  %v1247 = vpack.c.bf16 %v1240, %v1239
  %v1248 = vpack.c.bf16 %v1242, %v1241
  %v1249 = vpack.c.bf16 %v1244, %v1243
  %v1250 = vpack.c.bf16 %v1245, %v1245
  %v1256 = vunpack.c.l.b16 %v1246
  %v1257 = vunpack.c.h.b16 %v1246
  %v1258 = vunpack.c.l.b16 %v1247
  %v1259 = vunpack.c.h.b16 %v1247
  %v1260 = vunpack.c.l.b16 %v1248
  %v1261 = vunpack.c.h.b16 %v1248
  %v1262 = vunpack.c.l.b16 %v1249
  %v1263 = vunpack.c.h.b16 %v1249
  %v1264 = vunpack.c.l.b16 %v1250
  %v1265 = vpack.c.b16 %v1256, %v1256
  %v1266 = vpack.c.b16 %v1257, %v1257
  %v1267 = vpack.c.b16 %v1258, %v1258
  %v1268 = vpack.c.b16 %v1259, %v1259
  %v1269 = vpack.c.b16 %v1260, %v1260
  %v1270 = vpack.c.b16 %v1261, %v1261
  %v1271 = vpack.c.b16 %v1262, %v1262
  %v1272 = vpack.c.b16 %v1263, %v1263
  %v1273 = vpack.c.b16 %v1264, %v1264
  %1283 = vst [vmem:[%s3] sm:$0xf] %v1265
  %1284 = vst [vmem:[%s3 + $0x4] sm:$0xf] %v1266
  %1285 = vst [vmem:[%s3 + $0x8] sm:$0xf] %v1267
  %1286 = vst [vmem:[%s3 + $0xc] sm:$0xf] %v1268
  %1287 = vst [vmem:[%s3 + $0x10] sm:$0xf] %v1269
  %1288 = vst [vmem:[%s3 + $0x14] sm:$0xf] %v1270
  %1289 = vst [vmem:[%s3 + $0x18] sm:$0xf] %v1271
  %1290 = vst [vmem:[%s3 + $0x1c] sm:$0xf] %v1272
  %1291 = vst [vmem:[%s3 + $0x20] sm:$0xf] %v1273
  // Predicated region
  $region14: #{discriminator_forward.10} parent=0 // pred_check
    _
  $region15: #{discriminator_forward.10} parent=0 // pred_check_branch
    %1293 = sbr.rel (0) target = $region17
  $region16: #{discriminator_forward.10} parent=0 // pred_region
    _
  $region17: #{discriminator_forward.10} parent=0 // pred_fallthru
    _
  // Predicated region
  $region18: #{discriminator_forward.10} parent=0 // pred_check
    _
  $region19: #{discriminator_forward.10} parent=0 // pred_check_branch
    %1295 = sbr.rel (0) target = $region21
  $region20: #{discriminator_forward.10} parent=0 // pred_region
    _
  $region21: #{discriminator_forward.10} parent=0 // pred_fallthru
    _

// kernel: discriminator_forward.11
$region0: #{discriminator_forward.11}
  #allocation0 [shape = 'u32[]', space=smem, size = 0x4, offset = 0x4, fixed_abs, tag = 'smem constant byte address 0x4 - core index']
  #allocation1 [shape = 'u32[144,128]{1,0:T(1,128)}', space=vmem, size = 0x12000, scoped, tag = 'internal scratch']
  %s0 = inlined_call_operand.vmem [shape: bf16[32,1152], index: 0, kind: input, shape index: {}]
  %s1 = inlined_call_operand.vmem [shape: bf16[1152,256], index: 1, kind: input, shape index: {}]
  %s2 = inlined_call_operand.vmem [shape: f32[1,256], index: 2, kind: input, shape index: {}]
  %s3 = inlined_call_operand.vmem [shape: bf16[32,256], index: 3, kind: output, shape index: {}]
  %s4 = sld [smem:[#allocation0]]
  $region22: #{discriminator_forward.11} parent=0
    _
  %s6 = ssub.s32 1, %s4
  %s7 = scalar_select 0, %s6, %s4
  // Predicated region
  $region2: #{discriminator_forward.11} parent=0 // pred_check
    _
  $region3: #{discriminator_forward.11} parent=0 // pred_check_branch
    %9 = sbr.rel (0) target = $region5
  $region4: #{discriminator_forward.11} parent=0 // pred_region
    _
  $region5: #{discriminator_forward.11} parent=0 // pred_fallthru
    _
  // Predicated region
  $region6: #{discriminator_forward.11} parent=0 // pred_check
    _
  $region7: #{discriminator_forward.11} parent=0 // pred_check_branch
    %11 = sbr.rel (0) target = $region9
  $region8: #{discriminator_forward.11} parent=0 // pred_region
    _
  $region9: #{discriminator_forward.11} parent=0 // pred_fallthru
    _
  // Predicated region
  $region10: #{discriminator_forward.11} parent=0 // pred_check
    _
  $region11: #{discriminator_forward.11} parent=0 // pred_check_branch
    %13 = sbr.rel (0) target = $region13
  $region12: #{discriminator_forward.11} parent=0 // pred_region
    _
  $region13: #{discriminator_forward.11} parent=0 // pred_fallthru
    _
  %v15 = vld [vmem:[%s0] sm:$0xff]
  %v16 = vld [vmem:[%s0 + $0x8] sm:$0xff]
  %v17 = vld [vmem:[%s0 + $0x10] sm:$0xff]
  %v18 = vld [vmem:[%s0 + $0x18] sm:$0xff]
  %v19 = vld [vmem:[%s0 + $0x20] sm:$0xf]
  %v20 = vld [vmem:[%s0 + $0x24] sm:$0xff]
  %v21 = vld [vmem:[%s0 + $0x2c] sm:$0xff]
  %v22 = vld [vmem:[%s0 + $0x34] sm:$0xff]
  %v23 = vld [vmem:[%s0 + $0x3c] sm:$0xff]
  %v24 = vld [vmem:[%s0 + $0x44] sm:$0xf]
  %v25 = vld [vmem:[%s0 + $0x48] sm:$0xff]
  %v26 = vld [vmem:[%s0 + $0x50] sm:$0xff]
  %v27 = vld [vmem:[%s0 + $0x58] sm:$0xff]
  %v28 = vld [vmem:[%s0 + $0x60] sm:$0xff]
  %v29 = vld [vmem:[%s0 + $0x68] sm:$0xf]
  %v30 = vld [vmem:[%s0 + $0x6c] sm:$0xff]
  %v31 = vld [vmem:[%s0 + $0x74] sm:$0xff]
  %v32 = vld [vmem:[%s0 + $0x7c] sm:$0xff]
  %v33 = vld [vmem:[%s0 + $0x84] sm:$0xff]
  %v34 = vld [vmem:[%s0 + $0x8c] sm:$0xf]
  %v35 = vld [vmem:[%s1] sm:$0xff]
  %v36 = vld [vmem:[%s1 + $0x8] sm:$0xff]
  %v37 = vld [vmem:[%s1 + $0x10] sm:$0xff]
  %v38 = vld [vmem:[%s1 + $0x18] sm:$0xff]
  %v39 = vld [vmem:[%s1 + $0x20] sm:$0xff]
  %v40 = vld [vmem:[%s1 + $0x28] sm:$0xff]
  %v41 = vld [vmem:[%s1 + $0x30] sm:$0xff]
  %v42 = vld [vmem:[%s1 + $0x38] sm:$0xff]
  %v43 = vld [vmem:[%s1 + $0x40] sm:$0xff]
  %v44 = vld [vmem:[%s1 + $0x48] sm:$0xff]
  %v45 = vld [vmem:[%s1 + $0x50] sm:$0xff]
  %v46 = vld [vmem:[%s1 + $0x58] sm:$0xff]
  %v47 = vld [vmem:[%s1 + $0x60] sm:$0xff]
  %v48 = vld [vmem:[%s1 + $0x68] sm:$0xff]
  %v49 = vld [vmem:[%s1 + $0x70] sm:$0xff]
  %v50 = vld [vmem:[%s1 + $0x78] sm:$0xff]
  %v51 = vld [vmem:[%s1 + $0x80] sm:$0xff]
  %v52 = vld [vmem:[%s1 + $0x88] sm:$0xff]
  %v53 = vld [vmem:[%s1 + $0x90] sm:$0xff]
  %v54 = vld [vmem:[%s1 + $0x98] sm:$0xff]
  %v55 = vld [vmem:[%s1 + $0xa0] sm:$0xff]
  %v56 = vld [vmem:[%s1 + $0xa8] sm:$0xff]
  %v57 = vld [vmem:[%s1 + $0xb0] sm:$0xff]
  %v58 = vld [vmem:[%s1 + $0xb8] sm:$0xff]
  %v59 = vld [vmem:[%s1 + $0xc0] sm:$0xff]
  %v60 = vld [vmem:[%s1 + $0xc8] sm:$0xff]
  %v61 = vld [vmem:[%s1 + $0xd0] sm:$0xff]
  %v62 = vld [vmem:[%s1 + $0xd8] sm:$0xff]
  %v63 = vld [vmem:[%s1 + $0xe0] sm:$0xff]
  %v64 = vld [vmem:[%s1 + $0xe8] sm:$0xff]
  %v65 = vld [vmem:[%s1 + $0xf0] sm:$0xff]
  %v66 = vld [vmem:[%s1 + $0xf8] sm:$0xff]
  %v67 = vld [vmem:[%s1 + $0x100] sm:$0xff]
  %v68 = vld [vmem:[%s1 + $0x108] sm:$0xff]
  %v69 = vld [vmem:[%s1 + $0x110] sm:$0xff]
  %v70 = vld [vmem:[%s1 + $0x118] sm:$0xff]
  %v71 = vld [vmem:[%s1 + $0x120] sm:$0xff]
  %v72 = vld [vmem:[%s1 + $0x128] sm:$0xff]
  %v73 = vld [vmem:[%s1 + $0x130] sm:$0xff]
  %v74 = vld [vmem:[%s1 + $0x138] sm:$0xff]
  %v75 = vld [vmem:[%s1 + $0x140] sm:$0xff]
  %v76 = vld [vmem:[%s1 + $0x148] sm:$0xff]
  %v77 = vld [vmem:[%s1 + $0x150] sm:$0xff]
  %v78 = vld [vmem:[%s1 + $0x158] sm:$0xff]
  %v79 = vld [vmem:[%s1 + $0x160] sm:$0xff]
  %v80 = vld [vmem:[%s1 + $0x168] sm:$0xff]
  %v81 = vld [vmem:[%s1 + $0x170] sm:$0xff]
  %v82 = vld [vmem:[%s1 + $0x178] sm:$0xff]
  %v83 = vld [vmem:[%s1 + $0x180] sm:$0xff]
  %v84 = vld [vmem:[%s1 + $0x188] sm:$0xff]
  %v85 = vld [vmem:[%s1 + $0x190] sm:$0xff]
  %v86 = vld [vmem:[%s1 + $0x198] sm:$0xff]
  %v87 = vld [vmem:[%s1 + $0x1a0] sm:$0xff]
  %v88 = vld [vmem:[%s1 + $0x1a8] sm:$0xff]
  %v89 = vld [vmem:[%s1 + $0x1b0] sm:$0xff]
  %v90 = vld [vmem:[%s1 + $0x1b8] sm:$0xff]
  %v91 = vld [vmem:[%s1 + $0x1c0] sm:$0xff]
  %v92 = vld [vmem:[%s1 + $0x1c8] sm:$0xff]
  %v93 = vld [vmem:[%s1 + $0x1d0] sm:$0xff]
  %v94 = vld [vmem:[%s1 + $0x1d8] sm:$0xff]
  %v95 = vld [vmem:[%s1 + $0x1e0] sm:$0xff]
  %v96 = vld [vmem:[%s1 + $0x1e8] sm:$0xff]
  %v97 = vld [vmem:[%s1 + $0x1f0] sm:$0xff]
  %v98 = vld [vmem:[%s1 + $0x1f8] sm:$0xff]
  %v99 = vld [vmem:[%s1 + $0x200] sm:$0xff]
  %v100 = vld [vmem:[%s1 + $0x208] sm:$0xff]
  %v101 = vld [vmem:[%s1 + $0x210] sm:$0xff]
  %v102 = vld [vmem:[%s1 + $0x218] sm:$0xff]
  %v103 = vld [vmem:[%s1 + $0x220] sm:$0xff]
  %v104 = vld [vmem:[%s1 + $0x228] sm:$0xff]
  %v105 = vld [vmem:[%s1 + $0x230] sm:$0xff]
  %v106 = vld [vmem:[%s1 + $0x238] sm:$0xff]
  %v107 = vld [vmem:[%s1 + $0x240] sm:$0xff]
  %v108 = vld [vmem:[%s1 + $0x248] sm:$0xff]
  %v109 = vld [vmem:[%s1 + $0x250] sm:$0xff]
  %v110 = vld [vmem:[%s1 + $0x258] sm:$0xff]
  %v111 = vld [vmem:[%s1 + $0x260] sm:$0xff]
  %v112 = vld [vmem:[%s1 + $0x268] sm:$0xff]
  %v113 = vld [vmem:[%s1 + $0x270] sm:$0xff]
  %v114 = vld [vmem:[%s1 + $0x278] sm:$0xff]
  %v115 = vld [vmem:[%s1 + $0x280] sm:$0xff]
  %v116 = vld [vmem:[%s1 + $0x288] sm:$0xff]
  %v117 = vld [vmem:[%s1 + $0x290] sm:$0xff]
  %v118 = vld [vmem:[%s1 + $0x298] sm:$0xff]
  %v119 = vld [vmem:[%s1 + $0x2a0] sm:$0xff]
  %v120 = vld [vmem:[%s1 + $0x2a8] sm:$0xff]
  %v121 = vld [vmem:[%s1 + $0x2b0] sm:$0xff]
  %v122 = vld [vmem:[%s1 + $0x2b8] sm:$0xff]
  %v123 = vld [vmem:[%s1 + $0x2c0] sm:$0xff]
  %v124 = vld [vmem:[%s1 + $0x2c8] sm:$0xff]
  %v125 = vld [vmem:[%s1 + $0x2d0] sm:$0xff]
  %v126 = vld [vmem:[%s1 + $0x2d8] sm:$0xff]
  %v127 = vld [vmem:[%s1 + $0x2e0] sm:$0xff]
  %v128 = vld [vmem:[%s1 + $0x2e8] sm:$0xff]
  %v129 = vld [vmem:[%s1 + $0x2f0] sm:$0xff]
  %v130 = vld [vmem:[%s1 + $0x2f8] sm:$0xff]
  %v131 = vld [vmem:[%s1 + $0x300] sm:$0xff]
  %v132 = vld [vmem:[%s1 + $0x308] sm:$0xff]
  %v133 = vld [vmem:[%s1 + $0x310] sm:$0xff]
  %v134 = vld [vmem:[%s1 + $0x318] sm:$0xff]
  %v135 = vld [vmem:[%s1 + $0x320] sm:$0xff]
  %v136 = vld [vmem:[%s1 + $0x328] sm:$0xff]
  %v137 = vld [vmem:[%s1 + $0x330] sm:$0xff]
  %v138 = vld [vmem:[%s1 + $0x338] sm:$0xff]
  %v139 = vld [vmem:[%s1 + $0x340] sm:$0xff]
  %v140 = vld [vmem:[%s1 + $0x348] sm:$0xff]
  %v141 = vld [vmem:[%s1 + $0x350] sm:$0xff]
  %v142 = vld [vmem:[%s1 + $0x358] sm:$0xff]
  %v143 = vld [vmem:[%s1 + $0x360] sm:$0xff]
  %v144 = vld [vmem:[%s1 + $0x368] sm:$0xff]
  %v145 = vld [vmem:[%s1 + $0x370] sm:$0xff]
  %v146 = vld [vmem:[%s1 + $0x378] sm:$0xff]
  %v147 = vld [vmem:[%s1 + $0x380] sm:$0xff]
  %v148 = vld [vmem:[%s1 + $0x388] sm:$0xff]
  %v149 = vld [vmem:[%s1 + $0x390] sm:$0xff]
  %v150 = vld [vmem:[%s1 + $0x398] sm:$0xff]
  %v151 = vld [vmem:[%s1 + $0x3a0] sm:$0xff]
  %v152 = vld [vmem:[%s1 + $0x3a8] sm:$0xff]
  %v153 = vld [vmem:[%s1 + $0x3b0] sm:$0xff]
  %v154 = vld [vmem:[%s1 + $0x3b8] sm:$0xff]
  %v155 = vld [vmem:[%s1 + $0x3c0] sm:$0xff]
  %v156 = vld [vmem:[%s1 + $0x3c8] sm:$0xff]
  %v157 = vld [vmem:[%s1 + $0x3d0] sm:$0xff]
  %v158 = vld [vmem:[%s1 + $0x3d8] sm:$0xff]
  %v159 = vld [vmem:[%s1 + $0x3e0] sm:$0xff]
  %v160 = vld [vmem:[%s1 + $0x3e8] sm:$0xff]
  %v161 = vld [vmem:[%s1 + $0x3f0] sm:$0xff]
  %v162 = vld [vmem:[%s1 + $0x3f8] sm:$0xff]
  %v163 = vld [vmem:[%s1 + $0x400] sm:$0xff]
  %v164 = vld [vmem:[%s1 + $0x408] sm:$0xff]
  %v165 = vld [vmem:[%s1 + $0x410] sm:$0xff]
  %v166 = vld [vmem:[%s1 + $0x418] sm:$0xff]
  %v167 = vld [vmem:[%s1 + $0x420] sm:$0xff]
  %v168 = vld [vmem:[%s1 + $0x428] sm:$0xff]
  %v169 = vld [vmem:[%s1 + $0x430] sm:$0xff]
  %v170 = vld [vmem:[%s1 + $0x438] sm:$0xff]
  %v171 = vld [vmem:[%s1 + $0x440] sm:$0xff]
  %v172 = vld [vmem:[%s1 + $0x448] sm:$0xff]
  %v173 = vld [vmem:[%s1 + $0x450] sm:$0xff]
  %v174 = vld [vmem:[%s1 + $0x458] sm:$0xff]
  %v175 = vld [vmem:[%s1 + $0x460] sm:$0xff]
  %v176 = vld [vmem:[%s1 + $0x468] sm:$0xff]
  %v177 = vld [vmem:[%s1 + $0x470] sm:$0xff]
  %v178 = vld [vmem:[%s1 + $0x478] sm:$0xff]
  %v179 = vld [vmem:[%s2] sm:$0x3]
  %v181 = vlaneseq
  %v182 = vshrl.u32 %v181, 7
  %v183 = vsub.s32 0, %v182
  %v184 = vrot.slane %v179, %v183
  %v185 = vlaneseq
  %v186 = vshrl.u32 %v185, 7
  %v187 = vsub.s32 1, %v186
  %v188 = vrot.slane %v179, %v187
  %v211 = vunpack.c.l.b16 %v15
  %v212 = vunpack.c.h.b16 %v15
  %v213 = vunpack.c.l.b16 %v16
  %v214 = vunpack.c.h.b16 %v16
  %v215 = vunpack.c.l.b16 %v17
  %v216 = vunpack.c.h.b16 %v17
  %v217 = vunpack.c.l.b16 %v18
  %v218 = vunpack.c.h.b16 %v18
  %v219 = vunpack.c.l.b16 %v19
  %v220 = vunpack.c.l.b16 %v20
  %v221 = vunpack.c.h.b16 %v20
  %v222 = vunpack.c.l.b16 %v21
  %v223 = vunpack.c.h.b16 %v21
  %v224 = vunpack.c.l.b16 %v22
  %v225 = vunpack.c.h.b16 %v22
  %v226 = vunpack.c.l.b16 %v23
  %v227 = vunpack.c.h.b16 %v23
  %v228 = vunpack.c.l.b16 %v24
  %v229 = vunpack.c.l.b16 %v25
  %v230 = vunpack.c.h.b16 %v25
  %v231 = vunpack.c.l.b16 %v26
  %v232 = vunpack.c.h.b16 %v26
  %v233 = vunpack.c.l.b16 %v27
  %v234 = vunpack.c.h.b16 %v27
  %v235 = vunpack.c.l.b16 %v28
  %v236 = vunpack.c.h.b16 %v28
  %v237 = vunpack.c.l.b16 %v29
  %v238 = vunpack.c.l.b16 %v30
  %v239 = vunpack.c.h.b16 %v30
  %v240 = vunpack.c.l.b16 %v31
  %v241 = vunpack.c.h.b16 %v31
  %v242 = vunpack.c.l.b16 %v32
  %v243 = vunpack.c.h.b16 %v32
  %v244 = vunpack.c.l.b16 %v33
  %v245 = vunpack.c.h.b16 %v33
  %v246 = vunpack.c.l.b16 %v34
  %v247 = vpack.c.b16 %v220, %v211
  %v248 = vpack.c.b16 %v221, %v212
  %v249 = vpack.c.b16 %v222, %v213
  %v250 = vpack.c.b16 %v223, %v214
  %v251 = vpack.c.b16 %v224, %v215
  %v252 = vpack.c.b16 %v225, %v216
  %v253 = vpack.c.b16 %v226, %v217
  %v254 = vpack.c.b16 %v227, %v218
  %v255 = vpack.c.b16 %v228, %v219
  %v256 = vpack.c.b16 %v238, %v229
  %v257 = vpack.c.b16 %v239, %v230
  %v258 = vpack.c.b16 %v240, %v231
  %v259 = vpack.c.b16 %v241, %v232
  %v260 = vpack.c.b16 %v242, %v233
  %v261 = vpack.c.b16 %v243, %v234
  %v262 = vpack.c.b16 %v244, %v235
  %v263 = vpack.c.b16 %v245, %v236
  %v264 = vpack.c.b16 %v246, %v237
  %v427 = vunpack.c.l.b16 %v35
  %v428 = vunpack.c.h.b16 %v35
  %v429 = vunpack.c.l.b16 %v36
  %v430 = vunpack.c.h.b16 %v36
  %v431 = vunpack.c.l.b16 %v37
  %v432 = vunpack.c.h.b16 %v37
  %v433 = vunpack.c.l.b16 %v38
  %v434 = vunpack.c.h.b16 %v38
  %v435 = vunpack.c.l.b16 %v39
  %v436 = vunpack.c.h.b16 %v39
  %v437 = vunpack.c.l.b16 %v40
  %v438 = vunpack.c.h.b16 %v40
  %v439 = vunpack.c.l.b16 %v41
  %v440 = vunpack.c.h.b16 %v41
  %v441 = vunpack.c.l.b16 %v42
  %v442 = vunpack.c.h.b16 %v42
  %v443 = vunpack.c.l.b16 %v43
  %v444 = vunpack.c.h.b16 %v43
  %v445 = vunpack.c.l.b16 %v44
  %v446 = vunpack.c.h.b16 %v44
  %v447 = vunpack.c.l.b16 %v45
  %v448 = vunpack.c.h.b16 %v45
  %v449 = vunpack.c.l.b16 %v46
  %v450 = vunpack.c.h.b16 %v46
  %v451 = vunpack.c.l.b16 %v47
  %v452 = vunpack.c.h.b16 %v47
  %v453 = vunpack.c.l.b16 %v48
  %v454 = vunpack.c.h.b16 %v48
  %v455 = vunpack.c.l.b16 %v49
  %v456 = vunpack.c.h.b16 %v49
  %v457 = vunpack.c.l.b16 %v50
  %v458 = vunpack.c.h.b16 %v50
  %v459 = vunpack.c.l.b16 %v51
  %v460 = vunpack.c.h.b16 %v51
  %v461 = vunpack.c.l.b16 %v52
  %v462 = vunpack.c.h.b16 %v52
  %v463 = vunpack.c.l.b16 %v53
  %v464 = vunpack.c.h.b16 %v53
  %v465 = vunpack.c.l.b16 %v54
  %v466 = vunpack.c.h.b16 %v54
  %v467 = vunpack.c.l.b16 %v55
  %v468 = vunpack.c.h.b16 %v55
  %v469 = vunpack.c.l.b16 %v56
  %v470 = vunpack.c.h.b16 %v56
  %v471 = vunpack.c.l.b16 %v57
  %v472 = vunpack.c.h.b16 %v57
  %v473 = vunpack.c.l.b16 %v58
  %v474 = vunpack.c.h.b16 %v58
  %v475 = vunpack.c.l.b16 %v59
  %v476 = vunpack.c.h.b16 %v59
  %v477 = vunpack.c.l.b16 %v60
  %v478 = vunpack.c.h.b16 %v60
  %v479 = vunpack.c.l.b16 %v61
  %v480 = vunpack.c.h.b16 %v61
  %v481 = vunpack.c.l.b16 %v62
  %v482 = vunpack.c.h.b16 %v62
  %v483 = vunpack.c.l.b16 %v63
  %v484 = vunpack.c.h.b16 %v63
  %v485 = vunpack.c.l.b16 %v64
  %v486 = vunpack.c.h.b16 %v64
  %v487 = vunpack.c.l.b16 %v65
  %v488 = vunpack.c.h.b16 %v65
  %v489 = vunpack.c.l.b16 %v66
  %v490 = vunpack.c.h.b16 %v66
  %v491 = vunpack.c.l.b16 %v67
  %v492 = vunpack.c.h.b16 %v67
  %v493 = vunpack.c.l.b16 %v68
  %v494 = vunpack.c.h.b16 %v68
  %v495 = vunpack.c.l.b16 %v69
  %v496 = vunpack.c.h.b16 %v69
  %v497 = vunpack.c.l.b16 %v70
  %v498 = vunpack.c.h.b16 %v70
  %v499 = vunpack.c.l.b16 %v71
  %v500 = vunpack.c.h.b16 %v71
  %v501 = vunpack.c.l.b16 %v72
  %v502 = vunpack.c.h.b16 %v72
  %v503 = vunpack.c.l.b16 %v73
  %v504 = vunpack.c.h.b16 %v73
  %v505 = vunpack.c.l.b16 %v74
  %v506 = vunpack.c.h.b16 %v74
  %v507 = vunpack.c.l.b16 %v75
  %v508 = vunpack.c.h.b16 %v75
  %v509 = vunpack.c.l.b16 %v76
  %v510 = vunpack.c.h.b16 %v76
  %v511 = vunpack.c.l.b16 %v77
  %v512 = vunpack.c.h.b16 %v77
  %v513 = vunpack.c.l.b16 %v78
  %v514 = vunpack.c.h.b16 %v78
  %v515 = vunpack.c.l.b16 %v79
  %v516 = vunpack.c.h.b16 %v79
  %v517 = vunpack.c.l.b16 %v80
  %v518 = vunpack.c.h.b16 %v80
  %v519 = vunpack.c.l.b16 %v81
  %v520 = vunpack.c.h.b16 %v81
  %v521 = vunpack.c.l.b16 %v82
  %v522 = vunpack.c.h.b16 %v82
  %v523 = vunpack.c.l.b16 %v83
  %v524 = vunpack.c.h.b16 %v83
  %v525 = vunpack.c.l.b16 %v84
  %v526 = vunpack.c.h.b16 %v84
  %v527 = vunpack.c.l.b16 %v85
  %v528 = vunpack.c.h.b16 %v85
  %v529 = vunpack.c.l.b16 %v86
  %v530 = vunpack.c.h.b16 %v86
  %v531 = vunpack.c.l.b16 %v87
  %v532 = vunpack.c.h.b16 %v87
  %v533 = vunpack.c.l.b16 %v88
  %v534 = vunpack.c.h.b16 %v88
  %v535 = vunpack.c.l.b16 %v89
  %v536 = vunpack.c.h.b16 %v89
  %v537 = vunpack.c.l.b16 %v90
  %v538 = vunpack.c.h.b16 %v90
  %v539 = vunpack.c.l.b16 %v91
  %v540 = vunpack.c.h.b16 %v91
  %v541 = vunpack.c.l.b16 %v92
  %v542 = vunpack.c.h.b16 %v92
  %v543 = vunpack.c.l.b16 %v93
  %v544 = vunpack.c.h.b16 %v93
  %v545 = vunpack.c.l.b16 %v94
  %v546 = vunpack.c.h.b16 %v94
  %v547 = vunpack.c.l.b16 %v95
  %v548 = vunpack.c.h.b16 %v95
  %v549 = vunpack.c.l.b16 %v96
  %v550 = vunpack.c.h.b16 %v96
  %v551 = vunpack.c.l.b16 %v97
  %v552 = vunpack.c.h.b16 %v97
  %v553 = vunpack.c.l.b16 %v98
  %v554 = vunpack.c.h.b16 %v98
  %v555 = vunpack.c.l.b16 %v99
  %v556 = vunpack.c.h.b16 %v99
  %v557 = vunpack.c.l.b16 %v100
  %v558 = vunpack.c.h.b16 %v100
  %v559 = vunpack.c.l.b16 %v101
  %v560 = vunpack.c.h.b16 %v101
  %v561 = vunpack.c.l.b16 %v102
  %v562 = vunpack.c.h.b16 %v102
  %v563 = vunpack.c.l.b16 %v103
  %v564 = vunpack.c.h.b16 %v103
  %v565 = vunpack.c.l.b16 %v104
  %v566 = vunpack.c.h.b16 %v104
  %v567 = vunpack.c.l.b16 %v105
  %v568 = vunpack.c.h.b16 %v105
  %v569 = vunpack.c.l.b16 %v106
  %v570 = vunpack.c.h.b16 %v106
  %v571 = vunpack.c.l.b16 %v107
  %v572 = vunpack.c.h.b16 %v107
  %v573 = vunpack.c.l.b16 %v108
  %v574 = vunpack.c.h.b16 %v108
  %v575 = vunpack.c.l.b16 %v109
  %v576 = vunpack.c.h.b16 %v109
  %v577 = vunpack.c.l.b16 %v110
  %v578 = vunpack.c.h.b16 %v110
  %v579 = vunpack.c.l.b16 %v111
  %v580 = vunpack.c.h.b16 %v111
  %v581 = vunpack.c.l.b16 %v112
  %v582 = vunpack.c.h.b16 %v112
  %v583 = vunpack.c.l.b16 %v113
  %v584 = vunpack.c.h.b16 %v113
  %v585 = vunpack.c.l.b16 %v114
  %v586 = vunpack.c.h.b16 %v114
  %v587 = vunpack.c.l.b16 %v115
  %v588 = vunpack.c.h.b16 %v115
  %v589 = vunpack.c.l.b16 %v116
  %v590 = vunpack.c.h.b16 %v116
  %v591 = vunpack.c.l.b16 %v117
  %v592 = vunpack.c.h.b16 %v117
  %v593 = vunpack.c.l.b16 %v118
  %v594 = vunpack.c.h.b16 %v118
  %v595 = vunpack.c.l.b16 %v119
  %v596 = vunpack.c.h.b16 %v119
  %v597 = vunpack.c.l.b16 %v120
  %v598 = vunpack.c.h.b16 %v120
  %v599 = vunpack.c.l.b16 %v121
  %v600 = vunpack.c.h.b16 %v121
  %v601 = vunpack.c.l.b16 %v122
  %v602 = vunpack.c.h.b16 %v122
  %v603 = vunpack.c.l.b16 %v123
  %v604 = vunpack.c.h.b16 %v123
  %v605 = vunpack.c.l.b16 %v124
  %v606 = vunpack.c.h.b16 %v124
  %v607 = vunpack.c.l.b16 %v125
  %v608 = vunpack.c.h.b16 %v125
  %v609 = vunpack.c.l.b16 %v126
  %v610 = vunpack.c.h.b16 %v126
  %v611 = vunpack.c.l.b16 %v127
  %v612 = vunpack.c.h.b16 %v127
  %v613 = vunpack.c.l.b16 %v128
  %v614 = vunpack.c.h.b16 %v128
  %v615 = vunpack.c.l.b16 %v129
  %v616 = vunpack.c.h.b16 %v129
  %v617 = vunpack.c.l.b16 %v130
  %v618 = vunpack.c.h.b16 %v130
  %v619 = vunpack.c.l.b16 %v131
  %v620 = vunpack.c.h.b16 %v131
  %v621 = vunpack.c.l.b16 %v132
  %v622 = vunpack.c.h.b16 %v132
  %v623 = vunpack.c.l.b16 %v133
  %v624 = vunpack.c.h.b16 %v133
  %v625 = vunpack.c.l.b16 %v134
  %v626 = vunpack.c.h.b16 %v134
  %v627 = vunpack.c.l.b16 %v135
  %v628 = vunpack.c.h.b16 %v135
  %v629 = vunpack.c.l.b16 %v136
  %v630 = vunpack.c.h.b16 %v136
  %v631 = vunpack.c.l.b16 %v137
  %v632 = vunpack.c.h.b16 %v137
  %v633 = vunpack.c.l.b16 %v138
  %v634 = vunpack.c.h.b16 %v138
  %v635 = vunpack.c.l.b16 %v139
  %v636 = vunpack.c.h.b16 %v139
  %v637 = vunpack.c.l.b16 %v140
  %v638 = vunpack.c.h.b16 %v140
  %v639 = vunpack.c.l.b16 %v141
  %v640 = vunpack.c.h.b16 %v141
  %v641 = vunpack.c.l.b16 %v142
  %v642 = vunpack.c.h.b16 %v142
  %v643 = vunpack.c.l.b16 %v143
  %v644 = vunpack.c.h.b16 %v143
  %v645 = vunpack.c.l.b16 %v144
  %v646 = vunpack.c.h.b16 %v144
  %v647 = vunpack.c.l.b16 %v145
  %v648 = vunpack.c.h.b16 %v145
  %v649 = vunpack.c.l.b16 %v146
  %v650 = vunpack.c.h.b16 %v146
  %v651 = vunpack.c.l.b16 %v147
  %v652 = vunpack.c.h.b16 %v147
  %v653 = vunpack.c.l.b16 %v148
  %v654 = vunpack.c.h.b16 %v148
  %v655 = vunpack.c.l.b16 %v149
  %v656 = vunpack.c.h.b16 %v149
  %v657 = vunpack.c.l.b16 %v150
  %v658 = vunpack.c.h.b16 %v150
  %v659 = vunpack.c.l.b16 %v151
  %v660 = vunpack.c.h.b16 %v151
  %v661 = vunpack.c.l.b16 %v152
  %v662 = vunpack.c.h.b16 %v152
  %v663 = vunpack.c.l.b16 %v153
  %v664 = vunpack.c.h.b16 %v153
  %v665 = vunpack.c.l.b16 %v154
  %v666 = vunpack.c.h.b16 %v154
  %v667 = vunpack.c.l.b16 %v155
  %v668 = vunpack.c.h.b16 %v155
  %v669 = vunpack.c.l.b16 %v156
  %v670 = vunpack.c.h.b16 %v156
  %v671 = vunpack.c.l.b16 %v157
  %v672 = vunpack.c.h.b16 %v157
  %v673 = vunpack.c.l.b16 %v158
  %v674 = vunpack.c.h.b16 %v158
  %v675 = vunpack.c.l.b16 %v159
  %v676 = vunpack.c.h.b16 %v159
  %v677 = vunpack.c.l.b16 %v160
  %v678 = vunpack.c.h.b16 %v160
  %v679 = vunpack.c.l.b16 %v161
  %v680 = vunpack.c.h.b16 %v161
  %v681 = vunpack.c.l.b16 %v162
  %v682 = vunpack.c.h.b16 %v162
  %v683 = vunpack.c.l.b16 %v163
  %v684 = vunpack.c.h.b16 %v163
  %v685 = vunpack.c.l.b16 %v164
  %v686 = vunpack.c.h.b16 %v164
  %v687 = vunpack.c.l.b16 %v165
  %v688 = vunpack.c.h.b16 %v165
  %v689 = vunpack.c.l.b16 %v166
  %v690 = vunpack.c.h.b16 %v166
  %v691 = vunpack.c.l.b16 %v167
  %v692 = vunpack.c.h.b16 %v167
  %v693 = vunpack.c.l.b16 %v168
  %v694 = vunpack.c.h.b16 %v168
  %v695 = vunpack.c.l.b16 %v169
  %v696 = vunpack.c.h.b16 %v169
  %v697 = vunpack.c.l.b16 %v170
  %v698 = vunpack.c.h.b16 %v170
  %v699 = vunpack.c.l.b16 %v171
  %v700 = vunpack.c.h.b16 %v171
  %v701 = vunpack.c.l.b16 %v172
  %v702 = vunpack.c.h.b16 %v172
  %v703 = vunpack.c.l.b16 %v173
  %v704 = vunpack.c.h.b16 %v173
  %v705 = vunpack.c.l.b16 %v174
  %v706 = vunpack.c.h.b16 %v174
  %v707 = vunpack.c.l.b16 %v175
  %v708 = vunpack.c.h.b16 %v175
  %v709 = vunpack.c.l.b16 %v176
  %v710 = vunpack.c.h.b16 %v176
  %v711 = vunpack.c.l.b16 %v177
  %v712 = vunpack.c.h.b16 %v177
  %v713 = vunpack.c.l.b16 %v178
  %v714 = vunpack.c.h.b16 %v178
  %v715 = vpack.c.b16 %v429, %v427
  %v716 = vpack.c.b16 %v430, %v428
  %v717 = vpack.c.b16 %v433, %v431
  %v718 = vpack.c.b16 %v434, %v432
  %v719 = vpack.c.b16 %v437, %v435
  %v720 = vpack.c.b16 %v438, %v436
  %v721 = vpack.c.b16 %v441, %v439
  %v722 = vpack.c.b16 %v442, %v440
  %v723 = vpack.c.b16 %v445, %v443
  %v724 = vpack.c.b16 %v446, %v444
  %v725 = vpack.c.b16 %v449, %v447
  %v726 = vpack.c.b16 %v450, %v448
  %v727 = vpack.c.b16 %v453, %v451
  %v728 = vpack.c.b16 %v454, %v452
  %v729 = vpack.c.b16 %v457, %v455
  %v730 = vpack.c.b16 %v458, %v456
  %v731 = vpack.c.b16 %v461, %v459
  %v732 = vpack.c.b16 %v462, %v460
  %v733 = vpack.c.b16 %v465, %v463
  %v734 = vpack.c.b16 %v466, %v464
  %v735 = vpack.c.b16 %v469, %v467
  %v736 = vpack.c.b16 %v470, %v468
  %v737 = vpack.c.b16 %v473, %v471
  %v738 = vpack.c.b16 %v474, %v472
  %v739 = vpack.c.b16 %v477, %v475
  %v740 = vpack.c.b16 %v478, %v476
  %v741 = vpack.c.b16 %v481, %v479
  %v742 = vpack.c.b16 %v482, %v480
  %v743 = vpack.c.b16 %v485, %v483
  %v744 = vpack.c.b16 %v486, %v484
  %v745 = vpack.c.b16 %v489, %v487
  %v746 = vpack.c.b16 %v490, %v488
  %v747 = vpack.c.b16 %v493, %v491
  %v748 = vpack.c.b16 %v494, %v492
  %v749 = vpack.c.b16 %v497, %v495
  %v750 = vpack.c.b16 %v498, %v496
  %v751 = vpack.c.b16 %v501, %v499
  %v752 = vpack.c.b16 %v502, %v500
  %v753 = vpack.c.b16 %v505, %v503
  %v754 = vpack.c.b16 %v506, %v504
  %v755 = vpack.c.b16 %v509, %v507
  %v756 = vpack.c.b16 %v510, %v508
  %v757 = vpack.c.b16 %v513, %v511
  %v758 = vpack.c.b16 %v514, %v512
  %v759 = vpack.c.b16 %v517, %v515
  %v760 = vpack.c.b16 %v518, %v516
  %v761 = vpack.c.b16 %v521, %v519
  %v762 = vpack.c.b16 %v522, %v520
  %v763 = vpack.c.b16 %v525, %v523
  %v764 = vpack.c.b16 %v526, %v524
  %v765 = vpack.c.b16 %v529, %v527
  %v766 = vpack.c.b16 %v530, %v528
  %v767 = vpack.c.b16 %v533, %v531
  %v768 = vpack.c.b16 %v534, %v532
  %v769 = vpack.c.b16 %v537, %v535
  %v770 = vpack.c.b16 %v538, %v536
  %v771 = vpack.c.b16 %v541, %v539
  %v772 = vpack.c.b16 %v542, %v540
  %v773 = vpack.c.b16 %v545, %v543
  %v774 = vpack.c.b16 %v546, %v544
  %v775 = vpack.c.b16 %v549, %v547
  %v776 = vpack.c.b16 %v550, %v548
  %v777 = vpack.c.b16 %v553, %v551
  %v778 = vpack.c.b16 %v554, %v552
  %v779 = vpack.c.b16 %v557, %v555
  %v780 = vpack.c.b16 %v558, %v556
  %v781 = vpack.c.b16 %v561, %v559
  %v782 = vpack.c.b16 %v562, %v560
  %v783 = vpack.c.b16 %v565, %v563
  %v784 = vpack.c.b16 %v566, %v564
  %v785 = vpack.c.b16 %v569, %v567
  %v786 = vpack.c.b16 %v570, %v568
  %v787 = vpack.c.b16 %v573, %v571
  %v788 = vpack.c.b16 %v574, %v572
  %v789 = vpack.c.b16 %v577, %v575
  %v790 = vpack.c.b16 %v578, %v576
  %v791 = vpack.c.b16 %v581, %v579
  %v792 = vpack.c.b16 %v582, %v580
  %v793 = vpack.c.b16 %v585, %v583
  %v794 = vpack.c.b16 %v586, %v584
  %v795 = vpack.c.b16 %v589, %v587
  %v796 = vpack.c.b16 %v590, %v588
  %v797 = vpack.c.b16 %v593, %v591
  %v798 = vpack.c.b16 %v594, %v592
  %v799 = vpack.c.b16 %v597, %v595
  %v800 = vpack.c.b16 %v598, %v596
  %v801 = vpack.c.b16 %v601, %v599
  %v802 = vpack.c.b16 %v602, %v600
  %v803 = vpack.c.b16 %v605, %v603
  %v804 = vpack.c.b16 %v606, %v604
  %v805 = vpack.c.b16 %v609, %v607
  %v806 = vpack.c.b16 %v610, %v608
  %v807 = vpack.c.b16 %v613, %v611
  %v808 = vpack.c.b16 %v614, %v612
  %v809 = vpack.c.b16 %v617, %v615
  %v810 = vpack.c.b16 %v618, %v616
  %v811 = vpack.c.b16 %v621, %v619
  %v812 = vpack.c.b16 %v622, %v620
  %v813 = vpack.c.b16 %v625, %v623
  %v814 = vpack.c.b16 %v626, %v624
  %v815 = vpack.c.b16 %v629, %v627
  %v816 = vpack.c.b16 %v630, %v628
  %v817 = vpack.c.b16 %v633, %v631
  %v818 = vpack.c.b16 %v634, %v632
  %v819 = vpack.c.b16 %v637, %v635
  %v820 = vpack.c.b16 %v638, %v636
  %v821 = vpack.c.b16 %v641, %v639
  %v822 = vpack.c.b16 %v642, %v640
  %v823 = vpack.c.b16 %v645, %v643
  %v824 = vpack.c.b16 %v646, %v644
  %v825 = vpack.c.b16 %v649, %v647
  %v826 = vpack.c.b16 %v650, %v648
  %v827 = vpack.c.b16 %v653, %v651
  %v828 = vpack.c.b16 %v654, %v652
  %v829 = vpack.c.b16 %v657, %v655
  %v830 = vpack.c.b16 %v658, %v656
  %v831 = vpack.c.b16 %v661, %v659
  %v832 = vpack.c.b16 %v662, %v660
  %v833 = vpack.c.b16 %v665, %v663
  %v834 = vpack.c.b16 %v666, %v664
  %v835 = vpack.c.b16 %v669, %v667
  %v836 = vpack.c.b16 %v670, %v668
  %v837 = vpack.c.b16 %v673, %v671
  %v838 = vpack.c.b16 %v674, %v672
  %v839 = vpack.c.b16 %v677, %v675
  %v840 = vpack.c.b16 %v678, %v676
  %v841 = vpack.c.b16 %v681, %v679
  %v842 = vpack.c.b16 %v682, %v680
  %v843 = vpack.c.b16 %v685, %v683
  %v844 = vpack.c.b16 %v686, %v684
  %v845 = vpack.c.b16 %v689, %v687
  %v846 = vpack.c.b16 %v690, %v688
  %v847 = vpack.c.b16 %v693, %v691
  %v848 = vpack.c.b16 %v694, %v692
  %v849 = vpack.c.b16 %v697, %v695
  %v850 = vpack.c.b16 %v698, %v696
  %v851 = vpack.c.b16 %v701, %v699
  %v852 = vpack.c.b16 %v702, %v700
  %v853 = vpack.c.b16 %v705, %v703
  %v854 = vpack.c.b16 %v706, %v704
  %v855 = vpack.c.b16 %v709, %v707
  %v856 = vpack.c.b16 %v710, %v708
  %v857 = vpack.c.b16 %v713, %v711
  %v858 = vpack.c.b16 %v714, %v712
  %1003 = vmatprep.subr.bf16.mxu0 %v730
  %1004 = vmatpush1.bf16.msra.mxu0 %v729
  %1005 = vmatprep.subr.bf16.mxu0 %v728
  %1006 = vmatpush1.bf16.msra.mxu0 %v727
  %1007 = vmatprep.subr.bf16.mxu0 %v726
  %1008 = vmatpush1.bf16.msra.mxu0 %v725
  %1009 = vmatprep.subr.bf16.mxu0 %v724
  %1010 = vmatpush1.bf16.msra.mxu0 %v723
  %1011 = vmatprep.subr.bf16.mxu0 %v722
  %1012 = vmatpush1.bf16.msra.mxu0 %v721
  %1013 = vmatprep.subr.bf16.mxu0 %v720
  %1014 = vmatpush1.bf16.msra.mxu0 %v719
  %1015 = vmatprep.subr.bf16.mxu0 %v718
  %1016 = vmatpush1.bf16.msra.mxu0 %v717
  %1017 = vmatprep.subr.bf16.mxu0 %v716
  %1018 = vmatpush1.bf16.msra.mxu0 %v715
  %1019 = vmatprep.subr.bf16.mxu0 %v746
  %1020 = vmatpush2.bf16.msra.mxu0 %v745
  %1021 = vmatprep.subr.bf16.mxu0 %v744
  %1022 = vmatpush2.bf16.msra.mxu0 %v743
  %1023 = vmatprep.subr.bf16.mxu0 %v742
  %1024 = vmatpush2.bf16.msra.mxu0 %v741
  %1025 = vmatprep.subr.bf16.mxu0 %v740
  %1026 = vmatpush2.bf16.msra.mxu0 %v739
  %1027 = vmatprep.subr.bf16.mxu0 %v738
  %1028 = vmatpush2.bf16.msra.mxu0 %v737
  %1029 = vmatprep.subr.bf16.mxu0 %v736
  %1030 = vmatpush2.bf16.msra.mxu0 %v735
  %1031 = vmatprep.subr.bf16.mxu0 %v734
  %1032 = vmatpush2.bf16.msra.mxu0 %v733
  %1033 = vmatprep.subr.bf16.mxu0 %v732
  %1034 = vmatpush2.bf16.msra.mxu0 %v731
  %1035 = vmatprep.mubr.bf16.mxu0 %v248
  %1036 = vmatmul.mubr.bf16.gmra.mxu0 %v247
  %v1037 = vpop.f32.mrf.mxu0
  %v1038 = vadd.f32 %v184, %v1037
  %v1039 = vpop.f32.mrf.mxu0
  %v1040 = vadd.f32 %v188, %v1039
  %v1041 = vpop.f32.mrf.mxu0
  %v1042 = vadd.f32 %v184, %v1041
  %v1043 = vpop.f32.mrf.mxu0
  %v1044 = vadd.f32 %v188, %v1043
  %1045 = vmatprep.mubr.bf16.mxu0 %v257
  %1046 = vmatmul.mubr.bf16.gmra.mxu0 %v256
  %v1047 = vpop.f32.mrf.mxu0
  %v1048 = vadd.f32 %v184, %v1047
  %v1049 = vpop.f32.mrf.mxu0
  %v1050 = vadd.f32 %v188, %v1049
  %v1051 = vpop.f32.mrf.mxu0
  %v1052 = vadd.f32 %v184, %v1051
  %v1053 = vpop.f32.mrf.mxu0
  %v1054 = vadd.f32 %v188, %v1053
  %1055 = vdwg.mxu0
  %1056 = vmatprep.subr.bf16.mxu0 %v762
  %1057 = vmatpush1.bf16.msra.mxu0 %v761
  %1058 = vmatprep.subr.bf16.mxu0 %v760
  %1059 = vmatpush1.bf16.msra.mxu0 %v759
  %1060 = vmatprep.subr.bf16.mxu0 %v758
  %1061 = vmatpush1.bf16.msra.mxu0 %v757
  %1062 = vmatprep.subr.bf16.mxu0 %v756
  %1063 = vmatpush1.bf16.msra.mxu0 %v755
  %1064 = vmatprep.subr.bf16.mxu0 %v754
  %1065 = vmatpush1.bf16.msra.mxu0 %v753
  %1066 = vmatprep.subr.bf16.mxu0 %v752
  %1067 = vmatpush1.bf16.msra.mxu0 %v751
  %1068 = vmatprep.subr.bf16.mxu0 %v750
  %1069 = vmatpush1.bf16.msra.mxu0 %v749
  %1070 = vmatprep.subr.bf16.mxu0 %v748
  %1071 = vmatpush1.bf16.msra.mxu0 %v747
  %1072 = vmatprep.subr.bf16.mxu0 %v778
  %1073 = vmatpush2.bf16.msra.mxu0 %v777
  %1074 = vmatprep.subr.bf16.mxu0 %v776
  %1075 = vmatpush2.bf16.msra.mxu0 %v775
  %1076 = vmatprep.subr.bf16.mxu0 %v774
  %1077 = vmatpush2.bf16.msra.mxu0 %v773
  %1078 = vmatprep.subr.bf16.mxu0 %v772
  %1079 = vmatpush2.bf16.msra.mxu0 %v771
  %1080 = vmatprep.subr.bf16.mxu0 %v770
  %1081 = vmatpush2.bf16.msra.mxu0 %v769
  %1082 = vmatprep.subr.bf16.mxu0 %v768
  %1083 = vmatpush2.bf16.msra.mxu0 %v767
  %1084 = vmatprep.subr.bf16.mxu0 %v766
  %1085 = vmatpush2.bf16.msra.mxu0 %v765
  %1086 = vmatprep.subr.bf16.mxu0 %v764
  %1087 = vmatpush2.bf16.msra.mxu0 %v763
  %1088 = vmatprep.mubr.bf16.mxu0 %v250
  %1089 = vmatmul.mubr.bf16.gmra.mxu0 %v249
  %v1090 = vpop.f32.mrf.mxu0
  %v1091 = vadd.f32 %v1038, %v1090
  %v1092 = vpop.f32.mrf.mxu0
  %v1093 = vadd.f32 %v1040, %v1092
  %v1094 = vpop.f32.mrf.mxu0
  %v1095 = vadd.f32 %v1042, %v1094
  %v1096 = vpop.f32.mrf.mxu0
  %v1097 = vadd.f32 %v1044, %v1096
  %1098 = vmatprep.mubr.bf16.mxu0 %v259
  %1099 = vmatmul.mubr.bf16.gmra.mxu0 %v258
  %v1100 = vpop.f32.mrf.mxu0
  %v1101 = vadd.f32 %v1048, %v1100
  %v1102 = vpop.f32.mrf.mxu0
  %v1103 = vadd.f32 %v1050, %v1102
  %v1104 = vpop.f32.mrf.mxu0
  %v1105 = vadd.f32 %v1052, %v1104
  %v1106 = vpop.f32.mrf.mxu0
  %v1107 = vadd.f32 %v1054, %v1106
  %1108 = vdwg.mxu0
  %1109 = vmatprep.subr.bf16.mxu0 %v794
  %1110 = vmatpush1.bf16.msra.mxu0 %v793
  %1111 = vmatprep.subr.bf16.mxu0 %v792
  %1112 = vmatpush1.bf16.msra.mxu0 %v791
  %1113 = vmatprep.subr.bf16.mxu0 %v790
  %1114 = vmatpush1.bf16.msra.mxu0 %v789
  %1115 = vmatprep.subr.bf16.mxu0 %v788
  %1116 = vmatpush1.bf16.msra.mxu0 %v787
  %1117 = vmatprep.subr.bf16.mxu0 %v786
  %1118 = vmatpush1.bf16.msra.mxu0 %v785
  %1119 = vmatprep.subr.bf16.mxu0 %v784
  %1120 = vmatpush1.bf16.msra.mxu0 %v783
  %1121 = vmatprep.subr.bf16.mxu0 %v782
  %1122 = vmatpush1.bf16.msra.mxu0 %v781
  %1123 = vmatprep.subr.bf16.mxu0 %v780
  %1124 = vmatpush1.bf16.msra.mxu0 %v779
  %1125 = vmatprep.subr.bf16.mxu0 %v810
  %1126 = vmatpush2.bf16.msra.mxu0 %v809
  %1127 = vmatprep.subr.bf16.mxu0 %v808
  %1128 = vmatpush2.bf16.msra.mxu0 %v807
  %1129 = vmatprep.subr.bf16.mxu0 %v806
  %1130 = vmatpush2.bf16.msra.mxu0 %v805
  %1131 = vmatprep.subr.bf16.mxu0 %v804
  %1132 = vmatpush2.bf16.msra.mxu0 %v803
  %1133 = vmatprep.subr.bf16.mxu0 %v802
  %1134 = vmatpush2.bf16.msra.mxu0 %v801
  %1135 = vmatprep.subr.bf16.mxu0 %v800
  %1136 = vmatpush2.bf16.msra.mxu0 %v799
  %1137 = vmatprep.subr.bf16.mxu0 %v798
  %1138 = vmatpush2.bf16.msra.mxu0 %v797
  %1139 = vmatprep.subr.bf16.mxu0 %v796
  %1140 = vmatpush2.bf16.msra.mxu0 %v795
  %1141 = vmatprep.mubr.bf16.mxu0 %v252
  %1142 = vmatmul.mubr.bf16.gmra.mxu0 %v251
  %v1143 = vpop.f32.mrf.mxu0
  %v1144 = vadd.f32 %v1091, %v1143
  %v1145 = vpop.f32.mrf.mxu0
  %v1146 = vadd.f32 %v1093, %v1145
  %v1147 = vpop.f32.mrf.mxu0
  %v1148 = vadd.f32 %v1095, %v1147
  %v1149 = vpop.f32.mrf.mxu0
  %v1150 = vadd.f32 %v1097, %v1149
  %1151 = vmatprep.mubr.bf16.mxu0 %v261
  %1152 = vmatmul.mubr.bf16.gmra.mxu0 %v260
  %v1153 = vpop.f32.mrf.mxu0
  %v1154 = vadd.f32 %v1101, %v1153
  %v1155 = vpop.f32.mrf.mxu0
  %v1156 = vadd.f32 %v1103, %v1155
  %v1157 = vpop.f32.mrf.mxu0
  %v1158 = vadd.f32 %v1105, %v1157
  %v1159 = vpop.f32.mrf.mxu0
  %v1160 = vadd.f32 %v1107, %v1159
  %1161 = vdwg.mxu0
  %1162 = vmatprep.subr.bf16.mxu0 %v826
  %1163 = vmatpush1.bf16.msra.mxu0 %v825
  %1164 = vmatprep.subr.bf16.mxu0 %v824
  %1165 = vmatpush1.bf16.msra.mxu0 %v823
  %1166 = vmatprep.subr.bf16.mxu0 %v822
  %1167 = vmatpush1.bf16.msra.mxu0 %v821
  %1168 = vmatprep.subr.bf16.mxu0 %v820
  %1169 = vmatpush1.bf16.msra.mxu0 %v819
  %1170 = vmatprep.subr.bf16.mxu0 %v818
  %1171 = vmatpush1.bf16.msra.mxu0 %v817
  %1172 = vmatprep.subr.bf16.mxu0 %v816
  %1173 = vmatpush1.bf16.msra.mxu0 %v815
  %1174 = vmatprep.subr.bf16.mxu0 %v814
  %1175 = vmatpush1.bf16.msra.mxu0 %v813
  %1176 = vmatprep.subr.bf16.mxu0 %v812
  %1177 = vmatpush1.bf16.msra.mxu0 %v811
  %1178 = vmatprep.subr.bf16.mxu0 %v842
  %1179 = vmatpush2.bf16.msra.mxu0 %v841
  %1180 = vmatprep.subr.bf16.mxu0 %v840
  %1181 = vmatpush2.bf16.msra.mxu0 %v839
  %1182 = vmatprep.subr.bf16.mxu0 %v838
  %1183 = vmatpush2.bf16.msra.mxu0 %v837
  %1184 = vmatprep.subr.bf16.mxu0 %v836
  %1185 = vmatpush2.bf16.msra.mxu0 %v835
  %1186 = vmatprep.subr.bf16.mxu0 %v834
  %1187 = vmatpush2.bf16.msra.mxu0 %v833
  %1188 = vmatprep.subr.bf16.mxu0 %v832
  %1189 = vmatpush2.bf16.msra.mxu0 %v831
  %1190 = vmatprep.subr.bf16.mxu0 %v830
  %1191 = vmatpush2.bf16.msra.mxu0 %v829
  %1192 = vmatprep.subr.bf16.mxu0 %v828
  %1193 = vmatpush2.bf16.msra.mxu0 %v827
  %1194 = vmatprep.mubr.bf16.mxu0 %v254
  %1195 = vmatmul.mubr.bf16.gmra.mxu0 %v253
  %v1196 = vpop.f32.mrf.mxu0
  %v1197 = vadd.f32 %v1144, %v1196
  %v1198 = vpop.f32.mrf.mxu0
  %v1199 = vadd.f32 %v1146, %v1198
  %v1200 = vpop.f32.mrf.mxu0
  %v1201 = vadd.f32 %v1148, %v1200
  %v1202 = vpop.f32.mrf.mxu0
  %v1203 = vadd.f32 %v1150, %v1202
  %1204 = vmatprep.mubr.bf16.mxu0 %v263
  %1205 = vmatmul.mubr.bf16.gmra.mxu0 %v262
  %v1206 = vpop.f32.mrf.mxu0
  %v1207 = vadd.f32 %v1154, %v1206
  %v1208 = vpop.f32.mrf.mxu0
  %v1209 = vadd.f32 %v1156, %v1208
  %v1210 = vpop.f32.mrf.mxu0
  %v1211 = vadd.f32 %v1158, %v1210
  %v1212 = vpop.f32.mrf.mxu0
  %v1213 = vadd.f32 %v1160, %v1212
  %1214 = vdwg.mxu0
  %1215 = vmatprep.subr.bf16.mxu0 %v858
  %1216 = vmatpush1.bf16.msra.mxu0 %v857
  %1217 = vmatprep.subr.bf16.mxu0 %v856
  %1218 = vmatpush1.bf16.msra.mxu0 %v855
  %1219 = vmatprep.subr.bf16.mxu0 %v854
  %1220 = vmatpush1.bf16.msra.mxu0 %v853
  %1221 = vmatprep.subr.bf16.mxu0 %v852
  %1222 = vmatpush1.bf16.msra.mxu0 %v851
  %1223 = vmatprep.subr.bf16.mxu0 %v850
  %1224 = vmatpush1.bf16.msra.mxu0 %v849
  %1225 = vmatprep.subr.bf16.mxu0 %v848
  %1226 = vmatpush1.bf16.msra.mxu0 %v847
  %1227 = vmatprep.subr.bf16.mxu0 %v846
  %1228 = vmatpush1.bf16.msra.mxu0 %v845
  %1229 = vmatprep.subr.bf16.mxu0 %v844
  %1230 = vmatpush1.bf16.msra.mxu0 %v843
  %1231 = vmatprep.subr.bf16.mxu0 0
  %1232 = vmatpush2.bf16.msra.mxu0 0
  %1233 = vmatprep.subr.bf16.mxu0 0
  %1234 = vmatpush2.bf16.msra.mxu0 0
  %1235 = vmatprep.subr.bf16.mxu0 0
  %1236 = vmatpush2.bf16.msra.mxu0 0
  %1237 = vmatprep.subr.bf16.mxu0 0
  %1238 = vmatpush2.bf16.msra.mxu0 0
  %1239 = vmatprep.subr.bf16.mxu0 0
  %1240 = vmatpush2.bf16.msra.mxu0 0
  %1241 = vmatprep.subr.bf16.mxu0 0
  %1242 = vmatpush2.bf16.msra.mxu0 0
  %1243 = vmatprep.subr.bf16.mxu0 0
  %1244 = vmatpush2.bf16.msra.mxu0 0
  %1245 = vmatprep.subr.bf16.mxu0 0
  %1246 = vmatpush2.bf16.msra.mxu0 0
  %1247 = vmatprep.mubr.bf16.mxu0 0
  %1248 = vmatmul.mubr.bf16.gmra.mxu0 %v255
  %v1249 = vpop.f32.mrf.mxu0
  %v1250 = vadd.f32 %v1197, %v1249
  %v1251 = vpop.f32.mrf.mxu0
  %v1252 = vadd.f32 %v1199, %v1251
  %v1253 = vpop.f32.mrf.mxu0
  %v1254 = vadd.f32 %v1201, %v1253
  %v1255 = vpop.f32.mrf.mxu0
  %v1256 = vadd.f32 %v1203, %v1255
  %1257 = vmatprep.mubr.bf16.mxu0 0
  %1258 = vmatmul.mubr.bf16.gmra.mxu0 %v264
  %v1259 = vpop.f32.mrf.mxu0
  %v1260 = vadd.f32 %v1207, %v1259
  %v1261 = vpop.f32.mrf.mxu0
  %v1262 = vadd.f32 %v1209, %v1261
  %v1263 = vpop.f32.mrf.mxu0
  %v1264 = vadd.f32 %v1211, %v1263
  %v1265 = vpop.f32.mrf.mxu0
  %v1266 = vadd.f32 %v1213, %v1265
  %1267 = vdwg.mxu0
  %vm1268 = vcmp.gt.f32.partialorder %v1250, 0.0
  %vm1269 = vcmp.gt.f32.partialorder %v1252, 0.0
  %vm1270 = vcmp.gt.f32.partialorder %v1254, 0.0
  %vm1271 = vcmp.gt.f32.partialorder %v1256, 0.0
  %vm1272 = vcmp.gt.f32.partialorder %v1260, 0.0
  %vm1273 = vcmp.gt.f32.partialorder %v1262, 0.0
  %vm1274 = vcmp.gt.f32.partialorder %v1264, 0.0
  %vm1275 = vcmp.gt.f32.partialorder %v1266, 0.0
  %v1276 = vmul.f32 %v1250, 0.1
  %v1277 = vmul.f32 %v1252, 0.1
  %v1278 = vmul.f32 %v1254, 0.1
  %v1279 = vmul.f32 %v1256, 0.1
  %v1280 = vmul.f32 %v1260, 0.1
  %v1281 = vmul.f32 %v1262, 0.1
  %v1282 = vmul.f32 %v1264, 0.1
  %v1283 = vmul.f32 %v1266, 0.1
  %v1284 = vsel %vm1268, %v1250, %v1276
  %v1285 = vsel %vm1269, %v1252, %v1277
  %v1286 = vsel %vm1270, %v1254, %v1278
  %v1287 = vsel %vm1271, %v1256, %v1279
  %v1288 = vsel %vm1272, %v1260, %v1280
  %v1289 = vsel %vm1273, %v1262, %v1281
  %v1290 = vsel %vm1274, %v1264, %v1282
  %v1291 = vsel %vm1275, %v1266, %v1283
  %v1292 = vpack.c.bf16 %v1286, %v1284
  %v1293 = vpack.c.bf16 %v1287, %v1285
  %v1294 = vpack.c.bf16 %v1290, %v1288
  %v1295 = vpack.c.bf16 %v1291, %v1289
  %v1300 = vunpack.c.l.b16 %v1292
  %v1301 = vunpack.c.l.b16 %v1293
  %v1302 = vunpack.c.h.b16 %v1292
  %v1303 = vunpack.c.h.b16 %v1293
  %v1304 = vunpack.c.l.b16 %v1294
  %v1305 = vunpack.c.l.b16 %v1295
  %v1306 = vunpack.c.h.b16 %v1294
  %v1307 = vunpack.c.h.b16 %v1295
  %v1308 = vpack.c.b16 %v1301, %v1300
  %v1309 = vpack.c.b16 %v1303, %v1302
  %v1310 = vpack.c.b16 %v1305, %v1304
  %v1311 = vpack.c.b16 %v1307, %v1306
  %1316 = vst [vmem:[%s3] sm:$0xff] %v1308
  %1317 = vst [vmem:[%s3 + $0x8] sm:$0xff] %v1309
  %1318 = vst [vmem:[%s3 + $0x10] sm:$0xff] %v1310
  %1319 = vst [vmem:[%s3 + $0x18] sm:$0xff] %v1311
  // Predicated region
  $region14: #{discriminator_forward.11} parent=0 // pred_check
    _
  $region15: #{discriminator_forward.11} parent=0 // pred_check_branch
    %1321 = sbr.rel (0) target = $region17
  $region16: #{discriminator_forward.11} parent=0 // pred_region
    _
  $region17: #{discriminator_forward.11} parent=0 // pred_fallthru
    _
  // Predicated region
  $region18: #{discriminator_forward.11} parent=0 // pred_check
    _
  $region19: #{discriminator_forward.11} parent=0 // pred_check_branch
    %1323 = sbr.rel (0) target = $region21
  $region20: #{discriminator_forward.11} parent=0 // pred_region
    _
  $region21: #{discriminator_forward.11} parent=0 // pred_fallthru
    _

// kernel: discriminator_forward.13
$region0: #{discriminator_forward.13}
  #allocation0 [shape = 'u32[]', space=smem, size = 0x4, offset = 0x4, fixed_abs, tag = 'smem constant byte address 0x4 - core index']
  #allocation1 [shape = 'u32[144,128]{1,0:T(1,128)}', space=vmem, size = 0x12000, scoped, tag = 'internal scratch']
  #allocation2 [shape = 'f32[1,1]{1,0:T(1,128)S(1)}', space=vmem, size = 0x200, scoped, tag = 'scoped memory for discriminator_forward.13']
  %s0 = inlined_call_operand.vmem [shape: f32[2,256], index: 0, kind: input, shape index: {}]
  %s1 = inlined_call_operand.vmem [shape: f32[256,1024], index: 1, kind: input, shape index: {}]
  %s2 = inlined_call_operand.vmem [shape: f32[1,1024], index: 2, kind: input, shape index: {}]
  %s3 = inlined_call_operand.vmem [shape: f32[1024,1], index: 3, kind: input, shape index: {}]
  %s4 = inlined_call_operand.<no memory space> [shape: f32[1,1], index: 4, kind: input, shape index: {}]
  %s5 = inlined_call_operand.vmem [shape: f32[2,1], index: 5, kind: output, shape index: {}]
  %s6 = sld [smem:[#allocation0]]
  $region30: #{discriminator_forward.13} parent=0
    _
  %s8 = ssub.s32 1, %s6
  %s9 = scalar_select 0, %s8, %s6
  %v10 = vstv %s4
  %11 = vst [vmem:[#allocation2] sm:$0x1] %v10
  // Predicated region
  $region2: #{discriminator_forward.13} parent=0 // pred_check
    _
  $region3: #{discriminator_forward.13} parent=0 // pred_check_branch
    %13 = sbr.rel (0) target = $region5
  $region4: #{discriminator_forward.13} parent=0 // pred_region
    _
  $region5: #{discriminator_forward.13} parent=0 // pred_fallthru
    _
  // Predicated region
  $region6: #{discriminator_forward.13} parent=0 // pred_check
    _
  $region7: #{discriminator_forward.13} parent=0 // pred_check_branch
    %15 = sbr.rel (0) target = $region9
  $region8: #{discriminator_forward.13} parent=0 // pred_region
    _
  $region9: #{discriminator_forward.13} parent=0 // pred_fallthru
    _
  // Predicated region
  $region10: #{discriminator_forward.13} parent=0 // pred_check
    _
  $region11: #{discriminator_forward.13} parent=0 // pred_check_branch
    %17 = sbr.rel (0) target = $region13
  $region12: #{discriminator_forward.13} parent=0 // pred_region
    _
  $region13: #{discriminator_forward.13} parent=0 // pred_fallthru
    _
  // Predicated region
  $region14: #{discriminator_forward.13} parent=0 // pred_check
    _
  $region15: #{discriminator_forward.13} parent=0 // pred_check_branch
    %19 = sbr.rel (0) target = $region17
  $region16: #{discriminator_forward.13} parent=0 // pred_region
    _
  $region17: #{discriminator_forward.13} parent=0 // pred_fallthru
    _
  // Predicated region
  $region18: #{discriminator_forward.13} parent=0 // pred_check
    _
  $region19: #{discriminator_forward.13} parent=0 // pred_check_branch
    %21 = sbr.rel (0) target = $region21
  $region20: #{discriminator_forward.13} parent=0 // pred_region
    _
  $region21: #{discriminator_forward.13} parent=0 // pred_fallthru
    _
  %v22 = vld [vmem:[%s0] sm:$0xf]
  %v23 = vld [vmem:[%s1] sm:$0xff]
  %v24 = vld [vmem:[%s1 + $0x8] sm:$0xff]
  %v25 = vld [vmem:[%s1 + $0x10] sm:$0xff]
  %v26 = vld [vmem:[%s1 + $0x18] sm:$0xff]
  %v27 = vld [vmem:[%s1 + $0x20] sm:$0xff]
  %v28 = vld [vmem:[%s1 + $0x28] sm:$0xff]
  %v29 = vld [vmem:[%s1 + $0x30] sm:$0xff]
  %v30 = vld [vmem:[%s1 + $0x38] sm:$0xff]
  %v31 = vld [vmem:[%s1 + $0x40] sm:$0xff]
  %v32 = vld [vmem:[%s1 + $0x48] sm:$0xff]
  %v33 = vld [vmem:[%s1 + $0x50] sm:$0xff]
  %v34 = vld [vmem:[%s1 + $0x58] sm:$0xff]
  %v35 = vld [vmem:[%s1 + $0x60] sm:$0xff]
  %v36 = vld [vmem:[%s1 + $0x68] sm:$0xff]
  %v37 = vld [vmem:[%s1 + $0x70] sm:$0xff]
  %v38 = vld [vmem:[%s1 + $0x78] sm:$0xff]
  %v39 = vld [vmem:[%s1 + $0x80] sm:$0xff]
  %v40 = vld [vmem:[%s1 + $0x88] sm:$0xff]
  %v41 = vld [vmem:[%s1 + $0x90] sm:$0xff]
  %v42 = vld [vmem:[%s1 + $0x98] sm:$0xff]
  %v43 = vld [vmem:[%s1 + $0xa0] sm:$0xff]
  %v44 = vld [vmem:[%s1 + $0xa8] sm:$0xff]
  %v45 = vld [vmem:[%s1 + $0xb0] sm:$0xff]
  %v46 = vld [vmem:[%s1 + $0xb8] sm:$0xff]
  %v47 = vld [vmem:[%s1 + $0xc0] sm:$0xff]
  %v48 = vld [vmem:[%s1 + $0xc8] sm:$0xff]
  %v49 = vld [vmem:[%s1 + $0xd0] sm:$0xff]
  %v50 = vld [vmem:[%s1 + $0xd8] sm:$0xff]
  %v51 = vld [vmem:[%s1 + $0xe0] sm:$0xff]
  %v52 = vld [vmem:[%s1 + $0xe8] sm:$0xff]
  %v53 = vld [vmem:[%s1 + $0xf0] sm:$0xff]
  %v54 = vld [vmem:[%s1 + $0xf8] sm:$0xff]
  %v55 = vld [vmem:[%s1 + $0x100] sm:$0xff]
  %v56 = vld [vmem:[%s1 + $0x108] sm:$0xff]
  %v57 = vld [vmem:[%s1 + $0x110] sm:$0xff]
  %v58 = vld [vmem:[%s1 + $0x118] sm:$0xff]
  %v59 = vld [vmem:[%s1 + $0x120] sm:$0xff]
  %v60 = vld [vmem:[%s1 + $0x128] sm:$0xff]
  %v61 = vld [vmem:[%s1 + $0x130] sm:$0xff]
  %v62 = vld [vmem:[%s1 + $0x138] sm:$0xff]
  %v63 = vld [vmem:[%s1 + $0x140] sm:$0xff]
  %v64 = vld [vmem:[%s1 + $0x148] sm:$0xff]
  %v65 = vld [vmem:[%s1 + $0x150] sm:$0xff]
  %v66 = vld [vmem:[%s1 + $0x158] sm:$0xff]
  %v67 = vld [vmem:[%s1 + $0x160] sm:$0xff]
  %v68 = vld [vmem:[%s1 + $0x168] sm:$0xff]
  %v69 = vld [vmem:[%s1 + $0x170] sm:$0xff]
  %v70 = vld [vmem:[%s1 + $0x178] sm:$0xff]
  %v71 = vld [vmem:[%s1 + $0x180] sm:$0xff]
  %v72 = vld [vmem:[%s1 + $0x188] sm:$0xff]
  %v73 = vld [vmem:[%s1 + $0x190] sm:$0xff]
  %v74 = vld [vmem:[%s1 + $0x198] sm:$0xff]
  %v75 = vld [vmem:[%s1 + $0x1a0] sm:$0xff]
  %v76 = vld [vmem:[%s1 + $0x1a8] sm:$0xff]
  %v77 = vld [vmem:[%s1 + $0x1b0] sm:$0xff]
  %v78 = vld [vmem:[%s1 + $0x1b8] sm:$0xff]
  %v79 = vld [vmem:[%s1 + $0x1c0] sm:$0xff]
  %v80 = vld [vmem:[%s1 + $0x1c8] sm:$0xff]
  %v81 = vld [vmem:[%s1 + $0x1d0] sm:$0xff]
  %v82 = vld [vmem:[%s1 + $0x1d8] sm:$0xff]
  %v83 = vld [vmem:[%s1 + $0x1e0] sm:$0xff]
  %v84 = vld [vmem:[%s1 + $0x1e8] sm:$0xff]
  %v85 = vld [vmem:[%s1 + $0x1f0] sm:$0xff]
  %v86 = vld [vmem:[%s1 + $0x1f8] sm:$0xff]
  %v87 = vld [vmem:[%s1 + $0x200] sm:$0xff]
  %v88 = vld [vmem:[%s1 + $0x208] sm:$0xff]
  %v89 = vld [vmem:[%s1 + $0x210] sm:$0xff]
  %v90 = vld [vmem:[%s1 + $0x218] sm:$0xff]
  %v91 = vld [vmem:[%s1 + $0x220] sm:$0xff]
  %v92 = vld [vmem:[%s1 + $0x228] sm:$0xff]
  %v93 = vld [vmem:[%s1 + $0x230] sm:$0xff]
  %v94 = vld [vmem:[%s1 + $0x238] sm:$0xff]
  %v95 = vld [vmem:[%s1 + $0x240] sm:$0xff]
  %v96 = vld [vmem:[%s1 + $0x248] sm:$0xff]
  %v97 = vld [vmem:[%s1 + $0x250] sm:$0xff]
  %v98 = vld [vmem:[%s1 + $0x258] sm:$0xff]
  %v99 = vld [vmem:[%s1 + $0x260] sm:$0xff]
  %v100 = vld [vmem:[%s1 + $0x268] sm:$0xff]
  %v101 = vld [vmem:[%s1 + $0x270] sm:$0xff]
  %v102 = vld [vmem:[%s1 + $0x278] sm:$0xff]
  %v103 = vld [vmem:[%s1 + $0x280] sm:$0xff]
  %v104 = vld [vmem:[%s1 + $0x288] sm:$0xff]
  %v105 = vld [vmem:[%s1 + $0x290] sm:$0xff]
  %v106 = vld [vmem:[%s1 + $0x298] sm:$0xff]
  %v107 = vld [vmem:[%s1 + $0x2a0] sm:$0xff]
  %v108 = vld [vmem:[%s1 + $0x2a8] sm:$0xff]
  %v109 = vld [vmem:[%s1 + $0x2b0] sm:$0xff]
  %v110 = vld [vmem:[%s1 + $0x2b8] sm:$0xff]
  %v111 = vld [vmem:[%s1 + $0x2c0] sm:$0xff]
  %v112 = vld [vmem:[%s1 + $0x2c8] sm:$0xff]
  %v113 = vld [vmem:[%s1 + $0x2d0] sm:$0xff]
  %v114 = vld [vmem:[%s1 + $0x2d8] sm:$0xff]
  %v115 = vld [vmem:[%s1 + $0x2e0] sm:$0xff]
  %v116 = vld [vmem:[%s1 + $0x2e8] sm:$0xff]
  %v117 = vld [vmem:[%s1 + $0x2f0] sm:$0xff]
  %v118 = vld [vmem:[%s1 + $0x2f8] sm:$0xff]
  %v119 = vld [vmem:[%s1 + $0x300] sm:$0xff]
  %v120 = vld [vmem:[%s1 + $0x308] sm:$0xff]
  %v121 = vld [vmem:[%s1 + $0x310] sm:$0xff]
  %v122 = vld [vmem:[%s1 + $0x318] sm:$0xff]
  %v123 = vld [vmem:[%s1 + $0x320] sm:$0xff]
  %v124 = vld [vmem:[%s1 + $0x328] sm:$0xff]
  %v125 = vld [vmem:[%s1 + $0x330] sm:$0xff]
  %v126 = vld [vmem:[%s1 + $0x338] sm:$0xff]
  %v127 = vld [vmem:[%s1 + $0x340] sm:$0xff]
  %v128 = vld [vmem:[%s1 + $0x348] sm:$0xff]
  %v129 = vld [vmem:[%s1 + $0x350] sm:$0xff]
  %v130 = vld [vmem:[%s1 + $0x358] sm:$0xff]
  %v131 = vld [vmem:[%s1 + $0x360] sm:$0xff]
  %v132 = vld [vmem:[%s1 + $0x368] sm:$0xff]
  %v133 = vld [vmem:[%s1 + $0x370] sm:$0xff]
  %v134 = vld [vmem:[%s1 + $0x378] sm:$0xff]
  %v135 = vld [vmem:[%s1 + $0x380] sm:$0xff]
  %v136 = vld [vmem:[%s1 + $0x388] sm:$0xff]
  %v137 = vld [vmem:[%s1 + $0x390] sm:$0xff]
  %v138 = vld [vmem:[%s1 + $0x398] sm:$0xff]
  %v139 = vld [vmem:[%s1 + $0x3a0] sm:$0xff]
  %v140 = vld [vmem:[%s1 + $0x3a8] sm:$0xff]
  %v141 = vld [vmem:[%s1 + $0x3b0] sm:$0xff]
  %v142 = vld [vmem:[%s1 + $0x3b8] sm:$0xff]
  %v143 = vld [vmem:[%s1 + $0x3c0] sm:$0xff]
  %v144 = vld [vmem:[%s1 + $0x3c8] sm:$0xff]
  %v145 = vld [vmem:[%s1 + $0x3d0] sm:$0xff]
  %v146 = vld [vmem:[%s1 + $0x3d8] sm:$0xff]
  %v147 = vld [vmem:[%s1 + $0x3e0] sm:$0xff]
  %v148 = vld [vmem:[%s1 + $0x3e8] sm:$0xff]
  %v149 = vld [vmem:[%s1 + $0x3f0] sm:$0xff]
  %v150 = vld [vmem:[%s1 + $0x3f8] sm:$0xff]
  %v151 = vld [vmem:[%s1 + $0x400] sm:$0xff]
  %v152 = vld [vmem:[%s1 + $0x408] sm:$0xff]
  %v153 = vld [vmem:[%s1 + $0x410] sm:$0xff]
  %v154 = vld [vmem:[%s1 + $0x418] sm:$0xff]
  %v155 = vld [vmem:[%s1 + $0x420] sm:$0xff]
  %v156 = vld [vmem:[%s1 + $0x428] sm:$0xff]
  %v157 = vld [vmem:[%s1 + $0x430] sm:$0xff]
  %v158 = vld [vmem:[%s1 + $0x438] sm:$0xff]
  %v159 = vld [vmem:[%s1 + $0x440] sm:$0xff]
  %v160 = vld [vmem:[%s1 + $0x448] sm:$0xff]
  %v161 = vld [vmem:[%s1 + $0x450] sm:$0xff]
  %v162 = vld [vmem:[%s1 + $0x458] sm:$0xff]
  %v163 = vld [vmem:[%s1 + $0x460] sm:$0xff]
  %v164 = vld [vmem:[%s1 + $0x468] sm:$0xff]
  %v165 = vld [vmem:[%s1 + $0x470] sm:$0xff]
  %v166 = vld [vmem:[%s1 + $0x478] sm:$0xff]
  %v167 = vld [vmem:[%s1 + $0x480] sm:$0xff]
  %v168 = vld [vmem:[%s1 + $0x488] sm:$0xff]
  %v169 = vld [vmem:[%s1 + $0x490] sm:$0xff]
  %v170 = vld [vmem:[%s1 + $0x498] sm:$0xff]
  %v171 = vld [vmem:[%s1 + $0x4a0] sm:$0xff]
  %v172 = vld [vmem:[%s1 + $0x4a8] sm:$0xff]
  %v173 = vld [vmem:[%s1 + $0x4b0] sm:$0xff]
  %v174 = vld [vmem:[%s1 + $0x4b8] sm:$0xff]
  %v175 = vld [vmem:[%s1 + $0x4c0] sm:$0xff]
  %v176 = vld [vmem:[%s1 + $0x4c8] sm:$0xff]
  %v177 = vld [vmem:[%s1 + $0x4d0] sm:$0xff]
  %v178 = vld [vmem:[%s1 + $0x4d8] sm:$0xff]
  %v179 = vld [vmem:[%s1 + $0x4e0] sm:$0xff]
  %v180 = vld [vmem:[%s1 + $0x4e8] sm:$0xff]
  %v181 = vld [vmem:[%s1 + $0x4f0] sm:$0xff]
  %v182 = vld [vmem:[%s1 + $0x4f8] sm:$0xff]
  %v183 = vld [vmem:[%s1 + $0x500] sm:$0xff]
  %v184 = vld [vmem:[%s1 + $0x508] sm:$0xff]
  %v185 = vld [vmem:[%s1 + $0x510] sm:$0xff]
  %v186 = vld [vmem:[%s1 + $0x518] sm:$0xff]
  %v187 = vld [vmem:[%s1 + $0x520] sm:$0xff]
  %v188 = vld [vmem:[%s1 + $0x528] sm:$0xff]
  %v189 = vld [vmem:[%s1 + $0x530] sm:$0xff]
  %v190 = vld [vmem:[%s1 + $0x538] sm:$0xff]
  %v191 = vld [vmem:[%s1 + $0x540] sm:$0xff]
  %v192 = vld [vmem:[%s1 + $0x548] sm:$0xff]
  %v193 = vld [vmem:[%s1 + $0x550] sm:$0xff]
  %v194 = vld [vmem:[%s1 + $0x558] sm:$0xff]
  %v195 = vld [vmem:[%s1 + $0x560] sm:$0xff]
  %v196 = vld [vmem:[%s1 + $0x568] sm:$0xff]
  %v197 = vld [vmem:[%s1 + $0x570] sm:$0xff]
  %v198 = vld [vmem:[%s1 + $0x578] sm:$0xff]
  %v199 = vld [vmem:[%s1 + $0x580] sm:$0xff]
  %v200 = vld [vmem:[%s1 + $0x588] sm:$0xff]
  %v201 = vld [vmem:[%s1 + $0x590] sm:$0xff]
  %v202 = vld [vmem:[%s1 + $0x598] sm:$0xff]
  %v203 = vld [vmem:[%s1 + $0x5a0] sm:$0xff]
  %v204 = vld [vmem:[%s1 + $0x5a8] sm:$0xff]
  %v205 = vld [vmem:[%s1 + $0x5b0] sm:$0xff]
  %v206 = vld [vmem:[%s1 + $0x5b8] sm:$0xff]
  %v207 = vld [vmem:[%s1 + $0x5c0] sm:$0xff]
  %v208 = vld [vmem:[%s1 + $0x5c8] sm:$0xff]
  %v209 = vld [vmem:[%s1 + $0x5d0] sm:$0xff]
  %v210 = vld [vmem:[%s1 + $0x5d8] sm:$0xff]
  %v211 = vld [vmem:[%s1 + $0x5e0] sm:$0xff]
  %v212 = vld [vmem:[%s1 + $0x5e8] sm:$0xff]
  %v213 = vld [vmem:[%s1 + $0x5f0] sm:$0xff]
  %v214 = vld [vmem:[%s1 + $0x5f8] sm:$0xff]
  %v215 = vld [vmem:[%s1 + $0x600] sm:$0xff]
  %v216 = vld [vmem:[%s1 + $0x608] sm:$0xff]
  %v217 = vld [vmem:[%s1 + $0x610] sm:$0xff]
  %v218 = vld [vmem:[%s1 + $0x618] sm:$0xff]
  %v219 = vld [vmem:[%s1 + $0x620] sm:$0xff]
  %v220 = vld [vmem:[%s1 + $0x628] sm:$0xff]
  %v221 = vld [vmem:[%s1 + $0x630] sm:$0xff]
  %v222 = vld [vmem:[%s1 + $0x638] sm:$0xff]
  %v223 = vld [vmem:[%s1 + $0x640] sm:$0xff]
  %v224 = vld [vmem:[%s1 + $0x648] sm:$0xff]
  %v225 = vld [vmem:[%s1 + $0x650] sm:$0xff]
  %v226 = vld [vmem:[%s1 + $0x658] sm:$0xff]
  %v227 = vld [vmem:[%s1 + $0x660] sm:$0xff]
  %v228 = vld [vmem:[%s1 + $0x668] sm:$0xff]
  %v229 = vld [vmem:[%s1 + $0x670] sm:$0xff]
  %v230 = vld [vmem:[%s1 + $0x678] sm:$0xff]
  %v231 = vld [vmem:[%s1 + $0x680] sm:$0xff]
  %v232 = vld [vmem:[%s1 + $0x688] sm:$0xff]
  %v233 = vld [vmem:[%s1 + $0x690] sm:$0xff]
  %v234 = vld [vmem:[%s1 + $0x698] sm:$0xff]
  %v235 = vld [vmem:[%s1 + $0x6a0] sm:$0xff]
  %v236 = vld [vmem:[%s1 + $0x6a8] sm:$0xff]
  %v237 = vld [vmem:[%s1 + $0x6b0] sm:$0xff]
  %v238 = vld [vmem:[%s1 + $0x6b8] sm:$0xff]
  %v239 = vld [vmem:[%s1 + $0x6c0] sm:$0xff]
  %v240 = vld [vmem:[%s1 + $0x6c8] sm:$0xff]
  %v241 = vld [vmem:[%s1 + $0x6d0] sm:$0xff]
  %v242 = vld [vmem:[%s1 + $0x6d8] sm:$0xff]
  %v243 = vld [vmem:[%s1 + $0x6e0] sm:$0xff]
  %v244 = vld [vmem:[%s1 + $0x6e8] sm:$0xff]
  %v245 = vld [vmem:[%s1 + $0x6f0] sm:$0xff]
  %v246 = vld [vmem:[%s1 + $0x6f8] sm:$0xff]
  %v247 = vld [vmem:[%s1 + $0x700] sm:$0xff]
  %v248 = vld [vmem:[%s1 + $0x708] sm:$0xff]
  %v249 = vld [vmem:[%s1 + $0x710] sm:$0xff]
  %v250 = vld [vmem:[%s1 + $0x718] sm:$0xff]
  %v251 = vld [vmem:[%s1 + $0x720] sm:$0xff]
  %v252 = vld [vmem:[%s1 + $0x728] sm:$0xff]
  %v253 = vld [vmem:[%s1 + $0x730] sm:$0xff]
  %v254 = vld [vmem:[%s1 + $0x738] sm:$0xff]
  %v255 = vld [vmem:[%s1 + $0x740] sm:$0xff]
  %v256 = vld [vmem:[%s1 + $0x748] sm:$0xff]
  %v257 = vld [vmem:[%s1 + $0x750] sm:$0xff]
  %v258 = vld [vmem:[%s1 + $0x758] sm:$0xff]
  %v259 = vld [vmem:[%s1 + $0x760] sm:$0xff]
  %v260 = vld [vmem:[%s1 + $0x768] sm:$0xff]
  %v261 = vld [vmem:[%s1 + $0x770] sm:$0xff]
  %v262 = vld [vmem:[%s1 + $0x778] sm:$0xff]
  %v263 = vld [vmem:[%s1 + $0x780] sm:$0xff]
  %v264 = vld [vmem:[%s1 + $0x788] sm:$0xff]
  %v265 = vld [vmem:[%s1 + $0x790] sm:$0xff]
  %v266 = vld [vmem:[%s1 + $0x798] sm:$0xff]
  %v267 = vld [vmem:[%s1 + $0x7a0] sm:$0xff]
  %v268 = vld [vmem:[%s1 + $0x7a8] sm:$0xff]
  %v269 = vld [vmem:[%s1 + $0x7b0] sm:$0xff]
  %v270 = vld [vmem:[%s1 + $0x7b8] sm:$0xff]
  %v271 = vld [vmem:[%s1 + $0x7c0] sm:$0xff]
  %v272 = vld [vmem:[%s1 + $0x7c8] sm:$0xff]
  %v273 = vld [vmem:[%s1 + $0x7d0] sm:$0xff]
  %v274 = vld [vmem:[%s1 + $0x7d8] sm:$0xff]
  %v275 = vld [vmem:[%s1 + $0x7e0] sm:$0xff]
  %v276 = vld [vmem:[%s1 + $0x7e8] sm:$0xff]
  %v277 = vld [vmem:[%s1 + $0x7f0] sm:$0xff]
  %v278 = vld [vmem:[%s1 + $0x7f8] sm:$0xff]
  %v279 = vld [vmem:[%s2] sm:$0xff]
  %v281 = vlaneseq
  %v282 = vshrl.u32 %v281, 7
  %v283 = vsub.s32 0, %v282
  %v284 = vrot.slane %v279, %v283
  %v285 = vlaneseq
  %v286 = vshrl.u32 %v285, 7
  %v287 = vsub.s32 1, %v286
  %v288 = vrot.slane %v279, %v287
  %v289 = vlaneseq
  %v290 = vshrl.u32 %v289, 7
  %v291 = vsub.s32 2, %v290
  %v292 = vrot.slane %v279, %v291
  %v293 = vlaneseq
  %v294 = vshrl.u32 %v293, 7
  %v295 = vsub.s32 3, %v294
  %v296 = vrot.slane %v279, %v295
  %v297 = vlaneseq
  %v298 = vshrl.u32 %v297, 7
  %v299 = vsub.s32 4, %v298
  %v300 = vrot.slane %v279, %v299
  %v301 = vlaneseq
  %v302 = vshrl.u32 %v301, 7
  %v303 = vsub.s32 5, %v302
  %v304 = vrot.slane %v279, %v303
  %v305 = vlaneseq
  %v306 = vshrl.u32 %v305, 7
  %v307 = vsub.s32 6, %v306
  %v308 = vrot.slane %v279, %v307
  %v309 = vlaneseq
  %v310 = vshrl.u32 %v309, 7
  %v311 = vsub.s32 7, %v310
  %v312 = vrot.slane %v279, %v311
  %v323 = vunpack.c.l.s4 1983009808
  %v324 = vunpack.c.0.s8 %v323
  %v325 = vlaneseq
  %v326 = vshrl.u32 %v325, 7
  %v327 = vsub.s32 %v324, %v326
  %v328 = vrot.slane %v22, %v327
  %v329 = vcombine.high %v328, %v328
  %332 = vmatprep.subr.mxu0 %v144
  %333 = vmatpush1.msra.mxu0 %v143
  %334 = vmatprep.subr.mxu0 %v136
  %335 = vmatpush1.msra.mxu0 %v135
  %336 = vmatprep.subr.mxu0 %v128
  %337 = vmatpush1.msra.mxu0 %v127
  %338 = vmatprep.subr.mxu0 %v120
  %339 = vmatpush1.msra.mxu0 %v119
  %340 = vmatprep.subr.mxu0 %v112
  %341 = vmatpush1.msra.mxu0 %v111
  %342 = vmatprep.subr.mxu0 %v104
  %343 = vmatpush1.msra.mxu0 %v103
  %344 = vmatprep.subr.mxu0 %v96
  %345 = vmatpush1.msra.mxu0 %v95
  %346 = vmatprep.subr.mxu0 %v88
  %347 = vmatpush1.msra.mxu0 %v87
  %348 = vmatprep.subr.mxu0 %v80
  %349 = vmatpush1.msra.mxu0 %v79
  %350 = vmatprep.subr.mxu0 %v72
  %351 = vmatpush1.msra.mxu0 %v71
  %352 = vmatprep.subr.mxu0 %v64
  %353 = vmatpush1.msra.mxu0 %v63
  %354 = vmatprep.subr.mxu0 %v56
  %355 = vmatpush1.msra.mxu0 %v55
  %356 = vmatprep.subr.mxu0 %v48
  %357 = vmatpush1.msra.mxu0 %v47
  %358 = vmatprep.subr.mxu0 %v40
  %359 = vmatpush1.msra.mxu0 %v39
  %360 = vmatprep.subr.mxu0 %v32
  %361 = vmatpush1.msra.mxu0 %v31
  %362 = vmatprep.subr.mxu0 %v24
  %363 = vmatpush1.msra.mxu0 %v23
  %364 = vmatprep.subr.mxu0 %v272
  %365 = vmatpush2.msra.mxu0 %v271
  %366 = vmatprep.subr.mxu0 %v264
  %367 = vmatpush2.msra.mxu0 %v263
  %368 = vmatprep.subr.mxu0 %v256
  %369 = vmatpush2.msra.mxu0 %v255
  %370 = vmatprep.subr.mxu0 %v248
  %371 = vmatpush2.msra.mxu0 %v247
  %372 = vmatprep.subr.mxu0 %v240
  %373 = vmatpush2.msra.mxu0 %v239
  %374 = vmatprep.subr.mxu0 %v232
  %375 = vmatpush2.msra.mxu0 %v231
  %376 = vmatprep.subr.mxu0 %v224
  %377 = vmatpush2.msra.mxu0 %v223
  %378 = vmatprep.subr.mxu0 %v216
  %379 = vmatpush2.msra.mxu0 %v215
  %380 = vmatprep.subr.mxu0 %v208
  %381 = vmatpush2.msra.mxu0 %v207
  %382 = vmatprep.subr.mxu0 %v200
  %383 = vmatpush2.msra.mxu0 %v199
  %384 = vmatprep.subr.mxu0 %v192
  %385 = vmatpush2.msra.mxu0 %v191
  %386 = vmatprep.subr.mxu0 %v184
  %387 = vmatpush2.msra.mxu0 %v183
  %388 = vmatprep.subr.mxu0 %v176
  %389 = vmatpush2.msra.mxu0 %v175
  %390 = vmatprep.subr.mxu0 %v168
  %391 = vmatpush2.msra.mxu0 %v167
  %392 = vmatprep.subr.mxu0 %v160
  %393 = vmatpush2.msra.mxu0 %v159
  %394 = vmatprep.subr.mxu0 %v152
  %395 = vmatpush2.msra.mxu0 %v151
  %396 = vmatprep.mubr.f32.mxu0 %v329
  %397 = vmatmul.mubr.f32.gmra.mxu0 %v328
  %v398 = vpop.f32.mrf.mxu0
  %v399 = vadd.f32 %v284, %v398
  %v400 = vpop.f32.mrf.mxu0
  %v401 = vadd.f32 %v288, %v400
  %402 = vdwg.mxu0
  %403 = vmatprep.subr.mxu0 %v146
  %404 = vmatpush1.msra.mxu0 %v145
  %405 = vmatprep.subr.mxu0 %v138
  %406 = vmatpush1.msra.mxu0 %v137
  %407 = vmatprep.subr.mxu0 %v130
  %408 = vmatpush1.msra.mxu0 %v129
  %409 = vmatprep.subr.mxu0 %v122
  %410 = vmatpush1.msra.mxu0 %v121
  %411 = vmatprep.subr.mxu0 %v114
  %412 = vmatpush1.msra.mxu0 %v113
  %413 = vmatprep.subr.mxu0 %v106
  %414 = vmatpush1.msra.mxu0 %v105
  %415 = vmatprep.subr.mxu0 %v98
  %416 = vmatpush1.msra.mxu0 %v97
  %417 = vmatprep.subr.mxu0 %v90
  %418 = vmatpush1.msra.mxu0 %v89
  %419 = vmatprep.subr.mxu0 %v82
  %420 = vmatpush1.msra.mxu0 %v81
  %421 = vmatprep.subr.mxu0 %v74
  %422 = vmatpush1.msra.mxu0 %v73
  %423 = vmatprep.subr.mxu0 %v66
  %424 = vmatpush1.msra.mxu0 %v65
  %425 = vmatprep.subr.mxu0 %v58
  %426 = vmatpush1.msra.mxu0 %v57
  %427 = vmatprep.subr.mxu0 %v50
  %428 = vmatpush1.msra.mxu0 %v49
  %429 = vmatprep.subr.mxu0 %v42
  %430 = vmatpush1.msra.mxu0 %v41
  %431 = vmatprep.subr.mxu0 %v34
  %432 = vmatpush1.msra.mxu0 %v33
  %433 = vmatprep.subr.mxu0 %v26
  %434 = vmatpush1.msra.mxu0 %v25
  %435 = vmatprep.subr.mxu0 %v274
  %436 = vmatpush2.msra.mxu0 %v273
  %437 = vmatprep.subr.mxu0 %v266
  %438 = vmatpush2.msra.mxu0 %v265
  %439 = vmatprep.subr.mxu0 %v258
  %440 = vmatpush2.msra.mxu0 %v257
  %441 = vmatprep.subr.mxu0 %v250
  %442 = vmatpush2.msra.mxu0 %v249
  %443 = vmatprep.subr.mxu0 %v242
  %444 = vmatpush2.msra.mxu0 %v241
  %445 = vmatprep.subr.mxu0 %v234
  %446 = vmatpush2.msra.mxu0 %v233
  %447 = vmatprep.subr.mxu0 %v226
  %448 = vmatpush2.msra.mxu0 %v225
  %449 = vmatprep.subr.mxu0 %v218
  %450 = vmatpush2.msra.mxu0 %v217
  %451 = vmatprep.subr.mxu0 %v210
  %452 = vmatpush2.msra.mxu0 %v209
  %453 = vmatprep.subr.mxu0 %v202
  %454 = vmatpush2.msra.mxu0 %v201
  %455 = vmatprep.subr.mxu0 %v194
  %456 = vmatpush2.msra.mxu0 %v193
  %457 = vmatprep.subr.mxu0 %v186
  %458 = vmatpush2.msra.mxu0 %v185
  %459 = vmatprep.subr.mxu0 %v178
  %460 = vmatpush2.msra.mxu0 %v177
  %461 = vmatprep.subr.mxu0 %v170
  %462 = vmatpush2.msra.mxu0 %v169
  %463 = vmatprep.subr.mxu0 %v162
  %464 = vmatpush2.msra.mxu0 %v161
  %465 = vmatprep.subr.mxu0 %v154
  %466 = vmatpush2.msra.mxu0 %v153
  %467 = vmatprep.mubr.f32.mxu0 %v329
  %468 = vmatmul.mubr.f32.gmra.mxu0 %v328
  %v469 = vpop.f32.mrf.mxu0
  %v470 = vadd.f32 %v292, %v469
  %v471 = vpop.f32.mrf.mxu0
  %v472 = vadd.f32 %v296, %v471
  %473 = vdwg.mxu0
  %474 = vmatprep.subr.mxu0 %v148
  %475 = vmatpush1.msra.mxu0 %v147
  %476 = vmatprep.subr.mxu0 %v140
  %477 = vmatpush1.msra.mxu0 %v139
  %478 = vmatprep.subr.mxu0 %v132
  %479 = vmatpush1.msra.mxu0 %v131
  %480 = vmatprep.subr.mxu0 %v124
  %481 = vmatpush1.msra.mxu0 %v123
  %482 = vmatprep.subr.mxu0 %v116
  %483 = vmatpush1.msra.mxu0 %v115
  %484 = vmatprep.subr.mxu0 %v108
  %485 = vmatpush1.msra.mxu0 %v107
  %486 = vmatprep.subr.mxu0 %v100
  %487 = vmatpush1.msra.mxu0 %v99
  %488 = vmatprep.subr.mxu0 %v92
  %489 = vmatpush1.msra.mxu0 %v91
  %490 = vmatprep.subr.mxu0 %v84
  %491 = vmatpush1.msra.mxu0 %v83
  %492 = vmatprep.subr.mxu0 %v76
  %493 = vmatpush1.msra.mxu0 %v75
  %494 = vmatprep.subr.mxu0 %v68
  %495 = vmatpush1.msra.mxu0 %v67
  %496 = vmatprep.subr.mxu0 %v60
  %497 = vmatpush1.msra.mxu0 %v59
  %498 = vmatprep.subr.mxu0 %v52
  %499 = vmatpush1.msra.mxu0 %v51
  %500 = vmatprep.subr.mxu0 %v44
  %501 = vmatpush1.msra.mxu0 %v43
  %502 = vmatprep.subr.mxu0 %v36
  %503 = vmatpush1.msra.mxu0 %v35
  %504 = vmatprep.subr.mxu0 %v28
  %505 = vmatpush1.msra.mxu0 %v27
  %506 = vmatprep.subr.mxu0 %v276
  %507 = vmatpush2.msra.mxu0 %v275
  %508 = vmatprep.subr.mxu0 %v268
  %509 = vmatpush2.msra.mxu0 %v267
  %510 = vmatprep.subr.mxu0 %v260
  %511 = vmatpush2.msra.mxu0 %v259
  %512 = vmatprep.subr.mxu0 %v252
  %513 = vmatpush2.msra.mxu0 %v251
  %514 = vmatprep.subr.mxu0 %v244
  %515 = vmatpush2.msra.mxu0 %v243
  %516 = vmatprep.subr.mxu0 %v236
  %517 = vmatpush2.msra.mxu0 %v235
  %518 = vmatprep.subr.mxu0 %v228
  %519 = vmatpush2.msra.mxu0 %v227
  %520 = vmatprep.subr.mxu0 %v220
  %521 = vmatpush2.msra.mxu0 %v219
  %522 = vmatprep.subr.mxu0 %v212
  %523 = vmatpush2.msra.mxu0 %v211
  %524 = vmatprep.subr.mxu0 %v204
  %525 = vmatpush2.msra.mxu0 %v203
  %526 = vmatprep.subr.mxu0 %v196
  %527 = vmatpush2.msra.mxu0 %v195
  %528 = vmatprep.subr.mxu0 %v188
  %529 = vmatpush2.msra.mxu0 %v187
  %530 = vmatprep.subr.mxu0 %v180
  %531 = vmatpush2.msra.mxu0 %v179
  %532 = vmatprep.subr.mxu0 %v172
  %533 = vmatpush2.msra.mxu0 %v171
  %534 = vmatprep.subr.mxu0 %v164
  %535 = vmatpush2.msra.mxu0 %v163
  %536 = vmatprep.subr.mxu0 %v156
  %537 = vmatpush2.msra.mxu0 %v155
  %538 = vmatprep.mubr.f32.mxu0 %v329
  %539 = vmatmul.mubr.f32.gmra.mxu0 %v328
  %v540 = vpop.f32.mrf.mxu0
  %v541 = vadd.f32 %v300, %v540
  %v542 = vpop.f32.mrf.mxu0
  %v543 = vadd.f32 %v304, %v542
  %544 = vdwg.mxu0
  %545 = vmatprep.subr.mxu0 %v150
  %546 = vmatpush1.msra.mxu0 %v149
  %547 = vmatprep.subr.mxu0 %v142
  %548 = vmatpush1.msra.mxu0 %v141
  %549 = vmatprep.subr.mxu0 %v134
  %550 = vmatpush1.msra.mxu0 %v133
  %551 = vmatprep.subr.mxu0 %v126
  %552 = vmatpush1.msra.mxu0 %v125
  %553 = vmatprep.subr.mxu0 %v118
  %554 = vmatpush1.msra.mxu0 %v117
  %555 = vmatprep.subr.mxu0 %v110
  %556 = vmatpush1.msra.mxu0 %v109
  %557 = vmatprep.subr.mxu0 %v102
  %558 = vmatpush1.msra.mxu0 %v101
  %559 = vmatprep.subr.mxu0 %v94
  %560 = vmatpush1.msra.mxu0 %v93
  %561 = vmatprep.subr.mxu0 %v86
  %562 = vmatpush1.msra.mxu0 %v85
  %563 = vmatprep.subr.mxu0 %v78
  %564 = vmatpush1.msra.mxu0 %v77
  %565 = vmatprep.subr.mxu0 %v70
  %566 = vmatpush1.msra.mxu0 %v69
  %567 = vmatprep.subr.mxu0 %v62
  %568 = vmatpush1.msra.mxu0 %v61
  %569 = vmatprep.subr.mxu0 %v54
  %570 = vmatpush1.msra.mxu0 %v53
  %571 = vmatprep.subr.mxu0 %v46
  %572 = vmatpush1.msra.mxu0 %v45
  %573 = vmatprep.subr.mxu0 %v38
  %574 = vmatpush1.msra.mxu0 %v37
  %575 = vmatprep.subr.mxu0 %v30
  %576 = vmatpush1.msra.mxu0 %v29
  %577 = vmatprep.subr.mxu0 %v278
  %578 = vmatpush2.msra.mxu0 %v277
  %579 = vmatprep.subr.mxu0 %v270
  %580 = vmatpush2.msra.mxu0 %v269
  %581 = vmatprep.subr.mxu0 %v262
  %582 = vmatpush2.msra.mxu0 %v261
  %583 = vmatprep.subr.mxu0 %v254
  %584 = vmatpush2.msra.mxu0 %v253
  %585 = vmatprep.subr.mxu0 %v246
  %586 = vmatpush2.msra.mxu0 %v245
  %587 = vmatprep.subr.mxu0 %v238
  %588 = vmatpush2.msra.mxu0 %v237
  %589 = vmatprep.subr.mxu0 %v230
  %590 = vmatpush2.msra.mxu0 %v229
  %591 = vmatprep.subr.mxu0 %v222
  %592 = vmatpush2.msra.mxu0 %v221
  %593 = vmatprep.subr.mxu0 %v214
  %594 = vmatpush2.msra.mxu0 %v213
  %595 = vmatprep.subr.mxu0 %v206
  %596 = vmatpush2.msra.mxu0 %v205
  %597 = vmatprep.subr.mxu0 %v198
  %598 = vmatpush2.msra.mxu0 %v197
  %599 = vmatprep.subr.mxu0 %v190
  %600 = vmatpush2.msra.mxu0 %v189
  %601 = vmatprep.subr.mxu0 %v182
  %602 = vmatpush2.msra.mxu0 %v181
  %603 = vmatprep.subr.mxu0 %v174
  %604 = vmatpush2.msra.mxu0 %v173
  %605 = vmatprep.subr.mxu0 %v166
  %606 = vmatpush2.msra.mxu0 %v165
  %607 = vmatprep.subr.mxu0 %v158
  %608 = vmatpush2.msra.mxu0 %v157
  %609 = vmatprep.mubr.f32.mxu0 %v329
  %610 = vmatmul.mubr.f32.gmra.mxu0 %v328
  %v611 = vpop.f32.mrf.mxu0
  %v612 = vadd.f32 %v308, %v611
  %v613 = vpop.f32.mrf.mxu0
  %v614 = vadd.f32 %v312, %v613
  %615 = vdwg.mxu0
  %vm616 = vcmp.gt.f32.partialorder %v399, 0.0
  %vm617 = vcmp.gt.f32.partialorder %v401, 0.0
  %vm618 = vcmp.gt.f32.partialorder %v470, 0.0
  %vm619 = vcmp.gt.f32.partialorder %v472, 0.0
  %vm620 = vcmp.gt.f32.partialorder %v541, 0.0
  %vm621 = vcmp.gt.f32.partialorder %v543, 0.0
  %vm622 = vcmp.gt.f32.partialorder %v612, 0.0
  %vm623 = vcmp.gt.f32.partialorder %v614, 0.0
  %v624 = vmul.f32 %v399, 0.1
  %v625 = vmul.f32 %v401, 0.1
  %v626 = vmul.f32 %v470, 0.1
  %v627 = vmul.f32 %v472, 0.1
  %v628 = vmul.f32 %v541, 0.1
  %v629 = vmul.f32 %v543, 0.1
  %v630 = vmul.f32 %v612, 0.1
  %v631 = vmul.f32 %v614, 0.1
  %v632 = vsel %vm616, %v399, %v624
  %v633 = vsel %vm617, %v401, %v625
  %v634 = vsel %vm618, %v470, %v626
  %v635 = vsel %vm619, %v472, %v627
  %v636 = vsel %vm620, %v541, %v628
  %v637 = vsel %vm621, %v543, %v629
  %v638 = vsel %vm622, %v612, %v630
  %v639 = vsel %vm623, %v614, %v631
  %v640 = vld [vmem:[%s3] sm:$0xff]
  %v641 = vld [vmem:[%s3 + $0x8] sm:$0xff]
  %v642 = vld [vmem:[%s3 + $0x10] sm:$0xff]
  %v643 = vld [vmem:[%s3 + $0x18] sm:$0xff]
  %v644 = vld [vmem:[%s3 + $0x20] sm:$0xff]
  %v645 = vld [vmem:[%s3 + $0x28] sm:$0xff]
  %v646 = vld [vmem:[%s3 + $0x30] sm:$0xff]
  %v647 = vld [vmem:[%s3 + $0x38] sm:$0xff]
  %v648 = vld [vmem:[%s3 + $0x40] sm:$0xff]
  %v649 = vld [vmem:[%s3 + $0x48] sm:$0xff]
  %v650 = vld [vmem:[%s3 + $0x50] sm:$0xff]
  %v651 = vld [vmem:[%s3 + $0x58] sm:$0xff]
  %v652 = vld [vmem:[%s3 + $0x60] sm:$0xff]
  %v653 = vld [vmem:[%s3 + $0x68] sm:$0xff]
  %v654 = vld [vmem:[%s3 + $0x70] sm:$0xff]
  %v655 = vld [vmem:[%s3 + $0x78] sm:$0xff]
  %v656 = vld [vmem:[%s3 + $0x80] sm:$0xff]
  %v657 = vld [vmem:[%s3 + $0x88] sm:$0xff]
  %v658 = vld [vmem:[%s3 + $0x90] sm:$0xff]
  %v659 = vld [vmem:[%s3 + $0x98] sm:$0xff]
  %v660 = vld [vmem:[%s3 + $0xa0] sm:$0xff]
  %v661 = vld [vmem:[%s3 + $0xa8] sm:$0xff]
  %v662 = vld [vmem:[%s3 + $0xb0] sm:$0xff]
  %v663 = vld [vmem:[%s3 + $0xb8] sm:$0xff]
  %v664 = vld [vmem:[%s3 + $0xc0] sm:$0xff]
  %v665 = vld [vmem:[%s3 + $0xc8] sm:$0xff]
  %v666 = vld [vmem:[%s3 + $0xd0] sm:$0xff]
  %v667 = vld [vmem:[%s3 + $0xd8] sm:$0xff]
  %v668 = vld [vmem:[%s3 + $0xe0] sm:$0xff]
  %v669 = vld [vmem:[%s3 + $0xe8] sm:$0xff]
  %v670 = vld [vmem:[%s3 + $0xf0] sm:$0xff]
  %v671 = vld [vmem:[%s3 + $0xf8] sm:$0xff]
  %v672 = vld [vmem:[%s3 + $0x100] sm:$0xff]
  %v673 = vld [vmem:[%s3 + $0x108] sm:$0xff]
  %v674 = vld [vmem:[%s3 + $0x110] sm:$0xff]
  %v675 = vld [vmem:[%s3 + $0x118] sm:$0xff]
  %v676 = vld [vmem:[%s3 + $0x120] sm:$0xff]
  %v677 = vld [vmem:[%s3 + $0x128] sm:$0xff]
  %v678 = vld [vmem:[%s3 + $0x130] sm:$0xff]
  %v679 = vld [vmem:[%s3 + $0x138] sm:$0xff]
  %v680 = vld [vmem:[%s3 + $0x140] sm:$0xff]
  %v681 = vld [vmem:[%s3 + $0x148] sm:$0xff]
  %v682 = vld [vmem:[%s3 + $0x150] sm:$0xff]
  %v683 = vld [vmem:[%s3 + $0x158] sm:$0xff]
  %v684 = vld [vmem:[%s3 + $0x160] sm:$0xff]
  %v685 = vld [vmem:[%s3 + $0x168] sm:$0xff]
  %v686 = vld [vmem:[%s3 + $0x170] sm:$0xff]
  %v687 = vld [vmem:[%s3 + $0x178] sm:$0xff]
  %v688 = vld [vmem:[%s3 + $0x180] sm:$0xff]
  %v689 = vld [vmem:[%s3 + $0x188] sm:$0xff]
  %v690 = vld [vmem:[%s3 + $0x190] sm:$0xff]
  %v691 = vld [vmem:[%s3 + $0x198] sm:$0xff]
  %v692 = vld [vmem:[%s3 + $0x1a0] sm:$0xff]
  %v693 = vld [vmem:[%s3 + $0x1a8] sm:$0xff]
  %v694 = vld [vmem:[%s3 + $0x1b0] sm:$0xff]
  %v695 = vld [vmem:[%s3 + $0x1b8] sm:$0xff]
  %v696 = vld [vmem:[%s3 + $0x1c0] sm:$0xff]
  %v697 = vld [vmem:[%s3 + $0x1c8] sm:$0xff]
  %v698 = vld [vmem:[%s3 + $0x1d0] sm:$0xff]
  %v699 = vld [vmem:[%s3 + $0x1d8] sm:$0xff]
  %v700 = vld [vmem:[%s3 + $0x1e0] sm:$0xff]
  %v701 = vld [vmem:[%s3 + $0x1e8] sm:$0xff]
  %v702 = vld [vmem:[%s3 + $0x1f0] sm:$0xff]
  %v703 = vld [vmem:[%s3 + $0x1f8] sm:$0xff]
  %v704 = vld [vmem:[%s3 + $0x200] sm:$0xff]
  %v705 = vld [vmem:[%s3 + $0x208] sm:$0xff]
  %v706 = vld [vmem:[%s3 + $0x210] sm:$0xff]
  %v707 = vld [vmem:[%s3 + $0x218] sm:$0xff]
  %v708 = vld [vmem:[%s3 + $0x220] sm:$0xff]
  %v709 = vld [vmem:[%s3 + $0x228] sm:$0xff]
  %v710 = vld [vmem:[%s3 + $0x230] sm:$0xff]
  %v711 = vld [vmem:[%s3 + $0x238] sm:$0xff]
  %v712 = vld [vmem:[%s3 + $0x240] sm:$0xff]
  %v713 = vld [vmem:[%s3 + $0x248] sm:$0xff]
  %v714 = vld [vmem:[%s3 + $0x250] sm:$0xff]
  %v715 = vld [vmem:[%s3 + $0x258] sm:$0xff]
  %v716 = vld [vmem:[%s3 + $0x260] sm:$0xff]
  %v717 = vld [vmem:[%s3 + $0x268] sm:$0xff]
  %v718 = vld [vmem:[%s3 + $0x270] sm:$0xff]
  %v719 = vld [vmem:[%s3 + $0x278] sm:$0xff]
  %v720 = vld [vmem:[%s3 + $0x280] sm:$0xff]
  %v721 = vld [vmem:[%s3 + $0x288] sm:$0xff]
  %v722 = vld [vmem:[%s3 + $0x290] sm:$0xff]
  %v723 = vld [vmem:[%s3 + $0x298] sm:$0xff]
  %v724 = vld [vmem:[%s3 + $0x2a0] sm:$0xff]
  %v725 = vld [vmem:[%s3 + $0x2a8] sm:$0xff]
  %v726 = vld [vmem:[%s3 + $0x2b0] sm:$0xff]
  %v727 = vld [vmem:[%s3 + $0x2b8] sm:$0xff]
  %v728 = vld [vmem:[%s3 + $0x2c0] sm:$0xff]
  %v729 = vld [vmem:[%s3 + $0x2c8] sm:$0xff]
  %v730 = vld [vmem:[%s3 + $0x2d0] sm:$0xff]
  %v731 = vld [vmem:[%s3 + $0x2d8] sm:$0xff]
  %v732 = vld [vmem:[%s3 + $0x2e0] sm:$0xff]
  %v733 = vld [vmem:[%s3 + $0x2e8] sm:$0xff]
  %v734 = vld [vmem:[%s3 + $0x2f0] sm:$0xff]
  %v735 = vld [vmem:[%s3 + $0x2f8] sm:$0xff]
  %v736 = vld [vmem:[%s3 + $0x300] sm:$0xff]
  %v737 = vld [vmem:[%s3 + $0x308] sm:$0xff]
  %v738 = vld [vmem:[%s3 + $0x310] sm:$0xff]
  %v739 = vld [vmem:[%s3 + $0x318] sm:$0xff]
  %v740 = vld [vmem:[%s3 + $0x320] sm:$0xff]
  %v741 = vld [vmem:[%s3 + $0x328] sm:$0xff]
  %v742 = vld [vmem:[%s3 + $0x330] sm:$0xff]
  %v743 = vld [vmem:[%s3 + $0x338] sm:$0xff]
  %v744 = vld [vmem:[%s3 + $0x340] sm:$0xff]
  %v745 = vld [vmem:[%s3 + $0x348] sm:$0xff]
  %v746 = vld [vmem:[%s3 + $0x350] sm:$0xff]
  %v747 = vld [vmem:[%s3 + $0x358] sm:$0xff]
  %v748 = vld [vmem:[%s3 + $0x360] sm:$0xff]
  %v749 = vld [vmem:[%s3 + $0x368] sm:$0xff]
  %v750 = vld [vmem:[%s3 + $0x370] sm:$0xff]
  %v751 = vld [vmem:[%s3 + $0x378] sm:$0xff]
  %v752 = vld [vmem:[%s3 + $0x380] sm:$0xff]
  %v753 = vld [vmem:[%s3 + $0x388] sm:$0xff]
  %v754 = vld [vmem:[%s3 + $0x390] sm:$0xff]
  %v755 = vld [vmem:[%s3 + $0x398] sm:$0xff]
  %v756 = vld [vmem:[%s3 + $0x3a0] sm:$0xff]
  %v757 = vld [vmem:[%s3 + $0x3a8] sm:$0xff]
  %v758 = vld [vmem:[%s3 + $0x3b0] sm:$0xff]
  %v759 = vld [vmem:[%s3 + $0x3b8] sm:$0xff]
  %v760 = vld [vmem:[%s3 + $0x3c0] sm:$0xff]
  %v761 = vld [vmem:[%s3 + $0x3c8] sm:$0xff]
  %v762 = vld [vmem:[%s3 + $0x3d0] sm:$0xff]
  %v763 = vld [vmem:[%s3 + $0x3d8] sm:$0xff]
  %v764 = vld [vmem:[%s3 + $0x3e0] sm:$0xff]
  %v765 = vld [vmem:[%s3 + $0x3e8] sm:$0xff]
  %v766 = vld [vmem:[%s3 + $0x3f0] sm:$0xff]
  %v767 = vld [vmem:[%s3 + $0x3f8] sm:$0xff]
  %v768 = vld [vmem:[#allocation2] sm:$0x1]
  %v770 = vlaneseq
  %v771 = vshrl.u32 %v770, 7
  %v772 = vsub.s32 0, %v771
  %v773 = vrot.slane %v768, %v772
  %775 = vmatprep.subr.mxu0 0.0
  %776 = vmatpush1.msra.mxu0 %v655
  %777 = vmatprep.subr.mxu0 0.0
  %778 = vmatpush1.msra.mxu0 %v654
  %779 = vmatprep.subr.mxu0 0.0
  %780 = vmatpush1.msra.mxu0 %v653
  %781 = vmatprep.subr.mxu0 0.0
  %782 = vmatpush1.msra.mxu0 %v652
  %783 = vmatprep.subr.mxu0 0.0
  %784 = vmatpush1.msra.mxu0 %v651
  %785 = vmatprep.subr.mxu0 0.0
  %786 = vmatpush1.msra.mxu0 %v650
  %787 = vmatprep.subr.mxu0 0.0
  %788 = vmatpush1.msra.mxu0 %v649
  %789 = vmatprep.subr.mxu0 0.0
  %790 = vmatpush1.msra.mxu0 %v648
  %791 = vmatprep.subr.mxu0 0.0
  %792 = vmatpush1.msra.mxu0 %v647
  %793 = vmatprep.subr.mxu0 0.0
  %794 = vmatpush1.msra.mxu0 %v646
  %795 = vmatprep.subr.mxu0 0.0
  %796 = vmatpush1.msra.mxu0 %v645
  %797 = vmatprep.subr.mxu0 0.0
  %798 = vmatpush1.msra.mxu0 %v644
  %799 = vmatprep.subr.mxu0 0.0
  %800 = vmatpush1.msra.mxu0 %v643
  %801 = vmatprep.subr.mxu0 0.0
  %802 = vmatpush1.msra.mxu0 %v642
  %803 = vmatprep.subr.mxu0 0.0
  %804 = vmatpush1.msra.mxu0 %v641
  %805 = vmatprep.subr.mxu0 0.0
  %806 = vmatpush1.msra.mxu0 %v640
  %807 = vmatprep.subr.mxu0 0.0
  %808 = vmatpush2.msra.mxu0 %v671
  %809 = vmatprep.subr.mxu0 0.0
  %810 = vmatpush2.msra.mxu0 %v670
  %811 = vmatprep.subr.mxu0 0.0
  %812 = vmatpush2.msra.mxu0 %v669
  %813 = vmatprep.subr.mxu0 0.0
  %814 = vmatpush2.msra.mxu0 %v668
  %815 = vmatprep.subr.mxu0 0.0
  %816 = vmatpush2.msra.mxu0 %v667
  %817 = vmatprep.subr.mxu0 0.0
  %818 = vmatpush2.msra.mxu0 %v666
  %819 = vmatprep.subr.mxu0 0.0
  %820 = vmatpush2.msra.mxu0 %v665
  %821 = vmatprep.subr.mxu0 0.0
  %822 = vmatpush2.msra.mxu0 %v664
  %823 = vmatprep.subr.mxu0 0.0
  %824 = vmatpush2.msra.mxu0 %v663
  %825 = vmatprep.subr.mxu0 0.0
  %826 = vmatpush2.msra.mxu0 %v662
  %827 = vmatprep.subr.mxu0 0.0
  %828 = vmatpush2.msra.mxu0 %v661
  %829 = vmatprep.subr.mxu0 0.0
  %830 = vmatpush2.msra.mxu0 %v660
  %831 = vmatprep.subr.mxu0 0.0
  %832 = vmatpush2.msra.mxu0 %v659
  %833 = vmatprep.subr.mxu0 0.0
  %834 = vmatpush2.msra.mxu0 %v658
  %835 = vmatprep.subr.mxu0 0.0
  %836 = vmatpush2.msra.mxu0 %v657
  %837 = vmatprep.subr.mxu0 0.0
  %838 = vmatpush2.msra.mxu0 %v656
  %839 = vmatprep.mubr.f32.mxu0 %v633
  %840 = vmatmul.mubr.f32.gmra.mxu0 %v632
  %v841 = vpop.f32.mrf.mxu0
  %v842 = vadd.f32 %v773, %v841
  %v843 = vpop.f32.mrf.mxu0
  %844 = vdwg.mxu0
  %845 = vmatprep.subr.mxu0 0.0
  %846 = vmatpush1.msra.mxu0 %v687
  %847 = vmatprep.subr.mxu0 0.0
  %848 = vmatpush1.msra.mxu0 %v686
  %849 = vmatprep.subr.mxu0 0.0
  %850 = vmatpush1.msra.mxu0 %v685
  %851 = vmatprep.subr.mxu0 0.0
  %852 = vmatpush1.msra.mxu0 %v684
  %853 = vmatprep.subr.mxu0 0.0
  %854 = vmatpush1.msra.mxu0 %v683
  %855 = vmatprep.subr.mxu0 0.0
  %856 = vmatpush1.msra.mxu0 %v682
  %857 = vmatprep.subr.mxu0 0.0
  %858 = vmatpush1.msra.mxu0 %v681
  %859 = vmatprep.subr.mxu0 0.0
  %860 = vmatpush1.msra.mxu0 %v680
  %861 = vmatprep.subr.mxu0 0.0
  %862 = vmatpush1.msra.mxu0 %v679
  %863 = vmatprep.subr.mxu0 0.0
  %864 = vmatpush1.msra.mxu0 %v678
  %865 = vmatprep.subr.mxu0 0.0
  %866 = vmatpush1.msra.mxu0 %v677
  %867 = vmatprep.subr.mxu0 0.0
  %868 = vmatpush1.msra.mxu0 %v676
  %869 = vmatprep.subr.mxu0 0.0
  %870 = vmatpush1.msra.mxu0 %v675
  %871 = vmatprep.subr.mxu0 0.0
  %872 = vmatpush1.msra.mxu0 %v674
  %873 = vmatprep.subr.mxu0 0.0
  %874 = vmatpush1.msra.mxu0 %v673
  %875 = vmatprep.subr.mxu0 0.0
  %876 = vmatpush1.msra.mxu0 %v672
  %877 = vmatprep.subr.mxu0 0.0
  %878 = vmatpush2.msra.mxu0 %v703
  %879 = vmatprep.subr.mxu0 0.0
  %880 = vmatpush2.msra.mxu0 %v702
  %881 = vmatprep.subr.mxu0 0.0
  %882 = vmatpush2.msra.mxu0 %v701
  %883 = vmatprep.subr.mxu0 0.0
  %884 = vmatpush2.msra.mxu0 %v700
  %885 = vmatprep.subr.mxu0 0.0
  %886 = vmatpush2.msra.mxu0 %v699
  %887 = vmatprep.subr.mxu0 0.0
  %888 = vmatpush2.msra.mxu0 %v698
  %889 = vmatprep.subr.mxu0 0.0
  %890 = vmatpush2.msra.mxu0 %v697
  %891 = vmatprep.subr.mxu0 0.0
  %892 = vmatpush2.msra.mxu0 %v696
  %893 = vmatprep.subr.mxu0 0.0
  %894 = vmatpush2.msra.mxu0 %v695
  %895 = vmatprep.subr.mxu0 0.0
  %896 = vmatpush2.msra.mxu0 %v694
  %897 = vmatprep.subr.mxu0 0.0
  %898 = vmatpush2.msra.mxu0 %v693
  %899 = vmatprep.subr.mxu0 0.0
  %900 = vmatpush2.msra.mxu0 %v692
  %901 = vmatprep.subr.mxu0 0.0
  %902 = vmatpush2.msra.mxu0 %v691
  %903 = vmatprep.subr.mxu0 0.0
  %904 = vmatpush2.msra.mxu0 %v690
  %905 = vmatprep.subr.mxu0 0.0
  %906 = vmatpush2.msra.mxu0 %v689
  %907 = vmatprep.subr.mxu0 0.0
  %908 = vmatpush2.msra.mxu0 %v688
  %909 = vmatprep.mubr.f32.mxu0 %v635
  %910 = vmatmul.mubr.f32.gmra.mxu0 %v634
  %v911 = vpop.f32.mrf.mxu0
  %v912 = vadd.f32 %v842, %v911
  %v913 = vpop.f32.mrf.mxu0
  %914 = vdwg.mxu0
  %915 = vmatprep.subr.mxu0 0.0
  %916 = vmatpush1.msra.mxu0 %v719
  %917 = vmatprep.subr.mxu0 0.0
  %918 = vmatpush1.msra.mxu0 %v718
  %919 = vmatprep.subr.mxu0 0.0
  %920 = vmatpush1.msra.mxu0 %v717
  %921 = vmatprep.subr.mxu0 0.0
  %922 = vmatpush1.msra.mxu0 %v716
  %923 = vmatprep.subr.mxu0 0.0
  %924 = vmatpush1.msra.mxu0 %v715
  %925 = vmatprep.subr.mxu0 0.0
  %926 = vmatpush1.msra.mxu0 %v714
  %927 = vmatprep.subr.mxu0 0.0
  %928 = vmatpush1.msra.mxu0 %v713
  %929 = vmatprep.subr.mxu0 0.0
  %930 = vmatpush1.msra.mxu0 %v712
  %931 = vmatprep.subr.mxu0 0.0
  %932 = vmatpush1.msra.mxu0 %v711
  %933 = vmatprep.subr.mxu0 0.0
  %934 = vmatpush1.msra.mxu0 %v710
  %935 = vmatprep.subr.mxu0 0.0
  %936 = vmatpush1.msra.mxu0 %v709
  %937 = vmatprep.subr.mxu0 0.0
  %938 = vmatpush1.msra.mxu0 %v708
  %939 = vmatprep.subr.mxu0 0.0
  %940 = vmatpush1.msra.mxu0 %v707
  %941 = vmatprep.subr.mxu0 0.0
  %942 = vmatpush1.msra.mxu0 %v706
  %943 = vmatprep.subr.mxu0 0.0
  %944 = vmatpush1.msra.mxu0 %v705
  %945 = vmatprep.subr.mxu0 0.0
  %946 = vmatpush1.msra.mxu0 %v704
  %947 = vmatprep.subr.mxu0 0.0
  %948 = vmatpush2.msra.mxu0 %v735
  %949 = vmatprep.subr.mxu0 0.0
  %950 = vmatpush2.msra.mxu0 %v734
  %951 = vmatprep.subr.mxu0 0.0
  %952 = vmatpush2.msra.mxu0 %v733
  %953 = vmatprep.subr.mxu0 0.0
  %954 = vmatpush2.msra.mxu0 %v732
  %955 = vmatprep.subr.mxu0 0.0
  %956 = vmatpush2.msra.mxu0 %v731
  %957 = vmatprep.subr.mxu0 0.0
  %958 = vmatpush2.msra.mxu0 %v730
  %959 = vmatprep.subr.mxu0 0.0
  %960 = vmatpush2.msra.mxu0 %v729
  %961 = vmatprep.subr.mxu0 0.0
  %962 = vmatpush2.msra.mxu0 %v728
  %963 = vmatprep.subr.mxu0 0.0
  %964 = vmatpush2.msra.mxu0 %v727
  %965 = vmatprep.subr.mxu0 0.0
  %966 = vmatpush2.msra.mxu0 %v726
  %967 = vmatprep.subr.mxu0 0.0
  %968 = vmatpush2.msra.mxu0 %v725
  %969 = vmatprep.subr.mxu0 0.0
  %970 = vmatpush2.msra.mxu0 %v724
  %971 = vmatprep.subr.mxu0 0.0
  %972 = vmatpush2.msra.mxu0 %v723
  %973 = vmatprep.subr.mxu0 0.0
  %974 = vmatpush2.msra.mxu0 %v722
  %975 = vmatprep.subr.mxu0 0.0
  %976 = vmatpush2.msra.mxu0 %v721
  %977 = vmatprep.subr.mxu0 0.0
  %978 = vmatpush2.msra.mxu0 %v720
  %979 = vmatprep.mubr.f32.mxu0 %v637
  %980 = vmatmul.mubr.f32.gmra.mxu0 %v636
  %v981 = vpop.f32.mrf.mxu0
  %v982 = vadd.f32 %v912, %v981
  %v983 = vpop.f32.mrf.mxu0
  %984 = vdwg.mxu0
  %985 = vmatprep.subr.mxu0 0.0
  %986 = vmatpush1.msra.mxu0 %v751
  %987 = vmatprep.subr.mxu0 0.0
  %988 = vmatpush1.msra.mxu0 %v750
  %989 = vmatprep.subr.mxu0 0.0
  %990 = vmatpush1.msra.mxu0 %v749
  %991 = vmatprep.subr.mxu0 0.0
  %992 = vmatpush1.msra.mxu0 %v748
  %993 = vmatprep.subr.mxu0 0.0
  %994 = vmatpush1.msra.mxu0 %v747
  %995 = vmatprep.subr.mxu0 0.0
  %996 = vmatpush1.msra.mxu0 %v746
  %997 = vmatprep.subr.mxu0 0.0
  %998 = vmatpush1.msra.mxu0 %v745
  %999 = vmatprep.subr.mxu0 0.0
  %1000 = vmatpush1.msra.mxu0 %v744
  %1001 = vmatprep.subr.mxu0 0.0
  %1002 = vmatpush1.msra.mxu0 %v743
  %1003 = vmatprep.subr.mxu0 0.0
  %1004 = vmatpush1.msra.mxu0 %v742
  %1005 = vmatprep.subr.mxu0 0.0
  %1006 = vmatpush1.msra.mxu0 %v741
  %1007 = vmatprep.subr.mxu0 0.0
  %1008 = vmatpush1.msra.mxu0 %v740
  %1009 = vmatprep.subr.mxu0 0.0
  %1010 = vmatpush1.msra.mxu0 %v739
  %1011 = vmatprep.subr.mxu0 0.0
  %1012 = vmatpush1.msra.mxu0 %v738
  %1013 = vmatprep.subr.mxu0 0.0
  %1014 = vmatpush1.msra.mxu0 %v737
  %1015 = vmatprep.subr.mxu0 0.0
  %1016 = vmatpush1.msra.mxu0 %v736
  %1017 = vmatprep.subr.mxu0 0.0
  %1018 = vmatpush2.msra.mxu0 %v767
  %1019 = vmatprep.subr.mxu0 0.0
  %1020 = vmatpush2.msra.mxu0 %v766
  %1021 = vmatprep.subr.mxu0 0.0
  %1022 = vmatpush2.msra.mxu0 %v765
  %1023 = vmatprep.subr.mxu0 0.0
  %1024 = vmatpush2.msra.mxu0 %v764
  %1025 = vmatprep.subr.mxu0 0.0
  %1026 = vmatpush2.msra.mxu0 %v763
  %1027 = vmatprep.subr.mxu0 0.0
  %1028 = vmatpush2.msra.mxu0 %v762
  %1029 = vmatprep.subr.mxu0 0.0
  %1030 = vmatpush2.msra.mxu0 %v761
  %1031 = vmatprep.subr.mxu0 0.0
  %1032 = vmatpush2.msra.mxu0 %v760
  %1033 = vmatprep.subr.mxu0 0.0
  %1034 = vmatpush2.msra.mxu0 %v759
  %1035 = vmatprep.subr.mxu0 0.0
  %1036 = vmatpush2.msra.mxu0 %v758
  %1037 = vmatprep.subr.mxu0 0.0
  %1038 = vmatpush2.msra.mxu0 %v757
  %1039 = vmatprep.subr.mxu0 0.0
  %1040 = vmatpush2.msra.mxu0 %v756
  %1041 = vmatprep.subr.mxu0 0.0
  %1042 = vmatpush2.msra.mxu0 %v755
  %1043 = vmatprep.subr.mxu0 0.0
  %1044 = vmatpush2.msra.mxu0 %v754
  %1045 = vmatprep.subr.mxu0 0.0
  %1046 = vmatpush2.msra.mxu0 %v753
  %1047 = vmatprep.subr.mxu0 0.0
  %1048 = vmatpush2.msra.mxu0 %v752
  %1049 = vmatprep.mubr.f32.mxu0 %v639
  %1050 = vmatmul.mubr.f32.gmra.mxu0 %v638
  %v1051 = vpop.f32.mrf.mxu0
  %v1052 = vadd.f32 %v982, %v1051
  %v1053 = vpop.f32.mrf.mxu0
  %1054 = vdwg.mxu0
  %vm1055 = vcmask 1024
  %1056 = vst.msk [vmem:[%s5] sm:$0x3] %vm1055, %v1052
  // Predicated region
  $region22: #{discriminator_forward.13} parent=0 // pred_check
    _
  $region23: #{discriminator_forward.13} parent=0 // pred_check_branch
    %1058 = sbr.rel (0) target = $region25
  $region24: #{discriminator_forward.13} parent=0 // pred_region
    _
  $region25: #{discriminator_forward.13} parent=0 // pred_fallthru
    _
  // Predicated region
  $region26: #{discriminator_forward.13} parent=0 // pred_check
    _
  $region27: #{discriminator_forward.13} parent=0 // pred_check_branch
    %1060 = sbr.rel (0) target = $region29
  $region28: #{discriminator_forward.13} parent=0 // pred_region
    _
  $region29: #{discriminator_forward.13} parent=0 // pred_fallthru
    _

// kernel: discriminator_forward.12
$region0: #{discriminator_forward.12}
  #allocation0 [shape = 'u32[]', space=smem, size = 0x4, offset = 0x4, fixed_abs, tag = 'smem constant byte address 0x4 - core index']
  #allocation1 [shape = 'u32[144,128]{1,0:T(1,128)}', space=vmem, size = 0x12000, scoped, tag = 'internal scratch']
  %s0 = inlined_call_operand.vmem [shape: bf16[8,2304], index: 0, kind: input, shape index: {}]
  %s1 = inlined_call_operand.vmem [shape: bf16[2304,256], index: 1, kind: input, shape index: {}]
  %s2 = inlined_call_operand.vmem [shape: f32[1,256], index: 2, kind: input, shape index: {}]
  %s3 = inlined_call_operand.vmem [shape: bf16[8,256], index: 3, kind: output, shape index: {}]
  %s4 = sld [smem:[#allocation0]]
  $region22: #{discriminator_forward.12} parent=0
    _
  %s6 = ssub.s32 1, %s4
  %s7 = scalar_select 0, %s6, %s4
  // Predicated region
  $region2: #{discriminator_forward.12} parent=0 // pred_check
    _
  $region3: #{discriminator_forward.12} parent=0 // pred_check_branch
    %9 = sbr.rel (0) target = $region5
  $region4: #{discriminator_forward.12} parent=0 // pred_region
    _
  $region5: #{discriminator_forward.12} parent=0 // pred_fallthru
    _
  // Predicated region
  $region6: #{discriminator_forward.12} parent=0 // pred_check
    _
  $region7: #{discriminator_forward.12} parent=0 // pred_check_branch
    %11 = sbr.rel (0) target = $region9
  $region8: #{discriminator_forward.12} parent=0 // pred_region
    _
  $region9: #{discriminator_forward.12} parent=0 // pred_fallthru
    _
  // Predicated region
  $region10: #{discriminator_forward.12} parent=0 // pred_check
    _
  $region11: #{discriminator_forward.12} parent=0 // pred_check_branch
    %13 = sbr.rel (0) target = $region13
  $region12: #{discriminator_forward.12} parent=0 // pred_region
    _
  $region13: #{discriminator_forward.12} parent=0 // pred_fallthru
    _
  %v14 = vld [vmem:[%s0] sm:$0xff]
  %v15 = vld [vmem:[%s0 + $0x8] sm:$0xff]
  %v16 = vld [vmem:[%s0 + $0x10] sm:$0xff]
  %v17 = vld [vmem:[%s0 + $0x18] sm:$0xff]
  %v18 = vld [vmem:[%s0 + $0x20] sm:$0xff]
  %v19 = vld [vmem:[%s0 + $0x28] sm:$0xff]
  %v20 = vld [vmem:[%s0 + $0x30] sm:$0xff]
  %v21 = vld [vmem:[%s0 + $0x38] sm:$0xff]
  %v22 = vld [vmem:[%s0 + $0x40] sm:$0xff]
  %v23 = vld [vmem:[%s1] sm:$0xff]
  %v24 = vld [vmem:[%s1 + $0x8] sm:$0xff]
  %v25 = vld [vmem:[%s1 + $0x10] sm:$0xff]
  %v26 = vld [vmem:[%s1 + $0x18] sm:$0xff]
  %v27 = vld [vmem:[%s1 + $0x20] sm:$0xff]
  %v28 = vld [vmem:[%s1 + $0x28] sm:$0xff]
  %v29 = vld [vmem:[%s1 + $0x30] sm:$0xff]
  %v30 = vld [vmem:[%s1 + $0x38] sm:$0xff]
  %v31 = vld [vmem:[%s1 + $0x40] sm:$0xff]
  %v32 = vld [vmem:[%s1 + $0x48] sm:$0xff]
  %v33 = vld [vmem:[%s1 + $0x50] sm:$0xff]
  %v34 = vld [vmem:[%s1 + $0x58] sm:$0xff]
  %v35 = vld [vmem:[%s1 + $0x60] sm:$0xff]
  %v36 = vld [vmem:[%s1 + $0x68] sm:$0xff]
  %v37 = vld [vmem:[%s1 + $0x70] sm:$0xff]
  %v38 = vld [vmem:[%s1 + $0x78] sm:$0xff]
  %v39 = vld [vmem:[%s1 + $0x80] sm:$0xff]
  %v40 = vld [vmem:[%s1 + $0x88] sm:$0xff]
  %v41 = vld [vmem:[%s1 + $0x90] sm:$0xff]
  %v42 = vld [vmem:[%s1 + $0x98] sm:$0xff]
  %v43 = vld [vmem:[%s1 + $0xa0] sm:$0xff]
  %v44 = vld [vmem:[%s1 + $0xa8] sm:$0xff]
  %v45 = vld [vmem:[%s1 + $0xb0] sm:$0xff]
  %v46 = vld [vmem:[%s1 + $0xb8] sm:$0xff]
  %v47 = vld [vmem:[%s1 + $0xc0] sm:$0xff]
  %v48 = vld [vmem:[%s1 + $0xc8] sm:$0xff]
  %v49 = vld [vmem:[%s1 + $0xd0] sm:$0xff]
  %v50 = vld [vmem:[%s1 + $0xd8] sm:$0xff]
  %v51 = vld [vmem:[%s1 + $0xe0] sm:$0xff]
  %v52 = vld [vmem:[%s1 + $0xe8] sm:$0xff]
  %v53 = vld [vmem:[%s1 + $0xf0] sm:$0xff]
  %v54 = vld [vmem:[%s1 + $0xf8] sm:$0xff]
  %v55 = vld [vmem:[%s1 + $0x100] sm:$0xff]
  %v56 = vld [vmem:[%s1 + $0x108] sm:$0xff]
  %v57 = vld [vmem:[%s1 + $0x110] sm:$0xff]
  %v58 = vld [vmem:[%s1 + $0x118] sm:$0xff]
  %v59 = vld [vmem:[%s1 + $0x120] sm:$0xff]
  %v60 = vld [vmem:[%s1 + $0x128] sm:$0xff]
  %v61 = vld [vmem:[%s1 + $0x130] sm:$0xff]
  %v62 = vld [vmem:[%s1 + $0x138] sm:$0xff]
  %v63 = vld [vmem:[%s1 + $0x140] sm:$0xff]
  %v64 = vld [vmem:[%s1 + $0x148] sm:$0xff]
  %v65 = vld [vmem:[%s1 + $0x150] sm:$0xff]
  %v66 = vld [vmem:[%s1 + $0x158] sm:$0xff]
  %v67 = vld [vmem:[%s1 + $0x160] sm:$0xff]
  %v68 = vld [vmem:[%s1 + $0x168] sm:$0xff]
  %v69 = vld [vmem:[%s1 + $0x170] sm:$0xff]
  %v70 = vld [vmem:[%s1 + $0x178] sm:$0xff]
  %v71 = vld [vmem:[%s1 + $0x180] sm:$0xff]
  %v72 = vld [vmem:[%s1 + $0x188] sm:$0xff]
  %v73 = vld [vmem:[%s1 + $0x190] sm:$0xff]
  %v74 = vld [vmem:[%s1 + $0x198] sm:$0xff]
  %v75 = vld [vmem:[%s1 + $0x1a0] sm:$0xff]
  %v76 = vld [vmem:[%s1 + $0x1a8] sm:$0xff]
  %v77 = vld [vmem:[%s1 + $0x1b0] sm:$0xff]
  %v78 = vld [vmem:[%s1 + $0x1b8] sm:$0xff]
  %v79 = vld [vmem:[%s1 + $0x1c0] sm:$0xff]
  %v80 = vld [vmem:[%s1 + $0x1c8] sm:$0xff]
  %v81 = vld [vmem:[%s1 + $0x1d0] sm:$0xff]
  %v82 = vld [vmem:[%s1 + $0x1d8] sm:$0xff]
  %v83 = vld [vmem:[%s1 + $0x1e0] sm:$0xff]
  %v84 = vld [vmem:[%s1 + $0x1e8] sm:$0xff]
  %v85 = vld [vmem:[%s1 + $0x1f0] sm:$0xff]
  %v86 = vld [vmem:[%s1 + $0x1f8] sm:$0xff]
  %v87 = vld [vmem:[%s1 + $0x200] sm:$0xff]
  %v88 = vld [vmem:[%s1 + $0x208] sm:$0xff]
  %v89 = vld [vmem:[%s1 + $0x210] sm:$0xff]
  %v90 = vld [vmem:[%s1 + $0x218] sm:$0xff]
  %v91 = vld [vmem:[%s1 + $0x220] sm:$0xff]
  %v92 = vld [vmem:[%s1 + $0x228] sm:$0xff]
  %v93 = vld [vmem:[%s1 + $0x230] sm:$0xff]
  %v94 = vld [vmem:[%s1 + $0x238] sm:$0xff]
  %v95 = vld [vmem:[%s1 + $0x240] sm:$0xff]
  %v96 = vld [vmem:[%s1 + $0x248] sm:$0xff]
  %v97 = vld [vmem:[%s1 + $0x250] sm:$0xff]
  %v98 = vld [vmem:[%s1 + $0x258] sm:$0xff]
  %v99 = vld [vmem:[%s1 + $0x260] sm:$0xff]
  %v100 = vld [vmem:[%s1 + $0x268] sm:$0xff]
  %v101 = vld [vmem:[%s1 + $0x270] sm:$0xff]
  %v102 = vld [vmem:[%s1 + $0x278] sm:$0xff]
  %v103 = vld [vmem:[%s1 + $0x280] sm:$0xff]
  %v104 = vld [vmem:[%s1 + $0x288] sm:$0xff]
  %v105 = vld [vmem:[%s1 + $0x290] sm:$0xff]
  %v106 = vld [vmem:[%s1 + $0x298] sm:$0xff]
  %v107 = vld [vmem:[%s1 + $0x2a0] sm:$0xff]
  %v108 = vld [vmem:[%s1 + $0x2a8] sm:$0xff]
  %v109 = vld [vmem:[%s1 + $0x2b0] sm:$0xff]
  %v110 = vld [vmem:[%s1 + $0x2b8] sm:$0xff]
  %v111 = vld [vmem:[%s1 + $0x2c0] sm:$0xff]
  %v112 = vld [vmem:[%s1 + $0x2c8] sm:$0xff]
  %v113 = vld [vmem:[%s1 + $0x2d0] sm:$0xff]
  %v114 = vld [vmem:[%s1 + $0x2d8] sm:$0xff]
  %v115 = vld [vmem:[%s1 + $0x2e0] sm:$0xff]
  %v116 = vld [vmem:[%s1 + $0x2e8] sm:$0xff]
  %v117 = vld [vmem:[%s1 + $0x2f0] sm:$0xff]
  %v118 = vld [vmem:[%s1 + $0x2f8] sm:$0xff]
  %v119 = vld [vmem:[%s1 + $0x300] sm:$0xff]
  %v120 = vld [vmem:[%s1 + $0x308] sm:$0xff]
  %v121 = vld [vmem:[%s1 + $0x310] sm:$0xff]
  %v122 = vld [vmem:[%s1 + $0x318] sm:$0xff]
  %v123 = vld [vmem:[%s1 + $0x320] sm:$0xff]
  %v124 = vld [vmem:[%s1 + $0x328] sm:$0xff]
  %v125 = vld [vmem:[%s1 + $0x330] sm:$0xff]
  %v126 = vld [vmem:[%s1 + $0x338] sm:$0xff]
  %v127 = vld [vmem:[%s1 + $0x340] sm:$0xff]
  %v128 = vld [vmem:[%s1 + $0x348] sm:$0xff]
  %v129 = vld [vmem:[%s1 + $0x350] sm:$0xff]
  %v130 = vld [vmem:[%s1 + $0x358] sm:$0xff]
  %v131 = vld [vmem:[%s1 + $0x360] sm:$0xff]
  %v132 = vld [vmem:[%s1 + $0x368] sm:$0xff]
  %v133 = vld [vmem:[%s1 + $0x370] sm:$0xff]
  %v134 = vld [vmem:[%s1 + $0x378] sm:$0xff]
  %v135 = vld [vmem:[%s1 + $0x380] sm:$0xff]
  %v136 = vld [vmem:[%s1 + $0x388] sm:$0xff]
  %v137 = vld [vmem:[%s1 + $0x390] sm:$0xff]
  %v138 = vld [vmem:[%s1 + $0x398] sm:$0xff]
  %v139 = vld [vmem:[%s1 + $0x3a0] sm:$0xff]
  %v140 = vld [vmem:[%s1 + $0x3a8] sm:$0xff]
  %v141 = vld [vmem:[%s1 + $0x3b0] sm:$0xff]
  %v142 = vld [vmem:[%s1 + $0x3b8] sm:$0xff]
  %v143 = vld [vmem:[%s1 + $0x3c0] sm:$0xff]
  %v144 = vld [vmem:[%s1 + $0x3c8] sm:$0xff]
  %v145 = vld [vmem:[%s1 + $0x3d0] sm:$0xff]
  %v146 = vld [vmem:[%s1 + $0x3d8] sm:$0xff]
  %v147 = vld [vmem:[%s1 + $0x3e0] sm:$0xff]
  %v148 = vld [vmem:[%s1 + $0x3e8] sm:$0xff]
  %v149 = vld [vmem:[%s1 + $0x3f0] sm:$0xff]
  %v150 = vld [vmem:[%s1 + $0x3f8] sm:$0xff]
  %v151 = vld [vmem:[%s1 + $0x400] sm:$0xff]
  %v152 = vld [vmem:[%s1 + $0x408] sm:$0xff]
  %v153 = vld [vmem:[%s1 + $0x410] sm:$0xff]
  %v154 = vld [vmem:[%s1 + $0x418] sm:$0xff]
  %v155 = vld [vmem:[%s1 + $0x420] sm:$0xff]
  %v156 = vld [vmem:[%s1 + $0x428] sm:$0xff]
  %v157 = vld [vmem:[%s1 + $0x430] sm:$0xff]
  %v158 = vld [vmem:[%s1 + $0x438] sm:$0xff]
  %v159 = vld [vmem:[%s1 + $0x440] sm:$0xff]
  %v160 = vld [vmem:[%s1 + $0x448] sm:$0xff]
  %v161 = vld [vmem:[%s1 + $0x450] sm:$0xff]
  %v162 = vld [vmem:[%s1 + $0x458] sm:$0xff]
  %v163 = vld [vmem:[%s1 + $0x460] sm:$0xff]
  %v164 = vld [vmem:[%s1 + $0x468] sm:$0xff]
  %v165 = vld [vmem:[%s1 + $0x470] sm:$0xff]
  %v166 = vld [vmem:[%s1 + $0x478] sm:$0xff]
  %v167 = vld [vmem:[%s1 + $0x480] sm:$0xff]
  %v168 = vld [vmem:[%s1 + $0x488] sm:$0xff]
  %v169 = vld [vmem:[%s1 + $0x490] sm:$0xff]
  %v170 = vld [vmem:[%s1 + $0x498] sm:$0xff]
  %v171 = vld [vmem:[%s1 + $0x4a0] sm:$0xff]
  %v172 = vld [vmem:[%s1 + $0x4a8] sm:$0xff]
  %v173 = vld [vmem:[%s1 + $0x4b0] sm:$0xff]
  %v174 = vld [vmem:[%s1 + $0x4b8] sm:$0xff]
  %v175 = vld [vmem:[%s1 + $0x4c0] sm:$0xff]
  %v176 = vld [vmem:[%s1 + $0x4c8] sm:$0xff]
  %v177 = vld [vmem:[%s1 + $0x4d0] sm:$0xff]
  %v178 = vld [vmem:[%s1 + $0x4d8] sm:$0xff]
  %v179 = vld [vmem:[%s1 + $0x4e0] sm:$0xff]
  %v180 = vld [vmem:[%s1 + $0x4e8] sm:$0xff]
  %v181 = vld [vmem:[%s1 + $0x4f0] sm:$0xff]
  %v182 = vld [vmem:[%s1 + $0x4f8] sm:$0xff]
  %v183 = vld [vmem:[%s1 + $0x500] sm:$0xff]
  %v184 = vld [vmem:[%s1 + $0x508] sm:$0xff]
  %v185 = vld [vmem:[%s1 + $0x510] sm:$0xff]
  %v186 = vld [vmem:[%s1 + $0x518] sm:$0xff]
  %v187 = vld [vmem:[%s1 + $0x520] sm:$0xff]
  %v188 = vld [vmem:[%s1 + $0x528] sm:$0xff]
  %v189 = vld [vmem:[%s1 + $0x530] sm:$0xff]
  %v190 = vld [vmem:[%s1 + $0x538] sm:$0xff]
  %v191 = vld [vmem:[%s1 + $0x540] sm:$0xff]
  %v192 = vld [vmem:[%s1 + $0x548] sm:$0xff]
  %v193 = vld [vmem:[%s1 + $0x550] sm:$0xff]
  %v194 = vld [vmem:[%s1 + $0x558] sm:$0xff]
  %v195 = vld [vmem:[%s1 + $0x560] sm:$0xff]
  %v196 = vld [vmem:[%s1 + $0x568] sm:$0xff]
  %v197 = vld [vmem:[%s1 + $0x570] sm:$0xff]
  %v198 = vld [vmem:[%s1 + $0x578] sm:$0xff]
  %v199 = vld [vmem:[%s1 + $0x580] sm:$0xff]
  %v200 = vld [vmem:[%s1 + $0x588] sm:$0xff]
  %v201 = vld [vmem:[%s1 + $0x590] sm:$0xff]
  %v202 = vld [vmem:[%s1 + $0x598] sm:$0xff]
  %v203 = vld [vmem:[%s1 + $0x5a0] sm:$0xff]
  %v204 = vld [vmem:[%s1 + $0x5a8] sm:$0xff]
  %v205 = vld [vmem:[%s1 + $0x5b0] sm:$0xff]
  %v206 = vld [vmem:[%s1 + $0x5b8] sm:$0xff]
  %v207 = vld [vmem:[%s1 + $0x5c0] sm:$0xff]
  %v208 = vld [vmem:[%s1 + $0x5c8] sm:$0xff]
  %v209 = vld [vmem:[%s1 + $0x5d0] sm:$0xff]
  %v210 = vld [vmem:[%s1 + $0x5d8] sm:$0xff]
  %v211 = vld [vmem:[%s1 + $0x5e0] sm:$0xff]
  %v212 = vld [vmem:[%s1 + $0x5e8] sm:$0xff]
  %v213 = vld [vmem:[%s1 + $0x5f0] sm:$0xff]
  %v214 = vld [vmem:[%s1 + $0x5f8] sm:$0xff]
  %v215 = vld [vmem:[%s1 + $0x600] sm:$0xff]
  %v216 = vld [vmem:[%s1 + $0x608] sm:$0xff]
  %v217 = vld [vmem:[%s1 + $0x610] sm:$0xff]
  %v218 = vld [vmem:[%s1 + $0x618] sm:$0xff]
  %v219 = vld [vmem:[%s1 + $0x620] sm:$0xff]
  %v220 = vld [vmem:[%s1 + $0x628] sm:$0xff]
  %v221 = vld [vmem:[%s1 + $0x630] sm:$0xff]
  %v222 = vld [vmem:[%s1 + $0x638] sm:$0xff]
  %v223 = vld [vmem:[%s1 + $0x640] sm:$0xff]
  %v224 = vld [vmem:[%s1 + $0x648] sm:$0xff]
  %v225 = vld [vmem:[%s1 + $0x650] sm:$0xff]
  %v226 = vld [vmem:[%s1 + $0x658] sm:$0xff]
  %v227 = vld [vmem:[%s1 + $0x660] sm:$0xff]
  %v228 = vld [vmem:[%s1 + $0x668] sm:$0xff]
  %v229 = vld [vmem:[%s1 + $0x670] sm:$0xff]
  %v230 = vld [vmem:[%s1 + $0x678] sm:$0xff]
  %v231 = vld [vmem:[%s1 + $0x680] sm:$0xff]
  %v232 = vld [vmem:[%s1 + $0x688] sm:$0xff]
  %v233 = vld [vmem:[%s1 + $0x690] sm:$0xff]
  %v234 = vld [vmem:[%s1 + $0x698] sm:$0xff]
  %v235 = vld [vmem:[%s1 + $0x6a0] sm:$0xff]
  %v236 = vld [vmem:[%s1 + $0x6a8] sm:$0xff]
  %v237 = vld [vmem:[%s1 + $0x6b0] sm:$0xff]
  %v238 = vld [vmem:[%s1 + $0x6b8] sm:$0xff]
  %v239 = vld [vmem:[%s1 + $0x6c0] sm:$0xff]
  %v240 = vld [vmem:[%s1 + $0x6c8] sm:$0xff]
  %v241 = vld [vmem:[%s1 + $0x6d0] sm:$0xff]
  %v242 = vld [vmem:[%s1 + $0x6d8] sm:$0xff]
  %v243 = vld [vmem:[%s1 + $0x6e0] sm:$0xff]
  %v244 = vld [vmem:[%s1 + $0x6e8] sm:$0xff]
  %v245 = vld [vmem:[%s1 + $0x6f0] sm:$0xff]
  %v246 = vld [vmem:[%s1 + $0x6f8] sm:$0xff]
  %v247 = vld [vmem:[%s1 + $0x700] sm:$0xff]
  %v248 = vld [vmem:[%s1 + $0x708] sm:$0xff]
  %v249 = vld [vmem:[%s1 + $0x710] sm:$0xff]
  %v250 = vld [vmem:[%s1 + $0x718] sm:$0xff]
  %v251 = vld [vmem:[%s1 + $0x720] sm:$0xff]
  %v252 = vld [vmem:[%s1 + $0x728] sm:$0xff]
  %v253 = vld [vmem:[%s1 + $0x730] sm:$0xff]
  %v254 = vld [vmem:[%s1 + $0x738] sm:$0xff]
  %v255 = vld [vmem:[%s1 + $0x740] sm:$0xff]
  %v256 = vld [vmem:[%s1 + $0x748] sm:$0xff]
  %v257 = vld [vmem:[%s1 + $0x750] sm:$0xff]
  %v258 = vld [vmem:[%s1 + $0x758] sm:$0xff]
  %v259 = vld [vmem:[%s1 + $0x760] sm:$0xff]
  %v260 = vld [vmem:[%s1 + $0x768] sm:$0xff]
  %v261 = vld [vmem:[%s1 + $0x770] sm:$0xff]
  %v262 = vld [vmem:[%s1 + $0x778] sm:$0xff]
  %v263 = vld [vmem:[%s1 + $0x780] sm:$0xff]
  %v264 = vld [vmem:[%s1 + $0x788] sm:$0xff]
  %v265 = vld [vmem:[%s1 + $0x790] sm:$0xff]
  %v266 = vld [vmem:[%s1 + $0x798] sm:$0xff]
  %v267 = vld [vmem:[%s1 + $0x7a0] sm:$0xff]
  %v268 = vld [vmem:[%s1 + $0x7a8] sm:$0xff]
  %v269 = vld [vmem:[%s1 + $0x7b0] sm:$0xff]
  %v270 = vld [vmem:[%s1 + $0x7b8] sm:$0xff]
  %v271 = vld [vmem:[%s1 + $0x7c0] sm:$0xff]
  %v272 = vld [vmem:[%s1 + $0x7c8] sm:$0xff]
  %v273 = vld [vmem:[%s1 + $0x7d0] sm:$0xff]
  %v274 = vld [vmem:[%s1 + $0x7d8] sm:$0xff]
  %v275 = vld [vmem:[%s1 + $0x7e0] sm:$0xff]
  %v276 = vld [vmem:[%s1 + $0x7e8] sm:$0xff]
  %v277 = vld [vmem:[%s1 + $0x7f0] sm:$0xff]
  %v278 = vld [vmem:[%s1 + $0x7f8] sm:$0xff]
  %v279 = vld [vmem:[%s1 + $0x800] sm:$0xff]
  %v280 = vld [vmem:[%s1 + $0x808] sm:$0xff]
  %v281 = vld [vmem:[%s1 + $0x810] sm:$0xff]
  %v282 = vld [vmem:[%s1 + $0x818] sm:$0xff]
  %v283 = vld [vmem:[%s1 + $0x820] sm:$0xff]
  %v284 = vld [vmem:[%s1 + $0x828] sm:$0xff]
  %v285 = vld [vmem:[%s1 + $0x830] sm:$0xff]
  %v286 = vld [vmem:[%s1 + $0x838] sm:$0xff]
  %v287 = vld [vmem:[%s1 + $0x840] sm:$0xff]
  %v288 = vld [vmem:[%s1 + $0x848] sm:$0xff]
  %v289 = vld [vmem:[%s1 + $0x850] sm:$0xff]
  %v290 = vld [vmem:[%s1 + $0x858] sm:$0xff]
  %v291 = vld [vmem:[%s1 + $0x860] sm:$0xff]
  %v292 = vld [vmem:[%s1 + $0x868] sm:$0xff]
  %v293 = vld [vmem:[%s1 + $0x870] sm:$0xff]
  %v294 = vld [vmem:[%s1 + $0x878] sm:$0xff]
  %v295 = vld [vmem:[%s1 + $0x880] sm:$0xff]
  %v296 = vld [vmem:[%s1 + $0x888] sm:$0xff]
  %v297 = vld [vmem:[%s1 + $0x890] sm:$0xff]
  %v298 = vld [vmem:[%s1 + $0x898] sm:$0xff]
  %v299 = vld [vmem:[%s1 + $0x8a0] sm:$0xff]
  %v300 = vld [vmem:[%s1 + $0x8a8] sm:$0xff]
  %v301 = vld [vmem:[%s1 + $0x8b0] sm:$0xff]
  %v302 = vld [vmem:[%s1 + $0x8b8] sm:$0xff]
  %v303 = vld [vmem:[%s1 + $0x8c0] sm:$0xff]
  %v304 = vld [vmem:[%s1 + $0x8c8] sm:$0xff]
  %v305 = vld [vmem:[%s1 + $0x8d0] sm:$0xff]
  %v306 = vld [vmem:[%s1 + $0x8d8] sm:$0xff]
  %v307 = vld [vmem:[%s1 + $0x8e0] sm:$0xff]
  %v308 = vld [vmem:[%s1 + $0x8e8] sm:$0xff]
  %v309 = vld [vmem:[%s1 + $0x8f0] sm:$0xff]
  %v310 = vld [vmem:[%s1 + $0x8f8] sm:$0xff]
  %v311 = vld [vmem:[%s2] sm:$0x3]
  %v313 = vlaneseq
  %v314 = vshrl.u32 %v313, 7
  %v315 = vsub.s32 0, %v314
  %v316 = vrot.slane %v311, %v315
  %v317 = vlaneseq
  %v318 = vshrl.u32 %v317, 7
  %v319 = vsub.s32 1, %v318
  %v320 = vrot.slane %v311, %v319
  %v332 = vunpack.c.l.b16 %v14
  %v333 = vunpack.c.h.b16 %v14
  %v334 = vunpack.c.l.b16 %v15
  %v335 = vunpack.c.h.b16 %v15
  %v336 = vunpack.c.l.b16 %v16
  %v337 = vunpack.c.h.b16 %v16
  %v338 = vunpack.c.l.b16 %v17
  %v339 = vunpack.c.h.b16 %v17
  %v340 = vunpack.c.l.b16 %v18
  %v341 = vunpack.c.h.b16 %v18
  %v342 = vunpack.c.l.b16 %v19
  %v343 = vunpack.c.h.b16 %v19
  %v344 = vunpack.c.l.b16 %v20
  %v345 = vunpack.c.h.b16 %v20
  %v346 = vunpack.c.l.b16 %v21
  %v347 = vunpack.c.h.b16 %v21
  %v348 = vunpack.c.l.b16 %v22
  %v349 = vunpack.c.h.b16 %v22
  %v350 = vpack.c.b16 %v332, %v332
  %v351 = vpack.c.b16 %v333, %v333
  %v352 = vpack.c.b16 %v334, %v334
  %v353 = vpack.c.b16 %v335, %v335
  %v354 = vpack.c.b16 %v336, %v336
  %v355 = vpack.c.b16 %v337, %v337
  %v356 = vpack.c.b16 %v338, %v338
  %v357 = vpack.c.b16 %v339, %v339
  %v358 = vpack.c.b16 %v340, %v340
  %v359 = vpack.c.b16 %v341, %v341
  %v360 = vpack.c.b16 %v342, %v342
  %v361 = vpack.c.b16 %v343, %v343
  %v362 = vpack.c.b16 %v344, %v344
  %v363 = vpack.c.b16 %v345, %v345
  %v364 = vpack.c.b16 %v346, %v346
  %v365 = vpack.c.b16 %v347, %v347
  %v366 = vpack.c.b16 %v348, %v348
  %v367 = vpack.c.b16 %v349, %v349
  %v674 = vunpack.c.l.b16 %v23
  %v675 = vunpack.c.h.b16 %v23
  %v676 = vunpack.c.l.b16 %v24
  %v677 = vunpack.c.h.b16 %v24
  %v678 = vunpack.c.l.b16 %v25
  %v679 = vunpack.c.h.b16 %v25
  %v680 = vunpack.c.l.b16 %v26
  %v681 = vunpack.c.h.b16 %v26
  %v682 = vunpack.c.l.b16 %v27
  %v683 = vunpack.c.h.b16 %v27
  %v684 = vunpack.c.l.b16 %v28
  %v685 = vunpack.c.h.b16 %v28
  %v686 = vunpack.c.l.b16 %v29
  %v687 = vunpack.c.h.b16 %v29
  %v688 = vunpack.c.l.b16 %v30
  %v689 = vunpack.c.h.b16 %v30
  %v690 = vunpack.c.l.b16 %v31
  %v691 = vunpack.c.h.b16 %v31
  %v692 = vunpack.c.l.b16 %v32
  %v693 = vunpack.c.h.b16 %v32
  %v694 = vunpack.c.l.b16 %v33
  %v695 = vunpack.c.h.b16 %v33
  %v696 = vunpack.c.l.b16 %v34
  %v697 = vunpack.c.h.b16 %v34
  %v698 = vunpack.c.l.b16 %v35
  %v699 = vunpack.c.h.b16 %v35
  %v700 = vunpack.c.l.b16 %v36
  %v701 = vunpack.c.h.b16 %v36
  %v702 = vunpack.c.l.b16 %v37
  %v703 = vunpack.c.h.b16 %v37
  %v704 = vunpack.c.l.b16 %v38
  %v705 = vunpack.c.h.b16 %v38
  %v706 = vunpack.c.l.b16 %v39
  %v707 = vunpack.c.h.b16 %v39
  %v708 = vunpack.c.l.b16 %v40
  %v709 = vunpack.c.h.b16 %v40
  %v710 = vunpack.c.l.b16 %v41
  %v711 = vunpack.c.h.b16 %v41
  %v712 = vunpack.c.l.b16 %v42
  %v713 = vunpack.c.h.b16 %v42
  %v714 = vunpack.c.l.b16 %v43
  %v715 = vunpack.c.h.b16 %v43
  %v716 = vunpack.c.l.b16 %v44
  %v717 = vunpack.c.h.b16 %v44
  %v718 = vunpack.c.l.b16 %v45
  %v719 = vunpack.c.h.b16 %v45
  %v720 = vunpack.c.l.b16 %v46
  %v721 = vunpack.c.h.b16 %v46
  %v722 = vunpack.c.l.b16 %v47
  %v723 = vunpack.c.h.b16 %v47
  %v724 = vunpack.c.l.b16 %v48
  %v725 = vunpack.c.h.b16 %v48
  %v726 = vunpack.c.l.b16 %v49
  %v727 = vunpack.c.h.b16 %v49
  %v728 = vunpack.c.l.b16 %v50
  %v729 = vunpack.c.h.b16 %v50
  %v730 = vunpack.c.l.b16 %v51
  %v731 = vunpack.c.h.b16 %v51
  %v732 = vunpack.c.l.b16 %v52
  %v733 = vunpack.c.h.b16 %v52
  %v734 = vunpack.c.l.b16 %v53
  %v735 = vunpack.c.h.b16 %v53
  %v736 = vunpack.c.l.b16 %v54
  %v737 = vunpack.c.h.b16 %v54
  %v738 = vunpack.c.l.b16 %v55
  %v739 = vunpack.c.h.b16 %v55
  %v740 = vunpack.c.l.b16 %v56
  %v741 = vunpack.c.h.b16 %v56
  %v742 = vunpack.c.l.b16 %v57
  %v743 = vunpack.c.h.b16 %v57
  %v744 = vunpack.c.l.b16 %v58
  %v745 = vunpack.c.h.b16 %v58
  %v746 = vunpack.c.l.b16 %v59
  %v747 = vunpack.c.h.b16 %v59
  %v748 = vunpack.c.l.b16 %v60
  %v749 = vunpack.c.h.b16 %v60
  %v750 = vunpack.c.l.b16 %v61
  %v751 = vunpack.c.h.b16 %v61
  %v752 = vunpack.c.l.b16 %v62
  %v753 = vunpack.c.h.b16 %v62
  %v754 = vunpack.c.l.b16 %v63
  %v755 = vunpack.c.h.b16 %v63
  %v756 = vunpack.c.l.b16 %v64
  %v757 = vunpack.c.h.b16 %v64
  %v758 = vunpack.c.l.b16 %v65
  %v759 = vunpack.c.h.b16 %v65
  %v760 = vunpack.c.l.b16 %v66
  %v761 = vunpack.c.h.b16 %v66
  %v762 = vunpack.c.l.b16 %v67
  %v763 = vunpack.c.h.b16 %v67
  %v764 = vunpack.c.l.b16 %v68
  %v765 = vunpack.c.h.b16 %v68
  %v766 = vunpack.c.l.b16 %v69
  %v767 = vunpack.c.h.b16 %v69
  %v768 = vunpack.c.l.b16 %v70
  %v769 = vunpack.c.h.b16 %v70
  %v770 = vunpack.c.l.b16 %v71
  %v771 = vunpack.c.h.b16 %v71
  %v772 = vunpack.c.l.b16 %v72
  %v773 = vunpack.c.h.b16 %v72
  %v774 = vunpack.c.l.b16 %v73
  %v775 = vunpack.c.h.b16 %v73
  %v776 = vunpack.c.l.b16 %v74
  %v777 = vunpack.c.h.b16 %v74
  %v778 = vunpack.c.l.b16 %v75
  %v779 = vunpack.c.h.b16 %v75
  %v780 = vunpack.c.l.b16 %v76
  %v781 = vunpack.c.h.b16 %v76
  %v782 = vunpack.c.l.b16 %v77
  %v783 = vunpack.c.h.b16 %v77
  %v784 = vunpack.c.l.b16 %v78
  %v785 = vunpack.c.h.b16 %v78
  %v786 = vunpack.c.l.b16 %v79
  %v787 = vunpack.c.h.b16 %v79
  %v788 = vunpack.c.l.b16 %v80
  %v789 = vunpack.c.h.b16 %v80
  %v790 = vunpack.c.l.b16 %v81
  %v791 = vunpack.c.h.b16 %v81
  %v792 = vunpack.c.l.b16 %v82
  %v793 = vunpack.c.h.b16 %v82
  %v794 = vunpack.c.l.b16 %v83
  %v795 = vunpack.c.h.b16 %v83
  %v796 = vunpack.c.l.b16 %v84
  %v797 = vunpack.c.h.b16 %v84
  %v798 = vunpack.c.l.b16 %v85
  %v799 = vunpack.c.h.b16 %v85
  %v800 = vunpack.c.l.b16 %v86
  %v801 = vunpack.c.h.b16 %v86
  %v802 = vunpack.c.l.b16 %v87
  %v803 = vunpack.c.h.b16 %v87
  %v804 = vunpack.c.l.b16 %v88
  %v805 = vunpack.c.h.b16 %v88
  %v806 = vunpack.c.l.b16 %v89
  %v807 = vunpack.c.h.b16 %v89
  %v808 = vunpack.c.l.b16 %v90
  %v809 = vunpack.c.h.b16 %v90
  %v810 = vunpack.c.l.b16 %v91
  %v811 = vunpack.c.h.b16 %v91
  %v812 = vunpack.c.l.b16 %v92
  %v813 = vunpack.c.h.b16 %v92
  %v814 = vunpack.c.l.b16 %v93
  %v815 = vunpack.c.h.b16 %v93
  %v816 = vunpack.c.l.b16 %v94
  %v817 = vunpack.c.h.b16 %v94
  %v818 = vunpack.c.l.b16 %v95
  %v819 = vunpack.c.h.b16 %v95
  %v820 = vunpack.c.l.b16 %v96
  %v821 = vunpack.c.h.b16 %v96
  %v822 = vunpack.c.l.b16 %v97
  %v823 = vunpack.c.h.b16 %v97
  %v824 = vunpack.c.l.b16 %v98
  %v825 = vunpack.c.h.b16 %v98
  %v826 = vunpack.c.l.b16 %v99
  %v827 = vunpack.c.h.b16 %v99
  %v828 = vunpack.c.l.b16 %v100
  %v829 = vunpack.c.h.b16 %v100
  %v830 = vunpack.c.l.b16 %v101
  %v831 = vunpack.c.h.b16 %v101
  %v832 = vunpack.c.l.b16 %v102
  %v833 = vunpack.c.h.b16 %v102
  %v834 = vunpack.c.l.b16 %v103
  %v835 = vunpack.c.h.b16 %v103
  %v836 = vunpack.c.l.b16 %v104
  %v837 = vunpack.c.h.b16 %v104
  %v838 = vunpack.c.l.b16 %v105
  %v839 = vunpack.c.h.b16 %v105
  %v840 = vunpack.c.l.b16 %v106
  %v841 = vunpack.c.h.b16 %v106
  %v842 = vunpack.c.l.b16 %v107
  %v843 = vunpack.c.h.b16 %v107
  %v844 = vunpack.c.l.b16 %v108
  %v845 = vunpack.c.h.b16 %v108
  %v846 = vunpack.c.l.b16 %v109
  %v847 = vunpack.c.h.b16 %v109
  %v848 = vunpack.c.l.b16 %v110
  %v849 = vunpack.c.h.b16 %v110
  %v850 = vunpack.c.l.b16 %v111
  %v851 = vunpack.c.h.b16 %v111
  %v852 = vunpack.c.l.b16 %v112
  %v853 = vunpack.c.h.b16 %v112
  %v854 = vunpack.c.l.b16 %v113
  %v855 = vunpack.c.h.b16 %v113
  %v856 = vunpack.c.l.b16 %v114
  %v857 = vunpack.c.h.b16 %v114
  %v858 = vunpack.c.l.b16 %v115
  %v859 = vunpack.c.h.b16 %v115
  %v860 = vunpack.c.l.b16 %v116
  %v861 = vunpack.c.h.b16 %v116
  %v862 = vunpack.c.l.b16 %v117
  %v863 = vunpack.c.h.b16 %v117
  %v864 = vunpack.c.l.b16 %v118
  %v865 = vunpack.c.h.b16 %v118
  %v866 = vunpack.c.l.b16 %v119
  %v867 = vunpack.c.h.b16 %v119
  %v868 = vunpack.c.l.b16 %v120
  %v869 = vunpack.c.h.b16 %v120
  %v870 = vunpack.c.l.b16 %v121
  %v871 = vunpack.c.h.b16 %v121
  %v872 = vunpack.c.l.b16 %v122
  %v873 = vunpack.c.h.b16 %v122
  %v874 = vunpack.c.l.b16 %v123
  %v875 = vunpack.c.h.b16 %v123
  %v876 = vunpack.c.l.b16 %v124
  %v877 = vunpack.c.h.b16 %v124
  %v878 = vunpack.c.l.b16 %v125
  %v879 = vunpack.c.h.b16 %v125
  %v880 = vunpack.c.l.b16 %v126
  %v881 = vunpack.c.h.b16 %v126
  %v882 = vunpack.c.l.b16 %v127
  %v883 = vunpack.c.h.b16 %v127
  %v884 = vunpack.c.l.b16 %v128
  %v885 = vunpack.c.h.b16 %v128
  %v886 = vunpack.c.l.b16 %v129
  %v887 = vunpack.c.h.b16 %v129
  %v888 = vunpack.c.l.b16 %v130
  %v889 = vunpack.c.h.b16 %v130
  %v890 = vunpack.c.l.b16 %v131
  %v891 = vunpack.c.h.b16 %v131
  %v892 = vunpack.c.l.b16 %v132
  %v893 = vunpack.c.h.b16 %v132
  %v894 = vunpack.c.l.b16 %v133
  %v895 = vunpack.c.h.b16 %v133
  %v896 = vunpack.c.l.b16 %v134
  %v897 = vunpack.c.h.b16 %v134
  %v898 = vunpack.c.l.b16 %v135
  %v899 = vunpack.c.h.b16 %v135
  %v900 = vunpack.c.l.b16 %v136
  %v901 = vunpack.c.h.b16 %v136
  %v902 = vunpack.c.l.b16 %v137
  %v903 = vunpack.c.h.b16 %v137
  %v904 = vunpack.c.l.b16 %v138
  %v905 = vunpack.c.h.b16 %v138
  %v906 = vunpack.c.l.b16 %v139
  %v907 = vunpack.c.h.b16 %v139
  %v908 = vunpack.c.l.b16 %v140
  %v909 = vunpack.c.h.b16 %v140
  %v910 = vunpack.c.l.b16 %v141
  %v911 = vunpack.c.h.b16 %v141
  %v912 = vunpack.c.l.b16 %v142
  %v913 = vunpack.c.h.b16 %v142
  %v914 = vunpack.c.l.b16 %v143
  %v915 = vunpack.c.h.b16 %v143
  %v916 = vunpack.c.l.b16 %v144
  %v917 = vunpack.c.h.b16 %v144
  %v918 = vunpack.c.l.b16 %v145
  %v919 = vunpack.c.h.b16 %v145
  %v920 = vunpack.c.l.b16 %v146
  %v921 = vunpack.c.h.b16 %v146
  %v922 = vunpack.c.l.b16 %v147
  %v923 = vunpack.c.h.b16 %v147
  %v924 = vunpack.c.l.b16 %v148
  %v925 = vunpack.c.h.b16 %v148
  %v926 = vunpack.c.l.b16 %v149
  %v927 = vunpack.c.h.b16 %v149
  %v928 = vunpack.c.l.b16 %v150
  %v929 = vunpack.c.h.b16 %v150
  %v930 = vunpack.c.l.b16 %v151
  %v931 = vunpack.c.h.b16 %v151
  %v932 = vunpack.c.l.b16 %v152
  %v933 = vunpack.c.h.b16 %v152
  %v934 = vunpack.c.l.b16 %v153
  %v935 = vunpack.c.h.b16 %v153
  %v936 = vunpack.c.l.b16 %v154
  %v937 = vunpack.c.h.b16 %v154
  %v938 = vunpack.c.l.b16 %v155
  %v939 = vunpack.c.h.b16 %v155
  %v940 = vunpack.c.l.b16 %v156
  %v941 = vunpack.c.h.b16 %v156
  %v942 = vunpack.c.l.b16 %v157
  %v943 = vunpack.c.h.b16 %v157
  %v944 = vunpack.c.l.b16 %v158
  %v945 = vunpack.c.h.b16 %v158
  %v946 = vunpack.c.l.b16 %v159
  %v947 = vunpack.c.h.b16 %v159
  %v948 = vunpack.c.l.b16 %v160
  %v949 = vunpack.c.h.b16 %v160
  %v950 = vunpack.c.l.b16 %v161
  %v951 = vunpack.c.h.b16 %v161
  %v952 = vunpack.c.l.b16 %v162
  %v953 = vunpack.c.h.b16 %v162
  %v954 = vunpack.c.l.b16 %v163
  %v955 = vunpack.c.h.b16 %v163
  %v956 = vunpack.c.l.b16 %v164
  %v957 = vunpack.c.h.b16 %v164
  %v958 = vunpack.c.l.b16 %v165
  %v959 = vunpack.c.h.b16 %v165
  %v960 = vunpack.c.l.b16 %v166
  %v961 = vunpack.c.h.b16 %v166
  %v962 = vunpack.c.l.b16 %v167
  %v963 = vunpack.c.h.b16 %v167
  %v964 = vunpack.c.l.b16 %v168
  %v965 = vunpack.c.h.b16 %v168
  %v966 = vunpack.c.l.b16 %v169
  %v967 = vunpack.c.h.b16 %v169
  %v968 = vunpack.c.l.b16 %v170
  %v969 = vunpack.c.h.b16 %v170
  %v970 = vunpack.c.l.b16 %v171
  %v971 = vunpack.c.h.b16 %v171
  %v972 = vunpack.c.l.b16 %v172
  %v973 = vunpack.c.h.b16 %v172
  %v974 = vunpack.c.l.b16 %v173
  %v975 = vunpack.c.h.b16 %v173
  %v976 = vunpack.c.l.b16 %v174
  %v977 = vunpack.c.h.b16 %v174
  %v978 = vunpack.c.l.b16 %v175
  %v979 = vunpack.c.h.b16 %v175
  %v980 = vunpack.c.l.b16 %v176
  %v981 = vunpack.c.h.b16 %v176
  %v982 = vunpack.c.l.b16 %v177
  %v983 = vunpack.c.h.b16 %v177
  %v984 = vunpack.c.l.b16 %v178
  %v985 = vunpack.c.h.b16 %v178
  %v986 = vunpack.c.l.b16 %v179
  %v987 = vunpack.c.h.b16 %v179
  %v988 = vunpack.c.l.b16 %v180
  %v989 = vunpack.c.h.b16 %v180
  %v990 = vunpack.c.l.b16 %v181
  %v991 = vunpack.c.h.b16 %v181
  %v992 = vunpack.c.l.b16 %v182
  %v993 = vunpack.c.h.b16 %v182
  %v994 = vunpack.c.l.b16 %v183
  %v995 = vunpack.c.h.b16 %v183
  %v996 = vunpack.c.l.b16 %v184
  %v997 = vunpack.c.h.b16 %v184
  %v998 = vunpack.c.l.b16 %v185
  %v999 = vunpack.c.h.b16 %v185
  %v1000 = vunpack.c.l.b16 %v186
  %v1001 = vunpack.c.h.b16 %v186
  %v1002 = vunpack.c.l.b16 %v187
  %v1003 = vunpack.c.h.b16 %v187
  %v1004 = vunpack.c.l.b16 %v188
  %v1005 = vunpack.c.h.b16 %v188
  %v1006 = vunpack.c.l.b16 %v189
  %v1007 = vunpack.c.h.b16 %v189
  %v1008 = vunpack.c.l.b16 %v190
  %v1009 = vunpack.c.h.b16 %v190
  %v1010 = vunpack.c.l.b16 %v191
  %v1011 = vunpack.c.h.b16 %v191
  %v1012 = vunpack.c.l.b16 %v192
  %v1013 = vunpack.c.h.b16 %v192
  %v1014 = vunpack.c.l.b16 %v193
  %v1015 = vunpack.c.h.b16 %v193
  %v1016 = vunpack.c.l.b16 %v194
  %v1017 = vunpack.c.h.b16 %v194
  %v1018 = vunpack.c.l.b16 %v195
  %v1019 = vunpack.c.h.b16 %v195
  %v1020 = vunpack.c.l.b16 %v196
  %v1021 = vunpack.c.h.b16 %v196
  %v1022 = vunpack.c.l.b16 %v197
  %v1023 = vunpack.c.h.b16 %v197
  %v1024 = vunpack.c.l.b16 %v198
  %v1025 = vunpack.c.h.b16 %v198
  %v1026 = vunpack.c.l.b16 %v199
  %v1027 = vunpack.c.h.b16 %v199
  %v1028 = vunpack.c.l.b16 %v200
  %v1029 = vunpack.c.h.b16 %v200
  %v1030 = vunpack.c.l.b16 %v201
  %v1031 = vunpack.c.h.b16 %v201
  %v1032 = vunpack.c.l.b16 %v202
  %v1033 = vunpack.c.h.b16 %v202
  %v1034 = vunpack.c.l.b16 %v203
  %v1035 = vunpack.c.h.b16 %v203
  %v1036 = vunpack.c.l.b16 %v204
  %v1037 = vunpack.c.h.b16 %v204
  %v1038 = vunpack.c.l.b16 %v205
  %v1039 = vunpack.c.h.b16 %v205
  %v1040 = vunpack.c.l.b16 %v206
  %v1041 = vunpack.c.h.b16 %v206
  %v1042 = vunpack.c.l.b16 %v207
  %v1043 = vunpack.c.h.b16 %v207
  %v1044 = vunpack.c.l.b16 %v208
  %v1045 = vunpack.c.h.b16 %v208
  %v1046 = vunpack.c.l.b16 %v209
  %v1047 = vunpack.c.h.b16 %v209
  %v1048 = vunpack.c.l.b16 %v210
  %v1049 = vunpack.c.h.b16 %v210
  %v1050 = vunpack.c.l.b16 %v211
  %v1051 = vunpack.c.h.b16 %v211
  %v1052 = vunpack.c.l.b16 %v212
  %v1053 = vunpack.c.h.b16 %v212
  %v1054 = vunpack.c.l.b16 %v213
  %v1055 = vunpack.c.h.b16 %v213
  %v1056 = vunpack.c.l.b16 %v214
  %v1057 = vunpack.c.h.b16 %v214
  %v1058 = vunpack.c.l.b16 %v215
  %v1059 = vunpack.c.h.b16 %v215
  %v1060 = vunpack.c.l.b16 %v216
  %v1061 = vunpack.c.h.b16 %v216
  %v1062 = vunpack.c.l.b16 %v217
  %v1063 = vunpack.c.h.b16 %v217
  %v1064 = vunpack.c.l.b16 %v218
  %v1065 = vunpack.c.h.b16 %v218
  %v1066 = vunpack.c.l.b16 %v219
  %v1067 = vunpack.c.h.b16 %v219
  %v1068 = vunpack.c.l.b16 %v220
  %v1069 = vunpack.c.h.b16 %v220
  %v1070 = vunpack.c.l.b16 %v221
  %v1071 = vunpack.c.h.b16 %v221
  %v1072 = vunpack.c.l.b16 %v222
  %v1073 = vunpack.c.h.b16 %v222
  %v1074 = vunpack.c.l.b16 %v223
  %v1075 = vunpack.c.h.b16 %v223
  %v1076 = vunpack.c.l.b16 %v224
  %v1077 = vunpack.c.h.b16 %v224
  %v1078 = vunpack.c.l.b16 %v225
  %v1079 = vunpack.c.h.b16 %v225
  %v1080 = vunpack.c.l.b16 %v226
  %v1081 = vunpack.c.h.b16 %v226
  %v1082 = vunpack.c.l.b16 %v227
  %v1083 = vunpack.c.h.b16 %v227
  %v1084 = vunpack.c.l.b16 %v228
  %v1085 = vunpack.c.h.b16 %v228
  %v1086 = vunpack.c.l.b16 %v229
  %v1087 = vunpack.c.h.b16 %v229
  %v1088 = vunpack.c.l.b16 %v230
  %v1089 = vunpack.c.h.b16 %v230
  %v1090 = vunpack.c.l.b16 %v231
  %v1091 = vunpack.c.h.b16 %v231
  %v1092 = vunpack.c.l.b16 %v232
  %v1093 = vunpack.c.h.b16 %v232
  %v1094 = vunpack.c.l.b16 %v233
  %v1095 = vunpack.c.h.b16 %v233
  %v1096 = vunpack.c.l.b16 %v234
  %v1097 = vunpack.c.h.b16 %v234
  %v1098 = vunpack.c.l.b16 %v235
  %v1099 = vunpack.c.h.b16 %v235
  %v1100 = vunpack.c.l.b16 %v236
  %v1101 = vunpack.c.h.b16 %v236
  %v1102 = vunpack.c.l.b16 %v237
  %v1103 = vunpack.c.h.b16 %v237
  %v1104 = vunpack.c.l.b16 %v238
  %v1105 = vunpack.c.h.b16 %v238
  %v1106 = vunpack.c.l.b16 %v239
  %v1107 = vunpack.c.h.b16 %v239
  %v1108 = vunpack.c.l.b16 %v240
  %v1109 = vunpack.c.h.b16 %v240
  %v1110 = vunpack.c.l.b16 %v241
  %v1111 = vunpack.c.h.b16 %v241
  %v1112 = vunpack.c.l.b16 %v242
  %v1113 = vunpack.c.h.b16 %v242
  %v1114 = vunpack.c.l.b16 %v243
  %v1115 = vunpack.c.h.b16 %v243
  %v1116 = vunpack.c.l.b16 %v244
  %v1117 = vunpack.c.h.b16 %v244
  %v1118 = vunpack.c.l.b16 %v245
  %v1119 = vunpack.c.h.b16 %v245
  %v1120 = vunpack.c.l.b16 %v246
  %v1121 = vunpack.c.h.b16 %v246
  %v1122 = vunpack.c.l.b16 %v247
  %v1123 = vunpack.c.h.b16 %v247
  %v1124 = vunpack.c.l.b16 %v248
  %v1125 = vunpack.c.h.b16 %v248
  %v1126 = vunpack.c.l.b16 %v249
  %v1127 = vunpack.c.h.b16 %v249
  %v1128 = vunpack.c.l.b16 %v250
  %v1129 = vunpack.c.h.b16 %v250
  %v1130 = vunpack.c.l.b16 %v251
  %v1131 = vunpack.c.h.b16 %v251
  %v1132 = vunpack.c.l.b16 %v252
  %v1133 = vunpack.c.h.b16 %v252
  %v1134 = vunpack.c.l.b16 %v253
  %v1135 = vunpack.c.h.b16 %v253
  %v1136 = vunpack.c.l.b16 %v254
  %v1137 = vunpack.c.h.b16 %v254
  %v1138 = vunpack.c.l.b16 %v255
  %v1139 = vunpack.c.h.b16 %v255
  %v1140 = vunpack.c.l.b16 %v256
  %v1141 = vunpack.c.h.b16 %v256
  %v1142 = vunpack.c.l.b16 %v257
  %v1143 = vunpack.c.h.b16 %v257
  %v1144 = vunpack.c.l.b16 %v258
  %v1145 = vunpack.c.h.b16 %v258
  %v1146 = vunpack.c.l.b16 %v259
  %v1147 = vunpack.c.h.b16 %v259
  %v1148 = vunpack.c.l.b16 %v260
  %v1149 = vunpack.c.h.b16 %v260
  %v1150 = vunpack.c.l.b16 %v261
  %v1151 = vunpack.c.h.b16 %v261
  %v1152 = vunpack.c.l.b16 %v262
  %v1153 = vunpack.c.h.b16 %v262
  %v1154 = vunpack.c.l.b16 %v263
  %v1155 = vunpack.c.h.b16 %v263
  %v1156 = vunpack.c.l.b16 %v264
  %v1157 = vunpack.c.h.b16 %v264
  %v1158 = vunpack.c.l.b16 %v265
  %v1159 = vunpack.c.h.b16 %v265
  %v1160 = vunpack.c.l.b16 %v266
  %v1161 = vunpack.c.h.b16 %v266
  %v1162 = vunpack.c.l.b16 %v267
  %v1163 = vunpack.c.h.b16 %v267
  %v1164 = vunpack.c.l.b16 %v268
  %v1165 = vunpack.c.h.b16 %v268
  %v1166 = vunpack.c.l.b16 %v269
  %v1167 = vunpack.c.h.b16 %v269
  %v1168 = vunpack.c.l.b16 %v270
  %v1169 = vunpack.c.h.b16 %v270
  %v1170 = vunpack.c.l.b16 %v271
  %v1171 = vunpack.c.h.b16 %v271
  %v1172 = vunpack.c.l.b16 %v272
  %v1173 = vunpack.c.h.b16 %v272
  %v1174 = vunpack.c.l.b16 %v273
  %v1175 = vunpack.c.h.b16 %v273
  %v1176 = vunpack.c.l.b16 %v274
  %v1177 = vunpack.c.h.b16 %v274
  %v1178 = vunpack.c.l.b16 %v275
  %v1179 = vunpack.c.h.b16 %v275
  %v1180 = vunpack.c.l.b16 %v276
  %v1181 = vunpack.c.h.b16 %v276
  %v1182 = vunpack.c.l.b16 %v277
  %v1183 = vunpack.c.h.b16 %v277
  %v1184 = vunpack.c.l.b16 %v278
  %v1185 = vunpack.c.h.b16 %v278
  %v1186 = vunpack.c.l.b16 %v279
  %v1187 = vunpack.c.h.b16 %v279
  %v1188 = vunpack.c.l.b16 %v280
  %v1189 = vunpack.c.h.b16 %v280
  %v1190 = vunpack.c.l.b16 %v281
  %v1191 = vunpack.c.h.b16 %v281
  %v1192 = vunpack.c.l.b16 %v282
  %v1193 = vunpack.c.h.b16 %v282
  %v1194 = vunpack.c.l.b16 %v283
  %v1195 = vunpack.c.h.b16 %v283
  %v1196 = vunpack.c.l.b16 %v284
  %v1197 = vunpack.c.h.b16 %v284
  %v1198 = vunpack.c.l.b16 %v285
  %v1199 = vunpack.c.h.b16 %v285
  %v1200 = vunpack.c.l.b16 %v286
  %v1201 = vunpack.c.h.b16 %v286
  %v1202 = vunpack.c.l.b16 %v287
  %v1203 = vunpack.c.h.b16 %v287
  %v1204 = vunpack.c.l.b16 %v288
  %v1205 = vunpack.c.h.b16 %v288
  %v1206 = vunpack.c.l.b16 %v289
  %v1207 = vunpack.c.h.b16 %v289
  %v1208 = vunpack.c.l.b16 %v290
  %v1209 = vunpack.c.h.b16 %v290
  %v1210 = vunpack.c.l.b16 %v291
  %v1211 = vunpack.c.h.b16 %v291
  %v1212 = vunpack.c.l.b16 %v292
  %v1213 = vunpack.c.h.b16 %v292
  %v1214 = vunpack.c.l.b16 %v293
  %v1215 = vunpack.c.h.b16 %v293
  %v1216 = vunpack.c.l.b16 %v294
  %v1217 = vunpack.c.h.b16 %v294
  %v1218 = vunpack.c.l.b16 %v295
  %v1219 = vunpack.c.h.b16 %v295
  %v1220 = vunpack.c.l.b16 %v296
  %v1221 = vunpack.c.h.b16 %v296
  %v1222 = vunpack.c.l.b16 %v297
  %v1223 = vunpack.c.h.b16 %v297
  %v1224 = vunpack.c.l.b16 %v298
  %v1225 = vunpack.c.h.b16 %v298
  %v1226 = vunpack.c.l.b16 %v299
  %v1227 = vunpack.c.h.b16 %v299
  %v1228 = vunpack.c.l.b16 %v300
  %v1229 = vunpack.c.h.b16 %v300
  %v1230 = vunpack.c.l.b16 %v301
  %v1231 = vunpack.c.h.b16 %v301
  %v1232 = vunpack.c.l.b16 %v302
  %v1233 = vunpack.c.h.b16 %v302
  %v1234 = vunpack.c.l.b16 %v303
  %v1235 = vunpack.c.h.b16 %v303
  %v1236 = vunpack.c.l.b16 %v304
  %v1237 = vunpack.c.h.b16 %v304
  %v1238 = vunpack.c.l.b16 %v305
  %v1239 = vunpack.c.h.b16 %v305
  %v1240 = vunpack.c.l.b16 %v306
  %v1241 = vunpack.c.h.b16 %v306
  %v1242 = vunpack.c.l.b16 %v307
  %v1243 = vunpack.c.h.b16 %v307
  %v1244 = vunpack.c.l.b16 %v308
  %v1245 = vunpack.c.h.b16 %v308
  %v1246 = vunpack.c.l.b16 %v309
  %v1247 = vunpack.c.h.b16 %v309
  %v1248 = vunpack.c.l.b16 %v310
  %v1249 = vunpack.c.h.b16 %v310
  %v1250 = vpack.c.b16 %v676, %v674
  %v1251 = vpack.c.b16 %v677, %v675
  %v1252 = vpack.c.b16 %v680, %v678
  %v1253 = vpack.c.b16 %v681, %v679
  %v1254 = vpack.c.b16 %v684, %v682
  %v1255 = vpack.c.b16 %v685, %v683
  %v1256 = vpack.c.b16 %v688, %v686
  %v1257 = vpack.c.b16 %v689, %v687
  %v1258 = vpack.c.b16 %v692, %v690
  %v1259 = vpack.c.b16 %v693, %v691
  %v1260 = vpack.c.b16 %v696, %v694
  %v1261 = vpack.c.b16 %v697, %v695
  %v1262 = vpack.c.b16 %v700, %v698
  %v1263 = vpack.c.b16 %v701, %v699
  %v1264 = vpack.c.b16 %v704, %v702
  %v1265 = vpack.c.b16 %v705, %v703
  %v1266 = vpack.c.b16 %v708, %v706
  %v1267 = vpack.c.b16 %v709, %v707
  %v1268 = vpack.c.b16 %v712, %v710
  %v1269 = vpack.c.b16 %v713, %v711
  %v1270 = vpack.c.b16 %v716, %v714
  %v1271 = vpack.c.b16 %v717, %v715
  %v1272 = vpack.c.b16 %v720, %v718
  %v1273 = vpack.c.b16 %v721, %v719
  %v1274 = vpack.c.b16 %v724, %v722
  %v1275 = vpack.c.b16 %v725, %v723
  %v1276 = vpack.c.b16 %v728, %v726
  %v1277 = vpack.c.b16 %v729, %v727
  %v1278 = vpack.c.b16 %v732, %v730
  %v1279 = vpack.c.b16 %v733, %v731
  %v1280 = vpack.c.b16 %v736, %v734
  %v1281 = vpack.c.b16 %v737, %v735
  %v1282 = vpack.c.b16 %v740, %v738
  %v1283 = vpack.c.b16 %v741, %v739
  %v1284 = vpack.c.b16 %v744, %v742
  %v1285 = vpack.c.b16 %v745, %v743
  %v1286 = vpack.c.b16 %v748, %v746
  %v1287 = vpack.c.b16 %v749, %v747
  %v1288 = vpack.c.b16 %v752, %v750
  %v1289 = vpack.c.b16 %v753, %v751
  %v1290 = vpack.c.b16 %v756, %v754
  %v1291 = vpack.c.b16 %v757, %v755
  %v1292 = vpack.c.b16 %v760, %v758
  %v1293 = vpack.c.b16 %v761, %v759
  %v1294 = vpack.c.b16 %v764, %v762
  %v1295 = vpack.c.b16 %v765, %v763
  %v1296 = vpack.c.b16 %v768, %v766
  %v1297 = vpack.c.b16 %v769, %v767
  %v1298 = vpack.c.b16 %v772, %v770
  %v1299 = vpack.c.b16 %v773, %v771
  %v1300 = vpack.c.b16 %v776, %v774
  %v1301 = vpack.c.b16 %v777, %v775
  %v1302 = vpack.c.b16 %v780, %v778
  %v1303 = vpack.c.b16 %v781, %v779
  %v1304 = vpack.c.b16 %v784, %v782
  %v1305 = vpack.c.b16 %v785, %v783
  %v1306 = vpack.c.b16 %v788, %v786
  %v1307 = vpack.c.b16 %v789, %v787
  %v1308 = vpack.c.b16 %v792, %v790
  %v1309 = vpack.c.b16 %v793, %v791
  %v1310 = vpack.c.b16 %v796, %v794
  %v1311 = vpack.c.b16 %v797, %v795
  %v1312 = vpack.c.b16 %v800, %v798
  %v1313 = vpack.c.b16 %v801, %v799
  %v1314 = vpack.c.b16 %v804, %v802
  %v1315 = vpack.c.b16 %v805, %v803
  %v1316 = vpack.c.b16 %v808, %v806
  %v1317 = vpack.c.b16 %v809, %v807
  %v1318 = vpack.c.b16 %v812, %v810
  %v1319 = vpack.c.b16 %v813, %v811
  %v1320 = vpack.c.b16 %v816, %v814
  %v1321 = vpack.c.b16 %v817, %v815
  %v1322 = vpack.c.b16 %v820, %v818
  %v1323 = vpack.c.b16 %v821, %v819
  %v1324 = vpack.c.b16 %v824, %v822
  %v1325 = vpack.c.b16 %v825, %v823
  %v1326 = vpack.c.b16 %v828, %v826
  %v1327 = vpack.c.b16 %v829, %v827
  %v1328 = vpack.c.b16 %v832, %v830
  %v1329 = vpack.c.b16 %v833, %v831
  %v1330 = vpack.c.b16 %v836, %v834
  %v1331 = vpack.c.b16 %v837, %v835
  %v1332 = vpack.c.b16 %v840, %v838
  %v1333 = vpack.c.b16 %v841, %v839
  %v1334 = vpack.c.b16 %v844, %v842
  %v1335 = vpack.c.b16 %v845, %v843
  %v1336 = vpack.c.b16 %v848, %v846
  %v1337 = vpack.c.b16 %v849, %v847
  %v1338 = vpack.c.b16 %v852, %v850
  %v1339 = vpack.c.b16 %v853, %v851
  %v1340 = vpack.c.b16 %v856, %v854
  %v1341 = vpack.c.b16 %v857, %v855
  %v1342 = vpack.c.b16 %v860, %v858
  %v1343 = vpack.c.b16 %v861, %v859
  %v1344 = vpack.c.b16 %v864, %v862
  %v1345 = vpack.c.b16 %v865, %v863
  %v1346 = vpack.c.b16 %v868, %v866
  %v1347 = vpack.c.b16 %v869, %v867
  %v1348 = vpack.c.b16 %v872, %v870
  %v1349 = vpack.c.b16 %v873, %v871
  %v1350 = vpack.c.b16 %v876, %v874
  %v1351 = vpack.c.b16 %v877, %v875
  %v1352 = vpack.c.b16 %v880, %v878
  %v1353 = vpack.c.b16 %v881, %v879
  %v1354 = vpack.c.b16 %v884, %v882
  %v1355 = vpack.c.b16 %v885, %v883
  %v1356 = vpack.c.b16 %v888, %v886
  %v1357 = vpack.c.b16 %v889, %v887
  %v1358 = vpack.c.b16 %v892, %v890
  %v1359 = vpack.c.b16 %v893, %v891
  %v1360 = vpack.c.b16 %v896, %v894
  %v1361 = vpack.c.b16 %v897, %v895
  %v1362 = vpack.c.b16 %v900, %v898
  %v1363 = vpack.c.b16 %v901, %v899
  %v1364 = vpack.c.b16 %v904, %v902
  %v1365 = vpack.c.b16 %v905, %v903
  %v1366 = vpack.c.b16 %v908, %v906
  %v1367 = vpack.c.b16 %v909, %v907
  %v1368 = vpack.c.b16 %v912, %v910
  %v1369 = vpack.c.b16 %v913, %v911
  %v1370 = vpack.c.b16 %v916, %v914
  %v1371 = vpack.c.b16 %v917, %v915
  %v1372 = vpack.c.b16 %v920, %v918
  %v1373 = vpack.c.b16 %v921, %v919
  %v1374 = vpack.c.b16 %v924, %v922
  %v1375 = vpack.c.b16 %v925, %v923
  %v1376 = vpack.c.b16 %v928, %v926
  %v1377 = vpack.c.b16 %v929, %v927
  %v1378 = vpack.c.b16 %v932, %v930
  %v1379 = vpack.c.b16 %v933, %v931
  %v1380 = vpack.c.b16 %v936, %v934
  %v1381 = vpack.c.b16 %v937, %v935
  %v1382 = vpack.c.b16 %v940, %v938
  %v1383 = vpack.c.b16 %v941, %v939
  %v1384 = vpack.c.b16 %v944, %v942
  %v1385 = vpack.c.b16 %v945, %v943
  %v1386 = vpack.c.b16 %v948, %v946
  %v1387 = vpack.c.b16 %v949, %v947
  %v1388 = vpack.c.b16 %v952, %v950
  %v1389 = vpack.c.b16 %v953, %v951
  %v1390 = vpack.c.b16 %v956, %v954
  %v1391 = vpack.c.b16 %v957, %v955
  %v1392 = vpack.c.b16 %v960, %v958
  %v1393 = vpack.c.b16 %v961, %v959
  %v1394 = vpack.c.b16 %v964, %v962
  %v1395 = vpack.c.b16 %v965, %v963
  %v1396 = vpack.c.b16 %v968, %v966
  %v1397 = vpack.c.b16 %v969, %v967
  %v1398 = vpack.c.b16 %v972, %v970
  %v1399 = vpack.c.b16 %v973, %v971
  %v1400 = vpack.c.b16 %v976, %v974
  %v1401 = vpack.c.b16 %v977, %v975
  %v1402 = vpack.c.b16 %v980, %v978
  %v1403 = vpack.c.b16 %v981, %v979
  %v1404 = vpack.c.b16 %v984, %v982
  %v1405 = vpack.c.b16 %v985, %v983
  %v1406 = vpack.c.b16 %v988, %v986
  %v1407 = vpack.c.b16 %v989, %v987
  %v1408 = vpack.c.b16 %v992, %v990
  %v1409 = vpack.c.b16 %v993, %v991
  %v1410 = vpack.c.b16 %v996, %v994
  %v1411 = vpack.c.b16 %v997, %v995
  %v1412 = vpack.c.b16 %v1000, %v998
  %v1413 = vpack.c.b16 %v1001, %v999
  %v1414 = vpack.c.b16 %v1004, %v1002
  %v1415 = vpack.c.b16 %v1005, %v1003
  %v1416 = vpack.c.b16 %v1008, %v1006
  %v1417 = vpack.c.b16 %v1009, %v1007
  %v1418 = vpack.c.b16 %v1012, %v1010
  %v1419 = vpack.c.b16 %v1013, %v1011
  %v1420 = vpack.c.b16 %v1016, %v1014
  %v1421 = vpack.c.b16 %v1017, %v1015
  %v1422 = vpack.c.b16 %v1020, %v1018
  %v1423 = vpack.c.b16 %v1021, %v1019
  %v1424 = vpack.c.b16 %v1024, %v1022
  %v1425 = vpack.c.b16 %v1025, %v1023
  %v1426 = vpack.c.b16 %v1028, %v1026
  %v1427 = vpack.c.b16 %v1029, %v1027
  %v1428 = vpack.c.b16 %v1032, %v1030
  %v1429 = vpack.c.b16 %v1033, %v1031
  %v1430 = vpack.c.b16 %v1036, %v1034
  %v1431 = vpack.c.b16 %v1037, %v1035
  %v1432 = vpack.c.b16 %v1040, %v1038
  %v1433 = vpack.c.b16 %v1041, %v1039
  %v1434 = vpack.c.b16 %v1044, %v1042
  %v1435 = vpack.c.b16 %v1045, %v1043
  %v1436 = vpack.c.b16 %v1048, %v1046
  %v1437 = vpack.c.b16 %v1049, %v1047
  %v1438 = vpack.c.b16 %v1052, %v1050
  %v1439 = vpack.c.b16 %v1053, %v1051
  %v1440 = vpack.c.b16 %v1056, %v1054
  %v1441 = vpack.c.b16 %v1057, %v1055
  %v1442 = vpack.c.b16 %v1060, %v1058
  %v1443 = vpack.c.b16 %v1061, %v1059
  %v1444 = vpack.c.b16 %v1064, %v1062
  %v1445 = vpack.c.b16 %v1065, %v1063
  %v1446 = vpack.c.b16 %v1068, %v1066
  %v1447 = vpack.c.b16 %v1069, %v1067
  %v1448 = vpack.c.b16 %v1072, %v1070
  %v1449 = vpack.c.b16 %v1073, %v1071
  %v1450 = vpack.c.b16 %v1076, %v1074
  %v1451 = vpack.c.b16 %v1077, %v1075
  %v1452 = vpack.c.b16 %v1080, %v1078
  %v1453 = vpack.c.b16 %v1081, %v1079
  %v1454 = vpack.c.b16 %v1084, %v1082
  %v1455 = vpack.c.b16 %v1085, %v1083
  %v1456 = vpack.c.b16 %v1088, %v1086
  %v1457 = vpack.c.b16 %v1089, %v1087
  %v1458 = vpack.c.b16 %v1092, %v1090
  %v1459 = vpack.c.b16 %v1093, %v1091
  %v1460 = vpack.c.b16 %v1096, %v1094
  %v1461 = vpack.c.b16 %v1097, %v1095
  %v1462 = vpack.c.b16 %v1100, %v1098
  %v1463 = vpack.c.b16 %v1101, %v1099
  %v1464 = vpack.c.b16 %v1104, %v1102
  %v1465 = vpack.c.b16 %v1105, %v1103
  %v1466 = vpack.c.b16 %v1108, %v1106
  %v1467 = vpack.c.b16 %v1109, %v1107
  %v1468 = vpack.c.b16 %v1112, %v1110
  %v1469 = vpack.c.b16 %v1113, %v1111
  %v1470 = vpack.c.b16 %v1116, %v1114
  %v1471 = vpack.c.b16 %v1117, %v1115
  %v1472 = vpack.c.b16 %v1120, %v1118
  %v1473 = vpack.c.b16 %v1121, %v1119
  %v1474 = vpack.c.b16 %v1124, %v1122
  %v1475 = vpack.c.b16 %v1125, %v1123
  %v1476 = vpack.c.b16 %v1128, %v1126
  %v1477 = vpack.c.b16 %v1129, %v1127
  %v1478 = vpack.c.b16 %v1132, %v1130
  %v1479 = vpack.c.b16 %v1133, %v1131
  %v1480 = vpack.c.b16 %v1136, %v1134
  %v1481 = vpack.c.b16 %v1137, %v1135
  %v1482 = vpack.c.b16 %v1140, %v1138
  %v1483 = vpack.c.b16 %v1141, %v1139
  %v1484 = vpack.c.b16 %v1144, %v1142
  %v1485 = vpack.c.b16 %v1145, %v1143
  %v1486 = vpack.c.b16 %v1148, %v1146
  %v1487 = vpack.c.b16 %v1149, %v1147
  %v1488 = vpack.c.b16 %v1152, %v1150
  %v1489 = vpack.c.b16 %v1153, %v1151
  %v1490 = vpack.c.b16 %v1156, %v1154
  %v1491 = vpack.c.b16 %v1157, %v1155
  %v1492 = vpack.c.b16 %v1160, %v1158
  %v1493 = vpack.c.b16 %v1161, %v1159
  %v1494 = vpack.c.b16 %v1164, %v1162
  %v1495 = vpack.c.b16 %v1165, %v1163
  %v1496 = vpack.c.b16 %v1168, %v1166
  %v1497 = vpack.c.b16 %v1169, %v1167
  %v1498 = vpack.c.b16 %v1172, %v1170
  %v1499 = vpack.c.b16 %v1173, %v1171
  %v1500 = vpack.c.b16 %v1176, %v1174
  %v1501 = vpack.c.b16 %v1177, %v1175
  %v1502 = vpack.c.b16 %v1180, %v1178
  %v1503 = vpack.c.b16 %v1181, %v1179
  %v1504 = vpack.c.b16 %v1184, %v1182
  %v1505 = vpack.c.b16 %v1185, %v1183
  %v1506 = vpack.c.b16 %v1188, %v1186
  %v1507 = vpack.c.b16 %v1189, %v1187
  %v1508 = vpack.c.b16 %v1192, %v1190
  %v1509 = vpack.c.b16 %v1193, %v1191
  %v1510 = vpack.c.b16 %v1196, %v1194
  %v1511 = vpack.c.b16 %v1197, %v1195
  %v1512 = vpack.c.b16 %v1200, %v1198
  %v1513 = vpack.c.b16 %v1201, %v1199
  %v1514 = vpack.c.b16 %v1204, %v1202
  %v1515 = vpack.c.b16 %v1205, %v1203
  %v1516 = vpack.c.b16 %v1208, %v1206
  %v1517 = vpack.c.b16 %v1209, %v1207
  %v1518 = vpack.c.b16 %v1212, %v1210
  %v1519 = vpack.c.b16 %v1213, %v1211
  %v1520 = vpack.c.b16 %v1216, %v1214
  %v1521 = vpack.c.b16 %v1217, %v1215
  %v1522 = vpack.c.b16 %v1220, %v1218
  %v1523 = vpack.c.b16 %v1221, %v1219
  %v1524 = vpack.c.b16 %v1224, %v1222
  %v1525 = vpack.c.b16 %v1225, %v1223
  %v1526 = vpack.c.b16 %v1228, %v1226
  %v1527 = vpack.c.b16 %v1229, %v1227
  %v1528 = vpack.c.b16 %v1232, %v1230
  %v1529 = vpack.c.b16 %v1233, %v1231
  %v1530 = vpack.c.b16 %v1236, %v1234
  %v1531 = vpack.c.b16 %v1237, %v1235
  %v1532 = vpack.c.b16 %v1240, %v1238
  %v1533 = vpack.c.b16 %v1241, %v1239
  %v1534 = vpack.c.b16 %v1244, %v1242
  %v1535 = vpack.c.b16 %v1245, %v1243
  %v1536 = vpack.c.b16 %v1248, %v1246
  %v1537 = vpack.c.b16 %v1249, %v1247
  %1826 = vmatprep.subr.bf16.mxu0 %v1265
  %1827 = vmatpush1.bf16.msra.mxu0 %v1264
  %1828 = vmatprep.subr.bf16.mxu0 %v1263
  %1829 = vmatpush1.bf16.msra.mxu0 %v1262
  %1830 = vmatprep.subr.bf16.mxu0 %v1261
  %1831 = vmatpush1.bf16.msra.mxu0 %v1260
  %1832 = vmatprep.subr.bf16.mxu0 %v1259
  %1833 = vmatpush1.bf16.msra.mxu0 %v1258
  %1834 = vmatprep.subr.bf16.mxu0 %v1257
  %1835 = vmatpush1.bf16.msra.mxu0 %v1256
  %1836 = vmatprep.subr.bf16.mxu0 %v1255
  %1837 = vmatpush1.bf16.msra.mxu0 %v1254
  %1838 = vmatprep.subr.bf16.mxu0 %v1253
  %1839 = vmatpush1.bf16.msra.mxu0 %v1252
  %1840 = vmatprep.subr.bf16.mxu0 %v1251
  %1841 = vmatpush1.bf16.msra.mxu0 %v1250
  %1842 = vmatprep.subr.bf16.mxu0 %v1281
  %1843 = vmatpush2.bf16.msra.mxu0 %v1280
  %1844 = vmatprep.subr.bf16.mxu0 %v1279
  %1845 = vmatpush2.bf16.msra.mxu0 %v1278
  %1846 = vmatprep.subr.bf16.mxu0 %v1277
  %1847 = vmatpush2.bf16.msra.mxu0 %v1276
  %1848 = vmatprep.subr.bf16.mxu0 %v1275
  %1849 = vmatpush2.bf16.msra.mxu0 %v1274
  %1850 = vmatprep.subr.bf16.mxu0 %v1273
  %1851 = vmatpush2.bf16.msra.mxu0 %v1272
  %1852 = vmatprep.subr.bf16.mxu0 %v1271
  %1853 = vmatpush2.bf16.msra.mxu0 %v1270
  %1854 = vmatprep.subr.bf16.mxu0 %v1269
  %1855 = vmatpush2.bf16.msra.mxu0 %v1268
  %1856 = vmatprep.subr.bf16.mxu0 %v1267
  %1857 = vmatpush2.bf16.msra.mxu0 %v1266
  %1858 = vmatprep.mubr.bf16.mxu0 %v351
  %1859 = vmatmul.mubr.bf16.gmra.mxu0 %v350
  %v1860 = vpop.f32.mrf.mxu0
  %v1861 = vadd.f32 %v316, %v1860
  %v1862 = vpop.f32.mrf.mxu0
  %v1863 = vadd.f32 %v320, %v1862
  %v1864 = vpop.f32.mrf.mxu0
  %v1865 = vpop.f32.mrf.mxu0
  %1866 = vdwg.mxu0
  %1867 = vmatprep.subr.bf16.mxu0 %v1297
  %1868 = vmatpush1.bf16.msra.mxu0 %v1296
  %1869 = vmatprep.subr.bf16.mxu0 %v1295
  %1870 = vmatpush1.bf16.msra.mxu0 %v1294
  %1871 = vmatprep.subr.bf16.mxu0 %v1293
  %1872 = vmatpush1.bf16.msra.mxu0 %v1292
  %1873 = vmatprep.subr.bf16.mxu0 %v1291
  %1874 = vmatpush1.bf16.msra.mxu0 %v1290
  %1875 = vmatprep.subr.bf16.mxu0 %v1289
  %1876 = vmatpush1.bf16.msra.mxu0 %v1288
  %1877 = vmatprep.subr.bf16.mxu0 %v1287
  %1878 = vmatpush1.bf16.msra.mxu0 %v1286
  %1879 = vmatprep.subr.bf16.mxu0 %v1285
  %1880 = vmatpush1.bf16.msra.mxu0 %v1284
  %1881 = vmatprep.subr.bf16.mxu0 %v1283
  %1882 = vmatpush1.bf16.msra.mxu0 %v1282
  %1883 = vmatprep.subr.bf16.mxu0 %v1313
  %1884 = vmatpush2.bf16.msra.mxu0 %v1312
  %1885 = vmatprep.subr.bf16.mxu0 %v1311
  %1886 = vmatpush2.bf16.msra.mxu0 %v1310
  %1887 = vmatprep.subr.bf16.mxu0 %v1309
  %1888 = vmatpush2.bf16.msra.mxu0 %v1308
  %1889 = vmatprep.subr.bf16.mxu0 %v1307
  %1890 = vmatpush2.bf16.msra.mxu0 %v1306
  %1891 = vmatprep.subr.bf16.mxu0 %v1305
  %1892 = vmatpush2.bf16.msra.mxu0 %v1304
  %1893 = vmatprep.subr.bf16.mxu0 %v1303
  %1894 = vmatpush2.bf16.msra.mxu0 %v1302
  %1895 = vmatprep.subr.bf16.mxu0 %v1301
  %1896 = vmatpush2.bf16.msra.mxu0 %v1300
  %1897 = vmatprep.subr.bf16.mxu0 %v1299
  %1898 = vmatpush2.bf16.msra.mxu0 %v1298
  %1899 = vmatprep.mubr.bf16.mxu0 %v353
  %1900 = vmatmul.mubr.bf16.gmra.mxu0 %v352
  %v1901 = vpop.f32.mrf.mxu0
  %v1902 = vadd.f32 %v1861, %v1901
  %v1903 = vpop.f32.mrf.mxu0
  %v1904 = vadd.f32 %v1863, %v1903
  %v1905 = vpop.f32.mrf.mxu0
  %v1906 = vpop.f32.mrf.mxu0
  %1907 = vdwg.mxu0
  %1908 = vmatprep.subr.bf16.mxu0 %v1329
  %1909 = vmatpush1.bf16.msra.mxu0 %v1328
  %1910 = vmatprep.subr.bf16.mxu0 %v1327
  %1911 = vmatpush1.bf16.msra.mxu0 %v1326
  %1912 = vmatprep.subr.bf16.mxu0 %v1325
  %1913 = vmatpush1.bf16.msra.mxu0 %v1324
  %1914 = vmatprep.subr.bf16.mxu0 %v1323
  %1915 = vmatpush1.bf16.msra.mxu0 %v1322
  %1916 = vmatprep.subr.bf16.mxu0 %v1321
  %1917 = vmatpush1.bf16.msra.mxu0 %v1320
  %1918 = vmatprep.subr.bf16.mxu0 %v1319
  %1919 = vmatpush1.bf16.msra.mxu0 %v1318
  %1920 = vmatprep.subr.bf16.mxu0 %v1317
  %1921 = vmatpush1.bf16.msra.mxu0 %v1316
  %1922 = vmatprep.subr.bf16.mxu0 %v1315
  %1923 = vmatpush1.bf16.msra.mxu0 %v1314
  %1924 = vmatprep.subr.bf16.mxu0 %v1345
  %1925 = vmatpush2.bf16.msra.mxu0 %v1344
  %1926 = vmatprep.subr.bf16.mxu0 %v1343
  %1927 = vmatpush2.bf16.msra.mxu0 %v1342
  %1928 = vmatprep.subr.bf16.mxu0 %v1341
  %1929 = vmatpush2.bf16.msra.mxu0 %v1340
  %1930 = vmatprep.subr.bf16.mxu0 %v1339
  %1931 = vmatpush2.bf16.msra.mxu0 %v1338
  %1932 = vmatprep.subr.bf16.mxu0 %v1337
  %1933 = vmatpush2.bf16.msra.mxu0 %v1336
  %1934 = vmatprep.subr.bf16.mxu0 %v1335
  %1935 = vmatpush2.bf16.msra.mxu0 %v1334
  %1936 = vmatprep.subr.bf16.mxu0 %v1333
  %1937 = vmatpush2.bf16.msra.mxu0 %v1332
  %1938 = vmatprep.subr.bf16.mxu0 %v1331
  %1939 = vmatpush2.bf16.msra.mxu0 %v1330
  %1940 = vmatprep.mubr.bf16.mxu0 %v355
  %1941 = vmatmul.mubr.bf16.gmra.mxu0 %v354
  %v1942 = vpop.f32.mrf.mxu0
  %v1943 = vadd.f32 %v1902, %v1942
  %v1944 = vpop.f32.mrf.mxu0
  %v1945 = vadd.f32 %v1904, %v1944
  %v1946 = vpop.f32.mrf.mxu0
  %v1947 = vpop.f32.mrf.mxu0
  %1948 = vdwg.mxu0
  %1949 = vmatprep.subr.bf16.mxu0 %v1361
  %1950 = vmatpush1.bf16.msra.mxu0 %v1360
  %1951 = vmatprep.subr.bf16.mxu0 %v1359
  %1952 = vmatpush1.bf16.msra.mxu0 %v1358
  %1953 = vmatprep.subr.bf16.mxu0 %v1357
  %1954 = vmatpush1.bf16.msra.mxu0 %v1356
  %1955 = vmatprep.subr.bf16.mxu0 %v1355
  %1956 = vmatpush1.bf16.msra.mxu0 %v1354
  %1957 = vmatprep.subr.bf16.mxu0 %v1353
  %1958 = vmatpush1.bf16.msra.mxu0 %v1352
  %1959 = vmatprep.subr.bf16.mxu0 %v1351
  %1960 = vmatpush1.bf16.msra.mxu0 %v1350
  %1961 = vmatprep.subr.bf16.mxu0 %v1349
  %1962 = vmatpush1.bf16.msra.mxu0 %v1348
  %1963 = vmatprep.subr.bf16.mxu0 %v1347
  %1964 = vmatpush1.bf16.msra.mxu0 %v1346
  %1965 = vmatprep.subr.bf16.mxu0 %v1377
  %1966 = vmatpush2.bf16.msra.mxu0 %v1376
  %1967 = vmatprep.subr.bf16.mxu0 %v1375
  %1968 = vmatpush2.bf16.msra.mxu0 %v1374
  %1969 = vmatprep.subr.bf16.mxu0 %v1373
  %1970 = vmatpush2.bf16.msra.mxu0 %v1372
  %1971 = vmatprep.subr.bf16.mxu0 %v1371
  %1972 = vmatpush2.bf16.msra.mxu0 %v1370
  %1973 = vmatprep.subr.bf16.mxu0 %v1369
  %1974 = vmatpush2.bf16.msra.mxu0 %v1368
  %1975 = vmatprep.subr.bf16.mxu0 %v1367
  %1976 = vmatpush2.bf16.msra.mxu0 %v1366
  %1977 = vmatprep.subr.bf16.mxu0 %v1365
  %1978 = vmatpush2.bf16.msra.mxu0 %v1364
  %1979 = vmatprep.subr.bf16.mxu0 %v1363
  %1980 = vmatpush2.bf16.msra.mxu0 %v1362
  %1981 = vmatprep.mubr.bf16.mxu0 %v357
  %1982 = vmatmul.mubr.bf16.gmra.mxu0 %v356
  %v1983 = vpop.f32.mrf.mxu0
  %v1984 = vadd.f32 %v1943, %v1983
  %v1985 = vpop.f32.mrf.mxu0
  %v1986 = vadd.f32 %v1945, %v1985
  %v1987 = vpop.f32.mrf.mxu0
  %v1988 = vpop.f32.mrf.mxu0
  %1989 = vdwg.mxu0
  %1990 = vmatprep.subr.bf16.mxu0 %v1393
  %1991 = vmatpush1.bf16.msra.mxu0 %v1392
  %1992 = vmatprep.subr.bf16.mxu0 %v1391
  %1993 = vmatpush1.bf16.msra.mxu0 %v1390
  %1994 = vmatprep.subr.bf16.mxu0 %v1389
  %1995 = vmatpush1.bf16.msra.mxu0 %v1388
  %1996 = vmatprep.subr.bf16.mxu0 %v1387
  %1997 = vmatpush1.bf16.msra.mxu0 %v1386
  %1998 = vmatprep.subr.bf16.mxu0 %v1385
  %1999 = vmatpush1.bf16.msra.mxu0 %v1384
  %2000 = vmatprep.subr.bf16.mxu0 %v1383
  %2001 = vmatpush1.bf16.msra.mxu0 %v1382
  %2002 = vmatprep.subr.bf16.mxu0 %v1381
  %2003 = vmatpush1.bf16.msra.mxu0 %v1380
  %2004 = vmatprep.subr.bf16.mxu0 %v1379
  %2005 = vmatpush1.bf16.msra.mxu0 %v1378
  %2006 = vmatprep.subr.bf16.mxu0 %v1409
  %2007 = vmatpush2.bf16.msra.mxu0 %v1408
  %2008 = vmatprep.subr.bf16.mxu0 %v1407
  %2009 = vmatpush2.bf16.msra.mxu0 %v1406
  %2010 = vmatprep.subr.bf16.mxu0 %v1405
  %2011 = vmatpush2.bf16.msra.mxu0 %v1404
  %2012 = vmatprep.subr.bf16.mxu0 %v1403
  %2013 = vmatpush2.bf16.msra.mxu0 %v1402
  %2014 = vmatprep.subr.bf16.mxu0 %v1401
  %2015 = vmatpush2.bf16.msra.mxu0 %v1400
  %2016 = vmatprep.subr.bf16.mxu0 %v1399
  %2017 = vmatpush2.bf16.msra.mxu0 %v1398
  %2018 = vmatprep.subr.bf16.mxu0 %v1397
  %2019 = vmatpush2.bf16.msra.mxu0 %v1396
  %2020 = vmatprep.subr.bf16.mxu0 %v1395
  %2021 = vmatpush2.bf16.msra.mxu0 %v1394
  %2022 = vmatprep.mubr.bf16.mxu0 %v359
  %2023 = vmatmul.mubr.bf16.gmra.mxu0 %v358
  %v2024 = vpop.f32.mrf.mxu0
  %v2025 = vadd.f32 %v1984, %v2024
  %v2026 = vpop.f32.mrf.mxu0
  %v2027 = vadd.f32 %v1986, %v2026
  %v2028 = vpop.f32.mrf.mxu0
  %v2029 = vpop.f32.mrf.mxu0
  %2030 = vdwg.mxu0
  %2031 = vmatprep.subr.bf16.mxu0 %v1425
  %2032 = vmatpush1.bf16.msra.mxu0 %v1424
  %2033 = vmatprep.subr.bf16.mxu0 %v1423
  %2034 = vmatpush1.bf16.msra.mxu0 %v1422
  %2035 = vmatprep.subr.bf16.mxu0 %v1421
  %2036 = vmatpush1.bf16.msra.mxu0 %v1420
  %2037 = vmatprep.subr.bf16.mxu0 %v1419
  %2038 = vmatpush1.bf16.msra.mxu0 %v1418
  %2039 = vmatprep.subr.bf16.mxu0 %v1417
  %2040 = vmatpush1.bf16.msra.mxu0 %v1416
  %2041 = vmatprep.subr.bf16.mxu0 %v1415
  %2042 = vmatpush1.bf16.msra.mxu0 %v1414
  %2043 = vmatprep.subr.bf16.mxu0 %v1413
  %2044 = vmatpush1.bf16.msra.mxu0 %v1412
  %2045 = vmatprep.subr.bf16.mxu0 %v1411
  %2046 = vmatpush1.bf16.msra.mxu0 %v1410
  %2047 = vmatprep.subr.bf16.mxu0 %v1441
  %2048 = vmatpush2.bf16.msra.mxu0 %v1440
  %2049 = vmatprep.subr.bf16.mxu0 %v1439
  %2050 = vmatpush2.bf16.msra.mxu0 %v1438
  %2051 = vmatprep.subr.bf16.mxu0 %v1437
  %2052 = vmatpush2.bf16.msra.mxu0 %v1436
  %2053 = vmatprep.subr.bf16.mxu0 %v1435
  %2054 = vmatpush2.bf16.msra.mxu0 %v1434
  %2055 = vmatprep.subr.bf16.mxu0 %v1433
  %2056 = vmatpush2.bf16.msra.mxu0 %v1432
  %2057 = vmatprep.subr.bf16.mxu0 %v1431
  %2058 = vmatpush2.bf16.msra.mxu0 %v1430
  %2059 = vmatprep.subr.bf16.mxu0 %v1429
  %2060 = vmatpush2.bf16.msra.mxu0 %v1428
  %2061 = vmatprep.subr.bf16.mxu0 %v1427
  %2062 = vmatpush2.bf16.msra.mxu0 %v1426
  %2063 = vmatprep.mubr.bf16.mxu0 %v361
  %2064 = vmatmul.mubr.bf16.gmra.mxu0 %v360
  %v2065 = vpop.f32.mrf.mxu0
  %v2066 = vadd.f32 %v2025, %v2065
  %v2067 = vpop.f32.mrf.mxu0
  %v2068 = vadd.f32 %v2027, %v2067
  %v2069 = vpop.f32.mrf.mxu0
  %v2070 = vpop.f32.mrf.mxu0
  %2071 = vdwg.mxu0
  %2072 = vmatprep.subr.bf16.mxu0 %v1457
  %2073 = vmatpush1.bf16.msra.mxu0 %v1456
  %2074 = vmatprep.subr.bf16.mxu0 %v1455
  %2075 = vmatpush1.bf16.msra.mxu0 %v1454
  %2076 = vmatprep.subr.bf16.mxu0 %v1453
  %2077 = vmatpush1.bf16.msra.mxu0 %v1452
  %2078 = vmatprep.subr.bf16.mxu0 %v1451
  %2079 = vmatpush1.bf16.msra.mxu0 %v1450
  %2080 = vmatprep.subr.bf16.mxu0 %v1449
  %2081 = vmatpush1.bf16.msra.mxu0 %v1448
  %2082 = vmatprep.subr.bf16.mxu0 %v1447
  %2083 = vmatpush1.bf16.msra.mxu0 %v1446
  %2084 = vmatprep.subr.bf16.mxu0 %v1445
  %2085 = vmatpush1.bf16.msra.mxu0 %v1444
  %2086 = vmatprep.subr.bf16.mxu0 %v1443
  %2087 = vmatpush1.bf16.msra.mxu0 %v1442
  %2088 = vmatprep.subr.bf16.mxu0 %v1473
  %2089 = vmatpush2.bf16.msra.mxu0 %v1472
  %2090 = vmatprep.subr.bf16.mxu0 %v1471
  %2091 = vmatpush2.bf16.msra.mxu0 %v1470
  %2092 = vmatprep.subr.bf16.mxu0 %v1469
  %2093 = vmatpush2.bf16.msra.mxu0 %v1468
  %2094 = vmatprep.subr.bf16.mxu0 %v1467
  %2095 = vmatpush2.bf16.msra.mxu0 %v1466
  %2096 = vmatprep.subr.bf16.mxu0 %v1465
  %2097 = vmatpush2.bf16.msra.mxu0 %v1464
  %2098 = vmatprep.subr.bf16.mxu0 %v1463
  %2099 = vmatpush2.bf16.msra.mxu0 %v1462
  %2100 = vmatprep.subr.bf16.mxu0 %v1461
  %2101 = vmatpush2.bf16.msra.mxu0 %v1460
  %2102 = vmatprep.subr.bf16.mxu0 %v1459
  %2103 = vmatpush2.bf16.msra.mxu0 %v1458
  %2104 = vmatprep.mubr.bf16.mxu0 %v363
  %2105 = vmatmul.mubr.bf16.gmra.mxu0 %v362
  %v2106 = vpop.f32.mrf.mxu0
  %v2107 = vadd.f32 %v2066, %v2106
  %v2108 = vpop.f32.mrf.mxu0
  %v2109 = vadd.f32 %v2068, %v2108
  %v2110 = vpop.f32.mrf.mxu0
  %v2111 = vpop.f32.mrf.mxu0
  %2112 = vdwg.mxu0
  %2113 = vmatprep.subr.bf16.mxu0 %v1489
  %2114 = vmatpush1.bf16.msra.mxu0 %v1488
  %2115 = vmatprep.subr.bf16.mxu0 %v1487
  %2116 = vmatpush1.bf16.msra.mxu0 %v1486
  %2117 = vmatprep.subr.bf16.mxu0 %v1485
  %2118 = vmatpush1.bf16.msra.mxu0 %v1484
  %2119 = vmatprep.subr.bf16.mxu0 %v1483
  %2120 = vmatpush1.bf16.msra.mxu0 %v1482
  %2121 = vmatprep.subr.bf16.mxu0 %v1481
  %2122 = vmatpush1.bf16.msra.mxu0 %v1480
  %2123 = vmatprep.subr.bf16.mxu0 %v1479
  %2124 = vmatpush1.bf16.msra.mxu0 %v1478
  %2125 = vmatprep.subr.bf16.mxu0 %v1477
  %2126 = vmatpush1.bf16.msra.mxu0 %v1476
  %2127 = vmatprep.subr.bf16.mxu0 %v1475
  %2128 = vmatpush1.bf16.msra.mxu0 %v1474
  %2129 = vmatprep.subr.bf16.mxu0 %v1505
  %2130 = vmatpush2.bf16.msra.mxu0 %v1504
  %2131 = vmatprep.subr.bf16.mxu0 %v1503
  %2132 = vmatpush2.bf16.msra.mxu0 %v1502
  %2133 = vmatprep.subr.bf16.mxu0 %v1501
  %2134 = vmatpush2.bf16.msra.mxu0 %v1500
  %2135 = vmatprep.subr.bf16.mxu0 %v1499
  %2136 = vmatpush2.bf16.msra.mxu0 %v1498
  %2137 = vmatprep.subr.bf16.mxu0 %v1497
  %2138 = vmatpush2.bf16.msra.mxu0 %v1496
  %2139 = vmatprep.subr.bf16.mxu0 %v1495
  %2140 = vmatpush2.bf16.msra.mxu0 %v1494
  %2141 = vmatprep.subr.bf16.mxu0 %v1493
  %2142 = vmatpush2.bf16.msra.mxu0 %v1492
  %2143 = vmatprep.subr.bf16.mxu0 %v1491
  %2144 = vmatpush2.bf16.msra.mxu0 %v1490
  %2145 = vmatprep.mubr.bf16.mxu0 %v365
  %2146 = vmatmul.mubr.bf16.gmra.mxu0 %v364
  %v2147 = vpop.f32.mrf.mxu0
  %v2148 = vadd.f32 %v2107, %v2147
  %v2149 = vpop.f32.mrf.mxu0
  %v2150 = vadd.f32 %v2109, %v2149
  %v2151 = vpop.f32.mrf.mxu0
  %v2152 = vpop.f32.mrf.mxu0
  %2153 = vdwg.mxu0
  %2154 = vmatprep.subr.bf16.mxu0 %v1521
  %2155 = vmatpush1.bf16.msra.mxu0 %v1520
  %2156 = vmatprep.subr.bf16.mxu0 %v1519
  %2157 = vmatpush1.bf16.msra.mxu0 %v1518
  %2158 = vmatprep.subr.bf16.mxu0 %v1517
  %2159 = vmatpush1.bf16.msra.mxu0 %v1516
  %2160 = vmatprep.subr.bf16.mxu0 %v1515
  %2161 = vmatpush1.bf16.msra.mxu0 %v1514
  %2162 = vmatprep.subr.bf16.mxu0 %v1513
  %2163 = vmatpush1.bf16.msra.mxu0 %v1512
  %2164 = vmatprep.subr.bf16.mxu0 %v1511
  %2165 = vmatpush1.bf16.msra.mxu0 %v1510
  %2166 = vmatprep.subr.bf16.mxu0 %v1509
  %2167 = vmatpush1.bf16.msra.mxu0 %v1508
  %2168 = vmatprep.subr.bf16.mxu0 %v1507
  %2169 = vmatpush1.bf16.msra.mxu0 %v1506
  %2170 = vmatprep.subr.bf16.mxu0 %v1537
  %2171 = vmatpush2.bf16.msra.mxu0 %v1536
  %2172 = vmatprep.subr.bf16.mxu0 %v1535
  %2173 = vmatpush2.bf16.msra.mxu0 %v1534
  %2174 = vmatprep.subr.bf16.mxu0 %v1533
  %2175 = vmatpush2.bf16.msra.mxu0 %v1532
  %2176 = vmatprep.subr.bf16.mxu0 %v1531
  %2177 = vmatpush2.bf16.msra.mxu0 %v1530
  %2178 = vmatprep.subr.bf16.mxu0 %v1529
  %2179 = vmatpush2.bf16.msra.mxu0 %v1528
  %2180 = vmatprep.subr.bf16.mxu0 %v1527
  %2181 = vmatpush2.bf16.msra.mxu0 %v1526
  %2182 = vmatprep.subr.bf16.mxu0 %v1525
  %2183 = vmatpush2.bf16.msra.mxu0 %v1524
  %2184 = vmatprep.subr.bf16.mxu0 %v1523
  %2185 = vmatpush2.bf16.msra.mxu0 %v1522
  %2186 = vmatprep.mubr.bf16.mxu0 %v367
  %2187 = vmatmul.mubr.bf16.gmra.mxu0 %v366
  %v2188 = vpop.f32.mrf.mxu0
  %v2189 = vadd.f32 %v2148, %v2188
  %v2190 = vpop.f32.mrf.mxu0
  %v2191 = vadd.f32 %v2150, %v2190
  %v2192 = vpop.f32.mrf.mxu0
  %v2193 = vpop.f32.mrf.mxu0
  %2194 = vdwg.mxu0
  %vm2195 = vcmp.gt.f32.partialorder %v2189, 0.0
  %vm2196 = vcmp.gt.f32.partialorder %v2191, 0.0
  %v2197 = vmul.f32 %v2189, 0.1
  %v2198 = vmul.f32 %v2191, 0.1
  %v2199 = vsel %vm2195, %v2189, %v2197
  %v2200 = vsel %vm2196, %v2191, %v2198
  %v2201 = vpack.c.bf16 %v2199, %v2199
  %v2202 = vpack.c.bf16 %v2200, %v2200
  %v2205 = vunpack.c.l.b16 %v2201
  %v2206 = vunpack.c.l.b16 %v2202
  %v2207 = vpack.c.b16 %v2206, %v2205
  %2209 = vst [vmem:[%s3] sm:$0xff] %v2207
  // Predicated region
  $region14: #{discriminator_forward.12} parent=0 // pred_check
    _
  $region15: #{discriminator_forward.12} parent=0 // pred_check_branch
    %2211 = sbr.rel (0) target = $region17
  $region16: #{discriminator_forward.12} parent=0 // pred_region
    _
  $region17: #{discriminator_forward.12} parent=0 // pred_fallthru
    _
  // Predicated region
  $region18: #{discriminator_forward.12} parent=0 // pred_check
    _
  $region19: #{discriminator_forward.12} parent=0 // pred_check_branch
    %2213 = sbr.rel (0) target = $region21
  $region20: #{discriminator_forward.12} parent=0 // pred_region
    _
  $region21: #{discriminator_forward.12} parent=0 // pred_fallthru
    _

</llo_original>
